<compile_context>
chip_gen: v6e
topology: v6e:2x2x1
jax: 0.10.0
libtpu: 0.0.40
codegen_flags: <defaults>
</compile_context>

<pallas_src>
import functools

import jax
import jax.numpy as jnp
from jax.experimental import pallas as pl
from jax.experimental.pallas import tpu as pltpu

candidate_Cs = [8, 16, 24, 32, 40, 48, 56, 64]
BN_EPS = 1e-5
CP = 128                        # channel padding -> full TPU lane width
MATMUL_DTYPE = jnp.float32      # flip to jnp.bfloat16 on v6e/v7x for MXU peak throughput
_VMEM_LIMIT = 32 * 1024 * 1024


# ----------------------------- Pallas kernels ------------------------------

def _fused_conv_kernel(x_ref, w_ref, b_ref, ps_ref, pb_ref,
                       o_ref, st_ref, xpad_ref, acc_ref,
                       *, taps, stride, pad, relu, Ho, Wo):
    """prologue(affine+ReLU) -> KxK conv (per-tap MXU matmuls) -> bias -> BN partials."""
    Hi, Wi = x_ref.shape[1], x_ref.shape[2]

    # ---- prologue: per-channel affine (previous BN folded in) + optional ReLU
    a = x_ref[0].astype(jnp.float32) * ps_ref[0, :] + pb_ref[0, :]
    if relu:
        a = jnp.maximum(a, 0.0)
    a = a.astype(xpad_ref.dtype)

    # ---- zero-padded activation tile lives only in VMEM (no HBM im2col)
    if pad > 0:
        xpad_ref[...] = jnp.zeros(xpad_ref.shape, xpad_ref.dtype)
        xpad_ref[pad:pad + Hi, pad:pad + Wi, :] = a
    else:
        xpad_ref[...] = a

    # ---- conv as accumulated per-tap (rows, CP) x (CP, CP) matmuls
    rows = Ho * Wo
    for t, (ki, kj) in enumerate(taps):
        if stride == 1:
            patch = xpad_ref[pl.ds(ki, Ho), pl.ds(kj, Wo), :]
        else:
            patch = xpad_ref[pl.ds(ki, Ho, stride=stride),
                             pl.ds(kj, Wo, stride=stride), :]
        patch = patch.reshape(rows, patch.shape[-1])
        contrib = jnp.dot(patch, w_ref[t], preferred_element_type=jnp.float32)
        if t == 0:
            acc_ref[...] = contrib
        else:
            acc_ref[...] += contrib

    # ---- epilogue: bias + per-tile BatchNorm partial sums
    y = acc_ref[...] + b_ref[...]
    o_ref[0] = y.reshape(Ho, Wo, y.shape[-1]).astype(o_ref.dtype)
    st_ref[0, 0, :] = jnp.sum(y, axis=0)
    st_ref[0, 1, :] = jnp.sum(y * y, axis=0)


def _bn_add_kernel(a_ref, r_ref, sa_ref, ba_ref, sr_ref, br_ref, o_ref):
    """out = BN_b(basicblock) + [BN_s or identity](residual), per-channel affines."""
    a = a_ref[...].astype(jnp.float32)
    r = r_ref[...].astype(jnp.float32)
    o = (a * sa_ref[...] + ba_ref[...]) + (r * sr_ref[...] + br_ref[...])
    o_ref[...] = o.astype(o_ref.dtype)


# ------------------------------ call helpers -------------------------------

def fused_conv(x_p, w_oihw, bias, *, stride, pad, relu,
               pre_scale=None, pre_shift=None):
    """ReLU/affine prologue -> conv (+bias) on channel-padded NHWC input.

    Returns the pre-BatchNorm conv output (N, Ho, Wo, CP) plus per-image
    [sum, sum_sq] partials (N, 2, CP) for a later global BN finalize.
    """
    N, Hi, Wi, cp = x_p.shape
    assert cp == CP
    Cout, Cin, kh, kw = w_oihw.shape
    Ho = (Hi + 2 * pad - kh) // stride + 1
    Wo = (Wi + 2 * pad - kw) // stride + 1
    taps = tuple((ki, kj) for ki in range(kh) for kj in range(kw))

    # torch (Cout, Cin, kh, kw) -> (kh*kw, CP, CP), zero-padded, lane-dense columns.
    w = jnp.transpose(w_oihw, (2, 3, 1, 0)).reshape(kh * kw, Cin, Cout)
    w_p = jnp.zeros((kh * kw, CP, CP), MATMUL_DTYPE)
    w_p = w_p.at[:, :Cin, :Cout].set(w.astype(MATMUL_DTYPE))
    b_p = jnp.zeros((1, CP), jnp.float32)
    if bias is not None:
        b_p = b_p.at[0, :Cout].set(bias)
    ps = (jnp.ones((1, CP), jnp.float32) if pre_scale is None
          else pre_scale.reshape(1, CP).astype(jnp.float32))
    pb = (jnp.zeros((1, CP), jnp.float32) if pre_shift is None
          else pre_shift.reshape(1, CP).astype(jnp.float32))

    kernel = functools.partial(_fused_conv_kernel, taps=taps, stride=stride,
                               pad=pad, relu=relu, Ho=Ho, Wo=Wo)
    out, stats = pl.pallas_call(
        kernel,
        out_shape=(jax.ShapeDtypeStruct((N, Ho, Wo, CP), jnp.float32),
                   jax.ShapeDtypeStruct((N, 2, CP), jnp.float32)),
        grid=(N,),
        in_specs=[
            pl.BlockSpec((1, Hi, Wi, CP), lambda n: (n, 0, 0, 0)),
            pl.BlockSpec((kh * kw, CP, CP), lambda n: (0, 0, 0)),  # resident weights
            pl.BlockSpec((1, CP), lambda n: (0, 0)),               # bias
            pl.BlockSpec((1, CP), lambda n: (0, 0)),               # prologue scale
            pl.BlockSpec((1, CP), lambda n: (0, 0)),               # prologue shift
        ],
        out_specs=(
            pl.BlockSpec((1, Ho, Wo, CP), lambda n: (n, 0, 0, 0)),
            pl.BlockSpec((1, 2, CP), lambda n: (n, 0, 0)),
        ),
        scratch_shapes=[
            pltpu.VMEM((Hi + 2 * pad, Wi + 2 * pad, CP), MATMUL_DTYPE),  # padded acts
            pltpu.VMEM((Ho * Wo, CP), jnp.float32),                      # f32 accumulator
        ],
        compiler_params=pltpu.CompilerParams(
            dimension_semantics=("parallel",),
            vmem_limit_bytes=_VMEM_LIMIT),
    )(x_p, w_p, b_p, ps, pb)
    return out, stats


def _pick_row_tile(m, target=2048):
    if m <= target:
        return m
    t = target - (target % 8)
    while t >= 8:
        if m % t == 0:
            return t
        t -= 8
    return m


def fused_bn_add(a2d, r2d, scale_a, shift_a, scale_r, shift_r):
    M, C = a2d.shape
    tr = _pick_row_tile(M)
    row_spec = pl.BlockSpec((tr, C), lambda i: (i, 0))
    vec_spec = pl.BlockSpec((1, C), lambda i: (0, 0))
    return pl.pallas_call(
        _bn_add_kernel,
        out_shape=jax.ShapeDtypeStruct((M, C), jnp.float32),
        grid=(M // tr,),
        in_specs=[row_spec, row_spec, vec_spec, vec_spec, vec_spec, vec_spec],
        out_specs=row_spec,
        compiler_params=pltpu.CompilerParams(
            dimension_semantics=("parallel",),
            vmem_limit_bytes=_VMEM_LIMIT),
    )(a2d, r2d, scale_a.reshape(1, C), shift_a.reshape(1, C),
      scale_r.reshape(1, C), shift_r.reshape(1, C))


def _bn_scale_shift(stats, count):
    """Finalize training-mode BN from per-tile [sum, sum_sq] partials (tiny JAX work)."""
    s = jnp.sum(stats[:, 0, :], axis=0)
    ss = jnp.sum(stats[:, 1, :], axis=0)
    mean = s / count
    var = jnp.maximum(ss / count - mean * mean, 0.0)   # biased variance (train mode)
    scale = jax.lax.rsqrt(var + BN_EPS)
    return scale, -mean * scale


# --------------------------- module: parameters -----------------------------

def init_params(key):
    """Deterministic synthetic parameters at the slimmable max width (64)."""
    C = max(candidate_Cs)
    ks = jax.random.split(key, 7)
    s = 0.05
    return {
        # ReLUConvBN conv_a: 3x3, bias=True (affine=False)
        "conv_a_w": jax.random.normal(ks[0], (C, C, 3, 3), jnp.float32) * s,
        "conv_a_b": jax.random.normal(ks[1], (C,), jnp.float32) * s,
        # ReLUConvBN conv_b: 3x3, bias=True
        "conv_b_w": jax.random.normal(ks[2], (C, C, 3, 3), jnp.float32) * s,
        "conv_b_b": jax.random.normal(ks[3], (C,), jnp.float32) * s,
        # downsample (stride==2): AvgPool2d + 1x1 conv, bias=False
        "down_w": jax.random.normal(ks[4], (C, C, 1, 1), jnp.float32) * s,
        # downsample_s (stride==1, in_idx != out_idx): ReLUConvBN 1x1, bias=True
        "down_s_w": jax.random.normal(ks[5], (C, C, 1, 1), jnp.float32) * s,
        "down_s_b": jax.random.normal(ks[6], (C,), jnp.float32) * s,
    }


# --------------------------- module: forward --------------------------------

def resnet_basicblock_forward(params, x_nchw, in_idx, out_idx, stride):
    assert stride in (1, 2), f"invalid stride {stride}"
    C_in = candidate_Cs[in_idx]
    C_out = candidate_Cs[out_idx]
    assert x_nchw.shape[1] == C_in, (x_nchw.shape, C_in)
    N, _, H, W = x_nchw.shape

    # NCHW -> NHWC, channel-pad to the full 128-lane width (lane-dense everywhere).
    x = jnp.transpose(x_nchw, (0, 2, 3, 1))
    x_p = jnp.zeros((N, H, W, CP), jnp.float32).at[..., :C_in].set(x)

    # conv_a: ReLU -> conv3x3(stride) -> bias ; BN_a is folded into conv_b's prologue.
    ya, st_a = fused_conv(x_p, params["conv_a_w"][:C_out, :C_in],
                          params["conv_a_b"][:C_out],
                          stride=stride, pad=1, relu=True)
    Na, Ha, Wa, _ = ya.shape
    scale_a, shift_a = _bn_scale_shift(st_a, Na * Ha * Wa)

    # conv_b: (BN_a -> ReLU) prologue -> conv3x3(s=1) -> bias ; BN_b folded into final add.
    yb, st_b = fused_conv(ya, params["conv_b_w"][:C_out, :C_out],
                          params["conv_b_b"][:C_out],
                          stride=1, pad=1, relu=True,
                          pre_scale=scale_a, pre_shift=shift_a)
    Nb, Hb, Wb, _ = yb.shape
    Mb = Nb * Hb * Wb
    scale_b, shift_b = _bn_scale_shift(st_b, Mb)

    # residual branch
    ones = jnp.ones((CP,), jnp.float32)
    zeros = jnp.zeros((CP,), jnp.float32)
    if stride == 2:
        # AvgPool2d(2,2) + 1x1 conv (no bias) == single 2x2 stride-2 conv with weight/4.
        # NOTE: assumes even H, W (PyTorch AvgPool2d also floors for odd sizes).
        wd = jnp.tile(params["down_w"][:C_out, :C_in] * 0.25, (1, 1, 2, 2))
        r, _ = fused_conv(x_p, wd, None, stride=2, pad=0, relu=False)
        scale_r, shift_r = ones, zeros
    elif in_idx != out_idx:
        # ReLU -> 1x1 conv -> bias ; its BN is folded into the final add kernel.
        r, st_s = fused_conv(x_p, params["down_s_w"][:C_out, :C_in],
                             params["down_s_b"][:C_out],
                             stride=1, pad=0, relu=True)
        scale_r, shift_r = _bn_scale_shift(st_s, Mb)
    else:
        r = x_p
        scale_r, shift_r = ones, zeros

    # out = BN_b(basicblock) + [BN_s](residual), fused in one tiled lane-dense kernel.
    out2d = fused_bn_add(yb.reshape(Mb, CP), r.reshape(Mb, CP),
                         scale_b, shift_b, scale_r, shift_r)
    out = out2d.reshape(Nb, Hb, Wb, CP)[..., :C_out]
    return jnp.transpose(out, (0, 3, 1, 2))  # NHWC -> NCHW


# ----------------------------------- main ------------------------------------

if __name__ == "__main__":
    key = jax.random.PRNGKey(0)
    pkey, xkey1, xkey2 = jax.random.split(key, 3)
    params = init_params(pkey)

    N, H, W = 2, 16, 16
    fwd = jax.jit(resnet_basicblock_forward, static_argnums=(2, 3, 4))

    # 1) stride-2 block (downsample = avgpool + 1x1 conv), C 8 -> 16
    x1 = jax.random.normal(xkey1, (N, candidate_Cs[0], H, W), jnp.float32)
    o1 = jax.block_until_ready(fwd(params, x1, 0, 1, 2))
    assert o1.shape == (N, candidate_Cs[1], H // 2, W // 2), o1.shape
    assert bool(jnp.all(jnp.isfinite(o1)))

    # 2) stride-1 block with channel change (downsample_s = ReLUConvBN 1x1), C 8 -> 16
    o2 = jax.block_until_ready(fwd(params, x1, 0, 1, 1))
    assert o2.shape == (N, candidate_Cs[1], H, W), o2.shape
    assert bool(jnp.all(jnp.isfinite(o2)))

    # 3) stride-1 identity-residual block, C 16 -> 16
    x2 = jax.random.normal(xkey2, (N, candidate_Cs[1], H, W), jnp.float32)
    o3 = jax.block_until_ready(fwd(params, x2, 1, 1, 1))
    assert o3.shape == (N, candidate_Cs[1], H, W), o3.shape
    assert bool(jnp.all(jnp.isfinite(o3)))

    print("KERNEL_OK")
</pallas_src>

<mosaic_0001>
module attributes {stable_mosaic.version = 11 : i64} {
  func.func @_fused_conv_kernel(%arg0: i32, %arg1: memref<1x16x16x128xf32, #tpu.memory_space<vmem>>, %arg2: memref<9x128x128xf32, #tpu.memory_space<vmem>>, %arg3: memref<1x128xf32, #tpu.memory_space<vmem>>, %arg4: memref<1x128xf32, #tpu.memory_space<vmem>>, %arg5: memref<1x128xf32, #tpu.memory_space<vmem>>, %arg6: memref<1x8x8x128xf32, #tpu.memory_space<vmem>>, %arg7: memref<1x2x128xf32, #tpu.memory_space<vmem>>, %arg8: memref<18x18x128xf32, #tpu.memory_space<vmem>>, %arg9: memref<64x128xf32, #tpu.memory_space<vmem>>) attributes {dimension_semantics = [#tpu.dimension_semantics<parallel>], iteration_bounds = array<i64: 2>, scalar_prefetch = 0 : i64, scratch_operands = 2 : i64, tpu.core_type = #tpu.core_type<tc>, window_params = [{transform_indices = @transform_0, window_bounds = array<i64: 1, 16, 16, 128>}, {pipeline_mode = #tpu.pipeline_mode<synchronous>, transform_indices = @transform_1, window_bounds = array<i64: 9, 128, 128>}, {pipeline_mode = #tpu.pipeline_mode<synchronous>, transform_indices = @transform_2, window_bounds = array<i64: 1, 128>}, {pipeline_mode = #tpu.pipeline_mode<synchronous>, transform_indices = @transform_3, window_bounds = array<i64: 1, 128>}, {pipeline_mode = #tpu.pipeline_mode<synchronous>, transform_indices = @transform_4, window_bounds = array<i64: 1, 128>}, {transform_indices = @transform_5, window_bounds = array<i64: 1, 8, 8, 128>}, {transform_indices = @transform_6, window_bounds = array<i64: 1, 2, 128>}]} {
    %c0 = arith.constant 0 : index
    %c0_0 = arith.constant 0 : index
    %c0_1 = arith.constant 0 : index
    %c0_2 = arith.constant 0 : index
    %0 = vector.load %arg1[%c0, %c0_0, %c0_1, %c0_2] : memref<1x16x16x128xf32, #tpu.memory_space<vmem>>, vector<1x16x16x128xf32>
    %1 = vector.shape_cast %0 : vector<1x16x16x128xf32> to vector<16x16x128xf32>
    %c0_3 = arith.constant 0 : index
    %c0_4 = arith.constant 0 : index
    %2 = vector.load %arg4[%c0_3, %c0_4] : memref<1x128xf32, #tpu.memory_space<vmem>>, vector<1x128xf32>
    %3 = vector.shape_cast %2 : vector<1x128xf32> to vector<128xf32>
    %4 = vector.shape_cast %3 : vector<128xf32> to vector<1x1x128xf32>
    %5 = vector.broadcast %4 : vector<1x1x128xf32> to vector<16x16x128xf32>
    %6 = arith.mulf %1, %5 : vector<16x16x128xf32>
    %c0_5 = arith.constant 0 : index
    %c0_6 = arith.constant 0 : index
    %7 = vector.load %arg5[%c0_5, %c0_6] : memref<1x128xf32, #tpu.memory_space<vmem>>, vector<1x128xf32>
    %8 = vector.shape_cast %7 : vector<1x128xf32> to vector<128xf32>
    %9 = vector.shape_cast %8 : vector<128xf32> to vector<1x1x128xf32>
    %10 = vector.broadcast %9 : vector<1x1x128xf32> to vector<16x16x128xf32>
    %11 = arith.addf %6, %10 : vector<16x16x128xf32>
    %cst = arith.constant 0.000000e+00 : f32
    %12 = vector.broadcast %cst : f32 to vector<16x16x128xf32>
    %13 = arith.maximumf %11, %12 : vector<16x16x128xf32>
    %cst_7 = arith.constant 0.000000e+00 : f32
    %14 = vector.broadcast %cst_7 : f32 to vector<18x18x128xf32>
    %c0_8 = arith.constant 0 : index
    %c0_9 = arith.constant 0 : index
    %c0_10 = arith.constant 0 : index
    %15 = vector.load %arg8[%c0_8, %c0_9, %c0_10] : memref<18x18x128xf32, #tpu.memory_space<vmem>>, vector<18x18x128xf32>
    tpu.vector_store %arg8[%c0_8, %c0_9, %c0_10], %14 {strides = array<i32>} : memref<18x18x128xf32, #tpu.memory_space<vmem>>, vector<18x18x128xf32>,
    %c1 = arith.constant 1 : index
    %c1_11 = arith.constant 1 : index
    %c0_12 = arith.constant 0 : index
    %16 = vector.load %arg8[%c1, %c1_11, %c0_12] : memref<18x18x128xf32, #tpu.memory_space<vmem>>, vector<16x16x128xf32>
    tpu.vector_store %arg8[%c1, %c1_11, %c0_12], %13 {strides = array<i32>} : memref<18x18x128xf32, #tpu.memory_space<vmem>>, vector<16x16x128xf32>,
    %c0_13 = arith.constant 0 : index
    %c0_14 = arith.constant 0 : index
    %c0_15 = arith.constant 0 : index
    %17 = tpu.strided_load %arg8[%c0_13, %c0_14, %c0_15] {strides = array<i32: 2, 2, 1>} : memref<18x18x128xf32, #tpu.memory_space<vmem>>, vector<8x8x128xf32>
    %18 = vector.shape_cast %17 : vector<8x8x128xf32> to vector<64x128xf32>
    %c0_16 = arith.constant 0 : index
    %c0_17 = arith.constant 0 : index
    %c0_18 = arith.constant 0 : index
    %19 = vector.load %arg2[%c0_16, %c0_17, %c0_18] : memref<9x128x128xf32, #tpu.memory_space<vmem>>, vector<1x128x128xf32>
    %20 = vector.shape_cast %19 : vector<1x128x128xf32> to vector<128x128xf32>
    %cst_19 = arith.constant dense<0.000000e+00> : vector<64x128xf32>
    %21 = tpu.matmul %18, %20, %cst_19 {dimension_numbers = #tpu.dot_dimension_numbers<[1], [0], [0], [1], [0, 0, 1, 1], [], []>} : vector<64x128xf32>, vector<128x128xf32>, vector<64x128xf32> -> vector<64x128xf32>
    %c0_20 = arith.constant 0 : index
    %c0_21 = arith.constant 0 : index
    %22 = vector.load %arg9[%c0_20, %c0_21] : memref<64x128xf32, #tpu.memory_space<vmem>>, vector<64x128xf32>
    tpu.vector_store %arg9[%c0_20, %c0_21], %21 {strides = array<i32>} : memref<64x128xf32, #tpu.memory_space<vmem>>, vector<64x128xf32>,
    %c0_22 = arith.constant 0 : index
    %c1_23 = arith.constant 1 : index
    %c0_24 = arith.constant 0 : index
    %23 = tpu.strided_load %arg8[%c0_22, %c1_23, %c0_24] {strides = array<i32: 2, 2, 1>} : memref<18x18x128xf32, #tpu.memory_space<vmem>>, vector<8x8x128xf32>
    %24 = vector.shape_cast %23 : vector<8x8x128xf32> to vector<64x128xf32>
    %c1_25 = arith.constant 1 : index
    %c0_26 = arith.constant 0 : index
    %c0_27 = arith.constant 0 : index
    %25 = vector.load %arg2[%c1_25, %c0_26, %c0_27] : memref<9x128x128xf32, #tpu.memory_space<vmem>>, vector<1x128x128xf32>
    %26 = vector.shape_cast %25 : vector<1x128x128xf32> to vector<128x128xf32>
    %cst_28 = arith.constant dense<0.000000e+00> : vector<64x128xf32>
    %27 = tpu.matmul %24, %26, %cst_28 {dimension_numbers = #tpu.dot_dimension_numbers<[1], [0], [0], [1], [0, 0, 1, 1], [], []>} : vector<64x128xf32>, vector<128x128xf32>, vector<64x128xf32> -> vector<64x128xf32>
    %c0_29 = arith.constant 0 : index
    %c0_30 = arith.constant 0 : index
    %28 = vector.load %arg9[%c0_29, %c0_30] : memref<64x128xf32, #tpu.memory_space<vmem>>, vector<64x128xf32>
    %29 = arith.addf %28, %27 : vector<64x128xf32>
    %c0_31 = arith.constant 0 : index
    %c0_32 = arith.constant 0 : index
    %30 = vector.load %arg9[%c0_31, %c0_32] : memref<64x128xf32, #tpu.memory_space<vmem>>, vector<64x128xf32>
    tpu.vector_store %arg9[%c0_31, %c0_32], %29 {strides = array<i32>} : memref<64x128xf32, #tpu.memory_space<vmem>>, vector<64x128xf32>,
    %c0_33 = arith.constant 0 : index
    %c2 = arith.constant 2 : index
    %c0_34 = arith.constant 0 : index
    %31 = tpu.strided_load %arg8[%c0_33, %c2, %c0_34] {strides = array<i32: 2, 2, 1>} : memref<18x18x128xf32, #tpu.memory_space<vmem>>, vector<8x8x128xf32>
    %32 = vector.shape_cast %31 : vector<8x8x128xf32> to vector<64x128xf32>
    %c2_35 = arith.constant 2 : index
    %c0_36 = arith.constant 0 : index
    %c0_37 = arith.constant 0 : index
    %33 = vector.load %arg2[%c2_35, %c0_36, %c0_37] : memref<9x128x128xf32, #tpu.memory_space<vmem>>, vector<1x128x128xf32>
    %34 = vector.shape_cast %33 : vector<1x128x128xf32> to vector<128x128xf32>
    %cst_38 = arith.constant dense<0.000000e+00> : vector<64x128xf32>
    %35 = tpu.matmul %32, %34, %cst_38 {dimension_numbers = #tpu.dot_dimension_numbers<[1], [0], [0], [1], [0, 0, 1, 1], [], []>} : vector<64x128xf32>, vector<128x128xf32>, vector<64x128xf32> -> vector<64x128xf32>
    %c0_39 = arith.constant 0 : index
    %c0_40 = arith.constant 0 : index
    %36 = vector.load %arg9[%c0_39, %c0_40] : memref<64x128xf32, #tpu.memory_space<vmem>>, vector<64x128xf32>
    %37 = arith.addf %36, %35 : vector<64x128xf32>
    %c0_41 = arith.constant 0 : index
    %c0_42 = arith.constant 0 : index
    %38 = vector.load %arg9[%c0_41, %c0_42] : memref<64x128xf32, #tpu.memory_space<vmem>>, vector<64x128xf32>
    tpu.vector_store %arg9[%c0_41, %c0_42], %37 {strides = array<i32>} : memref<64x128xf32, #tpu.memory_space<vmem>>, vector<64x128xf32>,
    %c1_43 = arith.constant 1 : index
    %c0_44 = arith.constant 0 : index
    %c0_45 = arith.constant 0 : index
    %39 = tpu.strided_load %arg8[%c1_43, %c0_44, %c0_45] {strides = array<i32: 2, 2, 1>} : memref<18x18x128xf32, #tpu.memory_space<vmem>>, vector<8x8x128xf32>
    %40 = vector.shape_cast %39 : vector<8x8x128xf32> to vector<64x128xf32>
    %c3 = arith.constant 3 : index
    %c0_46 = arith.constant 0 : index
    %c0_47 = arith.constant 0 : index
    %41 = vector.load %arg2[%c3, %c0_46, %c0_47] : memref<9x128x128xf32, #tpu.memory_space<vmem>>, vector<1x128x128xf32>
    %42 = vector.shape_cast %41 : vector<1x128x128xf32> to vector<128x128xf32>
    %cst_48 = arith.constant dense<0.000000e+00> : vector<64x128xf32>
    %43 = tpu.matmul %40, %42, %cst_48 {dimension_numbers = #tpu.dot_dimension_numbers<[1], [0], [0], [1], [0, 0, 1, 1], [], []>} : vector<64x128xf32>, vector<128x128xf32>, vector<64x128xf32> -> vector<64x128xf32>
    %c0_49 = arith.constant 0 : index
    %c0_50 = arith.constant 0 : index
    %44 = vector.load %arg9[%c0_49, %c0_50] : memref<64x128xf32, #tpu.memory_space<vmem>>, vector<64x128xf32>
    %45 = arith.addf %44, %43 : vector<64x128xf32>
    %c0_51 = arith.constant 0 : index
    %c0_52 = arith.constant 0 : index
    %46 = vector.load %arg9[%c0_51, %c0_52] : memref<64x128xf32, #tpu.memory_space<vmem>>, vector<64x128xf32>
    tpu.vector_store %arg9[%c0_51, %c0_52], %45 {strides = array<i32>} : memref<64x128xf32, #tpu.memory_space<vmem>>, vector<64x128xf32>,
    %c1_53 = arith.constant 1 : index
    %c1_54 = arith.constant 1 : index
    %c0_55 = arith.constant 0 : index
    %47 = tpu.strided_load %arg8[%c1_53, %c1_54, %c0_55] {strides = array<i32: 2, 2, 1>} : memref<18x18x128xf32, #tpu.memory_space<vmem>>, vector<8x8x128xf32>
    %48 = vector.shape_cast %47 : vector<8x8x128xf32> to vector<64x128xf32>
    %c4 = arith.constant 4 : index
    %c0_56 = arith.constant 0 : index
    %c0_57 = arith.constant 0 : index
    %49 = vector.load %arg2[%c4, %c0_56, %c0_57] : memref<9x128x128xf32, #tpu.memory_space<vmem>>, vector<1x128x128xf32>
    %50 = vector.shape_cast %49 : vector<1x128x128xf32> to vector<128x128xf32>
    %cst_58 = arith.constant dense<0.000000e+00> : vector<64x128xf32>
    %51 = tpu.matmul %48, %50, %cst_58 {dimension_numbers = #tpu.dot_dimension_numbers<[1], [0], [0], [1], [0, 0, 1, 1], [], []>} : vector<64x128xf32>, vector<128x128xf32>, vector<64x128xf32> -> vector<64x128xf32>
    %c0_59 = arith.constant 0 : index
    %c0_60 = arith.constant 0 : index
    %52 = vector.load %arg9[%c0_59, %c0_60] : memref<64x128xf32, #tpu.memory_space<vmem>>, vector<64x128xf32>
    %53 = arith.addf %52, %51 : vector<64x128xf32>
    %c0_61 = arith.constant 0 : index
    %c0_62 = arith.constant 0 : index
    %54 = vector.load %arg9[%c0_61, %c0_62] : memref<64x128xf32, #tpu.memory_space<vmem>>, vector<64x128xf32>
    tpu.vector_store %arg9[%c0_61, %c0_62], %53 {strides = array<i32>} : memref<64x128xf32, #tpu.memory_space<vmem>>, vector<64x128xf32>,
    %c1_63 = arith.constant 1 : index
    %c2_64 = arith.constant 2 : index
    %c0_65 = arith.constant 0 : index
    %55 = tpu.strided_load %arg8[%c1_63, %c2_64, %c0_65] {strides = array<i32: 2, 2, 1>} : memref<18x18x128xf32, #tpu.memory_space<vmem>>, vector<8x8x128xf32>
    %56 = vector.shape_cast %55 : vector<8x8x128xf32> to vector<64x128xf32>
    %c5 = arith.constant 5 : index
    %c0_66 = arith.constant 0 : index
    %c0_67 = arith.constant 0 : index
    %57 = vector.load %arg2[%c5, %c0_66, %c0_67] : memref<9x128x128xf32, #tpu.memory_space<vmem>>, vector<1x128x128xf32>
    %58 = vector.shape_cast %57 : vector<1x128x128xf32> to vector<128x128xf32>
    %cst_68 = arith.constant dense<0.000000e+00> : vector<64x128xf32>
    %59 = tpu.matmul %56, %58, %cst_68 {dimension_numbers = #tpu.dot_dimension_numbers<[1], [0], [0], [1], [0, 0, 1, 1], [], []>} : vector<64x128xf32>, vector<128x128xf32>, vector<64x128xf32> -> vector<64x128xf32>
    %c0_69 = arith.constant 0 : index
    %c0_70 = arith.constant 0 : index
    %60 = vector.load %arg9[%c0_69, %c0_70] : memref<64x128xf32, #tpu.memory_space<vmem>>, vector<64x128xf32>
    %61 = arith.addf %60, %59 : vector<64x128xf32>
    %c0_71 = arith.constant 0 : index
    %c0_72 = arith.constant 0 : index
    %62 = vector.load %arg9[%c0_71, %c0_72] : memref<64x128xf32, #tpu.memory_space<vmem>>, vector<64x128xf32>
    tpu.vector_store %arg9[%c0_71, %c0_72], %61 {strides = array<i32>} : memref<64x128xf32, #tpu.memory_space<vmem>>, vector<64x128xf32>,
    %c2_73 = arith.constant 2 : index
    %c0_74 = arith.constant 0 : index
    %c0_75 = arith.constant 0 : index
    %63 = tpu.strided_load %arg8[%c2_73, %c0_74, %c0_75] {strides = array<i32: 2, 2, 1>} : memref<18x18x128xf32, #tpu.memory_space<vmem>>, vector<8x8x128xf32>
    %64 = vector.shape_cast %63 : vector<8x8x128xf32> to vector<64x128xf32>
    %c6 = arith.constant 6 : index
    %c0_76 = arith.constant 0 : index
    %c0_77 = arith.constant 0 : index
    %65 = vector.load %arg2[%c6, %c0_76, %c0_77] : memref<9x128x128xf32, #tpu.memory_space<vmem>>, vector<1x128x128xf32>
    %66 = vector.shape_cast %65 : vector<1x128x128xf32> to vector<128x128xf32>
    %cst_78 = arith.constant dense<0.000000e+00> : vector<64x128xf32>
    %67 = tpu.matmul %64, %66, %cst_78 {dimension_numbers = #tpu.dot_dimension_numbers<[1], [0], [0], [1], [0, 0, 1, 1], [], []>} : vector<64x128xf32>, vector<128x128xf32>, vector<64x128xf32> -> vector<64x128xf32>
    %c0_79 = arith.constant 0 : index
    %c0_80 = arith.constant 0 : index
    %68 = vector.load %arg9[%c0_79, %c0_80] : memref<64x128xf32, #tpu.memory_space<vmem>>, vector<64x128xf32>
    %69 = arith.addf %68, %67 : vector<64x128xf32>
    %c0_81 = arith.constant 0 : index
    %c0_82 = arith.constant 0 : index
    %70 = vector.load %arg9[%c0_81, %c0_82] : memref<64x128xf32, #tpu.memory_space<vmem>>, vector<64x128xf32>
    tpu.vector_store %arg9[%c0_81, %c0_82], %69 {strides = array<i32>} : memref<64x128xf32, #tpu.memory_space<vmem>>, vector<64x128xf32>,
    %c2_83 = arith.constant 2 : index
    %c1_84 = arith.constant 1 : index
    %c0_85 = arith.constant 0 : index
    %71 = tpu.strided_load %arg8[%c2_83, %c1_84, %c0_85] {strides = array<i32: 2, 2, 1>} : memref<18x18x128xf32, #tpu.memory_space<vmem>>, vector<8x8x128xf32>
    %72 = vector.shape_cast %71 : vector<8x8x128xf32> to vector<64x128xf32>
    %c7 = arith.constant 7 : index
    %c0_86 = arith.constant 0 : index
    %c0_87 = arith.constant 0 : index
    %73 = vector.load %arg2[%c7, %c0_86, %c0_87] : memref<9x128x128xf32, #tpu.memory_space<vmem>>, vector<1x128x128xf32>
    %74 = vector.shape_cast %73 : vector<1x128x128xf32> to vector<128x128xf32>
    %cst_88 = arith.constant dense<0.000000e+00> : vector<64x128xf32>
    %75 = tpu.matmul %72, %74, %cst_88 {dimension_numbers = #tpu.dot_dimension_numbers<[1], [0], [0], [1], [0, 0, 1, 1], [], []>} : vector<64x128xf32>, vector<128x128xf32>, vector<64x128xf32> -> vector<64x128xf32>
    %c0_89 = arith.constant 0 : index
    %c0_90 = arith.constant 0 : index
    %76 = vector.load %arg9[%c0_89, %c0_90] : memref<64x128xf32, #tpu.memory_space<vmem>>, vector<64x128xf32>
    %77 = arith.addf %76, %75 : vector<64x128xf32>
    %c0_91 = arith.constant 0 : index
    %c0_92 = arith.constant 0 : index
    %78 = vector.load %arg9[%c0_91, %c0_92] : memref<64x128xf32, #tpu.memory_space<vmem>>, vector<64x128xf32>
    tpu.vector_store %arg9[%c0_91, %c0_92], %77 {strides = array<i32>} : memref<64x128xf32, #tpu.memory_space<vmem>>, vector<64x128xf32>,
    %c2_93 = arith.constant 2 : index
    %c2_94 = arith.constant 2 : index
    %c0_95 = arith.constant 0 : index
    %79 = tpu.strided_load %arg8[%c2_93, %c2_94, %c0_95] {strides = array<i32: 2, 2, 1>} : memref<18x18x128xf32, #tpu.memory_space<vmem>>, vector<8x8x128xf32>
    %80 = vector.shape_cast %79 : vector<8x8x128xf32> to vector<64x128xf32>
    %c8 = arith.constant 8 : index
    %c0_96 = arith.constant 0 : index
    %c0_97 = arith.constant 0 : index
    %81 = vector.load %arg2[%c8, %c0_96, %c0_97] : memref<9x128x128xf32, #tpu.memory_space<vmem>>, vector<1x128x128xf32>
    %82 = vector.shape_cast %81 : vector<1x128x128xf32> to vector<128x128xf32>
    %cst_98 = arith.constant dense<0.000000e+00> : vector<64x128xf32>
    %83 = tpu.matmul %80, %82, %cst_98 {dimension_numbers = #tpu.dot_dimension_numbers<[1], [0], [0], [1], [0, 0, 1, 1], [], []>} : vector<64x128xf32>, vector<128x128xf32>, vector<64x128xf32> -> vector<64x128xf32>
    %c0_99 = arith.constant 0 : index
    %c0_100 = arith.constant 0 : index
    %84 = vector.load %arg9[%c0_99, %c0_100] : memref<64x128xf32, #tpu.memory_space<vmem>>, vector<64x128xf32>
    %85 = arith.addf %84, %83 : vector<64x128xf32>
    %c0_101 = arith.constant 0 : index
    %c0_102 = arith.constant 0 : index
    %86 = vector.load %arg9[%c0_101, %c0_102] : memref<64x128xf32, #tpu.memory_space<vmem>>, vector<64x128xf32>
    tpu.vector_store %arg9[%c0_101, %c0_102], %85 {strides = array<i32>} : memref<64x128xf32, #tpu.memory_space<vmem>>, vector<64x128xf32>,
    %c0_103 = arith.constant 0 : index
    %c0_104 = arith.constant 0 : index
    %87 = vector.load %arg9[%c0_103, %c0_104] : memref<64x128xf32, #tpu.memory_space<vmem>>, vector<64x128xf32>
    %c0_105 = arith.constant 0 : index
    %c0_106 = arith.constant 0 : index
    %88 = vector.load %arg3[%c0_105, %c0_106] : memref<1x128xf32, #tpu.memory_space<vmem>>, vector<1x128xf32>
    %89 = vector.broadcast %88 : vector<1x128xf32> to vector<64x128xf32>
    %90 = arith.addf %87, %89 : vector<64x128xf32>
    %91 = vector.shape_cast %90 : vector<64x128xf32> to vector<8x8x128xf32>
    %c0_107 = arith.constant 0 : index
    %c0_108 = arith.constant 0 : index
    %c0_109 = arith.constant 0 : index
    %c0_110 = arith.constant 0 : index
    %92 = vector.load %arg6[%c0_107, %c0_108, %c0_109, %c0_110] : memref<1x8x8x128xf32, #tpu.memory_space<vmem>>, vector<1x8x8x128xf32>
    %93 = vector.shape_cast %92 : vector<1x8x8x128xf32> to vector<8x8x128xf32>
    %94 = vector.shape_cast %91 : vector<8x8x128xf32> to vector<1x8x8x128xf32>
    tpu.vector_store %arg6[%c0_107, %c0_108, %c0_109, %c0_110], %94 {strides = array<i32>} : memref<1x8x8x128xf32, #tpu.memory_space<vmem>>, vector<1x8x8x128xf32>,
    %cst_111 = arith.constant dense<0.000000e+00> : vector<128xf32>
    %95 = vector.multi_reduction <add>, %90, %cst_111 [0] : vector<64x128xf32> to vector<128xf32>
    %c0_112 = arith.constant 0 : index
    %c0_113 = arith.constant 0 : index
    %c0_114 = arith.constant 0 : index
    %96 = vector.load %arg7[%c0_112, %c0_113, %c0_114] : memref<1x2x128xf32, #tpu.memory_space<vmem>>, vector<1x1x128xf32>
    %97 = vector.shape_cast %96 : vector<1x1x128xf32> to vector<128xf32>
    %98 = vector.shape_cast %95 : vector<128xf32> to vector<1x1x128xf32>
    tpu.vector_store %arg7[%c0_112, %c0_113, %c0_114], %98 {strides = array<i32>} : memref<1x2x128xf32, #tpu.memory_space<vmem>>, vector<1x1x128xf32>,
    %99 = arith.mulf %90, %90 : vector<64x128xf32>
    %cst_115 = arith.constant dense<0.000000e+00> : vector<128xf32>
    %100 = vector.multi_reduction <add>, %99, %cst_115 [0] : vector<64x128xf32> to vector<128xf32>
    %c0_116 = arith.constant 0 : index
    %c1_117 = arith.constant 1 : index
    %c0_118 = arith.constant 0 : index
    %101 = vector.load %arg7[%c0_116, %c1_117, %c0_118] : memref<1x2x128xf32, #tpu.memory_space<vmem>>, vector<1x1x128xf32>
    %102 = vector.shape_cast %101 : vector<1x1x128xf32> to vector<128xf32>
    %103 = vector.shape_cast %100 : vector<128xf32> to vector<1x1x128xf32>
    tpu.vector_store %arg7[%c0_116, %c1_117, %c0_118], %103 {strides = array<i32>} : memref<1x2x128xf32, #tpu.memory_space<vmem>>, vector<1x1x128xf32>,
    return
  }
  func.func @transform_0(%arg0: i32) -> (i32, i32, i32, i32) {
    %c0_i32 = arith.constant 0 : i32
    %c0_i32_0 = arith.constant 0 : i32
    %c0_i32_1 = arith.constant 0 : i32
    %c0_i32_2 = arith.constant 0 : i32
    return %arg0, %c0_i32, %c0_i32_0, %c0_i32_1 : i32, i32, i32, i32
  }
  func.func @transform_1(%arg0: i32) -> (i32, i32, i32) {
    %c0_i32 = arith.constant 0 : i32
    %c0_i32_0 = arith.constant 0 : i32
    %c0_i32_1 = arith.constant 0 : i32
    %c0_i32_2 = arith.constant 0 : i32
    return %c0_i32, %c0_i32_0, %c0_i32_1 : i32, i32, i32
  }
  func.func @transform_2(%arg0: i32) -> (i32, i32) {
    %c0_i32 = arith.constant 0 : i32
    %c0_i32_0 = arith.constant 0 : i32
    %c0_i32_1 = arith.constant 0 : i32
    return %c0_i32, %c0_i32_0 : i32, i32
  }
  func.func @transform_3(%arg0: i32) -> (i32, i32) {
    %c0_i32 = arith.constant 0 : i32
    %c0_i32_0 = arith.constant 0 : i32
    %c0_i32_1 = arith.constant 0 : i32
    return %c0_i32, %c0_i32_0 : i32, i32
  }
  func.func @transform_4(%arg0: i32) -> (i32, i32) {
    %c0_i32 = arith.constant 0 : i32
    %c0_i32_0 = arith.constant 0 : i32
    %c0_i32_1 = arith.constant 0 : i32
    return %c0_i32, %c0_i32_0 : i32, i32
  }
  func.func @transform_5(%arg0: i32) -> (i32, i32, i32, i32) {
    %c0_i32 = arith.constant 0 : i32
    %c0_i32_0 = arith.constant 0 : i32
    %c0_i32_1 = arith.constant 0 : i32
    %c0_i32_2 = arith.constant 0 : i32
    return %arg0, %c0_i32, %c0_i32_0, %c0_i32_1 : i32, i32, i32, i32
  }
  func.func @transform_6(%arg0: i32) -> (i32, i32, i32) {
    %c0_i32 = arith.constant 0 : i32
    %c0_i32_0 = arith.constant 0 : i32
    %c0_i32_1 = arith.constant 0 : i32
    return %arg0, %c0_i32, %c0_i32_0 : i32, i32, i32
  }
}

module attributes {stable_mosaic.version = 11 : i64} {
  func.func @_fused_conv_kernel(%arg0: i32, %arg1: memref<1x8x8x128xf32, #tpu.memory_space<vmem>>, %arg2: memref<9x128x128xf32, #tpu.memory_space<vmem>>, %arg3: memref<1x128xf32, #tpu.memory_space<vmem>>, %arg4: memref<1x128xf32, #tpu.memory_space<vmem>>, %arg5: memref<1x128xf32, #tpu.memory_space<vmem>>, %arg6: memref<1x8x8x128xf32, #tpu.memory_space<vmem>>, %arg7: memref<1x2x128xf32, #tpu.memory_space<vmem>>, %arg8: memref<10x10x128xf32, #tpu.memory_space<vmem>>, %arg9: memref<64x128xf32, #tpu.memory_space<vmem>>) attributes {dimension_semantics = [#tpu.dimension_semantics<parallel>], iteration_bounds = array<i64: 2>, scalar_prefetch = 0 : i64, scratch_operands = 2 : i64, tpu.core_type = #tpu.core_type<tc>, window_params = [{transform_indices = @transform_0, window_bounds = array<i64: 1, 8, 8, 128>}, {pipeline_mode = #tpu.pipeline_mode<synchronous>, transform_indices = @transform_1, window_bounds = array<i64: 9, 128, 128>}, {pipeline_mode = #tpu.pipeline_mode<synchronous>, transform_indices = @transform_2, window_bounds = array<i64: 1, 128>}, {pipeline_mode = #tpu.pipeline_mode<synchronous>, transform_indices = @transform_3, window_bounds = array<i64: 1, 128>}, {pipeline_mode = #tpu.pipeline_mode<synchronous>, transform_indices = @transform_4, window_bounds = array<i64: 1, 128>}, {transform_indices = @transform_5, window_bounds = array<i64: 1, 8, 8, 128>}, {transform_indices = @transform_6, window_bounds = array<i64: 1, 2, 128>}]} {
    %c0 = arith.constant 0 : index
    %c0_0 = arith.constant 0 : index
    %c0_1 = arith.constant 0 : index
    %c0_2 = arith.constant 0 : index
    %0 = vector.load %arg1[%c0, %c0_0, %c0_1, %c0_2] : memref<1x8x8x128xf32, #tpu.memory_space<vmem>>, vector<1x8x8x128xf32>
    %1 = vector.shape_cast %0 : vector<1x8x8x128xf32> to vector<8x8x128xf32>
    %c0_3 = arith.constant 0 : index
    %c0_4 = arith.constant 0 : index
    %2 = vector.load %arg4[%c0_3, %c0_4] : memref<1x128xf32, #tpu.memory_space<vmem>>, vector<1x128xf32>
    %3 = vector.shape_cast %2 : vector<1x128xf32> to vector<128xf32>
    %4 = vector.shape_cast %3 : vector<128xf32> to vector<1x1x128xf32>
    %5 = vector.broadcast %4 : vector<1x1x128xf32> to vector<8x8x128xf32>
    %6 = arith.mulf %1, %5 : vector<8x8x128xf32>
    %c0_5 = arith.constant 0 : index
    %c0_6 = arith.constant 0 : index
    %7 = vector.load %arg5[%c0_5, %c0_6] : memref<1x128xf32, #tpu.memory_space<vmem>>, vector<1x128xf32>
    %8 = vector.shape_cast %7 : vector<1x128xf32> to vector<128xf32>
    %9 = vector.shape_cast %8 : vector<128xf32> to vector<1x1x128xf32>
    %10 = vector.broadcast %9 : vector<1x1x128xf32> to vector<8x8x128xf32>
    %11 = arith.addf %6, %10 : vector<8x8x128xf32>
    %cst = arith.constant 0.000000e+00 : f32
    %12 = vector.broadcast %cst : f32 to vector<8x8x128xf32>
    %13 = arith.maximumf %11, %12 : vector<8x8x128xf32>
    %cst_7 = arith.constant 0.000000e+00 : f32
    %14 = vector.broadcast %cst_7 : f32 to vector<10x10x128xf32>
    %c0_8 = arith.constant 0 : index
    %c0_9 = arith.constant 0 : index
    %c0_10 = arith.constant 0 : index
    %15 = vector.load %arg8[%c0_8, %c0_9, %c0_10] : memref<10x10x128xf32, #tpu.memory_space<vmem>>, vector<10x10x128xf32>
    tpu.vector_store %arg8[%c0_8, %c0_9, %c0_10], %14 {strides = array<i32>} : memref<10x10x128xf32, #tpu.memory_space<vmem>>, vector<10x10x128xf32>,
    %c1 = arith.constant 1 : index
    %c1_11 = arith.constant 1 : index
    %c0_12 = arith.constant 0 : index
    %16 = vector.load %arg8[%c1, %c1_11, %c0_12] : memref<10x10x128xf32, #tpu.memory_space<vmem>>, vector<8x8x128xf32>
    tpu.vector_store %arg8[%c1, %c1_11, %c0_12], %13 {strides = array<i32>} : memref<10x10x128xf32, #tpu.memory_space<vmem>>, vector<8x8x128xf32>,
    %c0_13 = arith.constant 0 : index
    %c0_14 = arith.constant 0 : index
    %c0_15 = arith.constant 0 : index
    %17 = vector.load %arg8[%c0_13, %c0_14, %c0_15] : memref<10x10x128xf32, #tpu.memory_space<vmem>>, vector<8x8x128xf32>
    %18 = vector.shape_cast %17 : vector<8x8x128xf32> to vector<64x128xf32>
    %c0_16 = arith.constant 0 : index
    %c0_17 = arith.constant 0 : index
    %c0_18 = arith.constant 0 : index
    %19 = vector.load %arg2[%c0_16, %c0_17, %c0_18] : memref<9x128x128xf32, #tpu.memory_space<vmem>>, vector<1x128x128xf32>
    %20 = vector.shape_cast %19 : vector<1x128x128xf32> to vector<128x128xf32>
    %cst_19 = arith.constant dense<0.000000e+00> : vector<64x128xf32>
    %21 = tpu.matmul %18, %20, %cst_19 {dimension_numbers = #tpu.dot_dimension_numbers<[1], [0], [0], [1], [0, 0, 1, 1], [], []>} : vector<64x128xf32>, vector<128x128xf32>, vector<64x128xf32> -> vector<64x128xf32>
    %c0_20 = arith.constant 0 : index
    %c0_21 = arith.constant 0 : index
    %22 = vector.load %arg9[%c0_20, %c0_21] : memref<64x128xf32, #tpu.memory_space<vmem>>, vector<64x128xf32>
    tpu.vector_store %arg9[%c0_20, %c0_21], %21 {strides = array<i32>} : memref<64x128xf32, #tpu.memory_space<vmem>>, vector<64x128xf32>,
    %c0_22 = arith.constant 0 : index
    %c1_23 = arith.constant 1 : index
    %c0_24 = arith.constant 0 : index
    %23 = vector.load %arg8[%c0_22, %c1_23, %c0_24] : memref<10x10x128xf32, #tpu.memory_space<vmem>>, vector<8x8x128xf32>
    %24 = vector.shape_cast %23 : vector<8x8x128xf32> to vector<64x128xf32>
    %c1_25 = arith.constant 1 : index
    %c0_26 = arith.constant 0 : index
    %c0_27 = arith.constant 0 : index
    %25 = vector.load %arg2[%c1_25, %c0_26, %c0_27] : memref<9x128x128xf32, #tpu.memory_space<vmem>>, vector<1x128x128xf32>
    %26 = vector.shape_cast %25 : vector<1x128x128xf32> to vector<128x128xf32>
    %cst_28 = arith.constant dense<0.000000e+00> : vector<64x128xf32>
    %27 = tpu.matmul %24, %26, %cst_28 {dimension_numbers = #tpu.dot_dimension_numbers<[1], [0], [0], [1], [0, 0, 1, 1], [], []>} : vector<64x128xf32>, vector<128x128xf32>, vector<64x128xf32> -> vector<64x128xf32>
    %c0_29 = arith.constant 0 : index
    %c0_30 = arith.constant 0 : index
    %28 = vector.load %arg9[%c0_29, %c0_30] : memref<64x128xf32, #tpu.memory_space<vmem>>, vector<64x128xf32>
    %29 = arith.addf %28, %27 : vector<64x128xf32>
    %c0_31 = arith.constant 0 : index
    %c0_32 = arith.constant 0 : index
    %30 = vector.load %arg9[%c0_31, %c0_32] : memref<64x128xf32, #tpu.memory_space<vmem>>, vector<64x128xf32>
    tpu.vector_store %arg9[%c0_31, %c0_32], %29 {strides = array<i32>} : memref<64x128xf32, #tpu.memory_space<vmem>>, vector<64x128xf32>,
    %c0_33 = arith.constant 0 : index
    %c2 = arith.constant 2 : index
    %c0_34 = arith.constant 0 : index
    %31 = vector.load %arg8[%c0_33, %c2, %c0_34] : memref<10x10x128xf32, #tpu.memory_space<vmem>>, vector<8x8x128xf32>
    %32 = vector.shape_cast %31 : vector<8x8x128xf32> to vector<64x128xf32>
    %c2_35 = arith.constant 2 : index
    %c0_36 = arith.constant 0 : index
    %c0_37 = arith.constant 0 : index
    %33 = vector.load %arg2[%c2_35, %c0_36, %c0_37] : memref<9x128x128xf32, #tpu.memory_space<vmem>>, vector<1x128x128xf32>
    %34 = vector.shape_cast %33 : vector<1x128x128xf32> to vector<128x128xf32>
    %cst_38 = arith.constant dense<0.000000e+00> : vector<64x128xf32>
    %35 = tpu.matmul %32, %34, %cst_38 {dimension_numbers = #tpu.dot_dimension_numbers<[1], [0], [0], [1], [0, 0, 1, 1], [], []>} : vector<64x128xf32>, vector<128x128xf32>, vector<64x128xf32> -> vector<64x128xf32>
    %c0_39 = arith.constant 0 : index
    %c0_40 = arith.constant 0 : index
    %36 = vector.load %arg9[%c0_39, %c0_40] : memref<64x128xf32, #tpu.memory_space<vmem>>, vector<64x128xf32>
    %37 = arith.addf %36, %35 : vector<64x128xf32>
    %c0_41 = arith.constant 0 : index
    %c0_42 = arith.constant 0 : index
    %38 = vector.load %arg9[%c0_41, %c0_42] : memref<64x128xf32, #tpu.memory_space<vmem>>, vector<64x128xf32>
    tpu.vector_store %arg9[%c0_41, %c0_42], %37 {strides = array<i32>} : memref<64x128xf32, #tpu.memory_space<vmem>>, vector<64x128xf32>,
    %c1_43 = arith.constant 1 : index
    %c0_44 = arith.constant 0 : index
    %c0_45 = arith.constant 0 : index
    %39 = vector.load %arg8[%c1_43, %c0_44, %c0_45] : memref<10x10x128xf32, #tpu.memory_space<vmem>>, vector<8x8x128xf32>
    %40 = vector.shape_cast %39 : vector<8x8x128xf32> to vector<64x128xf32>
    %c3 = arith.constant 3 : index
    %c0_46 = arith.constant 0 : index
    %c0_47 = arith.constant 0 : index
    %41 = vector.load %arg2[%c3, %c0_46, %c0_47] : memref<9x128x128xf32, #tpu.memory_space<vmem>>, vector<1x128x128xf32>
    %42 = vector.shape_cast %41 : vector<1x128x128xf32> to vector<128x128xf32>
    %cst_48 = arith.constant dense<0.000000e+00> : vector<64x128xf32>
    %43 = tpu.matmul %40, %42, %cst_48 {dimension_numbers = #tpu.dot_dimension_numbers<[1], [0], [0], [1], [0, 0, 1, 1], [], []>} : vector<64x128xf32>, vector<128x128xf32>, vector<64x128xf32> -> vector<64x128xf32>
    %c0_49 = arith.constant 0 : index
    %c0_50 = arith.constant 0 : index
    %44 = vector.load %arg9[%c0_49, %c0_50] : memref<64x128xf32, #tpu.memory_space<vmem>>, vector<64x128xf32>
    %45 = arith.addf %44, %43 : vector<64x128xf32>
    %c0_51 = arith.constant 0 : index
    %c0_52 = arith.constant 0 : index
    %46 = vector.load %arg9[%c0_51, %c0_52] : memref<64x128xf32, #tpu.memory_space<vmem>>, vector<64x128xf32>
    tpu.vector_store %arg9[%c0_51, %c0_52], %45 {strides = array<i32>} : memref<64x128xf32, #tpu.memory_space<vmem>>, vector<64x128xf32>,
    %c1_53 = arith.constant 1 : index
    %c1_54 = arith.constant 1 : index
    %c0_55 = arith.constant 0 : index
    %47 = vector.load %arg8[%c1_53, %c1_54, %c0_55] : memref<10x10x128xf32, #tpu.memory_space<vmem>>, vector<8x8x128xf32>
    %48 = vector.shape_cast %47 : vector<8x8x128xf32> to vector<64x128xf32>
    %c4 = arith.constant 4 : index
    %c0_56 = arith.constant 0 : index
    %c0_57 = arith.constant 0 : index
    %49 = vector.load %arg2[%c4, %c0_56, %c0_57] : memref<9x128x128xf32, #tpu.memory_space<vmem>>, vector<1x128x128xf32>
    %50 = vector.shape_cast %49 : vector<1x128x128xf32> to vector<128x128xf32>
    %cst_58 = arith.constant dense<0.000000e+00> : vector<64x128xf32>
    %51 = tpu.matmul %48, %50, %cst_58 {dimension_numbers = #tpu.dot_dimension_numbers<[1], [0], [0], [1], [0, 0, 1, 1], [], []>} : vector<64x128xf32>, vector<128x128xf32>, vector<64x128xf32> -> vector<64x128xf32>
    %c0_59 = arith.constant 0 : index
    %c0_60 = arith.constant 0 : index
    %52 = vector.load %arg9[%c0_59, %c0_60] : memref<64x128xf32, #tpu.memory_space<vmem>>, vector<64x128xf32>
    %53 = arith.addf %52, %51 : vector<64x128xf32>
    %c0_61 = arith.constant 0 : index
    %c0_62 = arith.constant 0 : index
    %54 = vector.load %arg9[%c0_61, %c0_62] : memref<64x128xf32, #tpu.memory_space<vmem>>, vector<64x128xf32>
    tpu.vector_store %arg9[%c0_61, %c0_62], %53 {strides = array<i32>} : memref<64x128xf32, #tpu.memory_space<vmem>>, vector<64x128xf32>,
    %c1_63 = arith.constant 1 : index
    %c2_64 = arith.constant 2 : index
    %c0_65 = arith.constant 0 : index
    %55 = vector.load %arg8[%c1_63, %c2_64, %c0_65] : memref<10x10x128xf32, #tpu.memory_space<vmem>>, vector<8x8x128xf32>
    %56 = vector.shape_cast %55 : vector<8x8x128xf32> to vector<64x128xf32>
    %c5 = arith.constant 5 : index
    %c0_66 = arith.constant 0 : index
    %c0_67 = arith.constant 0 : index
    %57 = vector.load %arg2[%c5, %c0_66, %c0_67] : memref<9x128x128xf32, #tpu.memory_space<vmem>>, vector<1x128x128xf32>
    %58 = vector.shape_cast %57 : vector<1x128x128xf32> to vector<128x128xf32>
    %cst_68 = arith.constant dense<0.000000e+00> : vector<64x128xf32>
    %59 = tpu.matmul %56, %58, %cst_68 {dimension_numbers = #tpu.dot_dimension_numbers<[1], [0], [0], [1], [0, 0, 1, 1], [], []>} : vector<64x128xf32>, vector<128x128xf32>, vector<64x128xf32> -> vector<64x128xf32>
    %c0_69 = arith.constant 0 : index
    %c0_70 = arith.constant 0 : index
    %60 = vector.load %arg9[%c0_69, %c0_70] : memref<64x128xf32, #tpu.memory_space<vmem>>, vector<64x128xf32>
    %61 = arith.addf %60, %59 : vector<64x128xf32>
    %c0_71 = arith.constant 0 : index
    %c0_72 = arith.constant 0 : index
    %62 = vector.load %arg9[%c0_71, %c0_72] : memref<64x128xf32, #tpu.memory_space<vmem>>, vector<64x128xf32>
    tpu.vector_store %arg9[%c0_71, %c0_72], %61 {strides = array<i32>} : memref<64x128xf32, #tpu.memory_space<vmem>>, vector<64x128xf32>,
    %c2_73 = arith.constant 2 : index
    %c0_74 = arith.constant 0 : index
    %c0_75 = arith.constant 0 : index
    %63 = vector.load %arg8[%c2_73, %c0_74, %c0_75] : memref<10x10x128xf32, #tpu.memory_space<vmem>>, vector<8x8x128xf32>
    %64 = vector.shape_cast %63 : vector<8x8x128xf32> to vector<64x128xf32>
    %c6 = arith.constant 6 : index
    %c0_76 = arith.constant 0 : index
    %c0_77 = arith.constant 0 : index
    %65 = vector.load %arg2[%c6, %c0_76, %c0_77] : memref<9x128x128xf32, #tpu.memory_space<vmem>>, vector<1x128x128xf32>
    %66 = vector.shape_cast %65 : vector<1x128x128xf32> to vector<128x128xf32>
    %cst_78 = arith.constant dense<0.000000e+00> : vector<64x128xf32>
    %67 = tpu.matmul %64, %66, %cst_78 {dimension_numbers = #tpu.dot_dimension_numbers<[1], [0], [0], [1], [0, 0, 1, 1], [], []>} : vector<64x128xf32>, vector<128x128xf32>, vector<64x128xf32> -> vector<64x128xf32>
    %c0_79 = arith.constant 0 : index
    %c0_80 = arith.constant 0 : index
    %68 = vector.load %arg9[%c0_79, %c0_80] : memref<64x128xf32, #tpu.memory_space<vmem>>, vector<64x128xf32>
    %69 = arith.addf %68, %67 : vector<64x128xf32>
    %c0_81 = arith.constant 0 : index
    %c0_82 = arith.constant 0 : index
    %70 = vector.load %arg9[%c0_81, %c0_82] : memref<64x128xf32, #tpu.memory_space<vmem>>, vector<64x128xf32>
    tpu.vector_store %arg9[%c0_81, %c0_82], %69 {strides = array<i32>} : memref<64x128xf32, #tpu.memory_space<vmem>>, vector<64x128xf32>,
    %c2_83 = arith.constant 2 : index
    %c1_84 = arith.constant 1 : index
    %c0_85 = arith.constant 0 : index
    %71 = vector.load %arg8[%c2_83, %c1_84, %c0_85] : memref<10x10x128xf32, #tpu.memory_space<vmem>>, vector<8x8x128xf32>
    %72 = vector.shape_cast %71 : vector<8x8x128xf32> to vector<64x128xf32>
    %c7 = arith.constant 7 : index
    %c0_86 = arith.constant 0 : index
    %c0_87 = arith.constant 0 : index
    %73 = vector.load %arg2[%c7, %c0_86, %c0_87] : memref<9x128x128xf32, #tpu.memory_space<vmem>>, vector<1x128x128xf32>
    %74 = vector.shape_cast %73 : vector<1x128x128xf32> to vector<128x128xf32>
    %cst_88 = arith.constant dense<0.000000e+00> : vector<64x128xf32>
    %75 = tpu.matmul %72, %74, %cst_88 {dimension_numbers = #tpu.dot_dimension_numbers<[1], [0], [0], [1], [0, 0, 1, 1], [], []>} : vector<64x128xf32>, vector<128x128xf32>, vector<64x128xf32> -> vector<64x128xf32>
    %c0_89 = arith.constant 0 : index
    %c0_90 = arith.constant 0 : index
    %76 = vector.load %arg9[%c0_89, %c0_90] : memref<64x128xf32, #tpu.memory_space<vmem>>, vector<64x128xf32>
    %77 = arith.addf %76, %75 : vector<64x128xf32>
    %c0_91 = arith.constant 0 : index
    %c0_92 = arith.constant 0 : index
    %78 = vector.load %arg9[%c0_91, %c0_92] : memref<64x128xf32, #tpu.memory_space<vmem>>, vector<64x128xf32>
    tpu.vector_store %arg9[%c0_91, %c0_92], %77 {strides = array<i32>} : memref<64x128xf32, #tpu.memory_space<vmem>>, vector<64x128xf32>,
    %c2_93 = arith.constant 2 : index
    %c2_94 = arith.constant 2 : index
    %c0_95 = arith.constant 0 : index
    %79 = vector.load %arg8[%c2_93, %c2_94, %c0_95] : memref<10x10x128xf32, #tpu.memory_space<vmem>>, vector<8x8x128xf32>
    %80 = vector.shape_cast %79 : vector<8x8x128xf32> to vector<64x128xf32>
    %c8 = arith.constant 8 : index
    %c0_96 = arith.constant 0 : index
    %c0_97 = arith.constant 0 : index
    %81 = vector.load %arg2[%c8, %c0_96, %c0_97] : memref<9x128x128xf32, #tpu.memory_space<vmem>>, vector<1x128x128xf32>
    %82 = vector.shape_cast %81 : vector<1x128x128xf32> to vector<128x128xf32>
    %cst_98 = arith.constant dense<0.000000e+00> : vector<64x128xf32>
    %83 = tpu.matmul %80, %82, %cst_98 {dimension_numbers = #tpu.dot_dimension_numbers<[1], [0], [0], [1], [0, 0, 1, 1], [], []>} : vector<64x128xf32>, vector<128x128xf32>, vector<64x128xf32> -> vector<64x128xf32>
    %c0_99 = arith.constant 0 : index
    %c0_100 = arith.constant 0 : index
    %84 = vector.load %arg9[%c0_99, %c0_100] : memref<64x128xf32, #tpu.memory_space<vmem>>, vector<64x128xf32>
    %85 = arith.addf %84, %83 : vector<64x128xf32>
    %c0_101 = arith.constant 0 : index
    %c0_102 = arith.constant 0 : index
    %86 = vector.load %arg9[%c0_101, %c0_102] : memref<64x128xf32, #tpu.memory_space<vmem>>, vector<64x128xf32>
    tpu.vector_store %arg9[%c0_101, %c0_102], %85 {strides = array<i32>} : memref<64x128xf32, #tpu.memory_space<vmem>>, vector<64x128xf32>,
    %c0_103 = arith.constant 0 : index
    %c0_104 = arith.constant 0 : index
    %87 = vector.load %arg9[%c0_103, %c0_104] : memref<64x128xf32, #tpu.memory_space<vmem>>, vector<64x128xf32>
    %c0_105 = arith.constant 0 : index
    %c0_106 = arith.constant 0 : index
    %88 = vector.load %arg3[%c0_105, %c0_106] : memref<1x128xf32, #tpu.memory_space<vmem>>, vector<1x128xf32>
    %89 = vector.broadcast %88 : vector<1x128xf32> to vector<64x128xf32>
    %90 = arith.addf %87, %89 : vector<64x128xf32>
    %91 = vector.shape_cast %90 : vector<64x128xf32> to vector<8x8x128xf32>
    %c0_107 = arith.constant 0 : index
    %c0_108 = arith.constant 0 : index
    %c0_109 = arith.constant 0 : index
    %c0_110 = arith.constant 0 : index
    %92 = vector.load %arg6[%c0_107, %c0_108, %c0_109, %c0_110] : memref<1x8x8x128xf32, #tpu.memory_space<vmem>>, vector<1x8x8x128xf32>
    %93 = vector.shape_cast %92 : vector<1x8x8x128xf32> to vector<8x8x128xf32>
    %94 = vector.shape_cast %91 : vector<8x8x128xf32> to vector<1x8x8x128xf32>
    tpu.vector_store %arg6[%c0_107, %c0_108, %c0_109, %c0_110], %94 {strides = array<i32>} : memref<1x8x8x128xf32, #tpu.memory_space<vmem>>, vector<1x8x8x128xf32>,
    %cst_111 = arith.constant dense<0.000000e+00> : vector<128xf32>
    %95 = vector.multi_reduction <add>, %90, %cst_111 [0] : vector<64x128xf32> to vector<128xf32>
    %c0_112 = arith.constant 0 : index
    %c0_113 = arith.constant 0 : index
    %c0_114 = arith.constant 0 : index
    %96 = vector.load %arg7[%c0_112, %c0_113, %c0_114] : memref<1x2x128xf32, #tpu.memory_space<vmem>>, vector<1x1x128xf32>
    %97 = vector.shape_cast %96 : vector<1x1x128xf32> to vector<128xf32>
    %98 = vector.shape_cast %95 : vector<128xf32> to vector<1x1x128xf32>
    tpu.vector_store %arg7[%c0_112, %c0_113, %c0_114], %98 {strides = array<i32>} : memref<1x2x128xf32, #tpu.memory_space<vmem>>, vector<1x1x128xf32>,
    %99 = arith.mulf %90, %90 : vector<64x128xf32>
    %cst_115 = arith.constant dense<0.000000e+00> : vector<128xf32>
    %100 = vector.multi_reduction <add>, %99, %cst_115 [0] : vector<64x128xf32> to vector<128xf32>
    %c0_116 = arith.constant 0 : index
    %c1_117 = arith.constant 1 : index
    %c0_118 = arith.constant 0 : index
    %101 = vector.load %arg7[%c0_116, %c1_117, %c0_118] : memref<1x2x128xf32, #tpu.memory_space<vmem>>, vector<1x1x128xf32>
    %102 = vector.shape_cast %101 : vector<1x1x128xf32> to vector<128xf32>
    %103 = vector.shape_cast %100 : vector<128xf32> to vector<1x1x128xf32>
    tpu.vector_store %arg7[%c0_116, %c1_117, %c0_118], %103 {strides = array<i32>} : memref<1x2x128xf32, #tpu.memory_space<vmem>>, vector<1x1x128xf32>,
    return
  }
  func.func @transform_0(%arg0: i32) -> (i32, i32, i32, i32) {
    %c0_i32 = arith.constant 0 : i32
    %c0_i32_0 = arith.constant 0 : i32
    %c0_i32_1 = arith.constant 0 : i32
    %c0_i32_2 = arith.constant 0 : i32
    return %arg0, %c0_i32, %c0_i32_0, %c0_i32_1 : i32, i32, i32, i32
  }
  func.func @transform_1(%arg0: i32) -> (i32, i32, i32) {
    %c0_i32 = arith.constant 0 : i32
    %c0_i32_0 = arith.constant 0 : i32
    %c0_i32_1 = arith.constant 0 : i32
    %c0_i32_2 = arith.constant 0 : i32
    return %c0_i32, %c0_i32_0, %c0_i32_1 : i32, i32, i32
  }
  func.func @transform_2(%arg0: i32) -> (i32, i32) {
    %c0_i32 = arith.constant 0 : i32
    %c0_i32_0 = arith.constant 0 : i32
    %c0_i32_1 = arith.constant 0 : i32
    return %c0_i32, %c0_i32_0 : i32, i32
  }
  func.func @transform_3(%arg0: i32) -> (i32, i32) {
    %c0_i32 = arith.constant 0 : i32
    %c0_i32_0 = arith.constant 0 : i32
    %c0_i32_1 = arith.constant 0 : i32
    return %c0_i32, %c0_i32_0 : i32, i32
  }
  func.func @transform_4(%arg0: i32) -> (i32, i32) {
    %c0_i32 = arith.constant 0 : i32
    %c0_i32_0 = arith.constant 0 : i32
    %c0_i32_1 = arith.constant 0 : i32
    return %c0_i32, %c0_i32_0 : i32, i32
  }
  func.func @transform_5(%arg0: i32) -> (i32, i32, i32, i32) {
    %c0_i32 = arith.constant 0 : i32
    %c0_i32_0 = arith.constant 0 : i32
    %c0_i32_1 = arith.constant 0 : i32
    %c0_i32_2 = arith.constant 0 : i32
    return %arg0, %c0_i32, %c0_i32_0, %c0_i32_1 : i32, i32, i32, i32
  }
  func.func @transform_6(%arg0: i32) -> (i32, i32, i32) {
    %c0_i32 = arith.constant 0 : i32
    %c0_i32_0 = arith.constant 0 : i32
    %c0_i32_1 = arith.constant 0 : i32
    return %arg0, %c0_i32, %c0_i32_0 : i32, i32, i32
  }
}

module attributes {stable_mosaic.version = 11 : i64} {
  func.func @_fused_conv_kernel(%arg0: i32, %arg1: memref<1x16x16x128xf32, #tpu.memory_space<vmem>>, %arg2: memref<4x128x128xf32, #tpu.memory_space<vmem>>, %arg3: memref<1x128xf32, #tpu.memory_space<vmem>>, %arg4: memref<1x128xf32, #tpu.memory_space<vmem>>, %arg5: memref<1x128xf32, #tpu.memory_space<vmem>>, %arg6: memref<1x8x8x128xf32, #tpu.memory_space<vmem>>, %arg7: memref<1x2x128xf32, #tpu.memory_space<vmem>>, %arg8: memref<16x16x128xf32, #tpu.memory_space<vmem>>, %arg9: memref<64x128xf32, #tpu.memory_space<vmem>>) attributes {dimension_semantics = [#tpu.dimension_semantics<parallel>], iteration_bounds = array<i64: 2>, scalar_prefetch = 0 : i64, scratch_operands = 2 : i64, tpu.core_type = #tpu.core_type<tc>, window_params = [{transform_indices = @transform_0, window_bounds = array<i64: 1, 16, 16, 128>}, {pipeline_mode = #tpu.pipeline_mode<synchronous>, transform_indices = @transform_1, window_bounds = array<i64: 4, 128, 128>}, {pipeline_mode = #tpu.pipeline_mode<synchronous>, transform_indices = @transform_2, window_bounds = array<i64: 1, 128>}, {pipeline_mode = #tpu.pipeline_mode<synchronous>, transform_indices = @transform_3, window_bounds = array<i64: 1, 128>}, {pipeline_mode = #tpu.pipeline_mode<synchronous>, transform_indices = @transform_4, window_bounds = array<i64: 1, 128>}, {transform_indices = @transform_5, window_bounds = array<i64: 1, 8, 8, 128>}, {transform_indices = @transform_6, window_bounds = array<i64: 1, 2, 128>}]} {
    %c0 = arith.constant 0 : index
    %c0_0 = arith.constant 0 : index
    %c0_1 = arith.constant 0 : index
    %c0_2 = arith.constant 0 : index
    %0 = vector.load %arg1[%c0, %c0_0, %c0_1, %c0_2] : memref<1x16x16x128xf32, #tpu.memory_space<vmem>>, vector<1x16x16x128xf32>
    %1 = vector.shape_cast %0 : vector<1x16x16x128xf32> to vector<16x16x128xf32>
    %c0_3 = arith.constant 0 : index
    %c0_4 = arith.constant 0 : index
    %2 = vector.load %arg4[%c0_3, %c0_4] : memref<1x128xf32, #tpu.memory_space<vmem>>, vector<1x128xf32>
    %3 = vector.shape_cast %2 : vector<1x128xf32> to vector<128xf32>
    %4 = vector.shape_cast %3 : vector<128xf32> to vector<1x1x128xf32>
    %5 = vector.broadcast %4 : vector<1x1x128xf32> to vector<16x16x128xf32>
    %6 = arith.mulf %1, %5 : vector<16x16x128xf32>
    %c0_5 = arith.constant 0 : index
    %c0_6 = arith.constant 0 : index
    %7 = vector.load %arg5[%c0_5, %c0_6] : memref<1x128xf32, #tpu.memory_space<vmem>>, vector<1x128xf32>
    %8 = vector.shape_cast %7 : vector<1x128xf32> to vector<128xf32>
    %9 = vector.shape_cast %8 : vector<128xf32> to vector<1x1x128xf32>
    %10 = vector.broadcast %9 : vector<1x1x128xf32> to vector<16x16x128xf32>
    %11 = arith.addf %6, %10 : vector<16x16x128xf32>
    %c0_7 = arith.constant 0 : index
    %c0_8 = arith.constant 0 : index
    %c0_9 = arith.constant 0 : index
    %12 = vector.load %arg8[%c0_7, %c0_8, %c0_9] : memref<16x16x128xf32, #tpu.memory_space<vmem>>, vector<16x16x128xf32>
    tpu.vector_store %arg8[%c0_7, %c0_8, %c0_9], %11 {strides = array<i32>} : memref<16x16x128xf32, #tpu.memory_space<vmem>>, vector<16x16x128xf32>,
    %c0_10 = arith.constant 0 : index
    %c0_11 = arith.constant 0 : index
    %c0_12 = arith.constant 0 : index
    %13 = tpu.strided_load %arg8[%c0_10, %c0_11, %c0_12] {strides = array<i32: 2, 2, 1>} : memref<16x16x128xf32, #tpu.memory_space<vmem>>, vector<8x8x128xf32>
    %14 = vector.shape_cast %13 : vector<8x8x128xf32> to vector<64x128xf32>
    %c0_13 = arith.constant 0 : index
    %c0_14 = arith.constant 0 : index
    %c0_15 = arith.constant 0 : index
    %15 = vector.load %arg2[%c0_13, %c0_14, %c0_15] : memref<4x128x128xf32, #tpu.memory_space<vmem>>, vector<1x128x128xf32>
    %16 = vector.shape_cast %15 : vector<1x128x128xf32> to vector<128x128xf32>
    %cst = arith.constant dense<0.000000e+00> : vector<64x128xf32>
    %17 = tpu.matmul %14, %16, %cst {dimension_numbers = #tpu.dot_dimension_numbers<[1], [0], [0], [1], [0, 0, 1, 1], [], []>} : vector<64x128xf32>, vector<128x128xf32>, vector<64x128xf32> -> vector<64x128xf32>
    %c0_16 = arith.constant 0 : index
    %c0_17 = arith.constant 0 : index
    %18 = vector.load %arg9[%c0_16, %c0_17] : memref<64x128xf32, #tpu.memory_space<vmem>>, vector<64x128xf32>
    tpu.vector_store %arg9[%c0_16, %c0_17], %17 {strides = array<i32>} : memref<64x128xf32, #tpu.memory_space<vmem>>, vector<64x128xf32>,
    %c0_18 = arith.constant 0 : index
    %c1 = arith.constant 1 : index
    %c0_19 = arith.constant 0 : index
    %19 = tpu.strided_load %arg8[%c0_18, %c1, %c0_19] {strides = array<i32: 2, 2, 1>} : memref<16x16x128xf32, #tpu.memory_space<vmem>>, vector<8x8x128xf32>
    %20 = vector.shape_cast %19 : vector<8x8x128xf32> to vector<64x128xf32>
    %c1_20 = arith.constant 1 : index
    %c0_21 = arith.constant 0 : index
    %c0_22 = arith.constant 0 : index
    %21 = vector.load %arg2[%c1_20, %c0_21, %c0_22] : memref<4x128x128xf32, #tpu.memory_space<vmem>>, vector<1x128x128xf32>
    %22 = vector.shape_cast %21 : vector<1x128x128xf32> to vector<128x128xf32>
    %cst_23 = arith.constant dense<0.000000e+00> : vector<64x128xf32>
    %23 = tpu.matmul %20, %22, %cst_23 {dimension_numbers = #tpu.dot_dimension_numbers<[1], [0], [0], [1], [0, 0, 1, 1], [], []>} : vector<64x128xf32>, vector<128x128xf32>, vector<64x128xf32> -> vector<64x128xf32>
    %c0_24 = arith.constant 0 : index
    %c0_25 = arith.constant 0 : index
    %24 = vector.load %arg9[%c0_24, %c0_25] : memref<64x128xf32, #tpu.memory_space<vmem>>, vector<64x128xf32>
    %25 = arith.addf %24, %23 : vector<64x128xf32>
    %c0_26 = arith.constant 0 : index
    %c0_27 = arith.constant 0 : index
    %26 = vector.load %arg9[%c0_26, %c0_27] : memref<64x128xf32, #tpu.memory_space<vmem>>, vector<64x128xf32>
    tpu.vector_store %arg9[%c0_26, %c0_27], %25 {strides = array<i32>} : memref<64x128xf32, #tpu.memory_space<vmem>>, vector<64x128xf32>,
    %c1_28 = arith.constant 1 : index
    %c0_29 = arith.constant 0 : index
    %c0_30 = arith.constant 0 : index
    %27 = tpu.strided_load %arg8[%c1_28, %c0_29, %c0_30] {strides = array<i32: 2, 2, 1>} : memref<16x16x128xf32, #tpu.memory_space<vmem>>, vector<8x8x128xf32>
    %28 = vector.shape_cast %27 : vector<8x8x128xf32> to vector<64x128xf32>
    %c2 = arith.constant 2 : index
    %c0_31 = arith.constant 0 : index
    %c0_32 = arith.constant 0 : index
    %29 = vector.load %arg2[%c2, %c0_31, %c0_32] : memref<4x128x128xf32, #tpu.memory_space<vmem>>, vector<1x128x128xf32>
    %30 = vector.shape_cast %29 : vector<1x128x128xf32> to vector<128x128xf32>
    %cst_33 = arith.constant dense<0.000000e+00> : vector<64x128xf32>
    %31 = tpu.matmul %28, %30, %cst_33 {dimension_numbers = #tpu.dot_dimension_numbers<[1], [0], [0], [1], [0, 0, 1, 1], [], []>} : vector<64x128xf32>, vector<128x128xf32>, vector<64x128xf32> -> vector<64x128xf32>
    %c0_34 = arith.constant 0 : index
    %c0_35 = arith.constant 0 : index
    %32 = vector.load %arg9[%c0_34, %c0_35] : memref<64x128xf32, #tpu.memory_space<vmem>>, vector<64x128xf32>
    %33 = arith.addf %32, %31 : vector<64x128xf32>
    %c0_36 = arith.constant 0 : index
    %c0_37 = arith.constant 0 : index
    %34 = vector.load %arg9[%c0_36, %c0_37] : memref<64x128xf32, #tpu.memory_space<vmem>>, vector<64x128xf32>
    tpu.vector_store %arg9[%c0_36, %c0_37], %33 {strides = array<i32>} : memref<64x128xf32, #tpu.memory_space<vmem>>, vector<64x128xf32>,
    %c1_38 = arith.constant 1 : index
    %c1_39 = arith.constant 1 : index
    %c0_40 = arith.constant 0 : index
    %35 = tpu.strided_load %arg8[%c1_38, %c1_39, %c0_40] {strides = array<i32: 2, 2, 1>} : memref<16x16x128xf32, #tpu.memory_space<vmem>>, vector<8x8x128xf32>
    %36 = vector.shape_cast %35 : vector<8x8x128xf32> to vector<64x128xf32>
    %c3 = arith.constant 3 : index
    %c0_41 = arith.constant 0 : index
    %c0_42 = arith.constant 0 : index
    %37 = vector.load %arg2[%c3, %c0_41, %c0_42] : memref<4x128x128xf32, #tpu.memory_space<vmem>>, vector<1x128x128xf32>
    %38 = vector.shape_cast %37 : vector<1x128x128xf32> to vector<128x128xf32>
    %cst_43 = arith.constant dense<0.000000e+00> : vector<64x128xf32>
    %39 = tpu.matmul %36, %38, %cst_43 {dimension_numbers = #tpu.dot_dimension_numbers<[1], [0], [0], [1], [0, 0, 1, 1], [], []>} : vector<64x128xf32>, vector<128x128xf32>, vector<64x128xf32> -> vector<64x128xf32>
    %c0_44 = arith.constant 0 : index
    %c0_45 = arith.constant 0 : index
    %40 = vector.load %arg9[%c0_44, %c0_45] : memref<64x128xf32, #tpu.memory_space<vmem>>, vector<64x128xf32>
    %41 = arith.addf %40, %39 : vector<64x128xf32>
    %c0_46 = arith.constant 0 : index
    %c0_47 = arith.constant 0 : index
    %42 = vector.load %arg9[%c0_46, %c0_47] : memref<64x128xf32, #tpu.memory_space<vmem>>, vector<64x128xf32>
    tpu.vector_store %arg9[%c0_46, %c0_47], %41 {strides = array<i32>} : memref<64x128xf32, #tpu.memory_space<vmem>>, vector<64x128xf32>,
    %c0_48 = arith.constant 0 : index
    %c0_49 = arith.constant 0 : index
    %43 = vector.load %arg9[%c0_48, %c0_49] : memref<64x128xf32, #tpu.memory_space<vmem>>, vector<64x128xf32>
    %c0_50 = arith.constant 0 : index
    %c0_51 = arith.constant 0 : index
    %44 = vector.load %arg3[%c0_50, %c0_51] : memref<1x128xf32, #tpu.memory_space<vmem>>, vector<1x128xf32>
    %45 = vector.broadcast %44 : vector<1x128xf32> to vector<64x128xf32>
    %46 = arith.addf %43, %45 : vector<64x128xf32>
    %47 = vector.shape_cast %46 : vector<64x128xf32> to vector<8x8x128xf32>
    %c0_52 = arith.constant 0 : index
    %c0_53 = arith.constant 0 : index
    %c0_54 = arith.constant 0 : index
    %c0_55 = arith.constant 0 : index
    %48 = vector.load %arg6[%c0_52, %c0_53, %c0_54, %c0_55] : memref<1x8x8x128xf32, #tpu.memory_space<vmem>>, vector<1x8x8x128xf32>
    %49 = vector.shape_cast %48 : vector<1x8x8x128xf32> to vector<8x8x128xf32>
    %50 = vector.shape_cast %47 : vector<8x8x128xf32> to vector<1x8x8x128xf32>
    tpu.vector_store %arg6[%c0_52, %c0_53, %c0_54, %c0_55], %50 {strides = array<i32>} : memref<1x8x8x128xf32, #tpu.memory_space<vmem>>, vector<1x8x8x128xf32>,
    %cst_56 = arith.constant dense<0.000000e+00> : vector<128xf32>
    %51 = vector.multi_reduction <add>, %46, %cst_56 [0] : vector<64x128xf32> to vector<128xf32>
    %c0_57 = arith.constant 0 : index
    %c0_58 = arith.constant 0 : index
    %c0_59 = arith.constant 0 : index
    %52 = vector.load %arg7[%c0_57, %c0_58, %c0_59] : memref<1x2x128xf32, #tpu.memory_space<vmem>>, vector<1x1x128xf32>
    %53 = vector.shape_cast %52 : vector<1x1x128xf32> to vector<128xf32>
    %54 = vector.shape_cast %51 : vector<128xf32> to vector<1x1x128xf32>
    tpu.vector_store %arg7[%c0_57, %c0_58, %c0_59], %54 {strides = array<i32>} : memref<1x2x128xf32, #tpu.memory_space<vmem>>, vector<1x1x128xf32>,
    %55 = arith.mulf %46, %46 : vector<64x128xf32>
    %cst_60 = arith.constant dense<0.000000e+00> : vector<128xf32>
    %56 = vector.multi_reduction <add>, %55, %cst_60 [0] : vector<64x128xf32> to vector<128xf32>
    %c0_61 = arith.constant 0 : index
    %c1_62 = arith.constant 1 : index
    %c0_63 = arith.constant 0 : index
    %57 = vector.load %arg7[%c0_61, %c1_62, %c0_63] : memref<1x2x128xf32, #tpu.memory_space<vmem>>, vector<1x1x128xf32>
    %58 = vector.shape_cast %57 : vector<1x1x128xf32> to vector<128xf32>
    %59 = vector.shape_cast %56 : vector<128xf32> to vector<1x1x128xf32>
    tpu.vector_store %arg7[%c0_61, %c1_62, %c0_63], %59 {strides = array<i32>} : memref<1x2x128xf32, #tpu.memory_space<vmem>>, vector<1x1x128xf32>,
    return
  }
  func.func @transform_0(%arg0: i32) -> (i32, i32, i32, i32) {
    %c0_i32 = arith.constant 0 : i32
    %c0_i32_0 = arith.constant 0 : i32
    %c0_i32_1 = arith.constant 0 : i32
    %c0_i32_2 = arith.constant 0 : i32
    return %arg0, %c0_i32, %c0_i32_0, %c0_i32_1 : i32, i32, i32, i32
  }
  func.func @transform_1(%arg0: i32) -> (i32, i32, i32) {
    %c0_i32 = arith.constant 0 : i32
    %c0_i32_0 = arith.constant 0 : i32
    %c0_i32_1 = arith.constant 0 : i32
    %c0_i32_2 = arith.constant 0 : i32
    return %c0_i32, %c0_i32_0, %c0_i32_1 : i32, i32, i32
  }
  func.func @transform_2(%arg0: i32) -> (i32, i32) {
    %c0_i32 = arith.constant 0 : i32
    %c0_i32_0 = arith.constant 0 : i32
    %c0_i32_1 = arith.constant 0 : i32
    return %c0_i32, %c0_i32_0 : i32, i32
  }
  func.func @transform_3(%arg0: i32) -> (i32, i32) {
    %c0_i32 = arith.constant 0 : i32
    %c0_i32_0 = arith.constant 0 : i32
    %c0_i32_1 = arith.constant 0 : i32
    return %c0_i32, %c0_i32_0 : i32, i32
  }
  func.func @transform_4(%arg0: i32) -> (i32, i32) {
    %c0_i32 = arith.constant 0 : i32
    %c0_i32_0 = arith.constant 0 : i32
    %c0_i32_1 = arith.constant 0 : i32
    return %c0_i32, %c0_i32_0 : i32, i32
  }
  func.func @transform_5(%arg0: i32) -> (i32, i32, i32, i32) {
    %c0_i32 = arith.constant 0 : i32
    %c0_i32_0 = arith.constant 0 : i32
    %c0_i32_1 = arith.constant 0 : i32
    %c0_i32_2 = arith.constant 0 : i32
    return %arg0, %c0_i32, %c0_i32_0, %c0_i32_1 : i32, i32, i32, i32
  }
  func.func @transform_6(%arg0: i32) -> (i32, i32, i32) {
    %c0_i32 = arith.constant 0 : i32
    %c0_i32_0 = arith.constant 0 : i32
    %c0_i32_1 = arith.constant 0 : i32
    return %arg0, %c0_i32, %c0_i32_0 : i32, i32, i32
  }
}

module attributes {stable_mosaic.version = 11 : i64} {
  func.func @_bn_add_kernel(%arg0: i32, %arg1: memref<128x128xf32, #tpu.memory_space<vmem>>, %arg2: memref<128x128xf32, #tpu.memory_space<vmem>>, %arg3: memref<1x128xf32, #tpu.memory_space<vmem>>, %arg4: memref<1x128xf32, #tpu.memory_space<vmem>>, %arg5: memref<1x128xf32, #tpu.memory_space<vmem>>, %arg6: memref<1x128xf32, #tpu.memory_space<vmem>>, %arg7: memref<128x128xf32, #tpu.memory_space<vmem>>) attributes {dimension_semantics = [#tpu.dimension_semantics<parallel>], iteration_bounds = array<i64: 1>, scalar_prefetch = 0 : i64, scratch_operands = 0 : i64, tpu.core_type = #tpu.core_type<tc>, window_params = [{transform_indices = @transform_0, window_bounds = array<i64: 128, 128>}, {transform_indices = @transform_1, window_bounds = array<i64: 128, 128>}, {pipeline_mode = #tpu.pipeline_mode<synchronous>, transform_indices = @transform_2, window_bounds = array<i64: 1, 128>}, {pipeline_mode = #tpu.pipeline_mode<synchronous>, transform_indices = @transform_3, window_bounds = array<i64: 1, 128>}, {pipeline_mode = #tpu.pipeline_mode<synchronous>, transform_indices = @transform_4, window_bounds = array<i64: 1, 128>}, {pipeline_mode = #tpu.pipeline_mode<synchronous>, transform_indices = @transform_5, window_bounds = array<i64: 1, 128>}, {transform_indices = @transform_6, window_bounds = array<i64: 128, 128>}]} {
    %c0 = arith.constant 0 : index
    %c0_0 = arith.constant 0 : index
    %0 = vector.load %arg1[%c0, %c0_0] : memref<128x128xf32, #tpu.memory_space<vmem>>, vector<128x128xf32>
    %c0_1 = arith.constant 0 : index
    %c0_2 = arith.constant 0 : index
    %1 = vector.load %arg2[%c0_1, %c0_2] : memref<128x128xf32, #tpu.memory_space<vmem>>, vector<128x128xf32>
    %c0_3 = arith.constant 0 : index
    %c0_4 = arith.constant 0 : index
    %2 = vector.load %arg3[%c0_3, %c0_4] : memref<1x128xf32, #tpu.memory_space<vmem>>, vector<1x128xf32>
    %3 = vector.broadcast %2 : vector<1x128xf32> to vector<128x128xf32>
    %4 = arith.mulf %0, %3 : vector<128x128xf32>
    %c0_5 = arith.constant 0 : index
    %c0_6 = arith.constant 0 : index
    %5 = vector.load %arg4[%c0_5, %c0_6] : memref<1x128xf32, #tpu.memory_space<vmem>>, vector<1x128xf32>
    %6 = vector.broadcast %5 : vector<1x128xf32> to vector<128x128xf32>
    %7 = arith.addf %4, %6 : vector<128x128xf32>
    %c0_7 = arith.constant 0 : index
    %c0_8 = arith.constant 0 : index
    %8 = vector.load %arg5[%c0_7, %c0_8] : memref<1x128xf32, #tpu.memory_space<vmem>>, vector<1x128xf32>
    %9 = vector.broadcast %8 : vector<1x128xf32> to vector<128x128xf32>
    %10 = arith.mulf %1, %9 : vector<128x128xf32>
    %c0_9 = arith.constant 0 : index
    %c0_10 = arith.constant 0 : index
    %11 = vector.load %arg6[%c0_9, %c0_10] : memref<1x128xf32, #tpu.memory_space<vmem>>, vector<1x128xf32>
    %12 = vector.broadcast %11 : vector<1x128xf32> to vector<128x128xf32>
    %13 = arith.addf %10, %12 : vector<128x128xf32>
    %14 = arith.addf %7, %13 : vector<128x128xf32>
    %c0_11 = arith.constant 0 : index
    %c0_12 = arith.constant 0 : index
    %15 = vector.load %arg7[%c0_11, %c0_12] : memref<128x128xf32, #tpu.memory_space<vmem>>, vector<128x128xf32>
    tpu.vector_store %arg7[%c0_11, %c0_12], %14 {strides = array<i32>} : memref<128x128xf32, #tpu.memory_space<vmem>>, vector<128x128xf32>,
    return
  }
  func.func @transform_0(%arg0: i32) -> (i32, i32) {
    %c0_i32 = arith.constant 0 : i32
    %c0_i32_0 = arith.constant 0 : i32
    return %arg0, %c0_i32 : i32, i32
  }
  func.func @transform_1(%arg0: i32) -> (i32, i32) {
    %c0_i32 = arith.constant 0 : i32
    %c0_i32_0 = arith.constant 0 : i32
    return %arg0, %c0_i32 : i32, i32
  }
  func.func @transform_2(%arg0: i32) -> (i32, i32) {
    %c0_i32 = arith.constant 0 : i32
    %c0_i32_0 = arith.constant 0 : i32
    %c0_i32_1 = arith.constant 0 : i32
    return %c0_i32, %c0_i32_0 : i32, i32
  }
  func.func @transform_3(%arg0: i32) -> (i32, i32) {
    %c0_i32 = arith.constant 0 : i32
    %c0_i32_0 = arith.constant 0 : i32
    %c0_i32_1 = arith.constant 0 : i32
    return %c0_i32, %c0_i32_0 : i32, i32
  }
  func.func @transform_4(%arg0: i32) -> (i32, i32) {
    %c0_i32 = arith.constant 0 : i32
    %c0_i32_0 = arith.constant 0 : i32
    %c0_i32_1 = arith.constant 0 : i32
    return %c0_i32, %c0_i32_0 : i32, i32
  }
  func.func @transform_5(%arg0: i32) -> (i32, i32) {
    %c0_i32 = arith.constant 0 : i32
    %c0_i32_0 = arith.constant 0 : i32
    %c0_i32_1 = arith.constant 0 : i32
    return %c0_i32, %c0_i32_0 : i32, i32
  }
  func.func @transform_6(%arg0: i32) -> (i32, i32) {
    %c0_i32 = arith.constant 0 : i32
    %c0_i32_0 = arith.constant 0 : i32
    return %arg0, %c0_i32 : i32, i32
  }
}

</mosaic_0001>

<llo_original>
// kernel: resnet_basicblock_forward.7
$region0: #{resnet_basicblock_forward.7}
  #allocation0 [shape = 'u32[]', space=smem, size = 0x4, offset = 0x4, fixed_abs, tag = 'smem constant byte address 0x4 - core index']
  #allocation1 [shape = 'u32[144,128]{1,0:T(1,128)}', space=vmem, size = 0x12000, scoped, tag = 'internal scratch']
  %s0 = inlined_call_operand.vmem [shape: f32[128,128], index: 0, kind: input, shape index: {}]
  %s1 = inlined_call_operand.vmem [shape: f32[128,128], index: 1, kind: input, shape index: {}]
  %s2 = inlined_call_operand.vmem [shape: f32[1,128], index: 2, kind: input, shape index: {}]
  %s3 = inlined_call_operand.vmem [shape: f32[1,128], index: 3, kind: input, shape index: {}]
  %s4 = inlined_call_operand.vmem [shape: f32[1,128], index: 4, kind: input, shape index: {}]
  %s5 = inlined_call_operand.vmem [shape: f32[1,128], index: 5, kind: input, shape index: {}]
  %s6 = inlined_call_operand.vmem [shape: f32[128,128], index: 6, kind: output, shape index: {}]
  %s7 = sld [smem:[#allocation0]]
  $region34: #{resnet_basicblock_forward.7} parent=0
    _
  %s9 = ssub.s32 1, %s7
  %s10 = scalar_select 0, %s9, %s7
  // Predicated region
  $region2: #{resnet_basicblock_forward.7} parent=0 // pred_check
    _
  $region3: #{resnet_basicblock_forward.7} parent=0 // pred_check_branch
    %12 = sbr.rel (0) target = $region5
  $region4: #{resnet_basicblock_forward.7} parent=0 // pred_region
    _
  $region5: #{resnet_basicblock_forward.7} parent=0 // pred_fallthru
    _
  // Predicated region
  $region6: #{resnet_basicblock_forward.7} parent=0 // pred_check
    _
  $region7: #{resnet_basicblock_forward.7} parent=0 // pred_check_branch
    %14 = sbr.rel (0) target = $region9
  $region8: #{resnet_basicblock_forward.7} parent=0 // pred_region
    _
  $region9: #{resnet_basicblock_forward.7} parent=0 // pred_fallthru
    _
  // Predicated region
  $region10: #{resnet_basicblock_forward.7} parent=0 // pred_check
    _
  $region11: #{resnet_basicblock_forward.7} parent=0 // pred_check_branch
    %16 = sbr.rel (0) target = $region13
  $region12: #{resnet_basicblock_forward.7} parent=0 // pred_region
    _
  $region13: #{resnet_basicblock_forward.7} parent=0 // pred_fallthru
    _
  // Predicated region
  $region14: #{resnet_basicblock_forward.7} parent=0 // pred_check
    _
  $region15: #{resnet_basicblock_forward.7} parent=0 // pred_check_branch
    %18 = sbr.rel (0) target = $region17
  $region16: #{resnet_basicblock_forward.7} parent=0 // pred_region
    _
  $region17: #{resnet_basicblock_forward.7} parent=0 // pred_fallthru
    _
  // Predicated region
  $region18: #{resnet_basicblock_forward.7} parent=0 // pred_check
    _
  $region19: #{resnet_basicblock_forward.7} parent=0 // pred_check_branch
    %20 = sbr.rel (0) target = $region21
  $region20: #{resnet_basicblock_forward.7} parent=0 // pred_region
    _
  $region21: #{resnet_basicblock_forward.7} parent=0 // pred_fallthru
    _
  // Predicated region
  $region22: #{resnet_basicblock_forward.7} parent=0 // pred_check
    _
  $region23: #{resnet_basicblock_forward.7} parent=0 // pred_check_branch
    %22 = sbr.rel (0) target = $region25
  $region24: #{resnet_basicblock_forward.7} parent=0 // pred_region
    _
  $region25: #{resnet_basicblock_forward.7} parent=0 // pred_fallthru
    _
  %v23 = vld [vmem:[%s0] sm:$0xff]
  %v24 = vld [vmem:[%s0 + $0x8] sm:$0xff]
  %v25 = vld [vmem:[%s0 + $0x10] sm:$0xff]
  %v26 = vld [vmem:[%s0 + $0x18] sm:$0xff]
  %v27 = vld [vmem:[%s0 + $0x20] sm:$0xff]
  %v28 = vld [vmem:[%s0 + $0x28] sm:$0xff]
  %v29 = vld [vmem:[%s0 + $0x30] sm:$0xff]
  %v30 = vld [vmem:[%s0 + $0x38] sm:$0xff]
  %v31 = vld [vmem:[%s0 + $0x40] sm:$0xff]
  %v32 = vld [vmem:[%s0 + $0x48] sm:$0xff]
  %v33 = vld [vmem:[%s0 + $0x50] sm:$0xff]
  %v34 = vld [vmem:[%s0 + $0x58] sm:$0xff]
  %v35 = vld [vmem:[%s0 + $0x60] sm:$0xff]
  %v36 = vld [vmem:[%s0 + $0x68] sm:$0xff]
  %v37 = vld [vmem:[%s0 + $0x70] sm:$0xff]
  %v38 = vld [vmem:[%s0 + $0x78] sm:$0xff]
  %v39 = vld [vmem:[%s1] sm:$0xff]
  %v40 = vld [vmem:[%s1 + $0x8] sm:$0xff]
  %v41 = vld [vmem:[%s1 + $0x10] sm:$0xff]
  %v42 = vld [vmem:[%s1 + $0x18] sm:$0xff]
  %v43 = vld [vmem:[%s1 + $0x20] sm:$0xff]
  %v44 = vld [vmem:[%s1 + $0x28] sm:$0xff]
  %v45 = vld [vmem:[%s1 + $0x30] sm:$0xff]
  %v46 = vld [vmem:[%s1 + $0x38] sm:$0xff]
  %v47 = vld [vmem:[%s1 + $0x40] sm:$0xff]
  %v48 = vld [vmem:[%s1 + $0x48] sm:$0xff]
  %v49 = vld [vmem:[%s1 + $0x50] sm:$0xff]
  %v50 = vld [vmem:[%s1 + $0x58] sm:$0xff]
  %v51 = vld [vmem:[%s1 + $0x60] sm:$0xff]
  %v52 = vld [vmem:[%s1 + $0x68] sm:$0xff]
  %v53 = vld [vmem:[%s1 + $0x70] sm:$0xff]
  %v54 = vld [vmem:[%s1 + $0x78] sm:$0xff]
  %v55 = vld [vmem:[%s2] sm:$0x1]
  %v57 = vlaneseq
  %v58 = vshrl.u32 %v57, 7
  %v59 = vsub.s32 0, %v58
  %v60 = vrot.slane %v55, %v59
  %v62 = vmul.f32 %v23, %v60
  %v63 = vmul.f32 %v24, %v60
  %v64 = vmul.f32 %v25, %v60
  %v65 = vmul.f32 %v26, %v60
  %v66 = vmul.f32 %v27, %v60
  %v67 = vmul.f32 %v28, %v60
  %v68 = vmul.f32 %v29, %v60
  %v69 = vmul.f32 %v30, %v60
  %v70 = vmul.f32 %v31, %v60
  %v71 = vmul.f32 %v32, %v60
  %v72 = vmul.f32 %v33, %v60
  %v73 = vmul.f32 %v34, %v60
  %v74 = vmul.f32 %v35, %v60
  %v75 = vmul.f32 %v36, %v60
  %v76 = vmul.f32 %v37, %v60
  %v77 = vmul.f32 %v38, %v60
  %v78 = vld [vmem:[%s3] sm:$0x1]
  %v80 = vlaneseq
  %v81 = vshrl.u32 %v80, 7
  %v82 = vsub.s32 0, %v81
  %v83 = vrot.slane %v78, %v82
  %v85 = vadd.f32 %v62, %v83
  %v86 = vadd.f32 %v63, %v83
  %v87 = vadd.f32 %v64, %v83
  %v88 = vadd.f32 %v65, %v83
  %v89 = vadd.f32 %v66, %v83
  %v90 = vadd.f32 %v67, %v83
  %v91 = vadd.f32 %v68, %v83
  %v92 = vadd.f32 %v69, %v83
  %v93 = vadd.f32 %v70, %v83
  %v94 = vadd.f32 %v71, %v83
  %v95 = vadd.f32 %v72, %v83
  %v96 = vadd.f32 %v73, %v83
  %v97 = vadd.f32 %v74, %v83
  %v98 = vadd.f32 %v75, %v83
  %v99 = vadd.f32 %v76, %v83
  %v100 = vadd.f32 %v77, %v83
  %v101 = vld [vmem:[%s4] sm:$0x1]
  %v103 = vlaneseq
  %v104 = vshrl.u32 %v103, 7
  %v105 = vsub.s32 0, %v104
  %v106 = vrot.slane %v101, %v105
  %v108 = vmul.f32 %v39, %v106
  %v109 = vmul.f32 %v40, %v106
  %v110 = vmul.f32 %v41, %v106
  %v111 = vmul.f32 %v42, %v106
  %v112 = vmul.f32 %v43, %v106
  %v113 = vmul.f32 %v44, %v106
  %v114 = vmul.f32 %v45, %v106
  %v115 = vmul.f32 %v46, %v106
  %v116 = vmul.f32 %v47, %v106
  %v117 = vmul.f32 %v48, %v106
  %v118 = vmul.f32 %v49, %v106
  %v119 = vmul.f32 %v50, %v106
  %v120 = vmul.f32 %v51, %v106
  %v121 = vmul.f32 %v52, %v106
  %v122 = vmul.f32 %v53, %v106
  %v123 = vmul.f32 %v54, %v106
  %v124 = vld [vmem:[%s5] sm:$0x1]
  %v126 = vlaneseq
  %v127 = vshrl.u32 %v126, 7
  %v128 = vsub.s32 0, %v127
  %v129 = vrot.slane %v124, %v128
  %v131 = vadd.f32 %v108, %v129
  %v132 = vadd.f32 %v109, %v129
  %v133 = vadd.f32 %v110, %v129
  %v134 = vadd.f32 %v111, %v129
  %v135 = vadd.f32 %v112, %v129
  %v136 = vadd.f32 %v113, %v129
  %v137 = vadd.f32 %v114, %v129
  %v138 = vadd.f32 %v115, %v129
  %v139 = vadd.f32 %v116, %v129
  %v140 = vadd.f32 %v117, %v129
  %v141 = vadd.f32 %v118, %v129
  %v142 = vadd.f32 %v119, %v129
  %v143 = vadd.f32 %v120, %v129
  %v144 = vadd.f32 %v121, %v129
  %v145 = vadd.f32 %v122, %v129
  %v146 = vadd.f32 %v123, %v129
  %v147 = vadd.f32 %v85, %v131
  %v148 = vadd.f32 %v86, %v132
  %v149 = vadd.f32 %v87, %v133
  %v150 = vadd.f32 %v88, %v134
  %v151 = vadd.f32 %v89, %v135
  %v152 = vadd.f32 %v90, %v136
  %v153 = vadd.f32 %v91, %v137
  %v154 = vadd.f32 %v92, %v138
  %v155 = vadd.f32 %v93, %v139
  %v156 = vadd.f32 %v94, %v140
  %v157 = vadd.f32 %v95, %v141
  %v158 = vadd.f32 %v96, %v142
  %v159 = vadd.f32 %v97, %v143
  %v160 = vadd.f32 %v98, %v144
  %v161 = vadd.f32 %v99, %v145
  %v162 = vadd.f32 %v100, %v146
  %163 = vst [vmem:[%s6] sm:$0xff] %v147
  %164 = vst [vmem:[%s6 + $0x8] sm:$0xff] %v148
  %165 = vst [vmem:[%s6 + $0x10] sm:$0xff] %v149
  %166 = vst [vmem:[%s6 + $0x18] sm:$0xff] %v150
  %167 = vst [vmem:[%s6 + $0x20] sm:$0xff] %v151
  %168 = vst [vmem:[%s6 + $0x28] sm:$0xff] %v152
  %169 = vst [vmem:[%s6 + $0x30] sm:$0xff] %v153
  %170 = vst [vmem:[%s6 + $0x38] sm:$0xff] %v154
  %171 = vst [vmem:[%s6 + $0x40] sm:$0xff] %v155
  %172 = vst [vmem:[%s6 + $0x48] sm:$0xff] %v156
  %173 = vst [vmem:[%s6 + $0x50] sm:$0xff] %v157
  %174 = vst [vmem:[%s6 + $0x58] sm:$0xff] %v158
  %175 = vst [vmem:[%s6 + $0x60] sm:$0xff] %v159
  %176 = vst [vmem:[%s6 + $0x68] sm:$0xff] %v160
  %177 = vst [vmem:[%s6 + $0x70] sm:$0xff] %v161
  %178 = vst [vmem:[%s6 + $0x78] sm:$0xff] %v162
  // Predicated region
  $region26: #{resnet_basicblock_forward.7} parent=0 // pred_check
    _
  $region27: #{resnet_basicblock_forward.7} parent=0 // pred_check_branch
    %180 = sbr.rel (0) target = $region29
  $region28: #{resnet_basicblock_forward.7} parent=0 // pred_region
    _
  $region29: #{resnet_basicblock_forward.7} parent=0 // pred_fallthru
    _
  // Predicated region
  $region30: #{resnet_basicblock_forward.7} parent=0 // pred_check
    _
  $region31: #{resnet_basicblock_forward.7} parent=0 // pred_check_branch
    %182 = sbr.rel (0) target = $region33
  $region32: #{resnet_basicblock_forward.7} parent=0 // pred_region
    _
  $region33: #{resnet_basicblock_forward.7} parent=0 // pred_fallthru
    _

// kernel: resnet_basicblock_forward.6
$region0: #{resnet_basicblock_forward.6}
  #allocation0 [shape = 'u32[]', space=smem, size = 0x4, offset = 0x4, fixed_abs, tag = 'smem constant byte address 0x4 - core index']
  #allocation1 [shape = 'u32[144,128]{1,0:T(1,128)}', space=vmem, size = 0x12000, scoped, tag = 'internal scratch']
  #allocation2 [shape = 'f32[16,16,128]{2,1,0:T(8,128)}', space=vmem, size = 0x20000, scoped, tag = 'scratch operand']
  #allocation3 [shape = 'f32[64,128]{1,0:T(8,128)}', space=vmem, size = 0x8000, scoped, tag = 'scratch operand']
  %s0 = inlined_call_operand.vmem [shape: f32[2,16,16,128], index: 0, kind: input, shape index: {}]
  %s1 = inlined_call_operand.vmem [shape: f32[4,128,128], index: 1, kind: input, shape index: {}]
  %s2 = inlined_call_operand.vmem [shape: f32[1,128], index: 2, kind: input, shape index: {}, may-alias: {2,4}]
  %s3 = inlined_call_operand.vmem [shape: f32[1,128], index: 3, kind: input, shape index: {}]
  %s4 = inlined_call_operand.vmem [shape: f32[1,128], index: 4, kind: input, shape index: {}, may-alias: {2,4}]
  %s5 = inlined_call_operand.vmem [shape: f32[2,8,8,128], index: 5, kind: output, shape index: {0}]
  %s6 = inlined_call_operand.hbm [shape: f32[2,2,128], index: 6, kind: output, shape index: {1}]
  %7 = xla_tuple %s5, %s6
  %s8 = sld [smem:[#allocation0]]
  $region61: #{resnet_basicblock_forward.6} parent=0
    _
  %s10 = ssub.s32 1, %s8
  %s11 = scalar_select 0, %s10, %s8
  $region1: #{resnet_basicblock_forward.6} parent=0
    #allocation4 [shape = 'u8[2048]{0}', space=vmem, size = 0x800, scoped, tag = 'output window, operand 1']
    #allocation5 [shape = 's32[2]{0}', space=sflag, size = 0x8, scoped, tag = 'scoped memory for resnet_basicblock_forward.6']
    %12 = vsyncpa [#allocation5], 0
    %s13 = scalar_lea.sflag [#allocation5], 1
    %14 = vsyncpa %s13, 0
    loop: start=0, step=1, limit=4
    $region2: #{resnet_basicblock_forward.6} parent=1 // loop_pre_header
      _
    $region3: #{resnet_basicblock_forward.6} parent=1 // loop_header
      %s16 = sphi 0, %s20
      %p17 = scmp.ge.s32.totalorder %s16, 4
      %s26 = sphi 0, %s28
      %s29 = sphi 0, %s26
      %s30 = sphi 0, %s29
      %s46 = sphi 0, %s30
      %s50 = sphi 0, %s50
      %s52 = sphi 0, %s50
      %s53 = sphi 0, %s52
      %s67 = sphi 0, %s53
      %s71 = sphi 0, %s71
      %s73 = sphi 0, %s71
      %s74 = sphi 0, %s73
      %s88 = sphi 0, %s74
      %s92 = sphi 0, %s92
      %s94 = sphi 0, %s92
      %s95 = sphi 0, %s94
      %s109 = sphi 0, %s95
      %s113 = sphi 0, %s113
      %s115 = sphi 0, %s113
      %s116 = sphi 0, %s115
      %s130 = sphi 0, %s116
      %s136 = sphi 0, %s138
      %s139 = sphi 0, %s136
      %s140 = sphi 0, %s139
      %s156 = sphi 0, %s140
      %s162 = sphi 0, %s164
      %s165 = sphi 0, %s162
      %s166 = sphi 0, %s165
      %s182 = sphi 0, %s166
    $region4: #{resnet_basicblock_forward.6} parent=1 // loop_header_branch
      %19 = sbr.rel (%p17) target = $region8
    $region5: #{resnet_basicblock_forward.6} parent=1 // loop_body
      %s21 = ssub.s32 %s16, 1
      %s22 = ssub.s32 %s16, 2
      %s23 = sadd.s32 %s16, 1
      %s24 = ssub.s32 %s16, %s23
      %p25 = scmp.eq.s32.totalorder %s24, 0
      %s27 = sadd.s32 %s26, 1
      %s28 = scalar_select %p25, %s26, %s27
      %p31 = pneg %p25
      %p32 = scmp.eq.s32.totalorder %s16, 1
      %p33 = por %p31, %p32
      %p34 = scmp.ne.s32.totalorder %s26, %s29
      %p35 = scmp.eq.s32.totalorder %s16, 0
      %p36 = por %p34, %p35
      %p37 = scmp.ne.s32.totalorder %s26, %s29
      %p38 = scmp.eq.s32.totalorder %s21, 1
      %p39 = por %p37, %p38
      %p40 = scmp.ne.s32.totalorder %s29, %s30
      %p41 = scmp.eq.s32.totalorder %s21, 0
      %p42 = por %p40, %p41
      %p43 = scmp.ne.s32.totalorder %s29, %s30
      %p44 = scmp.eq.s32.totalorder %s22, 1
      %p45 = por %p43, %p44
      %p47 = scmp.ne.s32.totalorder %s30, %s46
      %p48 = scmp.eq.s32.totalorder %s22, 0
      %p49 = por %p47, %p48
      %s51 = sadd.s32 %s50, 1
      %p54 = scmp.eq.s32.totalorder %s16, 1
      %p55 = scmp.ne.s32.totalorder %s50, %s52
      %p56 = scmp.eq.s32.totalorder %s16, 0
      %p57 = por %p55, %p56
      %p58 = scmp.ne.s32.totalorder %s50, %s52
      %p59 = scmp.eq.s32.totalorder %s21, 1
      %p60 = por %p58, %p59
      %p61 = scmp.ne.s32.totalorder %s52, %s53
      %p62 = scmp.eq.s32.totalorder %s21, 0
      %p63 = por %p61, %p62
      %p64 = scmp.ne.s32.totalorder %s52, %s53
      %p65 = scmp.eq.s32.totalorder %s22, 1
      %p66 = por %p64, %p65
      %p68 = scmp.ne.s32.totalorder %s53, %s67
      %p69 = scmp.eq.s32.totalorder %s22, 0
      %p70 = por %p68, %p69
      %s72 = sadd.s32 %s71, 1
      %p75 = scmp.eq.s32.totalorder %s16, 1
      %p76 = scmp.ne.s32.totalorder %s71, %s73
      %p77 = scmp.eq.s32.totalorder %s16, 0
      %p78 = por %p76, %p77
      %p79 = scmp.ne.s32.totalorder %s71, %s73
      %p80 = scmp.eq.s32.totalorder %s21, 1
      %p81 = por %p79, %p80
      %p82 = scmp.ne.s32.totalorder %s73, %s74
      %p83 = scmp.eq.s32.totalorder %s21, 0
      %p84 = por %p82, %p83
      %p85 = scmp.ne.s32.totalorder %s73, %s74
      %p86 = scmp.eq.s32.totalorder %s22, 1
      %p87 = por %p85, %p86
      %p89 = scmp.ne.s32.totalorder %s74, %s88
      %p90 = scmp.eq.s32.totalorder %s22, 0
      %p91 = por %p89, %p90
      %s93 = sadd.s32 %s92, 1
      %p96 = scmp.eq.s32.totalorder %s16, 1
      %p97 = scmp.ne.s32.totalorder %s92, %s94
      %p98 = scmp.eq.s32.totalorder %s16, 0
      %p99 = por %p97, %p98
      %p100 = scmp.ne.s32.totalorder %s92, %s94
      %p101 = scmp.eq.s32.totalorder %s21, 1
      %p102 = por %p100, %p101
      %p103 = scmp.ne.s32.totalorder %s94, %s95
      %p104 = scmp.eq.s32.totalorder %s21, 0
      %p105 = por %p103, %p104
      %p106 = scmp.ne.s32.totalorder %s94, %s95
      %p107 = scmp.eq.s32.totalorder %s22, 1
      %p108 = por %p106, %p107
      %p110 = scmp.ne.s32.totalorder %s95, %s109
      %p111 = scmp.eq.s32.totalorder %s22, 0
      %p112 = por %p110, %p111
      %s114 = sadd.s32 %s113, 1
      %p117 = scmp.eq.s32.totalorder %s16, 1
      %p118 = scmp.ne.s32.totalorder %s113, %s115
      %p119 = scmp.eq.s32.totalorder %s16, 0
      %p120 = por %p118, %p119
      %p121 = scmp.ne.s32.totalorder %s113, %s115
      %p122 = scmp.eq.s32.totalorder %s21, 1
      %p123 = por %p121, %p122
      %p124 = scmp.ne.s32.totalorder %s115, %s116
      %p125 = scmp.eq.s32.totalorder %s21, 0
      %p126 = por %p124, %p125
      %p127 = scmp.ne.s32.totalorder %s115, %s116
      %p128 = scmp.eq.s32.totalorder %s22, 1
      %p129 = por %p127, %p128
      %p131 = scmp.ne.s32.totalorder %s116, %s130
      %p132 = scmp.eq.s32.totalorder %s22, 0
      %p133 = por %p131, %p132
      %s134 = ssub.s32 %s16, %s23
      %p135 = scmp.eq.s32.totalorder %s134, 0
      %s137 = sadd.s32 %s136, 1
      %s138 = scalar_select %p135, %s136, %s137
      %p141 = pneg %p135
      %p142 = scmp.eq.s32.totalorder %s16, 1
      %p143 = por %p141, %p142
      %p144 = scmp.ne.s32.totalorder %s136, %s139
      %p145 = scmp.eq.s32.totalorder %s16, 0
      %p146 = por %p144, %p145
      %p147 = scmp.ne.s32.totalorder %s136, %s139
      %p148 = scmp.eq.s32.totalorder %s21, 1
      %p149 = por %p147, %p148
      %p150 = scmp.ne.s32.totalorder %s139, %s140
      %p151 = scmp.eq.s32.totalorder %s21, 0
      %p152 = por %p150, %p151
      %p153 = scmp.ne.s32.totalorder %s139, %s140
      %p154 = scmp.eq.s32.totalorder %s22, 1
      %p155 = por %p153, %p154
      %p157 = scmp.ne.s32.totalorder %s140, %s156
      %p158 = scmp.eq.s32.totalorder %s22, 0
      %p159 = por %p157, %p158
      %s160 = ssub.s32 %s16, %s23
      %p161 = scmp.eq.s32.totalorder %s160, 0
      %s163 = sadd.s32 %s162, 1
      %s164 = scalar_select %p161, %s162, %s163
      %p167 = pneg %p161
      %p168 = scmp.eq.s32.totalorder %s16, 1
      %p169 = por %p167, %p168
      %p170 = scmp.ne.s32.totalorder %s162, %s165
      %p171 = scmp.eq.s32.totalorder %s16, 0
      %p172 = por %p170, %p171
      %p173 = scmp.ne.s32.totalorder %s162, %s165
      %p174 = scmp.eq.s32.totalorder %s21, 1
      %p175 = por %p173, %p174
      %p176 = scmp.ne.s32.totalorder %s165, %s166
      %p177 = scmp.eq.s32.totalorder %s21, 0
      %p178 = por %p176, %p177
      %p179 = scmp.ne.s32.totalorder %s165, %s166
      %p180 = scmp.eq.s32.totalorder %s22, 1
      %p181 = por %p179, %p180
      %p183 = scmp.ne.s32.totalorder %s166, %s182
      %p184 = scmp.eq.s32.totalorder %s22, 0
      %p185 = por %p183, %p184
      %p186 = scmp.le.s32.totalorder 1, %s16
      %p187 = scmp.lt.s32.totalorder %s16, 3
      %p188 = pnand %p186, %p187
      %p189 = pneg %p188
      // Predicated region
      $region9: #{resnet_basicblock_forward.6} parent=5 // pred_check
        _
      $region10: #{resnet_basicblock_forward.6} parent=5 // pred_check_branch
        %191 = sbr.rel (%p188) target = $region12
      $region11: #{resnet_basicblock_forward.6} parent=5 // pred_region
        %s192 = ssub.s32 %s16, 1
        // Predicated region
        $region13: #{resnet_basicblock_forward.6} parent=11 // pred_check
          %p193 = pneg %p63
        $region14: #{resnet_basicblock_forward.6} parent=11 // pred_check_branch
          %195 = sbr.rel (%p193) target = $region16
        $region15: #{resnet_basicblock_forward.6} parent=11 // pred_region
          _
        $region16: #{resnet_basicblock_forward.6} parent=11 // pred_fallthru
          _
        // Predicated region
        $region17: #{resnet_basicblock_forward.6} parent=11 // pred_check
          %p196 = pneg %p84
        $region18: #{resnet_basicblock_forward.6} parent=11 // pred_check_branch
          %198 = sbr.rel (%p196) target = $region20
        $region19: #{resnet_basicblock_forward.6} parent=11 // pred_region
          _
        $region20: #{resnet_basicblock_forward.6} parent=11 // pred_fallthru
          _
        // Predicated region
        $region21: #{resnet_basicblock_forward.6} parent=11 // pred_check
          %p199 = pneg %p105
        $region22: #{resnet_basicblock_forward.6} parent=11 // pred_check_branch
          %201 = sbr.rel (%p199) target = $region24
        $region23: #{resnet_basicblock_forward.6} parent=11 // pred_region
          _
        $region24: #{resnet_basicblock_forward.6} parent=11 // pred_fallthru
          _
        // Predicated region
        $region25: #{resnet_basicblock_forward.6} parent=11 // pred_check
          %p202 = pneg %p126
        $region26: #{resnet_basicblock_forward.6} parent=11 // pred_check_branch
          %204 = sbr.rel (%p202) target = $region28
        $region27: #{resnet_basicblock_forward.6} parent=11 // pred_region
          _
        $region28: #{resnet_basicblock_forward.6} parent=11 // pred_fallthru
          _
      $region12: #{resnet_basicblock_forward.6} parent=5 // pred_fallthru
        _
      %p205 = scmp.lt.s32.totalorder %s16, 2
      // Predicated region
      $region29: #{resnet_basicblock_forward.6} parent=5 // pred_check
        %p206 = pneg %p205
      $region30: #{resnet_basicblock_forward.6} parent=5 // pred_check_branch
        %208 = sbr.rel (%p206) target = $region32
      $region31: #{resnet_basicblock_forward.6} parent=5 // pred_region
        // Predicated region
        $region33: #{resnet_basicblock_forward.6} parent=31 // pred_check
          %p209 = pneg %p36
        $region34: #{resnet_basicblock_forward.6} parent=31 // pred_check_branch
          %211 = sbr.rel (%p209) target = $region36
        $region35: #{resnet_basicblock_forward.6} parent=31 // pred_region
          %p212 = scmp.lt.s32.totalorder %s16, 1
          %s213 = scalar_select %p212, %s16, 1
          %s214 = smul.addr %s213, 32
          %s215 = smul.addr %s214, 8
          %s216 = scalar_lea.vmem %s0, %s215
        $region36: #{resnet_basicblock_forward.6} parent=31 // pred_fallthru
          _
      $region32: #{resnet_basicblock_forward.6} parent=5 // pred_fallthru
        _
      %p217 = scmp.le.s32.totalorder 1, %s16
      %p218 = scmp.lt.s32.totalorder %s16, 3
      %p219 = pnand %p217, %p218
      %p220 = pneg %p219
      // Predicated region
      $region37: #{resnet_basicblock_forward.6} parent=5 // pred_check
        _
      $region38: #{resnet_basicblock_forward.6} parent=5 // pred_check_branch
        %222 = sbr.rel (%p219) target = $region40
      $region39: #{resnet_basicblock_forward.6} parent=5 // pred_region
        %s223 = ssub.s32 %s16, 1
        %p224 = scmp.lt.s32.totalorder %s21, 1
        %s225 = scalar_select %p224, %s21, 1
        %s226 = smul.addr %s225, 32
        %s227 = smul.addr %s226, 8
        %s228 = scalar_lea.vmem %s0, %s227
        %p229 = pneg %p42
        %p230 = pneg %p39
        %p231 = pneg %p63
        %p232 = pneg %p60
        %p233 = pneg %p84
        %p234 = pneg %p81
        %p235 = pneg %p105
        %p236 = pneg %p102
        %p237 = pneg %p126
        %p238 = pneg %p123
        %p239 = pneg %p152
        %p240 = pneg %p149
        %p241 = scmp.lt.s32.totalorder %s21, 1
        %s242 = scalar_select %p241, %s21, 1
        %s243 = smul.addr %s242, 8
        %s244 = smul.addr %s243, 8
        %s245 = scalar_lea.vmem %s5, %s244
        %p246 = pneg %p178
        %p247 = pneg %p175
        %s248 = sand.u32 %s165, 1
        %s249 = scalar_lea.sflag [#allocation5], %s248
        %s250 = sand.u32 %s165, 1
        %s251 = smul.addr %s250, 2
        %s252 = scalar_lea.vmem [#allocation4], %s251
        %p253 = scmp.lt.s32.totalorder %s21, 1
        %s254 = scalar_select %p253, %s21, 1
        %s255 = smul.addr %s254, 32
        %s256 = smul.addr %s255, 8
        %s257 = scalar_lea.vmem %s0, %s256
        %p258 = scmp.lt.s32.totalorder %s21, 1
        %s259 = scalar_select %p258, %s21, 1
        %s260 = smul.addr %s259, 8
        %s261 = smul.addr %s260, 8
        %s262 = scalar_lea.vmem %s5, %s261
        %v263 = vld [vmem:[%s257] sm:$0xff]
        %v264 = vld [vmem:[%s257 + $0x8] sm:$0xff]
        %v265 = vld [vmem:[%s257 + $0x10] sm:$0xff]
        %v266 = vld [vmem:[%s257 + $0x18] sm:$0xff]
        %v267 = vld [vmem:[%s257 + $0x20] sm:$0xff]
        %v268 = vld [vmem:[%s257 + $0x28] sm:$0xff]
        %v269 = vld [vmem:[%s257 + $0x30] sm:$0xff]
        %v270 = vld [vmem:[%s257 + $0x38] sm:$0xff]
        %v271 = vld [vmem:[%s257 + $0x40] sm:$0xff]
        %v272 = vld [vmem:[%s257 + $0x48] sm:$0xff]
        %v273 = vld [vmem:[%s257 + $0x50] sm:$0xff]
        %v274 = vld [vmem:[%s257 + $0x58] sm:$0xff]
        %v275 = vld [vmem:[%s257 + $0x60] sm:$0xff]
        %v276 = vld [vmem:[%s257 + $0x68] sm:$0xff]
        %v277 = vld [vmem:[%s257 + $0x70] sm:$0xff]
        %v278 = vld [vmem:[%s257 + $0x78] sm:$0xff]
        %v279 = vld [vmem:[%s257 + $0x80] sm:$0xff]
        %v280 = vld [vmem:[%s257 + $0x88] sm:$0xff]
        %v281 = vld [vmem:[%s257 + $0x90] sm:$0xff]
        %v282 = vld [vmem:[%s257 + $0x98] sm:$0xff]
        %v283 = vld [vmem:[%s257 + $0xa0] sm:$0xff]
        %v284 = vld [vmem:[%s257 + $0xa8] sm:$0xff]
        %v285 = vld [vmem:[%s257 + $0xb0] sm:$0xff]
        %v286 = vld [vmem:[%s257 + $0xb8] sm:$0xff]
        %v287 = vld [vmem:[%s257 + $0xc0] sm:$0xff]
        %v288 = vld [vmem:[%s257 + $0xc8] sm:$0xff]
        %v289 = vld [vmem:[%s257 + $0xd0] sm:$0xff]
        %v290 = vld [vmem:[%s257 + $0xd8] sm:$0xff]
        %v291 = vld [vmem:[%s257 + $0xe0] sm:$0xff]
        %v292 = vld [vmem:[%s257 + $0xe8] sm:$0xff]
        %v293 = vld [vmem:[%s257 + $0xf0] sm:$0xff]
        %v294 = vld [vmem:[%s257 + $0xf8] sm:$0xff]
        %v295 = vld [vmem:[%s3] sm:$0x1]
        %v297 = vlaneseq
        %v298 = vshrl.u32 %v297, 7
        %v299 = vsub.s32 0, %v298
        %v300 = vrot.slane %v295, %v299
        %v302 = vmul.f32 %v263, %v300
        %v303 = vmul.f32 %v264, %v300
        %v304 = vmul.f32 %v265, %v300
        %v305 = vmul.f32 %v266, %v300
        %v306 = vmul.f32 %v267, %v300
        %v307 = vmul.f32 %v268, %v300
        %v308 = vmul.f32 %v269, %v300
        %v309 = vmul.f32 %v270, %v300
        %v310 = vmul.f32 %v271, %v300
        %v311 = vmul.f32 %v272, %v300
        %v312 = vmul.f32 %v273, %v300
        %v313 = vmul.f32 %v274, %v300
        %v314 = vmul.f32 %v275, %v300
        %v315 = vmul.f32 %v276, %v300
        %v316 = vmul.f32 %v277, %v300
        %v317 = vmul.f32 %v278, %v300
        %v318 = vmul.f32 %v279, %v300
        %v319 = vmul.f32 %v280, %v300
        %v320 = vmul.f32 %v281, %v300
        %v321 = vmul.f32 %v282, %v300
        %v322 = vmul.f32 %v283, %v300
        %v323 = vmul.f32 %v284, %v300
        %v324 = vmul.f32 %v285, %v300
        %v325 = vmul.f32 %v286, %v300
        %v326 = vmul.f32 %v287, %v300
        %v327 = vmul.f32 %v288, %v300
        %v328 = vmul.f32 %v289, %v300
        %v329 = vmul.f32 %v290, %v300
        %v330 = vmul.f32 %v291, %v300
        %v331 = vmul.f32 %v292, %v300
        %v332 = vmul.f32 %v293, %v300
        %v333 = vmul.f32 %v294, %v300
        %v334 = vld [vmem:[%s4] sm:$0x1]
        %v336 = vlaneseq
        %v337 = vshrl.u32 %v336, 7
        %v338 = vsub.s32 0, %v337
        %v339 = vrot.slane %v334, %v338
        %v341 = vadd.f32 %v302, %v339
        %v342 = vadd.f32 %v303, %v339
        %v343 = vadd.f32 %v304, %v339
        %v344 = vadd.f32 %v305, %v339
        %v345 = vadd.f32 %v306, %v339
        %v346 = vadd.f32 %v307, %v339
        %v347 = vadd.f32 %v308, %v339
        %v348 = vadd.f32 %v309, %v339
        %v349 = vadd.f32 %v310, %v339
        %v350 = vadd.f32 %v311, %v339
        %v351 = vadd.f32 %v312, %v339
        %v352 = vadd.f32 %v313, %v339
        %v353 = vadd.f32 %v314, %v339
        %v354 = vadd.f32 %v315, %v339
        %v355 = vadd.f32 %v316, %v339
        %v356 = vadd.f32 %v317, %v339
        %v357 = vadd.f32 %v318, %v339
        %v358 = vadd.f32 %v319, %v339
        %v359 = vadd.f32 %v320, %v339
        %v360 = vadd.f32 %v321, %v339
        %v361 = vadd.f32 %v322, %v339
        %v362 = vadd.f32 %v323, %v339
        %v363 = vadd.f32 %v324, %v339
        %v364 = vadd.f32 %v325, %v339
        %v365 = vadd.f32 %v326, %v339
        %v366 = vadd.f32 %v327, %v339
        %v367 = vadd.f32 %v328, %v339
        %v368 = vadd.f32 %v329, %v339
        %v369 = vadd.f32 %v330, %v339
        %v370 = vadd.f32 %v331, %v339
        %v371 = vadd.f32 %v332, %v339
        %v372 = vadd.f32 %v333, %v339
        %373 = vst [vmem:[#allocation2] sm:$0xff] %v341
        %374 = vst [vmem:[#allocation2 + $0x8] sm:$0xff] %v342
        %375 = vst [vmem:[#allocation2 + $0x10] sm:$0xff] %v343
        %376 = vst [vmem:[#allocation2 + $0x18] sm:$0xff] %v344
        %377 = vst [vmem:[#allocation2 + $0x20] sm:$0xff] %v345
        %378 = vst [vmem:[#allocation2 + $0x28] sm:$0xff] %v346
        %379 = vst [vmem:[#allocation2 + $0x30] sm:$0xff] %v347
        %380 = vst [vmem:[#allocation2 + $0x38] sm:$0xff] %v348
        %381 = vst [vmem:[#allocation2 + $0x40] sm:$0xff] %v349
        %382 = vst [vmem:[#allocation2 + $0x48] sm:$0xff] %v350
        %383 = vst [vmem:[#allocation2 + $0x50] sm:$0xff] %v351
        %384 = vst [vmem:[#allocation2 + $0x58] sm:$0xff] %v352
        %385 = vst [vmem:[#allocation2 + $0x60] sm:$0xff] %v353
        %386 = vst [vmem:[#allocation2 + $0x68] sm:$0xff] %v354
        %387 = vst [vmem:[#allocation2 + $0x70] sm:$0xff] %v355
        %388 = vst [vmem:[#allocation2 + $0x78] sm:$0xff] %v356
        %389 = vst [vmem:[#allocation2 + $0x80] sm:$0xff] %v357
        %390 = vst [vmem:[#allocation2 + $0x88] sm:$0xff] %v358
        %391 = vst [vmem:[#allocation2 + $0x90] sm:$0xff] %v359
        %392 = vst [vmem:[#allocation2 + $0x98] sm:$0xff] %v360
        %393 = vst [vmem:[#allocation2 + $0xa0] sm:$0xff] %v361
        %394 = vst [vmem:[#allocation2 + $0xa8] sm:$0xff] %v362
        %395 = vst [vmem:[#allocation2 + $0xb0] sm:$0xff] %v363
        %396 = vst [vmem:[#allocation2 + $0xb8] sm:$0xff] %v364
        %397 = vst [vmem:[#allocation2 + $0xc0] sm:$0xff] %v365
        %398 = vst [vmem:[#allocation2 + $0xc8] sm:$0xff] %v366
        %399 = vst [vmem:[#allocation2 + $0xd0] sm:$0xff] %v367
        %400 = vst [vmem:[#allocation2 + $0xd8] sm:$0xff] %v368
        %401 = vst [vmem:[#allocation2 + $0xe0] sm:$0xff] %v369
        %402 = vst [vmem:[#allocation2 + $0xe8] sm:$0xff] %v370
        %403 = vst [vmem:[#allocation2 + $0xf0] sm:$0xff] %v371
        %404 = vst [vmem:[#allocation2 + $0xf8] sm:$0xff] %v372
        %v405 = vld [vmem:[#allocation2] ss:$2 sm:$0xff]
        %s406 = scalar_lea.vmem [#allocation2], 32
        %v407 = vld [vmem:[%s406] ss:$2 sm:$0xff]
        %s408 = scalar_lea.vmem [#allocation2], 64
        %v409 = vld [vmem:[%s408] ss:$2 sm:$0xff]
        %s410 = scalar_lea.vmem [#allocation2], 96
        %v411 = vld [vmem:[%s410] ss:$2 sm:$0xff]
        %s412 = scalar_lea.vmem [#allocation2], 128
        %v413 = vld [vmem:[%s412] ss:$2 sm:$0xff]
        %s414 = scalar_lea.vmem [#allocation2], 160
        %v415 = vld [vmem:[%s414] ss:$2 sm:$0xff]
        %s416 = scalar_lea.vmem [#allocation2], 192
        %v417 = vld [vmem:[%s416] ss:$2 sm:$0xff]
        %s418 = scalar_lea.vmem [#allocation2], 224
        %v419 = vld [vmem:[%s418] ss:$2 sm:$0xff]
        %v420 = vld [vmem:[%s1] sm:$0xff]
        %v421 = vld [vmem:[%s1 + $0x8] sm:$0xff]
        %v422 = vld [vmem:[%s1 + $0x10] sm:$0xff]
        %v423 = vld [vmem:[%s1 + $0x18] sm:$0xff]
        %v424 = vld [vmem:[%s1 + $0x20] sm:$0xff]
        %v425 = vld [vmem:[%s1 + $0x28] sm:$0xff]
        %v426 = vld [vmem:[%s1 + $0x30] sm:$0xff]
        %v427 = vld [vmem:[%s1 + $0x38] sm:$0xff]
        %v428 = vld [vmem:[%s1 + $0x40] sm:$0xff]
        %v429 = vld [vmem:[%s1 + $0x48] sm:$0xff]
        %v430 = vld [vmem:[%s1 + $0x50] sm:$0xff]
        %v431 = vld [vmem:[%s1 + $0x58] sm:$0xff]
        %v432 = vld [vmem:[%s1 + $0x60] sm:$0xff]
        %v433 = vld [vmem:[%s1 + $0x68] sm:$0xff]
        %v434 = vld [vmem:[%s1 + $0x70] sm:$0xff]
        %v435 = vld [vmem:[%s1 + $0x78] sm:$0xff]
        %436 = vmatprep.subr.mxu0 0.0
        %437 = vmatpush1.msra.mxu0 %v435
        %438 = vmatprep.subr.mxu0 0.0
        %439 = vmatpush1.msra.mxu0 %v434
        %440 = vmatprep.subr.mxu0 0.0
        %441 = vmatpush1.msra.mxu0 %v433
        %442 = vmatprep.subr.mxu0 0.0
        %443 = vmatpush1.msra.mxu0 %v432
        %444 = vmatprep.subr.mxu0 0.0
        %445 = vmatpush1.msra.mxu0 %v431
        %446 = vmatprep.subr.mxu0 0.0
        %447 = vmatpush1.msra.mxu0 %v430
        %448 = vmatprep.subr.mxu0 0.0
        %449 = vmatpush1.msra.mxu0 %v429
        %450 = vmatprep.subr.mxu0 0.0
        %451 = vmatpush1.msra.mxu0 %v428
        %452 = vmatprep.subr.mxu0 0.0
        %453 = vmatpush1.msra.mxu0 %v427
        %454 = vmatprep.subr.mxu0 0.0
        %455 = vmatpush1.msra.mxu0 %v426
        %456 = vmatprep.subr.mxu0 0.0
        %457 = vmatpush1.msra.mxu0 %v425
        %458 = vmatprep.subr.mxu0 0.0
        %459 = vmatpush1.msra.mxu0 %v424
        %460 = vmatprep.subr.mxu0 0.0
        %461 = vmatpush1.msra.mxu0 %v423
        %462 = vmatprep.subr.mxu0 0.0
        %463 = vmatpush1.msra.mxu0 %v422
        %464 = vmatprep.subr.mxu0 0.0
        %465 = vmatpush1.msra.mxu0 %v421
        %466 = vmatprep.subr.mxu0 0.0
        %467 = vmatpush1.msra.mxu0 %v420
        %468 = vmatprep.subr.mxu0 0.0
        %469 = vmatpush2.msra.mxu0 0.0
        %470 = vmatprep.subr.mxu0 0.0
        %471 = vmatpush2.msra.mxu0 0.0
        %472 = vmatprep.subr.mxu0 0.0
        %473 = vmatpush2.msra.mxu0 0.0
        %474 = vmatprep.subr.mxu0 0.0
        %475 = vmatpush2.msra.mxu0 0.0
        %476 = vmatprep.subr.mxu0 0.0
        %477 = vmatpush2.msra.mxu0 0.0
        %478 = vmatprep.subr.mxu0 0.0
        %479 = vmatpush2.msra.mxu0 0.0
        %480 = vmatprep.subr.mxu0 0.0
        %481 = vmatpush2.msra.mxu0 0.0
        %482 = vmatprep.subr.mxu0 0.0
        %483 = vmatpush2.msra.mxu0 0.0
        %484 = vmatprep.subr.mxu0 0.0
        %485 = vmatpush2.msra.mxu0 0.0
        %486 = vmatprep.subr.mxu0 0.0
        %487 = vmatpush2.msra.mxu0 0.0
        %488 = vmatprep.subr.mxu0 0.0
        %489 = vmatpush2.msra.mxu0 0.0
        %490 = vmatprep.subr.mxu0 0.0
        %491 = vmatpush2.msra.mxu0 0.0
        %492 = vmatprep.subr.mxu0 0.0
        %493 = vmatpush2.msra.mxu0 0.0
        %494 = vmatprep.subr.mxu0 0.0
        %495 = vmatpush2.msra.mxu0 0.0
        %496 = vmatprep.subr.mxu0 0.0
        %497 = vmatpush2.msra.mxu0 0.0
        %498 = vmatprep.subr.mxu0 0.0
        %499 = vmatpush2.msra.mxu0 0.0
        %500 = vmatprep.mubr.f32.mxu0 0.0
        %501 = vmatmul.mubr.f32.gmra.mxu0 %v405
        %v502 = vpop.f32.mrf.mxu0
        %v503 = vadd.f32 0.0, %v502
        %v504 = vpop.f32.mrf.mxu0
        %505 = vmatprep.mubr.f32.mxu0 0.0
        %506 = vmatmul.mubr.f32.gmra.mxu0 %v407
        %v507 = vpop.f32.mrf.mxu0
        %v508 = vadd.f32 0.0, %v507
        %v509 = vpop.f32.mrf.mxu0
        %510 = vmatprep.mubr.f32.mxu0 0.0
        %511 = vmatmul.mubr.f32.gmra.mxu0 %v409
        %v512 = vpop.f32.mrf.mxu0
        %v513 = vadd.f32 0.0, %v512
        %v514 = vpop.f32.mrf.mxu0
        %515 = vmatprep.mubr.f32.mxu0 0.0
        %516 = vmatmul.mubr.f32.gmra.mxu0 %v411
        %v517 = vpop.f32.mrf.mxu0
        %v518 = vadd.f32 0.0, %v517
        %v519 = vpop.f32.mrf.mxu0
        %520 = vmatprep.mubr.f32.mxu0 0.0
        %521 = vmatmul.mubr.f32.gmra.mxu0 %v413
        %v522 = vpop.f32.mrf.mxu0
        %v523 = vadd.f32 0.0, %v522
        %v524 = vpop.f32.mrf.mxu0
        %525 = vmatprep.mubr.f32.mxu0 0.0
        %526 = vmatmul.mubr.f32.gmra.mxu0 %v415
        %v527 = vpop.f32.mrf.mxu0
        %v528 = vadd.f32 0.0, %v527
        %v529 = vpop.f32.mrf.mxu0
        %530 = vmatprep.mubr.f32.mxu0 0.0
        %531 = vmatmul.mubr.f32.gmra.mxu0 %v417
        %v532 = vpop.f32.mrf.mxu0
        %v533 = vadd.f32 0.0, %v532
        %v534 = vpop.f32.mrf.mxu0
        %535 = vmatprep.mubr.f32.mxu0 0.0
        %536 = vmatmul.mubr.f32.gmra.mxu0 %v419
        %v537 = vpop.f32.mrf.mxu0
        %v538 = vadd.f32 0.0, %v537
        %v539 = vpop.f32.mrf.mxu0
        %540 = vdwg.mxu0
        %541 = vst [vmem:[#allocation3] sm:$0xff] %v503
        %542 = vst [vmem:[#allocation3 + $0x8] sm:$0xff] %v508
        %543 = vst [vmem:[#allocation3 + $0x10] sm:$0xff] %v513
        %544 = vst [vmem:[#allocation3 + $0x18] sm:$0xff] %v518
        %545 = vst [vmem:[#allocation3 + $0x20] sm:$0xff] %v523
        %546 = vst [vmem:[#allocation3 + $0x28] sm:$0xff] %v528
        %547 = vst [vmem:[#allocation3 + $0x30] sm:$0xff] %v533
        %548 = vst [vmem:[#allocation3 + $0x38] sm:$0xff] %v538
        %s549 = scalar_lea.vmem [#allocation2], 1
        %v550 = vld [vmem:[%s549] ss:$2 sm:$0xff]
        %s551 = scalar_lea.vmem [#allocation2], 33
        %v552 = vld [vmem:[%s551] ss:$2 sm:$0xff]
        %s553 = scalar_lea.vmem [#allocation2], 65
        %v554 = vld [vmem:[%s553] ss:$2 sm:$0xff]
        %s555 = scalar_lea.vmem [#allocation2], 97
        %v556 = vld [vmem:[%s555] ss:$2 sm:$0xff]
        %s557 = scalar_lea.vmem [#allocation2], 129
        %v558 = vld [vmem:[%s557] ss:$2 sm:$0xff]
        %s559 = scalar_lea.vmem [#allocation2], 161
        %v560 = vld [vmem:[%s559] ss:$2 sm:$0xff]
        %s561 = scalar_lea.vmem [#allocation2], 193
        %v562 = vld [vmem:[%s561] ss:$2 sm:$0xff]
        %s563 = scalar_lea.vmem [#allocation2], 225
        %v564 = vld [vmem:[%s563] ss:$2 sm:$0xff]
        %s565 = scalar_lea.vmem %s1, 128
        %v566 = vld [vmem:[%s565] sm:$0xff]
        %v567 = vld [vmem:[%s565 + $0x8] sm:$0xff]
        %v568 = vld [vmem:[%s565 + $0x10] sm:$0xff]
        %v569 = vld [vmem:[%s565 + $0x18] sm:$0xff]
        %v570 = vld [vmem:[%s565 + $0x20] sm:$0xff]
        %v571 = vld [vmem:[%s565 + $0x28] sm:$0xff]
        %v572 = vld [vmem:[%s565 + $0x30] sm:$0xff]
        %v573 = vld [vmem:[%s565 + $0x38] sm:$0xff]
        %v574 = vld [vmem:[%s565 + $0x40] sm:$0xff]
        %v575 = vld [vmem:[%s565 + $0x48] sm:$0xff]
        %v576 = vld [vmem:[%s565 + $0x50] sm:$0xff]
        %v577 = vld [vmem:[%s565 + $0x58] sm:$0xff]
        %v578 = vld [vmem:[%s565 + $0x60] sm:$0xff]
        %v579 = vld [vmem:[%s565 + $0x68] sm:$0xff]
        %v580 = vld [vmem:[%s565 + $0x70] sm:$0xff]
        %v581 = vld [vmem:[%s565 + $0x78] sm:$0xff]
        %582 = vmatprep.subr.mxu0 0.0
        %583 = vmatpush1.msra.mxu0 %v581
        %584 = vmatprep.subr.mxu0 0.0
        %585 = vmatpush1.msra.mxu0 %v580
        %586 = vmatprep.subr.mxu0 0.0
        %587 = vmatpush1.msra.mxu0 %v579
        %588 = vmatprep.subr.mxu0 0.0
        %589 = vmatpush1.msra.mxu0 %v578
        %590 = vmatprep.subr.mxu0 0.0
        %591 = vmatpush1.msra.mxu0 %v577
        %592 = vmatprep.subr.mxu0 0.0
        %593 = vmatpush1.msra.mxu0 %v576
        %594 = vmatprep.subr.mxu0 0.0
        %595 = vmatpush1.msra.mxu0 %v575
        %596 = vmatprep.subr.mxu0 0.0
        %597 = vmatpush1.msra.mxu0 %v574
        %598 = vmatprep.subr.mxu0 0.0
        %599 = vmatpush1.msra.mxu0 %v573
        %600 = vmatprep.subr.mxu0 0.0
        %601 = vmatpush1.msra.mxu0 %v572
        %602 = vmatprep.subr.mxu0 0.0
        %603 = vmatpush1.msra.mxu0 %v571
        %604 = vmatprep.subr.mxu0 0.0
        %605 = vmatpush1.msra.mxu0 %v570
        %606 = vmatprep.subr.mxu0 0.0
        %607 = vmatpush1.msra.mxu0 %v569
        %608 = vmatprep.subr.mxu0 0.0
        %609 = vmatpush1.msra.mxu0 %v568
        %610 = vmatprep.subr.mxu0 0.0
        %611 = vmatpush1.msra.mxu0 %v567
        %612 = vmatprep.subr.mxu0 0.0
        %613 = vmatpush1.msra.mxu0 %v566
        %614 = vmatprep.subr.mxu0 0.0
        %615 = vmatpush2.msra.mxu0 0.0
        %616 = vmatprep.subr.mxu0 0.0
        %617 = vmatpush2.msra.mxu0 0.0
        %618 = vmatprep.subr.mxu0 0.0
        %619 = vmatpush2.msra.mxu0 0.0
        %620 = vmatprep.subr.mxu0 0.0
        %621 = vmatpush2.msra.mxu0 0.0
        %622 = vmatprep.subr.mxu0 0.0
        %623 = vmatpush2.msra.mxu0 0.0
        %624 = vmatprep.subr.mxu0 0.0
        %625 = vmatpush2.msra.mxu0 0.0
        %626 = vmatprep.subr.mxu0 0.0
        %627 = vmatpush2.msra.mxu0 0.0
        %628 = vmatprep.subr.mxu0 0.0
        %629 = vmatpush2.msra.mxu0 0.0
        %630 = vmatprep.subr.mxu0 0.0
        %631 = vmatpush2.msra.mxu0 0.0
        %632 = vmatprep.subr.mxu0 0.0
        %633 = vmatpush2.msra.mxu0 0.0
        %634 = vmatprep.subr.mxu0 0.0
        %635 = vmatpush2.msra.mxu0 0.0
        %636 = vmatprep.subr.mxu0 0.0
        %637 = vmatpush2.msra.mxu0 0.0
        %638 = vmatprep.subr.mxu0 0.0
        %639 = vmatpush2.msra.mxu0 0.0
        %640 = vmatprep.subr.mxu0 0.0
        %641 = vmatpush2.msra.mxu0 0.0
        %642 = vmatprep.subr.mxu0 0.0
        %643 = vmatpush2.msra.mxu0 0.0
        %644 = vmatprep.subr.mxu0 0.0
        %645 = vmatpush2.msra.mxu0 0.0
        %646 = vmatprep.mubr.f32.mxu0 0.0
        %647 = vmatmul.mubr.f32.gmra.mxu0 %v550
        %v648 = vpop.f32.mrf.mxu0
        %v649 = vadd.f32 0.0, %v648
        %v650 = vpop.f32.mrf.mxu0
        %651 = vmatprep.mubr.f32.mxu0 0.0
        %652 = vmatmul.mubr.f32.gmra.mxu0 %v552
        %v653 = vpop.f32.mrf.mxu0
        %v654 = vadd.f32 0.0, %v653
        %v655 = vpop.f32.mrf.mxu0
        %656 = vmatprep.mubr.f32.mxu0 0.0
        %657 = vmatmul.mubr.f32.gmra.mxu0 %v554
        %v658 = vpop.f32.mrf.mxu0
        %v659 = vadd.f32 0.0, %v658
        %v660 = vpop.f32.mrf.mxu0
        %661 = vmatprep.mubr.f32.mxu0 0.0
        %662 = vmatmul.mubr.f32.gmra.mxu0 %v556
        %v663 = vpop.f32.mrf.mxu0
        %v664 = vadd.f32 0.0, %v663
        %v665 = vpop.f32.mrf.mxu0
        %666 = vmatprep.mubr.f32.mxu0 0.0
        %667 = vmatmul.mubr.f32.gmra.mxu0 %v558
        %v668 = vpop.f32.mrf.mxu0
        %v669 = vadd.f32 0.0, %v668
        %v670 = vpop.f32.mrf.mxu0
        %671 = vmatprep.mubr.f32.mxu0 0.0
        %672 = vmatmul.mubr.f32.gmra.mxu0 %v560
        %v673 = vpop.f32.mrf.mxu0
        %v674 = vadd.f32 0.0, %v673
        %v675 = vpop.f32.mrf.mxu0
        %676 = vmatprep.mubr.f32.mxu0 0.0
        %677 = vmatmul.mubr.f32.gmra.mxu0 %v562
        %v678 = vpop.f32.mrf.mxu0
        %v679 = vadd.f32 0.0, %v678
        %v680 = vpop.f32.mrf.mxu0
        %681 = vmatprep.mubr.f32.mxu0 0.0
        %682 = vmatmul.mubr.f32.gmra.mxu0 %v564
        %v683 = vpop.f32.mrf.mxu0
        %v684 = vadd.f32 0.0, %v683
        %v685 = vpop.f32.mrf.mxu0
        %686 = vdwg.mxu0
        %v687 = vld [vmem:[#allocation3] sm:$0xff]
        %v688 = vld [vmem:[#allocation3 + $0x8] sm:$0xff]
        %v689 = vld [vmem:[#allocation3 + $0x10] sm:$0xff]
        %v690 = vld [vmem:[#allocation3 + $0x18] sm:$0xff]
        %v691 = vld [vmem:[#allocation3 + $0x20] sm:$0xff]
        %v692 = vld [vmem:[#allocation3 + $0x28] sm:$0xff]
        %v693 = vld [vmem:[#allocation3 + $0x30] sm:$0xff]
        %v694 = vld [vmem:[#allocation3 + $0x38] sm:$0xff]
        %v695 = vadd.f32 %v687, %v649
        %v696 = vadd.f32 %v688, %v654
        %v697 = vadd.f32 %v689, %v659
        %v698 = vadd.f32 %v690, %v664
        %v699 = vadd.f32 %v691, %v669
        %v700 = vadd.f32 %v692, %v674
        %v701 = vadd.f32 %v693, %v679
        %v702 = vadd.f32 %v694, %v684
        %703 = vst [vmem:[#allocation3] sm:$0xff] %v695
        %704 = vst [vmem:[#allocation3 + $0x8] sm:$0xff] %v696
        %705 = vst [vmem:[#allocation3 + $0x10] sm:$0xff] %v697
        %706 = vst [vmem:[#allocation3 + $0x18] sm:$0xff] %v698
        %707 = vst [vmem:[#allocation3 + $0x20] sm:$0xff] %v699
        %708 = vst [vmem:[#allocation3 + $0x28] sm:$0xff] %v700
        %709 = vst [vmem:[#allocation3 + $0x30] sm:$0xff] %v701
        %710 = vst [vmem:[#allocation3 + $0x38] sm:$0xff] %v702
        %s711 = scalar_lea.vmem [#allocation2], 16
        %v712 = vld [vmem:[%s711] ss:$2 sm:$0xff]
        %s713 = scalar_lea.vmem %s711, 32 [#allocation2]
        %v714 = vld [vmem:[%s713] ss:$2 sm:$0xff]
        %s715 = scalar_lea.vmem %s711, 64 [#allocation2]
        %v716 = vld [vmem:[%s715] ss:$2 sm:$0xff]
        %s717 = scalar_lea.vmem %s711, 96 [#allocation2]
        %v718 = vld [vmem:[%s717] ss:$2 sm:$0xff]
        %s719 = scalar_lea.vmem %s711, 128 [#allocation2]
        %v720 = vld [vmem:[%s719] ss:$2 sm:$0xff]
        %s721 = scalar_lea.vmem %s711, 160 [#allocation2]
        %v722 = vld [vmem:[%s721] ss:$2 sm:$0xff]
        %s723 = scalar_lea.vmem %s711, 192 [#allocation2]
        %v724 = vld [vmem:[%s723] ss:$2 sm:$0xff]
        %s725 = scalar_lea.vmem %s711, 224 [#allocation2]
        %v726 = vld [vmem:[%s725] ss:$2 sm:$0xff]
        %s727 = scalar_lea.vmem %s1, 256
        %v728 = vld [vmem:[%s727] sm:$0xff]
        %v729 = vld [vmem:[%s727 + $0x8] sm:$0xff]
        %v730 = vld [vmem:[%s727 + $0x10] sm:$0xff]
        %v731 = vld [vmem:[%s727 + $0x18] sm:$0xff]
        %v732 = vld [vmem:[%s727 + $0x20] sm:$0xff]
        %v733 = vld [vmem:[%s727 + $0x28] sm:$0xff]
        %v734 = vld [vmem:[%s727 + $0x30] sm:$0xff]
        %v735 = vld [vmem:[%s727 + $0x38] sm:$0xff]
        %v736 = vld [vmem:[%s727 + $0x40] sm:$0xff]
        %v737 = vld [vmem:[%s727 + $0x48] sm:$0xff]
        %v738 = vld [vmem:[%s727 + $0x50] sm:$0xff]
        %v739 = vld [vmem:[%s727 + $0x58] sm:$0xff]
        %v740 = vld [vmem:[%s727 + $0x60] sm:$0xff]
        %v741 = vld [vmem:[%s727 + $0x68] sm:$0xff]
        %v742 = vld [vmem:[%s727 + $0x70] sm:$0xff]
        %v743 = vld [vmem:[%s727 + $0x78] sm:$0xff]
        %744 = vmatprep.subr.mxu0 0.0
        %745 = vmatpush1.msra.mxu0 %v743
        %746 = vmatprep.subr.mxu0 0.0
        %747 = vmatpush1.msra.mxu0 %v742
        %748 = vmatprep.subr.mxu0 0.0
        %749 = vmatpush1.msra.mxu0 %v741
        %750 = vmatprep.subr.mxu0 0.0
        %751 = vmatpush1.msra.mxu0 %v740
        %752 = vmatprep.subr.mxu0 0.0
        %753 = vmatpush1.msra.mxu0 %v739
        %754 = vmatprep.subr.mxu0 0.0
        %755 = vmatpush1.msra.mxu0 %v738
        %756 = vmatprep.subr.mxu0 0.0
        %757 = vmatpush1.msra.mxu0 %v737
        %758 = vmatprep.subr.mxu0 0.0
        %759 = vmatpush1.msra.mxu0 %v736
        %760 = vmatprep.subr.mxu0 0.0
        %761 = vmatpush1.msra.mxu0 %v735
        %762 = vmatprep.subr.mxu0 0.0
        %763 = vmatpush1.msra.mxu0 %v734
        %764 = vmatprep.subr.mxu0 0.0
        %765 = vmatpush1.msra.mxu0 %v733
        %766 = vmatprep.subr.mxu0 0.0
        %767 = vmatpush1.msra.mxu0 %v732
        %768 = vmatprep.subr.mxu0 0.0
        %769 = vmatpush1.msra.mxu0 %v731
        %770 = vmatprep.subr.mxu0 0.0
        %771 = vmatpush1.msra.mxu0 %v730
        %772 = vmatprep.subr.mxu0 0.0
        %773 = vmatpush1.msra.mxu0 %v729
        %774 = vmatprep.subr.mxu0 0.0
        %775 = vmatpush1.msra.mxu0 %v728
        %776 = vmatprep.subr.mxu0 0.0
        %777 = vmatpush2.msra.mxu0 0.0
        %778 = vmatprep.subr.mxu0 0.0
        %779 = vmatpush2.msra.mxu0 0.0
        %780 = vmatprep.subr.mxu0 0.0
        %781 = vmatpush2.msra.mxu0 0.0
        %782 = vmatprep.subr.mxu0 0.0
        %783 = vmatpush2.msra.mxu0 0.0
        %784 = vmatprep.subr.mxu0 0.0
        %785 = vmatpush2.msra.mxu0 0.0
        %786 = vmatprep.subr.mxu0 0.0
        %787 = vmatpush2.msra.mxu0 0.0
        %788 = vmatprep.subr.mxu0 0.0
        %789 = vmatpush2.msra.mxu0 0.0
        %790 = vmatprep.subr.mxu0 0.0
        %791 = vmatpush2.msra.mxu0 0.0
        %792 = vmatprep.subr.mxu0 0.0
        %793 = vmatpush2.msra.mxu0 0.0
        %794 = vmatprep.subr.mxu0 0.0
        %795 = vmatpush2.msra.mxu0 0.0
        %796 = vmatprep.subr.mxu0 0.0
        %797 = vmatpush2.msra.mxu0 0.0
        %798 = vmatprep.subr.mxu0 0.0
        %799 = vmatpush2.msra.mxu0 0.0
        %800 = vmatprep.subr.mxu0 0.0
        %801 = vmatpush2.msra.mxu0 0.0
        %802 = vmatprep.subr.mxu0 0.0
        %803 = vmatpush2.msra.mxu0 0.0
        %804 = vmatprep.subr.mxu0 0.0
        %805 = vmatpush2.msra.mxu0 0.0
        %806 = vmatprep.subr.mxu0 0.0
        %807 = vmatpush2.msra.mxu0 0.0
        %808 = vmatprep.mubr.f32.mxu0 0.0
        %809 = vmatmul.mubr.f32.gmra.mxu0 %v712
        %v810 = vpop.f32.mrf.mxu0
        %v811 = vadd.f32 0.0, %v810
        %v812 = vpop.f32.mrf.mxu0
        %813 = vmatprep.mubr.f32.mxu0 0.0
        %814 = vmatmul.mubr.f32.gmra.mxu0 %v714
        %v815 = vpop.f32.mrf.mxu0
        %v816 = vadd.f32 0.0, %v815
        %v817 = vpop.f32.mrf.mxu0
        %818 = vmatprep.mubr.f32.mxu0 0.0
        %819 = vmatmul.mubr.f32.gmra.mxu0 %v716
        %v820 = vpop.f32.mrf.mxu0
        %v821 = vadd.f32 0.0, %v820
        %v822 = vpop.f32.mrf.mxu0
        %823 = vmatprep.mubr.f32.mxu0 0.0
        %824 = vmatmul.mubr.f32.gmra.mxu0 %v718
        %v825 = vpop.f32.mrf.mxu0
        %v826 = vadd.f32 0.0, %v825
        %v827 = vpop.f32.mrf.mxu0
        %828 = vmatprep.mubr.f32.mxu0 0.0
        %829 = vmatmul.mubr.f32.gmra.mxu0 %v720
        %v830 = vpop.f32.mrf.mxu0
        %v831 = vadd.f32 0.0, %v830
        %v832 = vpop.f32.mrf.mxu0
        %833 = vmatprep.mubr.f32.mxu0 0.0
        %834 = vmatmul.mubr.f32.gmra.mxu0 %v722
        %v835 = vpop.f32.mrf.mxu0
        %v836 = vadd.f32 0.0, %v835
        %v837 = vpop.f32.mrf.mxu0
        %838 = vmatprep.mubr.f32.mxu0 0.0
        %839 = vmatmul.mubr.f32.gmra.mxu0 %v724
        %v840 = vpop.f32.mrf.mxu0
        %v841 = vadd.f32 0.0, %v840
        %v842 = vpop.f32.mrf.mxu0
        %843 = vmatprep.mubr.f32.mxu0 0.0
        %844 = vmatmul.mubr.f32.gmra.mxu0 %v726
        %v845 = vpop.f32.mrf.mxu0
        %v846 = vadd.f32 0.0, %v845
        %v847 = vpop.f32.mrf.mxu0
        %848 = vdwg.mxu0
        %v849 = vld [vmem:[#allocation3] sm:$0xff]
        %v850 = vld [vmem:[#allocation3 + $0x8] sm:$0xff]
        %v851 = vld [vmem:[#allocation3 + $0x10] sm:$0xff]
        %v852 = vld [vmem:[#allocation3 + $0x18] sm:$0xff]
        %v853 = vld [vmem:[#allocation3 + $0x20] sm:$0xff]
        %v854 = vld [vmem:[#allocation3 + $0x28] sm:$0xff]
        %v855 = vld [vmem:[#allocation3 + $0x30] sm:$0xff]
        %v856 = vld [vmem:[#allocation3 + $0x38] sm:$0xff]
        %v857 = vadd.f32 %v849, %v811
        %v858 = vadd.f32 %v850, %v816
        %v859 = vadd.f32 %v851, %v821
        %v860 = vadd.f32 %v852, %v826
        %v861 = vadd.f32 %v853, %v831
        %v862 = vadd.f32 %v854, %v836
        %v863 = vadd.f32 %v855, %v841
        %v864 = vadd.f32 %v856, %v846
        %865 = vst [vmem:[#allocation3] sm:$0xff] %v857
        %866 = vst [vmem:[#allocation3 + $0x8] sm:$0xff] %v858
        %867 = vst [vmem:[#allocation3 + $0x10] sm:$0xff] %v859
        %868 = vst [vmem:[#allocation3 + $0x18] sm:$0xff] %v860
        %869 = vst [vmem:[#allocation3 + $0x20] sm:$0xff] %v861
        %870 = vst [vmem:[#allocation3 + $0x28] sm:$0xff] %v862
        %871 = vst [vmem:[#allocation3 + $0x30] sm:$0xff] %v863
        %872 = vst [vmem:[#allocation3 + $0x38] sm:$0xff] %v864
        %s873 = scalar_lea.vmem %s711, 1 [#allocation2]
        %v874 = vld [vmem:[%s873] ss:$2 sm:$0xff]
        %s875 = scalar_lea.vmem %s711, 33 [#allocation2]
        %v876 = vld [vmem:[%s875] ss:$2 sm:$0xff]
        %s877 = scalar_lea.vmem %s711, 65 [#allocation2]
        %v878 = vld [vmem:[%s877] ss:$2 sm:$0xff]
        %s879 = scalar_lea.vmem %s711, 97 [#allocation2]
        %v880 = vld [vmem:[%s879] ss:$2 sm:$0xff]
        %s881 = scalar_lea.vmem %s711, 129 [#allocation2]
        %v882 = vld [vmem:[%s881] ss:$2 sm:$0xff]
        %s883 = scalar_lea.vmem %s711, 161 [#allocation2]
        %v884 = vld [vmem:[%s883] ss:$2 sm:$0xff]
        %s885 = scalar_lea.vmem %s711, 193 [#allocation2]
        %v886 = vld [vmem:[%s885] ss:$2 sm:$0xff]
        %s887 = scalar_lea.vmem %s711, 225 [#allocation2]
        %v888 = vld [vmem:[%s887] ss:$2 sm:$0xff]
        %s889 = scalar_lea.vmem %s1, 384
        %v890 = vld [vmem:[%s889] sm:$0xff]
        %v891 = vld [vmem:[%s889 + $0x8] sm:$0xff]
        %v892 = vld [vmem:[%s889 + $0x10] sm:$0xff]
        %v893 = vld [vmem:[%s889 + $0x18] sm:$0xff]
        %v894 = vld [vmem:[%s889 + $0x20] sm:$0xff]
        %v895 = vld [vmem:[%s889 + $0x28] sm:$0xff]
        %v896 = vld [vmem:[%s889 + $0x30] sm:$0xff]
        %v897 = vld [vmem:[%s889 + $0x38] sm:$0xff]
        %v898 = vld [vmem:[%s889 + $0x40] sm:$0xff]
        %v899 = vld [vmem:[%s889 + $0x48] sm:$0xff]
        %v900 = vld [vmem:[%s889 + $0x50] sm:$0xff]
        %v901 = vld [vmem:[%s889 + $0x58] sm:$0xff]
        %v902 = vld [vmem:[%s889 + $0x60] sm:$0xff]
        %v903 = vld [vmem:[%s889 + $0x68] sm:$0xff]
        %v904 = vld [vmem:[%s889 + $0x70] sm:$0xff]
        %v905 = vld [vmem:[%s889 + $0x78] sm:$0xff]
        %906 = vmatprep.subr.mxu0 0.0
        %907 = vmatpush1.msra.mxu0 %v905
        %908 = vmatprep.subr.mxu0 0.0
        %909 = vmatpush1.msra.mxu0 %v904
        %910 = vmatprep.subr.mxu0 0.0
        %911 = vmatpush1.msra.mxu0 %v903
        %912 = vmatprep.subr.mxu0 0.0
        %913 = vmatpush1.msra.mxu0 %v902
        %914 = vmatprep.subr.mxu0 0.0
        %915 = vmatpush1.msra.mxu0 %v901
        %916 = vmatprep.subr.mxu0 0.0
        %917 = vmatpush1.msra.mxu0 %v900
        %918 = vmatprep.subr.mxu0 0.0
        %919 = vmatpush1.msra.mxu0 %v899
        %920 = vmatprep.subr.mxu0 0.0
        %921 = vmatpush1.msra.mxu0 %v898
        %922 = vmatprep.subr.mxu0 0.0
        %923 = vmatpush1.msra.mxu0 %v897
        %924 = vmatprep.subr.mxu0 0.0
        %925 = vmatpush1.msra.mxu0 %v896
        %926 = vmatprep.subr.mxu0 0.0
        %927 = vmatpush1.msra.mxu0 %v895
        %928 = vmatprep.subr.mxu0 0.0
        %929 = vmatpush1.msra.mxu0 %v894
        %930 = vmatprep.subr.mxu0 0.0
        %931 = vmatpush1.msra.mxu0 %v893
        %932 = vmatprep.subr.mxu0 0.0
        %933 = vmatpush1.msra.mxu0 %v892
        %934 = vmatprep.subr.mxu0 0.0
        %935 = vmatpush1.msra.mxu0 %v891
        %936 = vmatprep.subr.mxu0 0.0
        %937 = vmatpush1.msra.mxu0 %v890
        %938 = vmatprep.subr.mxu0 0.0
        %939 = vmatpush2.msra.mxu0 0.0
        %940 = vmatprep.subr.mxu0 0.0
        %941 = vmatpush2.msra.mxu0 0.0
        %942 = vmatprep.subr.mxu0 0.0
        %943 = vmatpush2.msra.mxu0 0.0
        %944 = vmatprep.subr.mxu0 0.0
        %945 = vmatpush2.msra.mxu0 0.0
        %946 = vmatprep.subr.mxu0 0.0
        %947 = vmatpush2.msra.mxu0 0.0
        %948 = vmatprep.subr.mxu0 0.0
        %949 = vmatpush2.msra.mxu0 0.0
        %950 = vmatprep.subr.mxu0 0.0
        %951 = vmatpush2.msra.mxu0 0.0
        %952 = vmatprep.subr.mxu0 0.0
        %953 = vmatpush2.msra.mxu0 0.0
        %954 = vmatprep.subr.mxu0 0.0
        %955 = vmatpush2.msra.mxu0 0.0
        %956 = vmatprep.subr.mxu0 0.0
        %957 = vmatpush2.msra.mxu0 0.0
        %958 = vmatprep.subr.mxu0 0.0
        %959 = vmatpush2.msra.mxu0 0.0
        %960 = vmatprep.subr.mxu0 0.0
        %961 = vmatpush2.msra.mxu0 0.0
        %962 = vmatprep.subr.mxu0 0.0
        %963 = vmatpush2.msra.mxu0 0.0
        %964 = vmatprep.subr.mxu0 0.0
        %965 = vmatpush2.msra.mxu0 0.0
        %966 = vmatprep.subr.mxu0 0.0
        %967 = vmatpush2.msra.mxu0 0.0
        %968 = vmatprep.subr.mxu0 0.0
        %969 = vmatpush2.msra.mxu0 0.0
        %970 = vmatprep.mubr.f32.mxu0 0.0
        %971 = vmatmul.mubr.f32.gmra.mxu0 %v874
        %v972 = vpop.f32.mrf.mxu0
        %v973 = vadd.f32 0.0, %v972
        %v974 = vpop.f32.mrf.mxu0
        %975 = vmatprep.mubr.f32.mxu0 0.0
        %976 = vmatmul.mubr.f32.gmra.mxu0 %v876
        %v977 = vpop.f32.mrf.mxu0
        %v978 = vadd.f32 0.0, %v977
        %v979 = vpop.f32.mrf.mxu0
        %980 = vmatprep.mubr.f32.mxu0 0.0
        %981 = vmatmul.mubr.f32.gmra.mxu0 %v878
        %v982 = vpop.f32.mrf.mxu0
        %v983 = vadd.f32 0.0, %v982
        %v984 = vpop.f32.mrf.mxu0
        %985 = vmatprep.mubr.f32.mxu0 0.0
        %986 = vmatmul.mubr.f32.gmra.mxu0 %v880
        %v987 = vpop.f32.mrf.mxu0
        %v988 = vadd.f32 0.0, %v987
        %v989 = vpop.f32.mrf.mxu0
        %990 = vmatprep.mubr.f32.mxu0 0.0
        %991 = vmatmul.mubr.f32.gmra.mxu0 %v882
        %v992 = vpop.f32.mrf.mxu0
        %v993 = vadd.f32 0.0, %v992
        %v994 = vpop.f32.mrf.mxu0
        %995 = vmatprep.mubr.f32.mxu0 0.0
        %996 = vmatmul.mubr.f32.gmra.mxu0 %v884
        %v997 = vpop.f32.mrf.mxu0
        %v998 = vadd.f32 0.0, %v997
        %v999 = vpop.f32.mrf.mxu0
        %1000 = vmatprep.mubr.f32.mxu0 0.0
        %1001 = vmatmul.mubr.f32.gmra.mxu0 %v886
        %v1002 = vpop.f32.mrf.mxu0
        %v1003 = vadd.f32 0.0, %v1002
        %v1004 = vpop.f32.mrf.mxu0
        %1005 = vmatprep.mubr.f32.mxu0 0.0
        %1006 = vmatmul.mubr.f32.gmra.mxu0 %v888
        %v1007 = vpop.f32.mrf.mxu0
        %v1008 = vadd.f32 0.0, %v1007
        %v1009 = vpop.f32.mrf.mxu0
        %1010 = vdwg.mxu0
        %v1011 = vld [vmem:[#allocation3] sm:$0xff]
        %v1012 = vld [vmem:[#allocation3 + $0x8] sm:$0xff]
        %v1013 = vld [vmem:[#allocation3 + $0x10] sm:$0xff]
        %v1014 = vld [vmem:[#allocation3 + $0x18] sm:$0xff]
        %v1015 = vld [vmem:[#allocation3 + $0x20] sm:$0xff]
        %v1016 = vld [vmem:[#allocation3 + $0x28] sm:$0xff]
        %v1017 = vld [vmem:[#allocation3 + $0x30] sm:$0xff]
        %v1018 = vld [vmem:[#allocation3 + $0x38] sm:$0xff]
        %v1019 = vadd.f32 %v1011, %v973
        %v1020 = vadd.f32 %v1012, %v978
        %v1021 = vadd.f32 %v1013, %v983
        %v1022 = vadd.f32 %v1014, %v988
        %v1023 = vadd.f32 %v1015, %v993
        %v1024 = vadd.f32 %v1016, %v998
        %v1025 = vadd.f32 %v1017, %v1003
        %v1026 = vadd.f32 %v1018, %v1008
        %1027 = vst [vmem:[#allocation3] sm:$0xff] %v1019
        %1028 = vst [vmem:[#allocation3 + $0x8] sm:$0xff] %v1020
        %1029 = vst [vmem:[#allocation3 + $0x10] sm:$0xff] %v1021
        %1030 = vst [vmem:[#allocation3 + $0x18] sm:$0xff] %v1022
        %1031 = vst [vmem:[#allocation3 + $0x20] sm:$0xff] %v1023
        %1032 = vst [vmem:[#allocation3 + $0x28] sm:$0xff] %v1024
        %1033 = vst [vmem:[#allocation3 + $0x30] sm:$0xff] %v1025
        %1034 = vst [vmem:[#allocation3 + $0x38] sm:$0xff] %v1026
        %v1035 = vld [vmem:[#allocation3] sm:$0xff]
        %v1036 = vld [vmem:[#allocation3 + $0x8] sm:$0xff]
        %v1037 = vld [vmem:[#allocation3 + $0x10] sm:$0xff]
        %v1038 = vld [vmem:[#allocation3 + $0x18] sm:$0xff]
        %v1039 = vld [vmem:[#allocation3 + $0x20] sm:$0xff]
        %v1040 = vld [vmem:[#allocation3 + $0x28] sm:$0xff]
        %v1041 = vld [vmem:[#allocation3 + $0x30] sm:$0xff]
        %v1042 = vld [vmem:[#allocation3 + $0x38] sm:$0xff]
        %v1043 = vld [vmem:[%s2] sm:$0x1]
        %v1045 = vlaneseq
        %v1046 = vshrl.u32 %v1045, 7
        %v1047 = vsub.s32 0, %v1046
        %v1048 = vrot.slane %v1043, %v1047
        %v1050 = vadd.f32 %v1035, %v1048
        %v1051 = vadd.f32 %v1036, %v1048
        %v1052 = vadd.f32 %v1037, %v1048
        %v1053 = vadd.f32 %v1038, %v1048
        %v1054 = vadd.f32 %v1039, %v1048
        %v1055 = vadd.f32 %v1040, %v1048
        %v1056 = vadd.f32 %v1041, %v1048
        %v1057 = vadd.f32 %v1042, %v1048
        %1058 = vst [vmem:[%s262] sm:$0xff] %v1050
        %1059 = vst [vmem:[%s262 + $0x8] sm:$0xff] %v1051
        %1060 = vst [vmem:[%s262 + $0x10] sm:$0xff] %v1052
        %1061 = vst [vmem:[%s262 + $0x18] sm:$0xff] %v1053
        %1062 = vst [vmem:[%s262 + $0x20] sm:$0xff] %v1054
        %1063 = vst [vmem:[%s262 + $0x28] sm:$0xff] %v1055
        %1064 = vst [vmem:[%s262 + $0x30] sm:$0xff] %v1056
        %1065 = vst [vmem:[%s262 + $0x38] sm:$0xff] %v1057
        %v1066 = vadd.f32 %v1050, %v1051
        %v1067 = vadd.f32 %v1066, %v1052
        %v1068 = vadd.f32 %v1067, %v1053
        %v1069 = vadd.f32 %v1068, %v1054
        %v1070 = vadd.f32 %v1069, %v1055
        %v1071 = vadd.f32 %v1070, %v1056
        %v1072 = vadd.f32 %v1071, %v1057
        %v1073 = vrot.slane %v1072, 4
        %v1074 = vadd.f32 %v1072, %v1073
        %v1075 = vrot.slane %v1074, 2
        %v1076 = vadd.f32 %v1074, %v1075
        %v1077 = vrot.slane %v1076, 1
        %v1078 = vadd.f32 %v1076, %v1077
        %1079 = vst [vmem:[%s252] sm:$0x1] %v1078
        %v1080 = vmul.f32 %v1050, %v1050
        %v1081 = vmul.f32 %v1051, %v1051
        %v1082 = vmul.f32 %v1052, %v1052
        %v1083 = vmul.f32 %v1053, %v1053
        %v1084 = vmul.f32 %v1054, %v1054
        %v1085 = vmul.f32 %v1055, %v1055
        %v1086 = vmul.f32 %v1056, %v1056
        %v1087 = vmul.f32 %v1057, %v1057
        %v1088 = vadd.f32 %v1080, %v1081
        %v1089 = vadd.f32 %v1088, %v1082
        %v1090 = vadd.f32 %v1089, %v1083
        %v1091 = vadd.f32 %v1090, %v1084
        %v1092 = vadd.f32 %v1091, %v1085
        %v1093 = vadd.f32 %v1092, %v1086
        %v1094 = vadd.f32 %v1093, %v1087
        %v1095 = vrot.slane %v1094, 4
        %v1096 = vadd.f32 %v1094, %v1095
        %v1097 = vrot.slane %v1096, 2
        %v1098 = vadd.f32 %v1096, %v1097
        %v1099 = vrot.slane %v1098, 1
        %v1100 = vadd.f32 %v1098, %v1099
        %1101 = vst [vmem:[%s252 + $0x1] sm:$0x1] %v1100
        %p1102 = scmp.lt.s32.totalorder %s21, 1
        %s1103 = scalar_select %p1102, %s21, 1
        %s1104 = smul.addr %s1103, 8
        %s1105 = smul.addr %s1104, 8
        %s1106 = scalar_lea.vmem %s5, %s1105
        %s1107 = sand.u32 %s165, 1
        %s1108 = scalar_lea.sflag [#allocation5], %s1107
        %s1109 = sand.u32 %s165, 1
        %s1110 = smul.addr %s1109, 2
        %s1111 = scalar_lea.vmem [#allocation4], %s1110
        // Predicated region
        $region41: #{resnet_basicblock_forward.6} parent=39 // pred_check
          %p1112 = pneg %p149
        $region42: #{resnet_basicblock_forward.6} parent=39 // pred_check_branch
          %1114 = sbr.rel (%p1112) target = $region44
        $region43: #{resnet_basicblock_forward.6} parent=39 // pred_region
          _
        $region44: #{resnet_basicblock_forward.6} parent=39 // pred_fallthru
          _
        // Predicated region
        $region45: #{resnet_basicblock_forward.6} parent=39 // pred_check
          %p1115 = pneg %p175
        $region46: #{resnet_basicblock_forward.6} parent=39 // pred_check_branch
          %1117 = sbr.rel (%p1115) target = $region48
        $region47: #{resnet_basicblock_forward.6} parent=39 // pred_region
          %s1119 = ssub.s32 32, 32
          %1120 = vsyncadd %s1108, %s1119
          %s1121 = smul.addr %s21, 32
          %s1122 = scalar_lea.hbm %s6, %s1121
          %s1124 = sshll.u32 %s1111, 4
          %s1125 = int_to_ptr.vmem [resolvable:$true] %s1124
          %1127 = dma.vmem_to_hbm [thread:$0]  %s1125, 32, %s1122, %s1108
        $region48: #{resnet_basicblock_forward.6} parent=39 // pred_fallthru
          _
      $region40: #{resnet_basicblock_forward.6} parent=5 // pred_fallthru
        _
      %p1128 = scmp.le.s32.totalorder 2, %s16
      // Predicated region
      $region49: #{resnet_basicblock_forward.6} parent=5 // pred_check
        %p1129 = pneg %p1128
      $region50: #{resnet_basicblock_forward.6} parent=5 // pred_check_branch
        %1131 = sbr.rel (%p1129) target = $region52
      $region51: #{resnet_basicblock_forward.6} parent=5 // pred_region
        %s1132 = ssub.s32 %s16, 2
        // Predicated region
        $region53: #{resnet_basicblock_forward.6} parent=51 // pred_check
          %p1133 = pneg %p155
        $region54: #{resnet_basicblock_forward.6} parent=51 // pred_check_branch
          %1135 = sbr.rel (%p1133) target = $region56
        $region55: #{resnet_basicblock_forward.6} parent=51 // pred_region
          %p1136 = scmp.lt.s32.totalorder %s22, 1
          %s1137 = scalar_select %p1136, %s22, 1
          %s1138 = smul.addr %s1137, 8
          %s1139 = smul.addr %s1138, 8
          %s1140 = scalar_lea.vmem %s5, %s1139
        $region56: #{resnet_basicblock_forward.6} parent=51 // pred_fallthru
          _
        // Predicated region
        $region57: #{resnet_basicblock_forward.6} parent=51 // pred_check
          %p1141 = pneg %p181
        $region58: #{resnet_basicblock_forward.6} parent=51 // pred_check_branch
          %1143 = sbr.rel (%p1141) target = $region60
        $region59: #{resnet_basicblock_forward.6} parent=51 // pred_region
          %s1144 = sand.u32 %s166, 1
          %s1145 = scalar_lea.sflag [#allocation5], %s1144
          %s1146 = sand.u32 %s166, 1
          %s1147 = smul.addr %s1146, 2
          %s1148 = scalar_lea.vmem [#allocation4], %s1147
          %1149 = dma.done %s1145, 32
        $region60: #{resnet_basicblock_forward.6} parent=51 // pred_fallthru
          _
      $region52: #{resnet_basicblock_forward.6} parent=5 // pred_fallthru
        _
    $region6: #{resnet_basicblock_forward.6} parent=1 // loop_footer
      %s20 = sadd.s32 1, %s16
    $region7: #{resnet_basicblock_forward.6} parent=1 // loop_footer_branch
      %15 = sbr.rel target = $region3
    $region8: #{resnet_basicblock_forward.6} parent=1 // loop_exit
      _
    %1150 = vsyncpa [#allocation5], 1
    %s1151 = scalar_lea.sflag [#allocation5], 1
    %1152 = vsyncpa %s1151, 1

// kernel: resnet_basicblock_forward.5
$region0: #{resnet_basicblock_forward.5}
  #allocation0 [shape = 'u32[]', space=smem, size = 0x4, offset = 0x4, fixed_abs, tag = 'smem constant byte address 0x4 - core index']
  #allocation1 [shape = 'u32[144,128]{1,0:T(1,128)}', space=vmem, size = 0x12000, scoped, tag = 'internal scratch']
  #allocation2 [shape = 'f32[10,10,128]{2,1,0:T(8,128)}', space=vmem, size = 0x14000, scoped, tag = 'scratch operand']
  #allocation3 [shape = 'f32[64,128]{1,0:T(8,128)}', space=vmem, size = 0x8000, scoped, tag = 'scratch operand']
  %s0 = inlined_call_operand.vmem [shape: f32[2,8,8,128], index: 0, kind: input, shape index: {}]
  %s1 = inlined_call_operand.vmem [shape: f32[9,128,128], index: 1, kind: input, shape index: {}]
  %s2 = inlined_call_operand.vmem [shape: f32[1,128], index: 2, kind: input, shape index: {}]
  %s3 = inlined_call_operand.vmem [shape: f32[1,128], index: 3, kind: input, shape index: {}]
  %s4 = inlined_call_operand.vmem [shape: f32[1,128], index: 4, kind: input, shape index: {}]
  %s5 = inlined_call_operand.vmem [shape: f32[2,8,8,128], index: 5, kind: output, shape index: {0}]
  %s6 = inlined_call_operand.vmem [shape: f32[2,2,128], index: 6, kind: output, shape index: {1}]
  %7 = xla_tuple %s5, %s6
  %s8 = sld [smem:[#allocation0]]
  $region61: #{resnet_basicblock_forward.5} parent=0
    _
  %s10 = ssub.s32 1, %s8
  %s11 = scalar_select 0, %s10, %s8
  loop: start=0, step=1, limit=4
  $region2: #{resnet_basicblock_forward.5} parent=0 // loop_pre_header
    _
  $region3: #{resnet_basicblock_forward.5} parent=0 // loop_header
    %s13 = sphi 0, %s17
    %p14 = scmp.ge.s32.totalorder %s13, 4
    %s23 = sphi 0, %s25
    %s26 = sphi 0, %s23
    %s27 = sphi 0, %s26
    %s43 = sphi 0, %s27
    %s47 = sphi 0, %s47
    %s49 = sphi 0, %s47
    %s50 = sphi 0, %s49
    %s64 = sphi 0, %s50
    %s68 = sphi 0, %s68
    %s70 = sphi 0, %s68
    %s71 = sphi 0, %s70
    %s85 = sphi 0, %s71
    %s89 = sphi 0, %s89
    %s91 = sphi 0, %s89
    %s92 = sphi 0, %s91
    %s106 = sphi 0, %s92
    %s110 = sphi 0, %s110
    %s112 = sphi 0, %s110
    %s113 = sphi 0, %s112
    %s127 = sphi 0, %s113
    %s133 = sphi 0, %s135
    %s136 = sphi 0, %s133
    %s137 = sphi 0, %s136
    %s153 = sphi 0, %s137
    %s159 = sphi 0, %s161
    %s162 = sphi 0, %s159
    %s163 = sphi 0, %s162
    %s179 = sphi 0, %s163
  $region4: #{resnet_basicblock_forward.5} parent=0 // loop_header_branch
    %16 = sbr.rel (%p14) target = $region8
  $region5: #{resnet_basicblock_forward.5} parent=0 // loop_body
    %s18 = ssub.s32 %s13, 1
    %s19 = ssub.s32 %s13, 2
    %s20 = sadd.s32 %s13, 1
    %s21 = ssub.s32 %s13, %s20
    %p22 = scmp.eq.s32.totalorder %s21, 0
    %s24 = sadd.s32 %s23, 1
    %s25 = scalar_select %p22, %s23, %s24
    %p28 = pneg %p22
    %p29 = scmp.eq.s32.totalorder %s13, 1
    %p30 = por %p28, %p29
    %p31 = scmp.ne.s32.totalorder %s23, %s26
    %p32 = scmp.eq.s32.totalorder %s13, 0
    %p33 = por %p31, %p32
    %p34 = scmp.ne.s32.totalorder %s23, %s26
    %p35 = scmp.eq.s32.totalorder %s18, 1
    %p36 = por %p34, %p35
    %p37 = scmp.ne.s32.totalorder %s26, %s27
    %p38 = scmp.eq.s32.totalorder %s18, 0
    %p39 = por %p37, %p38
    %p40 = scmp.ne.s32.totalorder %s26, %s27
    %p41 = scmp.eq.s32.totalorder %s19, 1
    %p42 = por %p40, %p41
    %p44 = scmp.ne.s32.totalorder %s27, %s43
    %p45 = scmp.eq.s32.totalorder %s19, 0
    %p46 = por %p44, %p45
    %s48 = sadd.s32 %s47, 1
    %p51 = scmp.eq.s32.totalorder %s13, 1
    %p52 = scmp.ne.s32.totalorder %s47, %s49
    %p53 = scmp.eq.s32.totalorder %s13, 0
    %p54 = por %p52, %p53
    %p55 = scmp.ne.s32.totalorder %s47, %s49
    %p56 = scmp.eq.s32.totalorder %s18, 1
    %p57 = por %p55, %p56
    %p58 = scmp.ne.s32.totalorder %s49, %s50
    %p59 = scmp.eq.s32.totalorder %s18, 0
    %p60 = por %p58, %p59
    %p61 = scmp.ne.s32.totalorder %s49, %s50
    %p62 = scmp.eq.s32.totalorder %s19, 1
    %p63 = por %p61, %p62
    %p65 = scmp.ne.s32.totalorder %s50, %s64
    %p66 = scmp.eq.s32.totalorder %s19, 0
    %p67 = por %p65, %p66
    %s69 = sadd.s32 %s68, 1
    %p72 = scmp.eq.s32.totalorder %s13, 1
    %p73 = scmp.ne.s32.totalorder %s68, %s70
    %p74 = scmp.eq.s32.totalorder %s13, 0
    %p75 = por %p73, %p74
    %p76 = scmp.ne.s32.totalorder %s68, %s70
    %p77 = scmp.eq.s32.totalorder %s18, 1
    %p78 = por %p76, %p77
    %p79 = scmp.ne.s32.totalorder %s70, %s71
    %p80 = scmp.eq.s32.totalorder %s18, 0
    %p81 = por %p79, %p80
    %p82 = scmp.ne.s32.totalorder %s70, %s71
    %p83 = scmp.eq.s32.totalorder %s19, 1
    %p84 = por %p82, %p83
    %p86 = scmp.ne.s32.totalorder %s71, %s85
    %p87 = scmp.eq.s32.totalorder %s19, 0
    %p88 = por %p86, %p87
    %s90 = sadd.s32 %s89, 1
    %p93 = scmp.eq.s32.totalorder %s13, 1
    %p94 = scmp.ne.s32.totalorder %s89, %s91
    %p95 = scmp.eq.s32.totalorder %s13, 0
    %p96 = por %p94, %p95
    %p97 = scmp.ne.s32.totalorder %s89, %s91
    %p98 = scmp.eq.s32.totalorder %s18, 1
    %p99 = por %p97, %p98
    %p100 = scmp.ne.s32.totalorder %s91, %s92
    %p101 = scmp.eq.s32.totalorder %s18, 0
    %p102 = por %p100, %p101
    %p103 = scmp.ne.s32.totalorder %s91, %s92
    %p104 = scmp.eq.s32.totalorder %s19, 1
    %p105 = por %p103, %p104
    %p107 = scmp.ne.s32.totalorder %s92, %s106
    %p108 = scmp.eq.s32.totalorder %s19, 0
    %p109 = por %p107, %p108
    %s111 = sadd.s32 %s110, 1
    %p114 = scmp.eq.s32.totalorder %s13, 1
    %p115 = scmp.ne.s32.totalorder %s110, %s112
    %p116 = scmp.eq.s32.totalorder %s13, 0
    %p117 = por %p115, %p116
    %p118 = scmp.ne.s32.totalorder %s110, %s112
    %p119 = scmp.eq.s32.totalorder %s18, 1
    %p120 = por %p118, %p119
    %p121 = scmp.ne.s32.totalorder %s112, %s113
    %p122 = scmp.eq.s32.totalorder %s18, 0
    %p123 = por %p121, %p122
    %p124 = scmp.ne.s32.totalorder %s112, %s113
    %p125 = scmp.eq.s32.totalorder %s19, 1
    %p126 = por %p124, %p125
    %p128 = scmp.ne.s32.totalorder %s113, %s127
    %p129 = scmp.eq.s32.totalorder %s19, 0
    %p130 = por %p128, %p129
    %s131 = ssub.s32 %s13, %s20
    %p132 = scmp.eq.s32.totalorder %s131, 0
    %s134 = sadd.s32 %s133, 1
    %s135 = scalar_select %p132, %s133, %s134
    %p138 = pneg %p132
    %p139 = scmp.eq.s32.totalorder %s13, 1
    %p140 = por %p138, %p139
    %p141 = scmp.ne.s32.totalorder %s133, %s136
    %p142 = scmp.eq.s32.totalorder %s13, 0
    %p143 = por %p141, %p142
    %p144 = scmp.ne.s32.totalorder %s133, %s136
    %p145 = scmp.eq.s32.totalorder %s18, 1
    %p146 = por %p144, %p145
    %p147 = scmp.ne.s32.totalorder %s136, %s137
    %p148 = scmp.eq.s32.totalorder %s18, 0
    %p149 = por %p147, %p148
    %p150 = scmp.ne.s32.totalorder %s136, %s137
    %p151 = scmp.eq.s32.totalorder %s19, 1
    %p152 = por %p150, %p151
    %p154 = scmp.ne.s32.totalorder %s137, %s153
    %p155 = scmp.eq.s32.totalorder %s19, 0
    %p156 = por %p154, %p155
    %s157 = ssub.s32 %s13, %s20
    %p158 = scmp.eq.s32.totalorder %s157, 0
    %s160 = sadd.s32 %s159, 1
    %s161 = scalar_select %p158, %s159, %s160
    %p164 = pneg %p158
    %p165 = scmp.eq.s32.totalorder %s13, 1
    %p166 = por %p164, %p165
    %p167 = scmp.ne.s32.totalorder %s159, %s162
    %p168 = scmp.eq.s32.totalorder %s13, 0
    %p169 = por %p167, %p168
    %p170 = scmp.ne.s32.totalorder %s159, %s162
    %p171 = scmp.eq.s32.totalorder %s18, 1
    %p172 = por %p170, %p171
    %p173 = scmp.ne.s32.totalorder %s162, %s163
    %p174 = scmp.eq.s32.totalorder %s18, 0
    %p175 = por %p173, %p174
    %p176 = scmp.ne.s32.totalorder %s162, %s163
    %p177 = scmp.eq.s32.totalorder %s19, 1
    %p178 = por %p176, %p177
    %p180 = scmp.ne.s32.totalorder %s163, %s179
    %p181 = scmp.eq.s32.totalorder %s19, 0
    %p182 = por %p180, %p181
    %p183 = scmp.le.s32.totalorder 1, %s13
    %p184 = scmp.lt.s32.totalorder %s13, 3
    %p185 = pnand %p183, %p184
    %p186 = pneg %p185
    // Predicated region
    $region9: #{resnet_basicblock_forward.5} parent=5 // pred_check
      _
    $region10: #{resnet_basicblock_forward.5} parent=5 // pred_check_branch
      %188 = sbr.rel (%p185) target = $region12
    $region11: #{resnet_basicblock_forward.5} parent=5 // pred_region
      %s189 = ssub.s32 %s13, 1
      // Predicated region
      $region13: #{resnet_basicblock_forward.5} parent=11 // pred_check
        %p190 = pneg %p60
      $region14: #{resnet_basicblock_forward.5} parent=11 // pred_check_branch
        %192 = sbr.rel (%p190) target = $region16
      $region15: #{resnet_basicblock_forward.5} parent=11 // pred_region
        _
      $region16: #{resnet_basicblock_forward.5} parent=11 // pred_fallthru
        _
      // Predicated region
      $region17: #{resnet_basicblock_forward.5} parent=11 // pred_check
        %p193 = pneg %p81
      $region18: #{resnet_basicblock_forward.5} parent=11 // pred_check_branch
        %195 = sbr.rel (%p193) target = $region20
      $region19: #{resnet_basicblock_forward.5} parent=11 // pred_region
        _
      $region20: #{resnet_basicblock_forward.5} parent=11 // pred_fallthru
        _
      // Predicated region
      $region21: #{resnet_basicblock_forward.5} parent=11 // pred_check
        %p196 = pneg %p102
      $region22: #{resnet_basicblock_forward.5} parent=11 // pred_check_branch
        %198 = sbr.rel (%p196) target = $region24
      $region23: #{resnet_basicblock_forward.5} parent=11 // pred_region
        _
      $region24: #{resnet_basicblock_forward.5} parent=11 // pred_fallthru
        _
      // Predicated region
      $region25: #{resnet_basicblock_forward.5} parent=11 // pred_check
        %p199 = pneg %p123
      $region26: #{resnet_basicblock_forward.5} parent=11 // pred_check_branch
        %201 = sbr.rel (%p199) target = $region28
      $region27: #{resnet_basicblock_forward.5} parent=11 // pred_region
        _
      $region28: #{resnet_basicblock_forward.5} parent=11 // pred_fallthru
        _
    $region12: #{resnet_basicblock_forward.5} parent=5 // pred_fallthru
      _
    %p202 = scmp.lt.s32.totalorder %s13, 2
    // Predicated region
    $region29: #{resnet_basicblock_forward.5} parent=5 // pred_check
      %p203 = pneg %p202
    $region30: #{resnet_basicblock_forward.5} parent=5 // pred_check_branch
      %205 = sbr.rel (%p203) target = $region32
    $region31: #{resnet_basicblock_forward.5} parent=5 // pred_region
      // Predicated region
      $region33: #{resnet_basicblock_forward.5} parent=31 // pred_check
        %p206 = pneg %p33
      $region34: #{resnet_basicblock_forward.5} parent=31 // pred_check_branch
        %208 = sbr.rel (%p206) target = $region36
      $region35: #{resnet_basicblock_forward.5} parent=31 // pred_region
        %p209 = scmp.lt.s32.totalorder %s13, 1
        %s210 = scalar_select %p209, %s13, 1
        %s211 = smul.addr %s210, 8
        %s212 = smul.addr %s211, 8
        %s213 = scalar_lea.vmem %s0, %s212
      $region36: #{resnet_basicblock_forward.5} parent=31 // pred_fallthru
        _
    $region32: #{resnet_basicblock_forward.5} parent=5 // pred_fallthru
      _
    %p214 = scmp.le.s32.totalorder 1, %s13
    %p215 = scmp.lt.s32.totalorder %s13, 3
    %p216 = pnand %p214, %p215
    %p217 = pneg %p216
    // Predicated region
    $region37: #{resnet_basicblock_forward.5} parent=5 // pred_check
      _
    $region38: #{resnet_basicblock_forward.5} parent=5 // pred_check_branch
      %219 = sbr.rel (%p216) target = $region40
    $region39: #{resnet_basicblock_forward.5} parent=5 // pred_region
      %s220 = ssub.s32 %s13, 1
      %p221 = scmp.lt.s32.totalorder %s18, 1
      %s222 = scalar_select %p221, %s18, 1
      %s223 = smul.addr %s222, 8
      %s224 = smul.addr %s223, 8
      %s225 = scalar_lea.vmem %s0, %s224
      %p226 = pneg %p39
      %p227 = pneg %p36
      %p228 = pneg %p60
      %p229 = pneg %p57
      %p230 = pneg %p81
      %p231 = pneg %p78
      %p232 = pneg %p102
      %p233 = pneg %p99
      %p234 = pneg %p123
      %p235 = pneg %p120
      %p236 = pneg %p149
      %p237 = pneg %p146
      %p238 = scmp.lt.s32.totalorder %s18, 1
      %s239 = scalar_select %p238, %s18, 1
      %s240 = smul.addr %s239, 8
      %s241 = smul.addr %s240, 8
      %s242 = scalar_lea.vmem %s5, %s241
      %p243 = pneg %p175
      %p244 = pneg %p172
      %p245 = scmp.lt.s32.totalorder %s18, 1
      %s246 = scalar_select %p245, %s18, 1
      %s247 = smul.addr %s246, 2
      %s248 = scalar_lea.vmem %s6, %s247
      %p249 = scmp.lt.s32.totalorder %s18, 1
      %s250 = scalar_select %p249, %s18, 1
      %s251 = smul.addr %s250, 8
      %s252 = smul.addr %s251, 8
      %s253 = scalar_lea.vmem %s0, %s252
      %p254 = scmp.lt.s32.totalorder %s18, 1
      %s255 = scalar_select %p254, %s18, 1
      %s256 = smul.addr %s255, 8
      %s257 = smul.addr %s256, 8
      %s258 = scalar_lea.vmem %s5, %s257
      %p259 = scmp.lt.s32.totalorder %s18, 1
      %s260 = scalar_select %p259, %s18, 1
      %s261 = smul.addr %s260, 2
      %s262 = scalar_lea.vmem %s6, %s261
      %v263 = vld [vmem:[%s253] sm:$0xff]
      %v264 = vld [vmem:[%s253 + $0x8] sm:$0xff]
      %v265 = vld [vmem:[%s253 + $0x10] sm:$0xff]
      %v266 = vld [vmem:[%s253 + $0x18] sm:$0xff]
      %v267 = vld [vmem:[%s253 + $0x20] sm:$0xff]
      %v268 = vld [vmem:[%s253 + $0x28] sm:$0xff]
      %v269 = vld [vmem:[%s253 + $0x30] sm:$0xff]
      %v270 = vld [vmem:[%s253 + $0x38] sm:$0xff]
      %v271 = vld [vmem:[%s3] sm:$0x1]
      %v273 = vlaneseq
      %v274 = vshrl.u32 %v273, 7
      %v275 = vsub.s32 0, %v274
      %v276 = vrot.slane %v271, %v275
      %v278 = vmul.f32 %v263, %v276
      %v279 = vmul.f32 %v264, %v276
      %v280 = vmul.f32 %v265, %v276
      %v281 = vmul.f32 %v266, %v276
      %v282 = vmul.f32 %v267, %v276
      %v283 = vmul.f32 %v268, %v276
      %v284 = vmul.f32 %v269, %v276
      %v285 = vmul.f32 %v270, %v276
      %v286 = vld [vmem:[%s4] sm:$0x1]
      %v288 = vlaneseq
      %v289 = vshrl.u32 %v288, 7
      %v290 = vsub.s32 0, %v289
      %v291 = vrot.slane %v286, %v290
      %v293 = vadd.f32 %v278, %v291
      %v294 = vadd.f32 %v279, %v291
      %v295 = vadd.f32 %v280, %v291
      %v296 = vadd.f32 %v281, %v291
      %v297 = vadd.f32 %v282, %v291
      %v298 = vadd.f32 %v283, %v291
      %v299 = vadd.f32 %v284, %v291
      %v300 = vadd.f32 %v285, %v291
      %v301 = vmax.f32 %v293, 0.0
      %v302 = vmax.f32 %v294, 0.0
      %v303 = vmax.f32 %v295, 0.0
      %v304 = vmax.f32 %v296, 0.0
      %v305 = vmax.f32 %v297, 0.0
      %v306 = vmax.f32 %v298, 0.0
      %v307 = vmax.f32 %v299, 0.0
      %v308 = vmax.f32 %v300, 0.0
      %309 = vst [vmem:[#allocation2] sm:$0xff] 0.0
      %310 = vst [vmem:[#allocation2 + $0x8] sm:$0x3] 0.0
      %311 = vst [vmem:[#allocation2 + $0x10] sm:$0xff] 0.0
      %312 = vst [vmem:[#allocation2 + $0x18] sm:$0x3] 0.0
      %313 = vst [vmem:[#allocation2 + $0x20] sm:$0xff] 0.0
      %314 = vst [vmem:[#allocation2 + $0x28] sm:$0x3] 0.0
      %315 = vst [vmem:[#allocation2 + $0x30] sm:$0xff] 0.0
      %316 = vst [vmem:[#allocation2 + $0x38] sm:$0x3] 0.0
      %317 = vst [vmem:[#allocation2 + $0x40] sm:$0xff] 0.0
      %318 = vst [vmem:[#allocation2 + $0x48] sm:$0x3] 0.0
      %319 = vst [vmem:[#allocation2 + $0x50] sm:$0xff] 0.0
      %320 = vst [vmem:[#allocation2 + $0x58] sm:$0x3] 0.0
      %321 = vst [vmem:[#allocation2 + $0x60] sm:$0xff] 0.0
      %322 = vst [vmem:[#allocation2 + $0x68] sm:$0x3] 0.0
      %323 = vst [vmem:[#allocation2 + $0x70] sm:$0xff] 0.0
      %324 = vst [vmem:[#allocation2 + $0x78] sm:$0x3] 0.0
      %325 = vst [vmem:[#allocation2 + $0x80] sm:$0xff] 0.0
      %326 = vst [vmem:[#allocation2 + $0x88] sm:$0x3] 0.0
      %327 = vst [vmem:[#allocation2 + $0x90] sm:$0xff] 0.0
      %328 = vst [vmem:[#allocation2 + $0x98] sm:$0x3] 0.0
      %s329 = scalar_lea.vmem [#allocation2], 16
      %330 = vst [vmem:[%s329 + $0x1] sm:$0xff] %v301
      %331 = vst [vmem:[%s329 + $0x11] sm:$0xff] %v302
      %332 = vst [vmem:[%s329 + $0x21] sm:$0xff] %v303
      %333 = vst [vmem:[%s329 + $0x31] sm:$0xff] %v304
      %334 = vst [vmem:[%s329 + $0x41] sm:$0xff] %v305
      %335 = vst [vmem:[%s329 + $0x51] sm:$0xff] %v306
      %336 = vst [vmem:[%s329 + $0x61] sm:$0xff] %v307
      %337 = vst [vmem:[%s329 + $0x71] sm:$0xff] %v308
      %v338 = vld [vmem:[#allocation2] sm:$0xff]
      %v339 = vld [vmem:[#allocation2 + $0x10] sm:$0xff]
      %v340 = vld [vmem:[#allocation2 + $0x20] sm:$0xff]
      %v341 = vld [vmem:[#allocation2 + $0x30] sm:$0xff]
      %v342 = vld [vmem:[#allocation2 + $0x40] sm:$0xff]
      %v343 = vld [vmem:[#allocation2 + $0x50] sm:$0xff]
      %v344 = vld [vmem:[#allocation2 + $0x60] sm:$0xff]
      %v345 = vld [vmem:[#allocation2 + $0x70] sm:$0xff]
      %v346 = vld [vmem:[%s1] sm:$0xff]
      %v347 = vld [vmem:[%s1 + $0x8] sm:$0xff]
      %v348 = vld [vmem:[%s1 + $0x10] sm:$0xff]
      %v349 = vld [vmem:[%s1 + $0x18] sm:$0xff]
      %v350 = vld [vmem:[%s1 + $0x20] sm:$0xff]
      %v351 = vld [vmem:[%s1 + $0x28] sm:$0xff]
      %v352 = vld [vmem:[%s1 + $0x30] sm:$0xff]
      %v353 = vld [vmem:[%s1 + $0x38] sm:$0xff]
      %v354 = vld [vmem:[%s1 + $0x40] sm:$0xff]
      %v355 = vld [vmem:[%s1 + $0x48] sm:$0xff]
      %v356 = vld [vmem:[%s1 + $0x50] sm:$0xff]
      %v357 = vld [vmem:[%s1 + $0x58] sm:$0xff]
      %v358 = vld [vmem:[%s1 + $0x60] sm:$0xff]
      %v359 = vld [vmem:[%s1 + $0x68] sm:$0xff]
      %v360 = vld [vmem:[%s1 + $0x70] sm:$0xff]
      %v361 = vld [vmem:[%s1 + $0x78] sm:$0xff]
      %362 = vmatprep.subr.mxu0 0.0
      %363 = vmatpush1.msra.mxu0 %v361
      %364 = vmatprep.subr.mxu0 0.0
      %365 = vmatpush1.msra.mxu0 %v360
      %366 = vmatprep.subr.mxu0 0.0
      %367 = vmatpush1.msra.mxu0 %v359
      %368 = vmatprep.subr.mxu0 0.0
      %369 = vmatpush1.msra.mxu0 %v358
      %370 = vmatprep.subr.mxu0 0.0
      %371 = vmatpush1.msra.mxu0 %v357
      %372 = vmatprep.subr.mxu0 0.0
      %373 = vmatpush1.msra.mxu0 %v356
      %374 = vmatprep.subr.mxu0 0.0
      %375 = vmatpush1.msra.mxu0 %v355
      %376 = vmatprep.subr.mxu0 0.0
      %377 = vmatpush1.msra.mxu0 %v354
      %378 = vmatprep.subr.mxu0 0.0
      %379 = vmatpush1.msra.mxu0 %v353
      %380 = vmatprep.subr.mxu0 0.0
      %381 = vmatpush1.msra.mxu0 %v352
      %382 = vmatprep.subr.mxu0 0.0
      %383 = vmatpush1.msra.mxu0 %v351
      %384 = vmatprep.subr.mxu0 0.0
      %385 = vmatpush1.msra.mxu0 %v350
      %386 = vmatprep.subr.mxu0 0.0
      %387 = vmatpush1.msra.mxu0 %v349
      %388 = vmatprep.subr.mxu0 0.0
      %389 = vmatpush1.msra.mxu0 %v348
      %390 = vmatprep.subr.mxu0 0.0
      %391 = vmatpush1.msra.mxu0 %v347
      %392 = vmatprep.subr.mxu0 0.0
      %393 = vmatpush1.msra.mxu0 %v346
      %394 = vmatprep.subr.mxu0 0.0
      %395 = vmatpush2.msra.mxu0 0.0
      %396 = vmatprep.subr.mxu0 0.0
      %397 = vmatpush2.msra.mxu0 0.0
      %398 = vmatprep.subr.mxu0 0.0
      %399 = vmatpush2.msra.mxu0 0.0
      %400 = vmatprep.subr.mxu0 0.0
      %401 = vmatpush2.msra.mxu0 0.0
      %402 = vmatprep.subr.mxu0 0.0
      %403 = vmatpush2.msra.mxu0 0.0
      %404 = vmatprep.subr.mxu0 0.0
      %405 = vmatpush2.msra.mxu0 0.0
      %406 = vmatprep.subr.mxu0 0.0
      %407 = vmatpush2.msra.mxu0 0.0
      %408 = vmatprep.subr.mxu0 0.0
      %409 = vmatpush2.msra.mxu0 0.0
      %410 = vmatprep.subr.mxu0 0.0
      %411 = vmatpush2.msra.mxu0 0.0
      %412 = vmatprep.subr.mxu0 0.0
      %413 = vmatpush2.msra.mxu0 0.0
      %414 = vmatprep.subr.mxu0 0.0
      %415 = vmatpush2.msra.mxu0 0.0
      %416 = vmatprep.subr.mxu0 0.0
      %417 = vmatpush2.msra.mxu0 0.0
      %418 = vmatprep.subr.mxu0 0.0
      %419 = vmatpush2.msra.mxu0 0.0
      %420 = vmatprep.subr.mxu0 0.0
      %421 = vmatpush2.msra.mxu0 0.0
      %422 = vmatprep.subr.mxu0 0.0
      %423 = vmatpush2.msra.mxu0 0.0
      %424 = vmatprep.subr.mxu0 0.0
      %425 = vmatpush2.msra.mxu0 0.0
      %426 = vmatprep.mubr.f32.mxu0 0.0
      %427 = vmatmul.mubr.f32.gmra.mxu0 %v338
      %v428 = vpop.f32.mrf.mxu0
      %v429 = vadd.f32 0.0, %v428
      %v430 = vpop.f32.mrf.mxu0
      %431 = vmatprep.mubr.f32.mxu0 0.0
      %432 = vmatmul.mubr.f32.gmra.mxu0 %v339
      %v433 = vpop.f32.mrf.mxu0
      %v434 = vadd.f32 0.0, %v433
      %v435 = vpop.f32.mrf.mxu0
      %436 = vmatprep.mubr.f32.mxu0 0.0
      %437 = vmatmul.mubr.f32.gmra.mxu0 %v340
      %v438 = vpop.f32.mrf.mxu0
      %v439 = vadd.f32 0.0, %v438
      %v440 = vpop.f32.mrf.mxu0
      %441 = vmatprep.mubr.f32.mxu0 0.0
      %442 = vmatmul.mubr.f32.gmra.mxu0 %v341
      %v443 = vpop.f32.mrf.mxu0
      %v444 = vadd.f32 0.0, %v443
      %v445 = vpop.f32.mrf.mxu0
      %446 = vmatprep.mubr.f32.mxu0 0.0
      %447 = vmatmul.mubr.f32.gmra.mxu0 %v342
      %v448 = vpop.f32.mrf.mxu0
      %v449 = vadd.f32 0.0, %v448
      %v450 = vpop.f32.mrf.mxu0
      %451 = vmatprep.mubr.f32.mxu0 0.0
      %452 = vmatmul.mubr.f32.gmra.mxu0 %v343
      %v453 = vpop.f32.mrf.mxu0
      %v454 = vadd.f32 0.0, %v453
      %v455 = vpop.f32.mrf.mxu0
      %456 = vmatprep.mubr.f32.mxu0 0.0
      %457 = vmatmul.mubr.f32.gmra.mxu0 %v344
      %v458 = vpop.f32.mrf.mxu0
      %v459 = vadd.f32 0.0, %v458
      %v460 = vpop.f32.mrf.mxu0
      %461 = vmatprep.mubr.f32.mxu0 0.0
      %462 = vmatmul.mubr.f32.gmra.mxu0 %v345
      %v463 = vpop.f32.mrf.mxu0
      %v464 = vadd.f32 0.0, %v463
      %v465 = vpop.f32.mrf.mxu0
      %466 = vdwg.mxu0
      %467 = vst [vmem:[#allocation3] sm:$0xff] %v429
      %468 = vst [vmem:[#allocation3 + $0x8] sm:$0xff] %v434
      %469 = vst [vmem:[#allocation3 + $0x10] sm:$0xff] %v439
      %470 = vst [vmem:[#allocation3 + $0x18] sm:$0xff] %v444
      %471 = vst [vmem:[#allocation3 + $0x20] sm:$0xff] %v449
      %472 = vst [vmem:[#allocation3 + $0x28] sm:$0xff] %v454
      %473 = vst [vmem:[#allocation3 + $0x30] sm:$0xff] %v459
      %474 = vst [vmem:[#allocation3 + $0x38] sm:$0xff] %v464
      %v475 = vld [vmem:[#allocation2 + $0x1] sm:$0xff]
      %v476 = vld [vmem:[#allocation2 + $0x11] sm:$0xff]
      %v477 = vld [vmem:[#allocation2 + $0x21] sm:$0xff]
      %v478 = vld [vmem:[#allocation2 + $0x31] sm:$0xff]
      %v479 = vld [vmem:[#allocation2 + $0x41] sm:$0xff]
      %v480 = vld [vmem:[#allocation2 + $0x51] sm:$0xff]
      %v481 = vld [vmem:[#allocation2 + $0x61] sm:$0xff]
      %v482 = vld [vmem:[#allocation2 + $0x71] sm:$0xff]
      %s483 = scalar_lea.vmem %s1, 128
      %v484 = vld [vmem:[%s483] sm:$0xff]
      %v485 = vld [vmem:[%s483 + $0x8] sm:$0xff]
      %v486 = vld [vmem:[%s483 + $0x10] sm:$0xff]
      %v487 = vld [vmem:[%s483 + $0x18] sm:$0xff]
      %v488 = vld [vmem:[%s483 + $0x20] sm:$0xff]
      %v489 = vld [vmem:[%s483 + $0x28] sm:$0xff]
      %v490 = vld [vmem:[%s483 + $0x30] sm:$0xff]
      %v491 = vld [vmem:[%s483 + $0x38] sm:$0xff]
      %v492 = vld [vmem:[%s483 + $0x40] sm:$0xff]
      %v493 = vld [vmem:[%s483 + $0x48] sm:$0xff]
      %v494 = vld [vmem:[%s483 + $0x50] sm:$0xff]
      %v495 = vld [vmem:[%s483 + $0x58] sm:$0xff]
      %v496 = vld [vmem:[%s483 + $0x60] sm:$0xff]
      %v497 = vld [vmem:[%s483 + $0x68] sm:$0xff]
      %v498 = vld [vmem:[%s483 + $0x70] sm:$0xff]
      %v499 = vld [vmem:[%s483 + $0x78] sm:$0xff]
      %500 = vmatprep.subr.mxu0 0.0
      %501 = vmatpush1.msra.mxu0 %v499
      %502 = vmatprep.subr.mxu0 0.0
      %503 = vmatpush1.msra.mxu0 %v498
      %504 = vmatprep.subr.mxu0 0.0
      %505 = vmatpush1.msra.mxu0 %v497
      %506 = vmatprep.subr.mxu0 0.0
      %507 = vmatpush1.msra.mxu0 %v496
      %508 = vmatprep.subr.mxu0 0.0
      %509 = vmatpush1.msra.mxu0 %v495
      %510 = vmatprep.subr.mxu0 0.0
      %511 = vmatpush1.msra.mxu0 %v494
      %512 = vmatprep.subr.mxu0 0.0
      %513 = vmatpush1.msra.mxu0 %v493
      %514 = vmatprep.subr.mxu0 0.0
      %515 = vmatpush1.msra.mxu0 %v492
      %516 = vmatprep.subr.mxu0 0.0
      %517 = vmatpush1.msra.mxu0 %v491
      %518 = vmatprep.subr.mxu0 0.0
      %519 = vmatpush1.msra.mxu0 %v490
      %520 = vmatprep.subr.mxu0 0.0
      %521 = vmatpush1.msra.mxu0 %v489
      %522 = vmatprep.subr.mxu0 0.0
      %523 = vmatpush1.msra.mxu0 %v488
      %524 = vmatprep.subr.mxu0 0.0
      %525 = vmatpush1.msra.mxu0 %v487
      %526 = vmatprep.subr.mxu0 0.0
      %527 = vmatpush1.msra.mxu0 %v486
      %528 = vmatprep.subr.mxu0 0.0
      %529 = vmatpush1.msra.mxu0 %v485
      %530 = vmatprep.subr.mxu0 0.0
      %531 = vmatpush1.msra.mxu0 %v484
      %532 = vmatprep.subr.mxu0 0.0
      %533 = vmatpush2.msra.mxu0 0.0
      %534 = vmatprep.subr.mxu0 0.0
      %535 = vmatpush2.msra.mxu0 0.0
      %536 = vmatprep.subr.mxu0 0.0
      %537 = vmatpush2.msra.mxu0 0.0
      %538 = vmatprep.subr.mxu0 0.0
      %539 = vmatpush2.msra.mxu0 0.0
      %540 = vmatprep.subr.mxu0 0.0
      %541 = vmatpush2.msra.mxu0 0.0
      %542 = vmatprep.subr.mxu0 0.0
      %543 = vmatpush2.msra.mxu0 0.0
      %544 = vmatprep.subr.mxu0 0.0
      %545 = vmatpush2.msra.mxu0 0.0
      %546 = vmatprep.subr.mxu0 0.0
      %547 = vmatpush2.msra.mxu0 0.0
      %548 = vmatprep.subr.mxu0 0.0
      %549 = vmatpush2.msra.mxu0 0.0
      %550 = vmatprep.subr.mxu0 0.0
      %551 = vmatpush2.msra.mxu0 0.0
      %552 = vmatprep.subr.mxu0 0.0
      %553 = vmatpush2.msra.mxu0 0.0
      %554 = vmatprep.subr.mxu0 0.0
      %555 = vmatpush2.msra.mxu0 0.0
      %556 = vmatprep.subr.mxu0 0.0
      %557 = vmatpush2.msra.mxu0 0.0
      %558 = vmatprep.subr.mxu0 0.0
      %559 = vmatpush2.msra.mxu0 0.0
      %560 = vmatprep.subr.mxu0 0.0
      %561 = vmatpush2.msra.mxu0 0.0
      %562 = vmatprep.subr.mxu0 0.0
      %563 = vmatpush2.msra.mxu0 0.0
      %564 = vmatprep.mubr.f32.mxu0 0.0
      %565 = vmatmul.mubr.f32.gmra.mxu0 %v475
      %v566 = vpop.f32.mrf.mxu0
      %v567 = vadd.f32 0.0, %v566
      %v568 = vpop.f32.mrf.mxu0
      %569 = vmatprep.mubr.f32.mxu0 0.0
      %570 = vmatmul.mubr.f32.gmra.mxu0 %v476
      %v571 = vpop.f32.mrf.mxu0
      %v572 = vadd.f32 0.0, %v571
      %v573 = vpop.f32.mrf.mxu0
      %574 = vmatprep.mubr.f32.mxu0 0.0
      %575 = vmatmul.mubr.f32.gmra.mxu0 %v477
      %v576 = vpop.f32.mrf.mxu0
      %v577 = vadd.f32 0.0, %v576
      %v578 = vpop.f32.mrf.mxu0
      %579 = vmatprep.mubr.f32.mxu0 0.0
      %580 = vmatmul.mubr.f32.gmra.mxu0 %v478
      %v581 = vpop.f32.mrf.mxu0
      %v582 = vadd.f32 0.0, %v581
      %v583 = vpop.f32.mrf.mxu0
      %584 = vmatprep.mubr.f32.mxu0 0.0
      %585 = vmatmul.mubr.f32.gmra.mxu0 %v479
      %v586 = vpop.f32.mrf.mxu0
      %v587 = vadd.f32 0.0, %v586
      %v588 = vpop.f32.mrf.mxu0
      %589 = vmatprep.mubr.f32.mxu0 0.0
      %590 = vmatmul.mubr.f32.gmra.mxu0 %v480
      %v591 = vpop.f32.mrf.mxu0
      %v592 = vadd.f32 0.0, %v591
      %v593 = vpop.f32.mrf.mxu0
      %594 = vmatprep.mubr.f32.mxu0 0.0
      %595 = vmatmul.mubr.f32.gmra.mxu0 %v481
      %v596 = vpop.f32.mrf.mxu0
      %v597 = vadd.f32 0.0, %v596
      %v598 = vpop.f32.mrf.mxu0
      %599 = vmatprep.mubr.f32.mxu0 0.0
      %600 = vmatmul.mubr.f32.gmra.mxu0 %v482
      %v601 = vpop.f32.mrf.mxu0
      %v602 = vadd.f32 0.0, %v601
      %v603 = vpop.f32.mrf.mxu0
      %604 = vdwg.mxu0
      %v605 = vld [vmem:[#allocation3] sm:$0xff]
      %v606 = vld [vmem:[#allocation3 + $0x8] sm:$0xff]
      %v607 = vld [vmem:[#allocation3 + $0x10] sm:$0xff]
      %v608 = vld [vmem:[#allocation3 + $0x18] sm:$0xff]
      %v609 = vld [vmem:[#allocation3 + $0x20] sm:$0xff]
      %v610 = vld [vmem:[#allocation3 + $0x28] sm:$0xff]
      %v611 = vld [vmem:[#allocation3 + $0x30] sm:$0xff]
      %v612 = vld [vmem:[#allocation3 + $0x38] sm:$0xff]
      %v613 = vadd.f32 %v605, %v567
      %v614 = vadd.f32 %v606, %v572
      %v615 = vadd.f32 %v607, %v577
      %v616 = vadd.f32 %v608, %v582
      %v617 = vadd.f32 %v609, %v587
      %v618 = vadd.f32 %v610, %v592
      %v619 = vadd.f32 %v611, %v597
      %v620 = vadd.f32 %v612, %v602
      %621 = vst [vmem:[#allocation3] sm:$0xff] %v613
      %622 = vst [vmem:[#allocation3 + $0x8] sm:$0xff] %v614
      %623 = vst [vmem:[#allocation3 + $0x10] sm:$0xff] %v615
      %624 = vst [vmem:[#allocation3 + $0x18] sm:$0xff] %v616
      %625 = vst [vmem:[#allocation3 + $0x20] sm:$0xff] %v617
      %626 = vst [vmem:[#allocation3 + $0x28] sm:$0xff] %v618
      %627 = vst [vmem:[#allocation3 + $0x30] sm:$0xff] %v619
      %628 = vst [vmem:[#allocation3 + $0x38] sm:$0xff] %v620
      %v629 = vld [vmem:[#allocation2 + $0x2] sm:$0xff]
      %v630 = vld [vmem:[#allocation2 + $0x12] sm:$0xff]
      %v631 = vld [vmem:[#allocation2 + $0x22] sm:$0xff]
      %v632 = vld [vmem:[#allocation2 + $0x32] sm:$0xff]
      %v633 = vld [vmem:[#allocation2 + $0x42] sm:$0xff]
      %v634 = vld [vmem:[#allocation2 + $0x52] sm:$0xff]
      %v635 = vld [vmem:[#allocation2 + $0x62] sm:$0xff]
      %v636 = vld [vmem:[#allocation2 + $0x72] sm:$0xff]
      %s637 = scalar_lea.vmem %s1, 256
      %v638 = vld [vmem:[%s637] sm:$0xff]
      %v639 = vld [vmem:[%s637 + $0x8] sm:$0xff]
      %v640 = vld [vmem:[%s637 + $0x10] sm:$0xff]
      %v641 = vld [vmem:[%s637 + $0x18] sm:$0xff]
      %v642 = vld [vmem:[%s637 + $0x20] sm:$0xff]
      %v643 = vld [vmem:[%s637 + $0x28] sm:$0xff]
      %v644 = vld [vmem:[%s637 + $0x30] sm:$0xff]
      %v645 = vld [vmem:[%s637 + $0x38] sm:$0xff]
      %v646 = vld [vmem:[%s637 + $0x40] sm:$0xff]
      %v647 = vld [vmem:[%s637 + $0x48] sm:$0xff]
      %v648 = vld [vmem:[%s637 + $0x50] sm:$0xff]
      %v649 = vld [vmem:[%s637 + $0x58] sm:$0xff]
      %v650 = vld [vmem:[%s637 + $0x60] sm:$0xff]
      %v651 = vld [vmem:[%s637 + $0x68] sm:$0xff]
      %v652 = vld [vmem:[%s637 + $0x70] sm:$0xff]
      %v653 = vld [vmem:[%s637 + $0x78] sm:$0xff]
      %654 = vmatprep.subr.mxu0 0.0
      %655 = vmatpush1.msra.mxu0 %v653
      %656 = vmatprep.subr.mxu0 0.0
      %657 = vmatpush1.msra.mxu0 %v652
      %658 = vmatprep.subr.mxu0 0.0
      %659 = vmatpush1.msra.mxu0 %v651
      %660 = vmatprep.subr.mxu0 0.0
      %661 = vmatpush1.msra.mxu0 %v650
      %662 = vmatprep.subr.mxu0 0.0
      %663 = vmatpush1.msra.mxu0 %v649
      %664 = vmatprep.subr.mxu0 0.0
      %665 = vmatpush1.msra.mxu0 %v648
      %666 = vmatprep.subr.mxu0 0.0
      %667 = vmatpush1.msra.mxu0 %v647
      %668 = vmatprep.subr.mxu0 0.0
      %669 = vmatpush1.msra.mxu0 %v646
      %670 = vmatprep.subr.mxu0 0.0
      %671 = vmatpush1.msra.mxu0 %v645
      %672 = vmatprep.subr.mxu0 0.0
      %673 = vmatpush1.msra.mxu0 %v644
      %674 = vmatprep.subr.mxu0 0.0
      %675 = vmatpush1.msra.mxu0 %v643
      %676 = vmatprep.subr.mxu0 0.0
      %677 = vmatpush1.msra.mxu0 %v642
      %678 = vmatprep.subr.mxu0 0.0
      %679 = vmatpush1.msra.mxu0 %v641
      %680 = vmatprep.subr.mxu0 0.0
      %681 = vmatpush1.msra.mxu0 %v640
      %682 = vmatprep.subr.mxu0 0.0
      %683 = vmatpush1.msra.mxu0 %v639
      %684 = vmatprep.subr.mxu0 0.0
      %685 = vmatpush1.msra.mxu0 %v638
      %686 = vmatprep.subr.mxu0 0.0
      %687 = vmatpush2.msra.mxu0 0.0
      %688 = vmatprep.subr.mxu0 0.0
      %689 = vmatpush2.msra.mxu0 0.0
      %690 = vmatprep.subr.mxu0 0.0
      %691 = vmatpush2.msra.mxu0 0.0
      %692 = vmatprep.subr.mxu0 0.0
      %693 = vmatpush2.msra.mxu0 0.0
      %694 = vmatprep.subr.mxu0 0.0
      %695 = vmatpush2.msra.mxu0 0.0
      %696 = vmatprep.subr.mxu0 0.0
      %697 = vmatpush2.msra.mxu0 0.0
      %698 = vmatprep.subr.mxu0 0.0
      %699 = vmatpush2.msra.mxu0 0.0
      %700 = vmatprep.subr.mxu0 0.0
      %701 = vmatpush2.msra.mxu0 0.0
      %702 = vmatprep.subr.mxu0 0.0
      %703 = vmatpush2.msra.mxu0 0.0
      %704 = vmatprep.subr.mxu0 0.0
      %705 = vmatpush2.msra.mxu0 0.0
      %706 = vmatprep.subr.mxu0 0.0
      %707 = vmatpush2.msra.mxu0 0.0
      %708 = vmatprep.subr.mxu0 0.0
      %709 = vmatpush2.msra.mxu0 0.0
      %710 = vmatprep.subr.mxu0 0.0
      %711 = vmatpush2.msra.mxu0 0.0
      %712 = vmatprep.subr.mxu0 0.0
      %713 = vmatpush2.msra.mxu0 0.0
      %714 = vmatprep.subr.mxu0 0.0
      %715 = vmatpush2.msra.mxu0 0.0
      %716 = vmatprep.subr.mxu0 0.0
      %717 = vmatpush2.msra.mxu0 0.0
      %718 = vmatprep.mubr.f32.mxu0 0.0
      %719 = vmatmul.mubr.f32.gmra.mxu0 %v629
      %v720 = vpop.f32.mrf.mxu0
      %v721 = vadd.f32 0.0, %v720
      %v722 = vpop.f32.mrf.mxu0
      %723 = vmatprep.mubr.f32.mxu0 0.0
      %724 = vmatmul.mubr.f32.gmra.mxu0 %v630
      %v725 = vpop.f32.mrf.mxu0
      %v726 = vadd.f32 0.0, %v725
      %v727 = vpop.f32.mrf.mxu0
      %728 = vmatprep.mubr.f32.mxu0 0.0
      %729 = vmatmul.mubr.f32.gmra.mxu0 %v631
      %v730 = vpop.f32.mrf.mxu0
      %v731 = vadd.f32 0.0, %v730
      %v732 = vpop.f32.mrf.mxu0
      %733 = vmatprep.mubr.f32.mxu0 0.0
      %734 = vmatmul.mubr.f32.gmra.mxu0 %v632
      %v735 = vpop.f32.mrf.mxu0
      %v736 = vadd.f32 0.0, %v735
      %v737 = vpop.f32.mrf.mxu0
      %738 = vmatprep.mubr.f32.mxu0 0.0
      %739 = vmatmul.mubr.f32.gmra.mxu0 %v633
      %v740 = vpop.f32.mrf.mxu0
      %v741 = vadd.f32 0.0, %v740
      %v742 = vpop.f32.mrf.mxu0
      %743 = vmatprep.mubr.f32.mxu0 0.0
      %744 = vmatmul.mubr.f32.gmra.mxu0 %v634
      %v745 = vpop.f32.mrf.mxu0
      %v746 = vadd.f32 0.0, %v745
      %v747 = vpop.f32.mrf.mxu0
      %748 = vmatprep.mubr.f32.mxu0 0.0
      %749 = vmatmul.mubr.f32.gmra.mxu0 %v635
      %v750 = vpop.f32.mrf.mxu0
      %v751 = vadd.f32 0.0, %v750
      %v752 = vpop.f32.mrf.mxu0
      %753 = vmatprep.mubr.f32.mxu0 0.0
      %754 = vmatmul.mubr.f32.gmra.mxu0 %v636
      %v755 = vpop.f32.mrf.mxu0
      %v756 = vadd.f32 0.0, %v755
      %v757 = vpop.f32.mrf.mxu0
      %758 = vdwg.mxu0
      %v759 = vld [vmem:[#allocation3] sm:$0xff]
      %v760 = vld [vmem:[#allocation3 + $0x8] sm:$0xff]
      %v761 = vld [vmem:[#allocation3 + $0x10] sm:$0xff]
      %v762 = vld [vmem:[#allocation3 + $0x18] sm:$0xff]
      %v763 = vld [vmem:[#allocation3 + $0x20] sm:$0xff]
      %v764 = vld [vmem:[#allocation3 + $0x28] sm:$0xff]
      %v765 = vld [vmem:[#allocation3 + $0x30] sm:$0xff]
      %v766 = vld [vmem:[#allocation3 + $0x38] sm:$0xff]
      %v767 = vadd.f32 %v759, %v721
      %v768 = vadd.f32 %v760, %v726
      %v769 = vadd.f32 %v761, %v731
      %v770 = vadd.f32 %v762, %v736
      %v771 = vadd.f32 %v763, %v741
      %v772 = vadd.f32 %v764, %v746
      %v773 = vadd.f32 %v765, %v751
      %v774 = vadd.f32 %v766, %v756
      %775 = vst [vmem:[#allocation3] sm:$0xff] %v767
      %776 = vst [vmem:[#allocation3 + $0x8] sm:$0xff] %v768
      %777 = vst [vmem:[#allocation3 + $0x10] sm:$0xff] %v769
      %778 = vst [vmem:[#allocation3 + $0x18] sm:$0xff] %v770
      %779 = vst [vmem:[#allocation3 + $0x20] sm:$0xff] %v771
      %780 = vst [vmem:[#allocation3 + $0x28] sm:$0xff] %v772
      %781 = vst [vmem:[#allocation3 + $0x30] sm:$0xff] %v773
      %782 = vst [vmem:[#allocation3 + $0x38] sm:$0xff] %v774
      %v783 = vld [vmem:[%s329] sm:$0xff]
      %v784 = vld [vmem:[%s329 + $0x10] sm:$0xff]
      %v785 = vld [vmem:[%s329 + $0x20] sm:$0xff]
      %v786 = vld [vmem:[%s329 + $0x30] sm:$0xff]
      %v787 = vld [vmem:[%s329 + $0x40] sm:$0xff]
      %v788 = vld [vmem:[%s329 + $0x50] sm:$0xff]
      %v789 = vld [vmem:[%s329 + $0x60] sm:$0xff]
      %v790 = vld [vmem:[%s329 + $0x70] sm:$0xff]
      %s791 = scalar_lea.vmem %s1, 384
      %v792 = vld [vmem:[%s791] sm:$0xff]
      %v793 = vld [vmem:[%s791 + $0x8] sm:$0xff]
      %v794 = vld [vmem:[%s791 + $0x10] sm:$0xff]
      %v795 = vld [vmem:[%s791 + $0x18] sm:$0xff]
      %v796 = vld [vmem:[%s791 + $0x20] sm:$0xff]
      %v797 = vld [vmem:[%s791 + $0x28] sm:$0xff]
      %v798 = vld [vmem:[%s791 + $0x30] sm:$0xff]
      %v799 = vld [vmem:[%s791 + $0x38] sm:$0xff]
      %v800 = vld [vmem:[%s791 + $0x40] sm:$0xff]
      %v801 = vld [vmem:[%s791 + $0x48] sm:$0xff]
      %v802 = vld [vmem:[%s791 + $0x50] sm:$0xff]
      %v803 = vld [vmem:[%s791 + $0x58] sm:$0xff]
      %v804 = vld [vmem:[%s791 + $0x60] sm:$0xff]
      %v805 = vld [vmem:[%s791 + $0x68] sm:$0xff]
      %v806 = vld [vmem:[%s791 + $0x70] sm:$0xff]
      %v807 = vld [vmem:[%s791 + $0x78] sm:$0xff]
      %808 = vmatprep.subr.mxu0 0.0
      %809 = vmatpush1.msra.mxu0 %v807
      %810 = vmatprep.subr.mxu0 0.0
      %811 = vmatpush1.msra.mxu0 %v806
      %812 = vmatprep.subr.mxu0 0.0
      %813 = vmatpush1.msra.mxu0 %v805
      %814 = vmatprep.subr.mxu0 0.0
      %815 = vmatpush1.msra.mxu0 %v804
      %816 = vmatprep.subr.mxu0 0.0
      %817 = vmatpush1.msra.mxu0 %v803
      %818 = vmatprep.subr.mxu0 0.0
      %819 = vmatpush1.msra.mxu0 %v802
      %820 = vmatprep.subr.mxu0 0.0
      %821 = vmatpush1.msra.mxu0 %v801
      %822 = vmatprep.subr.mxu0 0.0
      %823 = vmatpush1.msra.mxu0 %v800
      %824 = vmatprep.subr.mxu0 0.0
      %825 = vmatpush1.msra.mxu0 %v799
      %826 = vmatprep.subr.mxu0 0.0
      %827 = vmatpush1.msra.mxu0 %v798
      %828 = vmatprep.subr.mxu0 0.0
      %829 = vmatpush1.msra.mxu0 %v797
      %830 = vmatprep.subr.mxu0 0.0
      %831 = vmatpush1.msra.mxu0 %v796
      %832 = vmatprep.subr.mxu0 0.0
      %833 = vmatpush1.msra.mxu0 %v795
      %834 = vmatprep.subr.mxu0 0.0
      %835 = vmatpush1.msra.mxu0 %v794
      %836 = vmatprep.subr.mxu0 0.0
      %837 = vmatpush1.msra.mxu0 %v793
      %838 = vmatprep.subr.mxu0 0.0
      %839 = vmatpush1.msra.mxu0 %v792
      %840 = vmatprep.subr.mxu0 0.0
      %841 = vmatpush2.msra.mxu0 0.0
      %842 = vmatprep.subr.mxu0 0.0
      %843 = vmatpush2.msra.mxu0 0.0
      %844 = vmatprep.subr.mxu0 0.0
      %845 = vmatpush2.msra.mxu0 0.0
      %846 = vmatprep.subr.mxu0 0.0
      %847 = vmatpush2.msra.mxu0 0.0
      %848 = vmatprep.subr.mxu0 0.0
      %849 = vmatpush2.msra.mxu0 0.0
      %850 = vmatprep.subr.mxu0 0.0
      %851 = vmatpush2.msra.mxu0 0.0
      %852 = vmatprep.subr.mxu0 0.0
      %853 = vmatpush2.msra.mxu0 0.0
      %854 = vmatprep.subr.mxu0 0.0
      %855 = vmatpush2.msra.mxu0 0.0
      %856 = vmatprep.subr.mxu0 0.0
      %857 = vmatpush2.msra.mxu0 0.0
      %858 = vmatprep.subr.mxu0 0.0
      %859 = vmatpush2.msra.mxu0 0.0
      %860 = vmatprep.subr.mxu0 0.0
      %861 = vmatpush2.msra.mxu0 0.0
      %862 = vmatprep.subr.mxu0 0.0
      %863 = vmatpush2.msra.mxu0 0.0
      %864 = vmatprep.subr.mxu0 0.0
      %865 = vmatpush2.msra.mxu0 0.0
      %866 = vmatprep.subr.mxu0 0.0
      %867 = vmatpush2.msra.mxu0 0.0
      %868 = vmatprep.subr.mxu0 0.0
      %869 = vmatpush2.msra.mxu0 0.0
      %870 = vmatprep.subr.mxu0 0.0
      %871 = vmatpush2.msra.mxu0 0.0
      %872 = vmatprep.mubr.f32.mxu0 0.0
      %873 = vmatmul.mubr.f32.gmra.mxu0 %v783
      %v874 = vpop.f32.mrf.mxu0
      %v875 = vadd.f32 0.0, %v874
      %v876 = vpop.f32.mrf.mxu0
      %877 = vmatprep.mubr.f32.mxu0 0.0
      %878 = vmatmul.mubr.f32.gmra.mxu0 %v784
      %v879 = vpop.f32.mrf.mxu0
      %v880 = vadd.f32 0.0, %v879
      %v881 = vpop.f32.mrf.mxu0
      %882 = vmatprep.mubr.f32.mxu0 0.0
      %883 = vmatmul.mubr.f32.gmra.mxu0 %v785
      %v884 = vpop.f32.mrf.mxu0
      %v885 = vadd.f32 0.0, %v884
      %v886 = vpop.f32.mrf.mxu0
      %887 = vmatprep.mubr.f32.mxu0 0.0
      %888 = vmatmul.mubr.f32.gmra.mxu0 %v786
      %v889 = vpop.f32.mrf.mxu0
      %v890 = vadd.f32 0.0, %v889
      %v891 = vpop.f32.mrf.mxu0
      %892 = vmatprep.mubr.f32.mxu0 0.0
      %893 = vmatmul.mubr.f32.gmra.mxu0 %v787
      %v894 = vpop.f32.mrf.mxu0
      %v895 = vadd.f32 0.0, %v894
      %v896 = vpop.f32.mrf.mxu0
      %897 = vmatprep.mubr.f32.mxu0 0.0
      %898 = vmatmul.mubr.f32.gmra.mxu0 %v788
      %v899 = vpop.f32.mrf.mxu0
      %v900 = vadd.f32 0.0, %v899
      %v901 = vpop.f32.mrf.mxu0
      %902 = vmatprep.mubr.f32.mxu0 0.0
      %903 = vmatmul.mubr.f32.gmra.mxu0 %v789
      %v904 = vpop.f32.mrf.mxu0
      %v905 = vadd.f32 0.0, %v904
      %v906 = vpop.f32.mrf.mxu0
      %907 = vmatprep.mubr.f32.mxu0 0.0
      %908 = vmatmul.mubr.f32.gmra.mxu0 %v790
      %v909 = vpop.f32.mrf.mxu0
      %v910 = vadd.f32 0.0, %v909
      %v911 = vpop.f32.mrf.mxu0
      %912 = vdwg.mxu0
      %v913 = vld [vmem:[#allocation3] sm:$0xff]
      %v914 = vld [vmem:[#allocation3 + $0x8] sm:$0xff]
      %v915 = vld [vmem:[#allocation3 + $0x10] sm:$0xff]
      %v916 = vld [vmem:[#allocation3 + $0x18] sm:$0xff]
      %v917 = vld [vmem:[#allocation3 + $0x20] sm:$0xff]
      %v918 = vld [vmem:[#allocation3 + $0x28] sm:$0xff]
      %v919 = vld [vmem:[#allocation3 + $0x30] sm:$0xff]
      %v920 = vld [vmem:[#allocation3 + $0x38] sm:$0xff]
      %v921 = vadd.f32 %v913, %v875
      %v922 = vadd.f32 %v914, %v880
      %v923 = vadd.f32 %v915, %v885
      %v924 = vadd.f32 %v916, %v890
      %v925 = vadd.f32 %v917, %v895
      %v926 = vadd.f32 %v918, %v900
      %v927 = vadd.f32 %v919, %v905
      %v928 = vadd.f32 %v920, %v910
      %929 = vst [vmem:[#allocation3] sm:$0xff] %v921
      %930 = vst [vmem:[#allocation3 + $0x8] sm:$0xff] %v922
      %931 = vst [vmem:[#allocation3 + $0x10] sm:$0xff] %v923
      %932 = vst [vmem:[#allocation3 + $0x18] sm:$0xff] %v924
      %933 = vst [vmem:[#allocation3 + $0x20] sm:$0xff] %v925
      %934 = vst [vmem:[#allocation3 + $0x28] sm:$0xff] %v926
      %935 = vst [vmem:[#allocation3 + $0x30] sm:$0xff] %v927
      %936 = vst [vmem:[#allocation3 + $0x38] sm:$0xff] %v928
      %v937 = vld [vmem:[%s329 + $0x1] sm:$0xff]
      %v938 = vld [vmem:[%s329 + $0x11] sm:$0xff]
      %v939 = vld [vmem:[%s329 + $0x21] sm:$0xff]
      %v940 = vld [vmem:[%s329 + $0x31] sm:$0xff]
      %v941 = vld [vmem:[%s329 + $0x41] sm:$0xff]
      %v942 = vld [vmem:[%s329 + $0x51] sm:$0xff]
      %v943 = vld [vmem:[%s329 + $0x61] sm:$0xff]
      %v944 = vld [vmem:[%s329 + $0x71] sm:$0xff]
      %s945 = scalar_lea.vmem %s1, 512
      %v946 = vld [vmem:[%s945] sm:$0xff]
      %v947 = vld [vmem:[%s945 + $0x8] sm:$0xff]
      %v948 = vld [vmem:[%s945 + $0x10] sm:$0xff]
      %v949 = vld [vmem:[%s945 + $0x18] sm:$0xff]
      %v950 = vld [vmem:[%s945 + $0x20] sm:$0xff]
      %v951 = vld [vmem:[%s945 + $0x28] sm:$0xff]
      %v952 = vld [vmem:[%s945 + $0x30] sm:$0xff]
      %v953 = vld [vmem:[%s945 + $0x38] sm:$0xff]
      %v954 = vld [vmem:[%s945 + $0x40] sm:$0xff]
      %v955 = vld [vmem:[%s945 + $0x48] sm:$0xff]
      %v956 = vld [vmem:[%s945 + $0x50] sm:$0xff]
      %v957 = vld [vmem:[%s945 + $0x58] sm:$0xff]
      %v958 = vld [vmem:[%s945 + $0x60] sm:$0xff]
      %v959 = vld [vmem:[%s945 + $0x68] sm:$0xff]
      %v960 = vld [vmem:[%s945 + $0x70] sm:$0xff]
      %v961 = vld [vmem:[%s945 + $0x78] sm:$0xff]
      %962 = vmatprep.subr.mxu0 0.0
      %963 = vmatpush1.msra.mxu0 %v961
      %964 = vmatprep.subr.mxu0 0.0
      %965 = vmatpush1.msra.mxu0 %v960
      %966 = vmatprep.subr.mxu0 0.0
      %967 = vmatpush1.msra.mxu0 %v959
      %968 = vmatprep.subr.mxu0 0.0
      %969 = vmatpush1.msra.mxu0 %v958
      %970 = vmatprep.subr.mxu0 0.0
      %971 = vmatpush1.msra.mxu0 %v957
      %972 = vmatprep.subr.mxu0 0.0
      %973 = vmatpush1.msra.mxu0 %v956
      %974 = vmatprep.subr.mxu0 0.0
      %975 = vmatpush1.msra.mxu0 %v955
      %976 = vmatprep.subr.mxu0 0.0
      %977 = vmatpush1.msra.mxu0 %v954
      %978 = vmatprep.subr.mxu0 0.0
      %979 = vmatpush1.msra.mxu0 %v953
      %980 = vmatprep.subr.mxu0 0.0
      %981 = vmatpush1.msra.mxu0 %v952
      %982 = vmatprep.subr.mxu0 0.0
      %983 = vmatpush1.msra.mxu0 %v951
      %984 = vmatprep.subr.mxu0 0.0
      %985 = vmatpush1.msra.mxu0 %v950
      %986 = vmatprep.subr.mxu0 0.0
      %987 = vmatpush1.msra.mxu0 %v949
      %988 = vmatprep.subr.mxu0 0.0
      %989 = vmatpush1.msra.mxu0 %v948
      %990 = vmatprep.subr.mxu0 0.0
      %991 = vmatpush1.msra.mxu0 %v947
      %992 = vmatprep.subr.mxu0 0.0
      %993 = vmatpush1.msra.mxu0 %v946
      %994 = vmatprep.subr.mxu0 0.0
      %995 = vmatpush2.msra.mxu0 0.0
      %996 = vmatprep.subr.mxu0 0.0
      %997 = vmatpush2.msra.mxu0 0.0
      %998 = vmatprep.subr.mxu0 0.0
      %999 = vmatpush2.msra.mxu0 0.0
      %1000 = vmatprep.subr.mxu0 0.0
      %1001 = vmatpush2.msra.mxu0 0.0
      %1002 = vmatprep.subr.mxu0 0.0
      %1003 = vmatpush2.msra.mxu0 0.0
      %1004 = vmatprep.subr.mxu0 0.0
      %1005 = vmatpush2.msra.mxu0 0.0
      %1006 = vmatprep.subr.mxu0 0.0
      %1007 = vmatpush2.msra.mxu0 0.0
      %1008 = vmatprep.subr.mxu0 0.0
      %1009 = vmatpush2.msra.mxu0 0.0
      %1010 = vmatprep.subr.mxu0 0.0
      %1011 = vmatpush2.msra.mxu0 0.0
      %1012 = vmatprep.subr.mxu0 0.0
      %1013 = vmatpush2.msra.mxu0 0.0
      %1014 = vmatprep.subr.mxu0 0.0
      %1015 = vmatpush2.msra.mxu0 0.0
      %1016 = vmatprep.subr.mxu0 0.0
      %1017 = vmatpush2.msra.mxu0 0.0
      %1018 = vmatprep.subr.mxu0 0.0
      %1019 = vmatpush2.msra.mxu0 0.0
      %1020 = vmatprep.subr.mxu0 0.0
      %1021 = vmatpush2.msra.mxu0 0.0
      %1022 = vmatprep.subr.mxu0 0.0
      %1023 = vmatpush2.msra.mxu0 0.0
      %1024 = vmatprep.subr.mxu0 0.0
      %1025 = vmatpush2.msra.mxu0 0.0
      %1026 = vmatprep.mubr.f32.mxu0 0.0
      %1027 = vmatmul.mubr.f32.gmra.mxu0 %v937
      %v1028 = vpop.f32.mrf.mxu0
      %v1029 = vadd.f32 0.0, %v1028
      %v1030 = vpop.f32.mrf.mxu0
      %1031 = vmatprep.mubr.f32.mxu0 0.0
      %1032 = vmatmul.mubr.f32.gmra.mxu0 %v938
      %v1033 = vpop.f32.mrf.mxu0
      %v1034 = vadd.f32 0.0, %v1033
      %v1035 = vpop.f32.mrf.mxu0
      %1036 = vmatprep.mubr.f32.mxu0 0.0
      %1037 = vmatmul.mubr.f32.gmra.mxu0 %v939
      %v1038 = vpop.f32.mrf.mxu0
      %v1039 = vadd.f32 0.0, %v1038
      %v1040 = vpop.f32.mrf.mxu0
      %1041 = vmatprep.mubr.f32.mxu0 0.0
      %1042 = vmatmul.mubr.f32.gmra.mxu0 %v940
      %v1043 = vpop.f32.mrf.mxu0
      %v1044 = vadd.f32 0.0, %v1043
      %v1045 = vpop.f32.mrf.mxu0
      %1046 = vmatprep.mubr.f32.mxu0 0.0
      %1047 = vmatmul.mubr.f32.gmra.mxu0 %v941
      %v1048 = vpop.f32.mrf.mxu0
      %v1049 = vadd.f32 0.0, %v1048
      %v1050 = vpop.f32.mrf.mxu0
      %1051 = vmatprep.mubr.f32.mxu0 0.0
      %1052 = vmatmul.mubr.f32.gmra.mxu0 %v942
      %v1053 = vpop.f32.mrf.mxu0
      %v1054 = vadd.f32 0.0, %v1053
      %v1055 = vpop.f32.mrf.mxu0
      %1056 = vmatprep.mubr.f32.mxu0 0.0
      %1057 = vmatmul.mubr.f32.gmra.mxu0 %v943
      %v1058 = vpop.f32.mrf.mxu0
      %v1059 = vadd.f32 0.0, %v1058
      %v1060 = vpop.f32.mrf.mxu0
      %1061 = vmatprep.mubr.f32.mxu0 0.0
      %1062 = vmatmul.mubr.f32.gmra.mxu0 %v944
      %v1063 = vpop.f32.mrf.mxu0
      %v1064 = vadd.f32 0.0, %v1063
      %v1065 = vpop.f32.mrf.mxu0
      %1066 = vdwg.mxu0
      %v1067 = vld [vmem:[#allocation3] sm:$0xff]
      %v1068 = vld [vmem:[#allocation3 + $0x8] sm:$0xff]
      %v1069 = vld [vmem:[#allocation3 + $0x10] sm:$0xff]
      %v1070 = vld [vmem:[#allocation3 + $0x18] sm:$0xff]
      %v1071 = vld [vmem:[#allocation3 + $0x20] sm:$0xff]
      %v1072 = vld [vmem:[#allocation3 + $0x28] sm:$0xff]
      %v1073 = vld [vmem:[#allocation3 + $0x30] sm:$0xff]
      %v1074 = vld [vmem:[#allocation3 + $0x38] sm:$0xff]
      %v1075 = vadd.f32 %v1067, %v1029
      %v1076 = vadd.f32 %v1068, %v1034
      %v1077 = vadd.f32 %v1069, %v1039
      %v1078 = vadd.f32 %v1070, %v1044
      %v1079 = vadd.f32 %v1071, %v1049
      %v1080 = vadd.f32 %v1072, %v1054
      %v1081 = vadd.f32 %v1073, %v1059
      %v1082 = vadd.f32 %v1074, %v1064
      %1083 = vst [vmem:[#allocation3] sm:$0xff] %v1075
      %1084 = vst [vmem:[#allocation3 + $0x8] sm:$0xff] %v1076
      %1085 = vst [vmem:[#allocation3 + $0x10] sm:$0xff] %v1077
      %1086 = vst [vmem:[#allocation3 + $0x18] sm:$0xff] %v1078
      %1087 = vst [vmem:[#allocation3 + $0x20] sm:$0xff] %v1079
      %1088 = vst [vmem:[#allocation3 + $0x28] sm:$0xff] %v1080
      %1089 = vst [vmem:[#allocation3 + $0x30] sm:$0xff] %v1081
      %1090 = vst [vmem:[#allocation3 + $0x38] sm:$0xff] %v1082
      %v1091 = vld [vmem:[%s329 + $0x2] sm:$0xff]
      %v1092 = vld [vmem:[%s329 + $0x12] sm:$0xff]
      %v1093 = vld [vmem:[%s329 + $0x22] sm:$0xff]
      %v1094 = vld [vmem:[%s329 + $0x32] sm:$0xff]
      %v1095 = vld [vmem:[%s329 + $0x42] sm:$0xff]
      %v1096 = vld [vmem:[%s329 + $0x52] sm:$0xff]
      %v1097 = vld [vmem:[%s329 + $0x62] sm:$0xff]
      %v1098 = vld [vmem:[%s329 + $0x72] sm:$0xff]
      %s1099 = scalar_lea.vmem %s1, 640
      %v1100 = vld [vmem:[%s1099] sm:$0xff]
      %v1101 = vld [vmem:[%s1099 + $0x8] sm:$0xff]
      %v1102 = vld [vmem:[%s1099 + $0x10] sm:$0xff]
      %v1103 = vld [vmem:[%s1099 + $0x18] sm:$0xff]
      %v1104 = vld [vmem:[%s1099 + $0x20] sm:$0xff]
      %v1105 = vld [vmem:[%s1099 + $0x28] sm:$0xff]
      %v1106 = vld [vmem:[%s1099 + $0x30] sm:$0xff]
      %v1107 = vld [vmem:[%s1099 + $0x38] sm:$0xff]
      %v1108 = vld [vmem:[%s1099 + $0x40] sm:$0xff]
      %v1109 = vld [vmem:[%s1099 + $0x48] sm:$0xff]
      %v1110 = vld [vmem:[%s1099 + $0x50] sm:$0xff]
      %v1111 = vld [vmem:[%s1099 + $0x58] sm:$0xff]
      %v1112 = vld [vmem:[%s1099 + $0x60] sm:$0xff]
      %v1113 = vld [vmem:[%s1099 + $0x68] sm:$0xff]
      %v1114 = vld [vmem:[%s1099 + $0x70] sm:$0xff]
      %v1115 = vld [vmem:[%s1099 + $0x78] sm:$0xff]
      %1116 = vmatprep.subr.mxu0 0.0
      %1117 = vmatpush1.msra.mxu0 %v1115
      %1118 = vmatprep.subr.mxu0 0.0
      %1119 = vmatpush1.msra.mxu0 %v1114
      %1120 = vmatprep.subr.mxu0 0.0
      %1121 = vmatpush1.msra.mxu0 %v1113
      %1122 = vmatprep.subr.mxu0 0.0
      %1123 = vmatpush1.msra.mxu0 %v1112
      %1124 = vmatprep.subr.mxu0 0.0
      %1125 = vmatpush1.msra.mxu0 %v1111
      %1126 = vmatprep.subr.mxu0 0.0
      %1127 = vmatpush1.msra.mxu0 %v1110
      %1128 = vmatprep.subr.mxu0 0.0
      %1129 = vmatpush1.msra.mxu0 %v1109
      %1130 = vmatprep.subr.mxu0 0.0
      %1131 = vmatpush1.msra.mxu0 %v1108
      %1132 = vmatprep.subr.mxu0 0.0
      %1133 = vmatpush1.msra.mxu0 %v1107
      %1134 = vmatprep.subr.mxu0 0.0
      %1135 = vmatpush1.msra.mxu0 %v1106
      %1136 = vmatprep.subr.mxu0 0.0
      %1137 = vmatpush1.msra.mxu0 %v1105
      %1138 = vmatprep.subr.mxu0 0.0
      %1139 = vmatpush1.msra.mxu0 %v1104
      %1140 = vmatprep.subr.mxu0 0.0
      %1141 = vmatpush1.msra.mxu0 %v1103
      %1142 = vmatprep.subr.mxu0 0.0
      %1143 = vmatpush1.msra.mxu0 %v1102
      %1144 = vmatprep.subr.mxu0 0.0
      %1145 = vmatpush1.msra.mxu0 %v1101
      %1146 = vmatprep.subr.mxu0 0.0
      %1147 = vmatpush1.msra.mxu0 %v1100
      %1148 = vmatprep.subr.mxu0 0.0
      %1149 = vmatpush2.msra.mxu0 0.0
      %1150 = vmatprep.subr.mxu0 0.0
      %1151 = vmatpush2.msra.mxu0 0.0
      %1152 = vmatprep.subr.mxu0 0.0
      %1153 = vmatpush2.msra.mxu0 0.0
      %1154 = vmatprep.subr.mxu0 0.0
      %1155 = vmatpush2.msra.mxu0 0.0
      %1156 = vmatprep.subr.mxu0 0.0
      %1157 = vmatpush2.msra.mxu0 0.0
      %1158 = vmatprep.subr.mxu0 0.0
      %1159 = vmatpush2.msra.mxu0 0.0
      %1160 = vmatprep.subr.mxu0 0.0
      %1161 = vmatpush2.msra.mxu0 0.0
      %1162 = vmatprep.subr.mxu0 0.0
      %1163 = vmatpush2.msra.mxu0 0.0
      %1164 = vmatprep.subr.mxu0 0.0
      %1165 = vmatpush2.msra.mxu0 0.0
      %1166 = vmatprep.subr.mxu0 0.0
      %1167 = vmatpush2.msra.mxu0 0.0
      %1168 = vmatprep.subr.mxu0 0.0
      %1169 = vmatpush2.msra.mxu0 0.0
      %1170 = vmatprep.subr.mxu0 0.0
      %1171 = vmatpush2.msra.mxu0 0.0
      %1172 = vmatprep.subr.mxu0 0.0
      %1173 = vmatpush2.msra.mxu0 0.0
      %1174 = vmatprep.subr.mxu0 0.0
      %1175 = vmatpush2.msra.mxu0 0.0
      %1176 = vmatprep.subr.mxu0 0.0
      %1177 = vmatpush2.msra.mxu0 0.0
      %1178 = vmatprep.subr.mxu0 0.0
      %1179 = vmatpush2.msra.mxu0 0.0
      %1180 = vmatprep.mubr.f32.mxu0 0.0
      %1181 = vmatmul.mubr.f32.gmra.mxu0 %v1091
      %v1182 = vpop.f32.mrf.mxu0
      %v1183 = vadd.f32 0.0, %v1182
      %v1184 = vpop.f32.mrf.mxu0
      %1185 = vmatprep.mubr.f32.mxu0 0.0
      %1186 = vmatmul.mubr.f32.gmra.mxu0 %v1092
      %v1187 = vpop.f32.mrf.mxu0
      %v1188 = vadd.f32 0.0, %v1187
      %v1189 = vpop.f32.mrf.mxu0
      %1190 = vmatprep.mubr.f32.mxu0 0.0
      %1191 = vmatmul.mubr.f32.gmra.mxu0 %v1093
      %v1192 = vpop.f32.mrf.mxu0
      %v1193 = vadd.f32 0.0, %v1192
      %v1194 = vpop.f32.mrf.mxu0
      %1195 = vmatprep.mubr.f32.mxu0 0.0
      %1196 = vmatmul.mubr.f32.gmra.mxu0 %v1094
      %v1197 = vpop.f32.mrf.mxu0
      %v1198 = vadd.f32 0.0, %v1197
      %v1199 = vpop.f32.mrf.mxu0
      %1200 = vmatprep.mubr.f32.mxu0 0.0
      %1201 = vmatmul.mubr.f32.gmra.mxu0 %v1095
      %v1202 = vpop.f32.mrf.mxu0
      %v1203 = vadd.f32 0.0, %v1202
      %v1204 = vpop.f32.mrf.mxu0
      %1205 = vmatprep.mubr.f32.mxu0 0.0
      %1206 = vmatmul.mubr.f32.gmra.mxu0 %v1096
      %v1207 = vpop.f32.mrf.mxu0
      %v1208 = vadd.f32 0.0, %v1207
      %v1209 = vpop.f32.mrf.mxu0
      %1210 = vmatprep.mubr.f32.mxu0 0.0
      %1211 = vmatmul.mubr.f32.gmra.mxu0 %v1097
      %v1212 = vpop.f32.mrf.mxu0
      %v1213 = vadd.f32 0.0, %v1212
      %v1214 = vpop.f32.mrf.mxu0
      %1215 = vmatprep.mubr.f32.mxu0 0.0
      %1216 = vmatmul.mubr.f32.gmra.mxu0 %v1098
      %v1217 = vpop.f32.mrf.mxu0
      %v1218 = vadd.f32 0.0, %v1217
      %v1219 = vpop.f32.mrf.mxu0
      %1220 = vdwg.mxu0
      %v1221 = vld [vmem:[#allocation3] sm:$0xff]
      %v1222 = vld [vmem:[#allocation3 + $0x8] sm:$0xff]
      %v1223 = vld [vmem:[#allocation3 + $0x10] sm:$0xff]
      %v1224 = vld [vmem:[#allocation3 + $0x18] sm:$0xff]
      %v1225 = vld [vmem:[#allocation3 + $0x20] sm:$0xff]
      %v1226 = vld [vmem:[#allocation3 + $0x28] sm:$0xff]
      %v1227 = vld [vmem:[#allocation3 + $0x30] sm:$0xff]
      %v1228 = vld [vmem:[#allocation3 + $0x38] sm:$0xff]
      %v1229 = vadd.f32 %v1221, %v1183
      %v1230 = vadd.f32 %v1222, %v1188
      %v1231 = vadd.f32 %v1223, %v1193
      %v1232 = vadd.f32 %v1224, %v1198
      %v1233 = vadd.f32 %v1225, %v1203
      %v1234 = vadd.f32 %v1226, %v1208
      %v1235 = vadd.f32 %v1227, %v1213
      %v1236 = vadd.f32 %v1228, %v1218
      %1237 = vst [vmem:[#allocation3] sm:$0xff] %v1229
      %1238 = vst [vmem:[#allocation3 + $0x8] sm:$0xff] %v1230
      %1239 = vst [vmem:[#allocation3 + $0x10] sm:$0xff] %v1231
      %1240 = vst [vmem:[#allocation3 + $0x18] sm:$0xff] %v1232
      %1241 = vst [vmem:[#allocation3 + $0x20] sm:$0xff] %v1233
      %1242 = vst [vmem:[#allocation3 + $0x28] sm:$0xff] %v1234
      %1243 = vst [vmem:[#allocation3 + $0x30] sm:$0xff] %v1235
      %1244 = vst [vmem:[#allocation3 + $0x38] sm:$0xff] %v1236
      %s1245 = scalar_lea.vmem [#allocation2], 32
      %v1246 = vld [vmem:[%s1245] sm:$0xff]
      %v1247 = vld [vmem:[%s1245 + $0x10] sm:$0xff]
      %v1248 = vld [vmem:[%s1245 + $0x20] sm:$0xff]
      %v1249 = vld [vmem:[%s1245 + $0x30] sm:$0xff]
      %v1250 = vld [vmem:[%s1245 + $0x40] sm:$0xff]
      %v1251 = vld [vmem:[%s1245 + $0x50] sm:$0xff]
      %v1252 = vld [vmem:[%s1245 + $0x60] sm:$0xff]
      %v1253 = vld [vmem:[%s1245 + $0x70] sm:$0xff]
      %s1254 = scalar_lea.vmem %s1, 768
      %v1255 = vld [vmem:[%s1254] sm:$0xff]
      %v1256 = vld [vmem:[%s1254 + $0x8] sm:$0xff]
      %v1257 = vld [vmem:[%s1254 + $0x10] sm:$0xff]
      %v1258 = vld [vmem:[%s1254 + $0x18] sm:$0xff]
      %v1259 = vld [vmem:[%s1254 + $0x20] sm:$0xff]
      %v1260 = vld [vmem:[%s1254 + $0x28] sm:$0xff]
      %v1261 = vld [vmem:[%s1254 + $0x30] sm:$0xff]
      %v1262 = vld [vmem:[%s1254 + $0x38] sm:$0xff]
      %v1263 = vld [vmem:[%s1254 + $0x40] sm:$0xff]
      %v1264 = vld [vmem:[%s1254 + $0x48] sm:$0xff]
      %v1265 = vld [vmem:[%s1254 + $0x50] sm:$0xff]
      %v1266 = vld [vmem:[%s1254 + $0x58] sm:$0xff]
      %v1267 = vld [vmem:[%s1254 + $0x60] sm:$0xff]
      %v1268 = vld [vmem:[%s1254 + $0x68] sm:$0xff]
      %v1269 = vld [vmem:[%s1254 + $0x70] sm:$0xff]
      %v1270 = vld [vmem:[%s1254 + $0x78] sm:$0xff]
      %1271 = vmatprep.subr.mxu0 0.0
      %1272 = vmatpush1.msra.mxu0 %v1270
      %1273 = vmatprep.subr.mxu0 0.0
      %1274 = vmatpush1.msra.mxu0 %v1269
      %1275 = vmatprep.subr.mxu0 0.0
      %1276 = vmatpush1.msra.mxu0 %v1268
      %1277 = vmatprep.subr.mxu0 0.0
      %1278 = vmatpush1.msra.mxu0 %v1267
      %1279 = vmatprep.subr.mxu0 0.0
      %1280 = vmatpush1.msra.mxu0 %v1266
      %1281 = vmatprep.subr.mxu0 0.0
      %1282 = vmatpush1.msra.mxu0 %v1265
      %1283 = vmatprep.subr.mxu0 0.0
      %1284 = vmatpush1.msra.mxu0 %v1264
      %1285 = vmatprep.subr.mxu0 0.0
      %1286 = vmatpush1.msra.mxu0 %v1263
      %1287 = vmatprep.subr.mxu0 0.0
      %1288 = vmatpush1.msra.mxu0 %v1262
      %1289 = vmatprep.subr.mxu0 0.0
      %1290 = vmatpush1.msra.mxu0 %v1261
      %1291 = vmatprep.subr.mxu0 0.0
      %1292 = vmatpush1.msra.mxu0 %v1260
      %1293 = vmatprep.subr.mxu0 0.0
      %1294 = vmatpush1.msra.mxu0 %v1259
      %1295 = vmatprep.subr.mxu0 0.0
      %1296 = vmatpush1.msra.mxu0 %v1258
      %1297 = vmatprep.subr.mxu0 0.0
      %1298 = vmatpush1.msra.mxu0 %v1257
      %1299 = vmatprep.subr.mxu0 0.0
      %1300 = vmatpush1.msra.mxu0 %v1256
      %1301 = vmatprep.subr.mxu0 0.0
      %1302 = vmatpush1.msra.mxu0 %v1255
      %1303 = vmatprep.subr.mxu0 0.0
      %1304 = vmatpush2.msra.mxu0 0.0
      %1305 = vmatprep.subr.mxu0 0.0
      %1306 = vmatpush2.msra.mxu0 0.0
      %1307 = vmatprep.subr.mxu0 0.0
      %1308 = vmatpush2.msra.mxu0 0.0
      %1309 = vmatprep.subr.mxu0 0.0
      %1310 = vmatpush2.msra.mxu0 0.0
      %1311 = vmatprep.subr.mxu0 0.0
      %1312 = vmatpush2.msra.mxu0 0.0
      %1313 = vmatprep.subr.mxu0 0.0
      %1314 = vmatpush2.msra.mxu0 0.0
      %1315 = vmatprep.subr.mxu0 0.0
      %1316 = vmatpush2.msra.mxu0 0.0
      %1317 = vmatprep.subr.mxu0 0.0
      %1318 = vmatpush2.msra.mxu0 0.0
      %1319 = vmatprep.subr.mxu0 0.0
      %1320 = vmatpush2.msra.mxu0 0.0
      %1321 = vmatprep.subr.mxu0 0.0
      %1322 = vmatpush2.msra.mxu0 0.0
      %1323 = vmatprep.subr.mxu0 0.0
      %1324 = vmatpush2.msra.mxu0 0.0
      %1325 = vmatprep.subr.mxu0 0.0
      %1326 = vmatpush2.msra.mxu0 0.0
      %1327 = vmatprep.subr.mxu0 0.0
      %1328 = vmatpush2.msra.mxu0 0.0
      %1329 = vmatprep.subr.mxu0 0.0
      %1330 = vmatpush2.msra.mxu0 0.0
      %1331 = vmatprep.subr.mxu0 0.0
      %1332 = vmatpush2.msra.mxu0 0.0
      %1333 = vmatprep.subr.mxu0 0.0
      %1334 = vmatpush2.msra.mxu0 0.0
      %1335 = vmatprep.mubr.f32.mxu0 0.0
      %1336 = vmatmul.mubr.f32.gmra.mxu0 %v1246
      %v1337 = vpop.f32.mrf.mxu0
      %v1338 = vadd.f32 0.0, %v1337
      %v1339 = vpop.f32.mrf.mxu0
      %1340 = vmatprep.mubr.f32.mxu0 0.0
      %1341 = vmatmul.mubr.f32.gmra.mxu0 %v1247
      %v1342 = vpop.f32.mrf.mxu0
      %v1343 = vadd.f32 0.0, %v1342
      %v1344 = vpop.f32.mrf.mxu0
      %1345 = vmatprep.mubr.f32.mxu0 0.0
      %1346 = vmatmul.mubr.f32.gmra.mxu0 %v1248
      %v1347 = vpop.f32.mrf.mxu0
      %v1348 = vadd.f32 0.0, %v1347
      %v1349 = vpop.f32.mrf.mxu0
      %1350 = vmatprep.mubr.f32.mxu0 0.0
      %1351 = vmatmul.mubr.f32.gmra.mxu0 %v1249
      %v1352 = vpop.f32.mrf.mxu0
      %v1353 = vadd.f32 0.0, %v1352
      %v1354 = vpop.f32.mrf.mxu0
      %1355 = vmatprep.mubr.f32.mxu0 0.0
      %1356 = vmatmul.mubr.f32.gmra.mxu0 %v1250
      %v1357 = vpop.f32.mrf.mxu0
      %v1358 = vadd.f32 0.0, %v1357
      %v1359 = vpop.f32.mrf.mxu0
      %1360 = vmatprep.mubr.f32.mxu0 0.0
      %1361 = vmatmul.mubr.f32.gmra.mxu0 %v1251
      %v1362 = vpop.f32.mrf.mxu0
      %v1363 = vadd.f32 0.0, %v1362
      %v1364 = vpop.f32.mrf.mxu0
      %1365 = vmatprep.mubr.f32.mxu0 0.0
      %1366 = vmatmul.mubr.f32.gmra.mxu0 %v1252
      %v1367 = vpop.f32.mrf.mxu0
      %v1368 = vadd.f32 0.0, %v1367
      %v1369 = vpop.f32.mrf.mxu0
      %1370 = vmatprep.mubr.f32.mxu0 0.0
      %1371 = vmatmul.mubr.f32.gmra.mxu0 %v1253
      %v1372 = vpop.f32.mrf.mxu0
      %v1373 = vadd.f32 0.0, %v1372
      %v1374 = vpop.f32.mrf.mxu0
      %1375 = vdwg.mxu0
      %v1376 = vld [vmem:[#allocation3] sm:$0xff]
      %v1377 = vld [vmem:[#allocation3 + $0x8] sm:$0xff]
      %v1378 = vld [vmem:[#allocation3 + $0x10] sm:$0xff]
      %v1379 = vld [vmem:[#allocation3 + $0x18] sm:$0xff]
      %v1380 = vld [vmem:[#allocation3 + $0x20] sm:$0xff]
      %v1381 = vld [vmem:[#allocation3 + $0x28] sm:$0xff]
      %v1382 = vld [vmem:[#allocation3 + $0x30] sm:$0xff]
      %v1383 = vld [vmem:[#allocation3 + $0x38] sm:$0xff]
      %v1384 = vadd.f32 %v1376, %v1338
      %v1385 = vadd.f32 %v1377, %v1343
      %v1386 = vadd.f32 %v1378, %v1348
      %v1387 = vadd.f32 %v1379, %v1353
      %v1388 = vadd.f32 %v1380, %v1358
      %v1389 = vadd.f32 %v1381, %v1363
      %v1390 = vadd.f32 %v1382, %v1368
      %v1391 = vadd.f32 %v1383, %v1373
      %1392 = vst [vmem:[#allocation3] sm:$0xff] %v1384
      %1393 = vst [vmem:[#allocation3 + $0x8] sm:$0xff] %v1385
      %1394 = vst [vmem:[#allocation3 + $0x10] sm:$0xff] %v1386
      %1395 = vst [vmem:[#allocation3 + $0x18] sm:$0xff] %v1387
      %1396 = vst [vmem:[#allocation3 + $0x20] sm:$0xff] %v1388
      %1397 = vst [vmem:[#allocation3 + $0x28] sm:$0xff] %v1389
      %1398 = vst [vmem:[#allocation3 + $0x30] sm:$0xff] %v1390
      %1399 = vst [vmem:[#allocation3 + $0x38] sm:$0xff] %v1391
      %v1400 = vld [vmem:[%s1245 + $0x1] sm:$0xff]
      %v1401 = vld [vmem:[%s1245 + $0x11] sm:$0xff]
      %v1402 = vld [vmem:[%s1245 + $0x21] sm:$0xff]
      %v1403 = vld [vmem:[%s1245 + $0x31] sm:$0xff]
      %v1404 = vld [vmem:[%s1245 + $0x41] sm:$0xff]
      %v1405 = vld [vmem:[%s1245 + $0x51] sm:$0xff]
      %v1406 = vld [vmem:[%s1245 + $0x61] sm:$0xff]
      %v1407 = vld [vmem:[%s1245 + $0x71] sm:$0xff]
      %s1408 = scalar_lea.vmem %s1, 896
      %v1409 = vld [vmem:[%s1408] sm:$0xff]
      %v1410 = vld [vmem:[%s1408 + $0x8] sm:$0xff]
      %v1411 = vld [vmem:[%s1408 + $0x10] sm:$0xff]
      %v1412 = vld [vmem:[%s1408 + $0x18] sm:$0xff]
      %v1413 = vld [vmem:[%s1408 + $0x20] sm:$0xff]
      %v1414 = vld [vmem:[%s1408 + $0x28] sm:$0xff]
      %v1415 = vld [vmem:[%s1408 + $0x30] sm:$0xff]
      %v1416 = vld [vmem:[%s1408 + $0x38] sm:$0xff]
      %v1417 = vld [vmem:[%s1408 + $0x40] sm:$0xff]
      %v1418 = vld [vmem:[%s1408 + $0x48] sm:$0xff]
      %v1419 = vld [vmem:[%s1408 + $0x50] sm:$0xff]
      %v1420 = vld [vmem:[%s1408 + $0x58] sm:$0xff]
      %v1421 = vld [vmem:[%s1408 + $0x60] sm:$0xff]
      %v1422 = vld [vmem:[%s1408 + $0x68] sm:$0xff]
      %v1423 = vld [vmem:[%s1408 + $0x70] sm:$0xff]
      %v1424 = vld [vmem:[%s1408 + $0x78] sm:$0xff]
      %1425 = vmatprep.subr.mxu0 0.0
      %1426 = vmatpush1.msra.mxu0 %v1424
      %1427 = vmatprep.subr.mxu0 0.0
      %1428 = vmatpush1.msra.mxu0 %v1423
      %1429 = vmatprep.subr.mxu0 0.0
      %1430 = vmatpush1.msra.mxu0 %v1422
      %1431 = vmatprep.subr.mxu0 0.0
      %1432 = vmatpush1.msra.mxu0 %v1421
      %1433 = vmatprep.subr.mxu0 0.0
      %1434 = vmatpush1.msra.mxu0 %v1420
      %1435 = vmatprep.subr.mxu0 0.0
      %1436 = vmatpush1.msra.mxu0 %v1419
      %1437 = vmatprep.subr.mxu0 0.0
      %1438 = vmatpush1.msra.mxu0 %v1418
      %1439 = vmatprep.subr.mxu0 0.0
      %1440 = vmatpush1.msra.mxu0 %v1417
      %1441 = vmatprep.subr.mxu0 0.0
      %1442 = vmatpush1.msra.mxu0 %v1416
      %1443 = vmatprep.subr.mxu0 0.0
      %1444 = vmatpush1.msra.mxu0 %v1415
      %1445 = vmatprep.subr.mxu0 0.0
      %1446 = vmatpush1.msra.mxu0 %v1414
      %1447 = vmatprep.subr.mxu0 0.0
      %1448 = vmatpush1.msra.mxu0 %v1413
      %1449 = vmatprep.subr.mxu0 0.0
      %1450 = vmatpush1.msra.mxu0 %v1412
      %1451 = vmatprep.subr.mxu0 0.0
      %1452 = vmatpush1.msra.mxu0 %v1411
      %1453 = vmatprep.subr.mxu0 0.0
      %1454 = vmatpush1.msra.mxu0 %v1410
      %1455 = vmatprep.subr.mxu0 0.0
      %1456 = vmatpush1.msra.mxu0 %v1409
      %1457 = vmatprep.subr.mxu0 0.0
      %1458 = vmatpush2.msra.mxu0 0.0
      %1459 = vmatprep.subr.mxu0 0.0
      %1460 = vmatpush2.msra.mxu0 0.0
      %1461 = vmatprep.subr.mxu0 0.0
      %1462 = vmatpush2.msra.mxu0 0.0
      %1463 = vmatprep.subr.mxu0 0.0
      %1464 = vmatpush2.msra.mxu0 0.0
      %1465 = vmatprep.subr.mxu0 0.0
      %1466 = vmatpush2.msra.mxu0 0.0
      %1467 = vmatprep.subr.mxu0 0.0
      %1468 = vmatpush2.msra.mxu0 0.0
      %1469 = vmatprep.subr.mxu0 0.0
      %1470 = vmatpush2.msra.mxu0 0.0
      %1471 = vmatprep.subr.mxu0 0.0
      %1472 = vmatpush2.msra.mxu0 0.0
      %1473 = vmatprep.subr.mxu0 0.0
      %1474 = vmatpush2.msra.mxu0 0.0
      %1475 = vmatprep.subr.mxu0 0.0
      %1476 = vmatpush2.msra.mxu0 0.0
      %1477 = vmatprep.subr.mxu0 0.0
      %1478 = vmatpush2.msra.mxu0 0.0
      %1479 = vmatprep.subr.mxu0 0.0
      %1480 = vmatpush2.msra.mxu0 0.0
      %1481 = vmatprep.subr.mxu0 0.0
      %1482 = vmatpush2.msra.mxu0 0.0
      %1483 = vmatprep.subr.mxu0 0.0
      %1484 = vmatpush2.msra.mxu0 0.0
      %1485 = vmatprep.subr.mxu0 0.0
      %1486 = vmatpush2.msra.mxu0 0.0
      %1487 = vmatprep.subr.mxu0 0.0
      %1488 = vmatpush2.msra.mxu0 0.0
      %1489 = vmatprep.mubr.f32.mxu0 0.0
      %1490 = vmatmul.mubr.f32.gmra.mxu0 %v1400
      %v1491 = vpop.f32.mrf.mxu0
      %v1492 = vadd.f32 0.0, %v1491
      %v1493 = vpop.f32.mrf.mxu0
      %1494 = vmatprep.mubr.f32.mxu0 0.0
      %1495 = vmatmul.mubr.f32.gmra.mxu0 %v1401
      %v1496 = vpop.f32.mrf.mxu0
      %v1497 = vadd.f32 0.0, %v1496
      %v1498 = vpop.f32.mrf.mxu0
      %1499 = vmatprep.mubr.f32.mxu0 0.0
      %1500 = vmatmul.mubr.f32.gmra.mxu0 %v1402
      %v1501 = vpop.f32.mrf.mxu0
      %v1502 = vadd.f32 0.0, %v1501
      %v1503 = vpop.f32.mrf.mxu0
      %1504 = vmatprep.mubr.f32.mxu0 0.0
      %1505 = vmatmul.mubr.f32.gmra.mxu0 %v1403
      %v1506 = vpop.f32.mrf.mxu0
      %v1507 = vadd.f32 0.0, %v1506
      %v1508 = vpop.f32.mrf.mxu0
      %1509 = vmatprep.mubr.f32.mxu0 0.0
      %1510 = vmatmul.mubr.f32.gmra.mxu0 %v1404
      %v1511 = vpop.f32.mrf.mxu0
      %v1512 = vadd.f32 0.0, %v1511
      %v1513 = vpop.f32.mrf.mxu0
      %1514 = vmatprep.mubr.f32.mxu0 0.0
      %1515 = vmatmul.mubr.f32.gmra.mxu0 %v1405
      %v1516 = vpop.f32.mrf.mxu0
      %v1517 = vadd.f32 0.0, %v1516
      %v1518 = vpop.f32.mrf.mxu0
      %1519 = vmatprep.mubr.f32.mxu0 0.0
      %1520 = vmatmul.mubr.f32.gmra.mxu0 %v1406
      %v1521 = vpop.f32.mrf.mxu0
      %v1522 = vadd.f32 0.0, %v1521
      %v1523 = vpop.f32.mrf.mxu0
      %1524 = vmatprep.mubr.f32.mxu0 0.0
      %1525 = vmatmul.mubr.f32.gmra.mxu0 %v1407
      %v1526 = vpop.f32.mrf.mxu0
      %v1527 = vadd.f32 0.0, %v1526
      %v1528 = vpop.f32.mrf.mxu0
      %1529 = vdwg.mxu0
      %v1530 = vld [vmem:[#allocation3] sm:$0xff]
      %v1531 = vld [vmem:[#allocation3 + $0x8] sm:$0xff]
      %v1532 = vld [vmem:[#allocation3 + $0x10] sm:$0xff]
      %v1533 = vld [vmem:[#allocation3 + $0x18] sm:$0xff]
      %v1534 = vld [vmem:[#allocation3 + $0x20] sm:$0xff]
      %v1535 = vld [vmem:[#allocation3 + $0x28] sm:$0xff]
      %v1536 = vld [vmem:[#allocation3 + $0x30] sm:$0xff]
      %v1537 = vld [vmem:[#allocation3 + $0x38] sm:$0xff]
      %v1538 = vadd.f32 %v1530, %v1492
      %v1539 = vadd.f32 %v1531, %v1497
      %v1540 = vadd.f32 %v1532, %v1502
      %v1541 = vadd.f32 %v1533, %v1507
      %v1542 = vadd.f32 %v1534, %v1512
      %v1543 = vadd.f32 %v1535, %v1517
      %v1544 = vadd.f32 %v1536, %v1522
      %v1545 = vadd.f32 %v1537, %v1527
      %1546 = vst [vmem:[#allocation3] sm:$0xff] %v1538
      %1547 = vst [vmem:[#allocation3 + $0x8] sm:$0xff] %v1539
      %1548 = vst [vmem:[#allocation3 + $0x10] sm:$0xff] %v1540
      %1549 = vst [vmem:[#allocation3 + $0x18] sm:$0xff] %v1541
      %1550 = vst [vmem:[#allocation3 + $0x20] sm:$0xff] %v1542
      %1551 = vst [vmem:[#allocation3 + $0x28] sm:$0xff] %v1543
      %1552 = vst [vmem:[#allocation3 + $0x30] sm:$0xff] %v1544
      %1553 = vst [vmem:[#allocation3 + $0x38] sm:$0xff] %v1545
      %v1554 = vld [vmem:[%s1245 + $0x2] sm:$0xff]
      %v1555 = vld [vmem:[%s1245 + $0x12] sm:$0xff]
      %v1556 = vld [vmem:[%s1245 + $0x22] sm:$0xff]
      %v1557 = vld [vmem:[%s1245 + $0x32] sm:$0xff]
      %v1558 = vld [vmem:[%s1245 + $0x42] sm:$0xff]
      %v1559 = vld [vmem:[%s1245 + $0x52] sm:$0xff]
      %v1560 = vld [vmem:[%s1245 + $0x62] sm:$0xff]
      %v1561 = vld [vmem:[%s1245 + $0x72] sm:$0xff]
      %s1562 = scalar_lea.vmem %s1, 1024
      %v1563 = vld [vmem:[%s1562] sm:$0xff]
      %v1564 = vld [vmem:[%s1562 + $0x8] sm:$0xff]
      %v1565 = vld [vmem:[%s1562 + $0x10] sm:$0xff]
      %v1566 = vld [vmem:[%s1562 + $0x18] sm:$0xff]
      %v1567 = vld [vmem:[%s1562 + $0x20] sm:$0xff]
      %v1568 = vld [vmem:[%s1562 + $0x28] sm:$0xff]
      %v1569 = vld [vmem:[%s1562 + $0x30] sm:$0xff]
      %v1570 = vld [vmem:[%s1562 + $0x38] sm:$0xff]
      %v1571 = vld [vmem:[%s1562 + $0x40] sm:$0xff]
      %v1572 = vld [vmem:[%s1562 + $0x48] sm:$0xff]
      %v1573 = vld [vmem:[%s1562 + $0x50] sm:$0xff]
      %v1574 = vld [vmem:[%s1562 + $0x58] sm:$0xff]
      %v1575 = vld [vmem:[%s1562 + $0x60] sm:$0xff]
      %v1576 = vld [vmem:[%s1562 + $0x68] sm:$0xff]
      %v1577 = vld [vmem:[%s1562 + $0x70] sm:$0xff]
      %v1578 = vld [vmem:[%s1562 + $0x78] sm:$0xff]
      %1579 = vmatprep.subr.mxu0 0.0
      %1580 = vmatpush1.msra.mxu0 %v1578
      %1581 = vmatprep.subr.mxu0 0.0
      %1582 = vmatpush1.msra.mxu0 %v1577
      %1583 = vmatprep.subr.mxu0 0.0
      %1584 = vmatpush1.msra.mxu0 %v1576
      %1585 = vmatprep.subr.mxu0 0.0
      %1586 = vmatpush1.msra.mxu0 %v1575
      %1587 = vmatprep.subr.mxu0 0.0
      %1588 = vmatpush1.msra.mxu0 %v1574
      %1589 = vmatprep.subr.mxu0 0.0
      %1590 = vmatpush1.msra.mxu0 %v1573
      %1591 = vmatprep.subr.mxu0 0.0
      %1592 = vmatpush1.msra.mxu0 %v1572
      %1593 = vmatprep.subr.mxu0 0.0
      %1594 = vmatpush1.msra.mxu0 %v1571
      %1595 = vmatprep.subr.mxu0 0.0
      %1596 = vmatpush1.msra.mxu0 %v1570
      %1597 = vmatprep.subr.mxu0 0.0
      %1598 = vmatpush1.msra.mxu0 %v1569
      %1599 = vmatprep.subr.mxu0 0.0
      %1600 = vmatpush1.msra.mxu0 %v1568
      %1601 = vmatprep.subr.mxu0 0.0
      %1602 = vmatpush1.msra.mxu0 %v1567
      %1603 = vmatprep.subr.mxu0 0.0
      %1604 = vmatpush1.msra.mxu0 %v1566
      %1605 = vmatprep.subr.mxu0 0.0
      %1606 = vmatpush1.msra.mxu0 %v1565
      %1607 = vmatprep.subr.mxu0 0.0
      %1608 = vmatpush1.msra.mxu0 %v1564
      %1609 = vmatprep.subr.mxu0 0.0
      %1610 = vmatpush1.msra.mxu0 %v1563
      %1611 = vmatprep.subr.mxu0 0.0
      %1612 = vmatpush2.msra.mxu0 0.0
      %1613 = vmatprep.subr.mxu0 0.0
      %1614 = vmatpush2.msra.mxu0 0.0
      %1615 = vmatprep.subr.mxu0 0.0
      %1616 = vmatpush2.msra.mxu0 0.0
      %1617 = vmatprep.subr.mxu0 0.0
      %1618 = vmatpush2.msra.mxu0 0.0
      %1619 = vmatprep.subr.mxu0 0.0
      %1620 = vmatpush2.msra.mxu0 0.0
      %1621 = vmatprep.subr.mxu0 0.0
      %1622 = vmatpush2.msra.mxu0 0.0
      %1623 = vmatprep.subr.mxu0 0.0
      %1624 = vmatpush2.msra.mxu0 0.0
      %1625 = vmatprep.subr.mxu0 0.0
      %1626 = vmatpush2.msra.mxu0 0.0
      %1627 = vmatprep.subr.mxu0 0.0
      %1628 = vmatpush2.msra.mxu0 0.0
      %1629 = vmatprep.subr.mxu0 0.0
      %1630 = vmatpush2.msra.mxu0 0.0
      %1631 = vmatprep.subr.mxu0 0.0
      %1632 = vmatpush2.msra.mxu0 0.0
      %1633 = vmatprep.subr.mxu0 0.0
      %1634 = vmatpush2.msra.mxu0 0.0
      %1635 = vmatprep.subr.mxu0 0.0
      %1636 = vmatpush2.msra.mxu0 0.0
      %1637 = vmatprep.subr.mxu0 0.0
      %1638 = vmatpush2.msra.mxu0 0.0
      %1639 = vmatprep.subr.mxu0 0.0
      %1640 = vmatpush2.msra.mxu0 0.0
      %1641 = vmatprep.subr.mxu0 0.0
      %1642 = vmatpush2.msra.mxu0 0.0
      %1643 = vmatprep.mubr.f32.mxu0 0.0
      %1644 = vmatmul.mubr.f32.gmra.mxu0 %v1554
      %v1645 = vpop.f32.mrf.mxu0
      %v1646 = vadd.f32 0.0, %v1645
      %v1647 = vpop.f32.mrf.mxu0
      %1648 = vmatprep.mubr.f32.mxu0 0.0
      %1649 = vmatmul.mubr.f32.gmra.mxu0 %v1555
      %v1650 = vpop.f32.mrf.mxu0
      %v1651 = vadd.f32 0.0, %v1650
      %v1652 = vpop.f32.mrf.mxu0
      %1653 = vmatprep.mubr.f32.mxu0 0.0
      %1654 = vmatmul.mubr.f32.gmra.mxu0 %v1556
      %v1655 = vpop.f32.mrf.mxu0
      %v1656 = vadd.f32 0.0, %v1655
      %v1657 = vpop.f32.mrf.mxu0
      %1658 = vmatprep.mubr.f32.mxu0 0.0
      %1659 = vmatmul.mubr.f32.gmra.mxu0 %v1557
      %v1660 = vpop.f32.mrf.mxu0
      %v1661 = vadd.f32 0.0, %v1660
      %v1662 = vpop.f32.mrf.mxu0
      %1663 = vmatprep.mubr.f32.mxu0 0.0
      %1664 = vmatmul.mubr.f32.gmra.mxu0 %v1558
      %v1665 = vpop.f32.mrf.mxu0
      %v1666 = vadd.f32 0.0, %v1665
      %v1667 = vpop.f32.mrf.mxu0
      %1668 = vmatprep.mubr.f32.mxu0 0.0
      %1669 = vmatmul.mubr.f32.gmra.mxu0 %v1559
      %v1670 = vpop.f32.mrf.mxu0
      %v1671 = vadd.f32 0.0, %v1670
      %v1672 = vpop.f32.mrf.mxu0
      %1673 = vmatprep.mubr.f32.mxu0 0.0
      %1674 = vmatmul.mubr.f32.gmra.mxu0 %v1560
      %v1675 = vpop.f32.mrf.mxu0
      %v1676 = vadd.f32 0.0, %v1675
      %v1677 = vpop.f32.mrf.mxu0
      %1678 = vmatprep.mubr.f32.mxu0 0.0
      %1679 = vmatmul.mubr.f32.gmra.mxu0 %v1561
      %v1680 = vpop.f32.mrf.mxu0
      %v1681 = vadd.f32 0.0, %v1680
      %v1682 = vpop.f32.mrf.mxu0
      %1683 = vdwg.mxu0
      %v1684 = vld [vmem:[#allocation3] sm:$0xff]
      %v1685 = vld [vmem:[#allocation3 + $0x8] sm:$0xff]
      %v1686 = vld [vmem:[#allocation3 + $0x10] sm:$0xff]
      %v1687 = vld [vmem:[#allocation3 + $0x18] sm:$0xff]
      %v1688 = vld [vmem:[#allocation3 + $0x20] sm:$0xff]
      %v1689 = vld [vmem:[#allocation3 + $0x28] sm:$0xff]
      %v1690 = vld [vmem:[#allocation3 + $0x30] sm:$0xff]
      %v1691 = vld [vmem:[#allocation3 + $0x38] sm:$0xff]
      %v1692 = vadd.f32 %v1684, %v1646
      %v1693 = vadd.f32 %v1685, %v1651
      %v1694 = vadd.f32 %v1686, %v1656
      %v1695 = vadd.f32 %v1687, %v1661
      %v1696 = vadd.f32 %v1688, %v1666
      %v1697 = vadd.f32 %v1689, %v1671
      %v1698 = vadd.f32 %v1690, %v1676
      %v1699 = vadd.f32 %v1691, %v1681
      %1700 = vst [vmem:[#allocation3] sm:$0xff] %v1692
      %1701 = vst [vmem:[#allocation3 + $0x8] sm:$0xff] %v1693
      %1702 = vst [vmem:[#allocation3 + $0x10] sm:$0xff] %v1694
      %1703 = vst [vmem:[#allocation3 + $0x18] sm:$0xff] %v1695
      %1704 = vst [vmem:[#allocation3 + $0x20] sm:$0xff] %v1696
      %1705 = vst [vmem:[#allocation3 + $0x28] sm:$0xff] %v1697
      %1706 = vst [vmem:[#allocation3 + $0x30] sm:$0xff] %v1698
      %1707 = vst [vmem:[#allocation3 + $0x38] sm:$0xff] %v1699
      %v1708 = vld [vmem:[#allocation3] sm:$0xff]
      %v1709 = vld [vmem:[#allocation3 + $0x8] sm:$0xff]
      %v1710 = vld [vmem:[#allocation3 + $0x10] sm:$0xff]
      %v1711 = vld [vmem:[#allocation3 + $0x18] sm:$0xff]
      %v1712 = vld [vmem:[#allocation3 + $0x20] sm:$0xff]
      %v1713 = vld [vmem:[#allocation3 + $0x28] sm:$0xff]
      %v1714 = vld [vmem:[#allocation3 + $0x30] sm:$0xff]
      %v1715 = vld [vmem:[#allocation3 + $0x38] sm:$0xff]
      %v1716 = vld [vmem:[%s2] sm:$0x1]
      %v1718 = vlaneseq
      %v1719 = vshrl.u32 %v1718, 7
      %v1720 = vsub.s32 0, %v1719
      %v1721 = vrot.slane %v1716, %v1720
      %v1723 = vadd.f32 %v1708, %v1721
      %v1724 = vadd.f32 %v1709, %v1721
      %v1725 = vadd.f32 %v1710, %v1721
      %v1726 = vadd.f32 %v1711, %v1721
      %v1727 = vadd.f32 %v1712, %v1721
      %v1728 = vadd.f32 %v1713, %v1721
      %v1729 = vadd.f32 %v1714, %v1721
      %v1730 = vadd.f32 %v1715, %v1721
      %1731 = vst [vmem:[%s258] sm:$0xff] %v1723
      %1732 = vst [vmem:[%s258 + $0x8] sm:$0xff] %v1724
      %1733 = vst [vmem:[%s258 + $0x10] sm:$0xff] %v1725
      %1734 = vst [vmem:[%s258 + $0x18] sm:$0xff] %v1726
      %1735 = vst [vmem:[%s258 + $0x20] sm:$0xff] %v1727
      %1736 = vst [vmem:[%s258 + $0x28] sm:$0xff] %v1728
      %1737 = vst [vmem:[%s258 + $0x30] sm:$0xff] %v1729
      %1738 = vst [vmem:[%s258 + $0x38] sm:$0xff] %v1730
      %v1739 = vadd.f32 %v1723, %v1724
      %v1740 = vadd.f32 %v1739, %v1725
      %v1741 = vadd.f32 %v1740, %v1726
      %v1742 = vadd.f32 %v1741, %v1727
      %v1743 = vadd.f32 %v1742, %v1728
      %v1744 = vadd.f32 %v1743, %v1729
      %v1745 = vadd.f32 %v1744, %v1730
      %v1746 = vrot.slane %v1745, 4
      %v1747 = vadd.f32 %v1745, %v1746
      %v1748 = vrot.slane %v1747, 2
      %v1749 = vadd.f32 %v1747, %v1748
      %v1750 = vrot.slane %v1749, 1
      %v1751 = vadd.f32 %v1749, %v1750
      %1752 = vst [vmem:[%s262] sm:$0x1] %v1751
      %v1753 = vmul.f32 %v1723, %v1723
      %v1754 = vmul.f32 %v1724, %v1724
      %v1755 = vmul.f32 %v1725, %v1725
      %v1756 = vmul.f32 %v1726, %v1726
      %v1757 = vmul.f32 %v1727, %v1727
      %v1758 = vmul.f32 %v1728, %v1728
      %v1759 = vmul.f32 %v1729, %v1729
      %v1760 = vmul.f32 %v1730, %v1730
      %v1761 = vadd.f32 %v1753, %v1754
      %v1762 = vadd.f32 %v1761, %v1755
      %v1763 = vadd.f32 %v1762, %v1756
      %v1764 = vadd.f32 %v1763, %v1757
      %v1765 = vadd.f32 %v1764, %v1758
      %v1766 = vadd.f32 %v1765, %v1759
      %v1767 = vadd.f32 %v1766, %v1760
      %v1768 = vrot.slane %v1767, 4
      %v1769 = vadd.f32 %v1767, %v1768
      %v1770 = vrot.slane %v1769, 2
      %v1771 = vadd.f32 %v1769, %v1770
      %v1772 = vrot.slane %v1771, 1
      %v1773 = vadd.f32 %v1771, %v1772
      %1774 = vst [vmem:[%s262 + $0x1] sm:$0x1] %v1773
      %p1775 = scmp.lt.s32.totalorder %s18, 1
      %s1776 = scalar_select %p1775, %s18, 1
      %s1777 = smul.addr %s1776, 8
      %s1778 = smul.addr %s1777, 8
      %s1779 = scalar_lea.vmem %s5, %s1778
      %p1780 = scmp.lt.s32.totalorder %s18, 1
      %s1781 = scalar_select %p1780, %s18, 1
      %s1782 = smul.addr %s1781, 2
      %s1783 = scalar_lea.vmem %s6, %s1782
      // Predicated region
      $region41: #{resnet_basicblock_forward.5} parent=39 // pred_check
        %p1784 = pneg %p146
      $region42: #{resnet_basicblock_forward.5} parent=39 // pred_check_branch
        %1786 = sbr.rel (%p1784) target = $region44
      $region43: #{resnet_basicblock_forward.5} parent=39 // pred_region
        _
      $region44: #{resnet_basicblock_forward.5} parent=39 // pred_fallthru
        _
      // Predicated region
      $region45: #{resnet_basicblock_forward.5} parent=39 // pred_check
        %p1787 = pneg %p172
      $region46: #{resnet_basicblock_forward.5} parent=39 // pred_check_branch
        %1789 = sbr.rel (%p1787) target = $region48
      $region47: #{resnet_basicblock_forward.5} parent=39 // pred_region
        _
      $region48: #{resnet_basicblock_forward.5} parent=39 // pred_fallthru
        _
    $region40: #{resnet_basicblock_forward.5} parent=5 // pred_fallthru
      _
    %p1790 = scmp.le.s32.totalorder 2, %s13
    // Predicated region
    $region49: #{resnet_basicblock_forward.5} parent=5 // pred_check
      %p1791 = pneg %p1790
    $region50: #{resnet_basicblock_forward.5} parent=5 // pred_check_branch
      %1793 = sbr.rel (%p1791) target = $region52
    $region51: #{resnet_basicblock_forward.5} parent=5 // pred_region
      %s1794 = ssub.s32 %s13, 2
      // Predicated region
      $region53: #{resnet_basicblock_forward.5} parent=51 // pred_check
        %p1795 = pneg %p152
      $region54: #{resnet_basicblock_forward.5} parent=51 // pred_check_branch
        %1797 = sbr.rel (%p1795) target = $region56
      $region55: #{resnet_basicblock_forward.5} parent=51 // pred_region
        %p1798 = scmp.lt.s32.totalorder %s19, 1
        %s1799 = scalar_select %p1798, %s19, 1
        %s1800 = smul.addr %s1799, 8
        %s1801 = smul.addr %s1800, 8
        %s1802 = scalar_lea.vmem %s5, %s1801
      $region56: #{resnet_basicblock_forward.5} parent=51 // pred_fallthru
        _
      // Predicated region
      $region57: #{resnet_basicblock_forward.5} parent=51 // pred_check
        %p1803 = pneg %p178
      $region58: #{resnet_basicblock_forward.5} parent=51 // pred_check_branch
        %1805 = sbr.rel (%p1803) target = $region60
      $region59: #{resnet_basicblock_forward.5} parent=51 // pred_region
        %p1806 = scmp.lt.s32.totalorder %s19, 1
        %s1807 = scalar_select %p1806, %s19, 1
        %s1808 = smul.addr %s1807, 2
        %s1809 = scalar_lea.vmem %s6, %s1808
      $region60: #{resnet_basicblock_forward.5} parent=51 // pred_fallthru
        _
    $region52: #{resnet_basicblock_forward.5} parent=5 // pred_fallthru
      _
  $region6: #{resnet_basicblock_forward.5} parent=0 // loop_footer
    %s17 = sadd.s32 1, %s13
  $region7: #{resnet_basicblock_forward.5} parent=0 // loop_footer_branch
    %12 = sbr.rel target = $region3
  $region8: #{resnet_basicblock_forward.5} parent=0 // loop_exit
    _

// kernel: resnet_basicblock_forward.4
$region0: #{resnet_basicblock_forward.4}
  #allocation0 [shape = 'u32[]', space=smem, size = 0x4, offset = 0x4, fixed_abs, tag = 'smem constant byte address 0x4 - core index']
  #allocation1 [shape = 'u32[144,128]{1,0:T(1,128)}', space=vmem, size = 0x12000, scoped, tag = 'internal scratch']
  #allocation2 [shape = 'f32[18,18,128]{2,1,0:T(8,128)}', space=vmem, size = 0x36000, scoped, tag = 'scratch operand']
  #allocation3 [shape = 'f32[64,128]{1,0:T(8,128)}', space=vmem, size = 0x8000, scoped, tag = 'scratch operand']
  %s0 = inlined_call_operand.vmem [shape: f32[2,16,16,128], index: 0, kind: input, shape index: {}]
  %s1 = inlined_call_operand.vmem [shape: f32[9,128,128], index: 1, kind: input, shape index: {}]
  %s2 = inlined_call_operand.vmem [shape: f32[1,128], index: 2, kind: input, shape index: {}]
  %s3 = inlined_call_operand.vmem [shape: f32[1,128], index: 3, kind: input, shape index: {}]
  %s4 = inlined_call_operand.vmem [shape: f32[1,128], index: 4, kind: input, shape index: {}]
  %s5 = inlined_call_operand.vmem [shape: f32[2,8,8,128], index: 5, kind: output, shape index: {0}]
  %s6 = inlined_call_operand.vmem [shape: f32[2,2,128], index: 6, kind: output, shape index: {1}]
  %7 = xla_tuple %s5, %s6
  %s8 = sld [smem:[#allocation0]]
  $region61: #{resnet_basicblock_forward.4} parent=0
    _
  %s10 = ssub.s32 1, %s8
  %s11 = scalar_select 0, %s10, %s8
  loop: start=0, step=1, limit=4
  $region2: #{resnet_basicblock_forward.4} parent=0 // loop_pre_header
    _
  $region3: #{resnet_basicblock_forward.4} parent=0 // loop_header
    %s13 = sphi 0, %s17
    %p14 = scmp.ge.s32.totalorder %s13, 4
    %s23 = sphi 0, %s25
    %s26 = sphi 0, %s23
    %s27 = sphi 0, %s26
    %s43 = sphi 0, %s27
    %s47 = sphi 0, %s47
    %s49 = sphi 0, %s47
    %s50 = sphi 0, %s49
    %s64 = sphi 0, %s50
    %s68 = sphi 0, %s68
    %s70 = sphi 0, %s68
    %s71 = sphi 0, %s70
    %s85 = sphi 0, %s71
    %s89 = sphi 0, %s89
    %s91 = sphi 0, %s89
    %s92 = sphi 0, %s91
    %s106 = sphi 0, %s92
    %s110 = sphi 0, %s110
    %s112 = sphi 0, %s110
    %s113 = sphi 0, %s112
    %s127 = sphi 0, %s113
    %s133 = sphi 0, %s135
    %s136 = sphi 0, %s133
    %s137 = sphi 0, %s136
    %s153 = sphi 0, %s137
    %s159 = sphi 0, %s161
    %s162 = sphi 0, %s159
    %s163 = sphi 0, %s162
    %s179 = sphi 0, %s163
  $region4: #{resnet_basicblock_forward.4} parent=0 // loop_header_branch
    %16 = sbr.rel (%p14) target = $region8
  $region5: #{resnet_basicblock_forward.4} parent=0 // loop_body
    %s18 = ssub.s32 %s13, 1
    %s19 = ssub.s32 %s13, 2
    %s20 = sadd.s32 %s13, 1
    %s21 = ssub.s32 %s13, %s20
    %p22 = scmp.eq.s32.totalorder %s21, 0
    %s24 = sadd.s32 %s23, 1
    %s25 = scalar_select %p22, %s23, %s24
    %p28 = pneg %p22
    %p29 = scmp.eq.s32.totalorder %s13, 1
    %p30 = por %p28, %p29
    %p31 = scmp.ne.s32.totalorder %s23, %s26
    %p32 = scmp.eq.s32.totalorder %s13, 0
    %p33 = por %p31, %p32
    %p34 = scmp.ne.s32.totalorder %s23, %s26
    %p35 = scmp.eq.s32.totalorder %s18, 1
    %p36 = por %p34, %p35
    %p37 = scmp.ne.s32.totalorder %s26, %s27
    %p38 = scmp.eq.s32.totalorder %s18, 0
    %p39 = por %p37, %p38
    %p40 = scmp.ne.s32.totalorder %s26, %s27
    %p41 = scmp.eq.s32.totalorder %s19, 1
    %p42 = por %p40, %p41
    %p44 = scmp.ne.s32.totalorder %s27, %s43
    %p45 = scmp.eq.s32.totalorder %s19, 0
    %p46 = por %p44, %p45
    %s48 = sadd.s32 %s47, 1
    %p51 = scmp.eq.s32.totalorder %s13, 1
    %p52 = scmp.ne.s32.totalorder %s47, %s49
    %p53 = scmp.eq.s32.totalorder %s13, 0
    %p54 = por %p52, %p53
    %p55 = scmp.ne.s32.totalorder %s47, %s49
    %p56 = scmp.eq.s32.totalorder %s18, 1
    %p57 = por %p55, %p56
    %p58 = scmp.ne.s32.totalorder %s49, %s50
    %p59 = scmp.eq.s32.totalorder %s18, 0
    %p60 = por %p58, %p59
    %p61 = scmp.ne.s32.totalorder %s49, %s50
    %p62 = scmp.eq.s32.totalorder %s19, 1
    %p63 = por %p61, %p62
    %p65 = scmp.ne.s32.totalorder %s50, %s64
    %p66 = scmp.eq.s32.totalorder %s19, 0
    %p67 = por %p65, %p66
    %s69 = sadd.s32 %s68, 1
    %p72 = scmp.eq.s32.totalorder %s13, 1
    %p73 = scmp.ne.s32.totalorder %s68, %s70
    %p74 = scmp.eq.s32.totalorder %s13, 0
    %p75 = por %p73, %p74
    %p76 = scmp.ne.s32.totalorder %s68, %s70
    %p77 = scmp.eq.s32.totalorder %s18, 1
    %p78 = por %p76, %p77
    %p79 = scmp.ne.s32.totalorder %s70, %s71
    %p80 = scmp.eq.s32.totalorder %s18, 0
    %p81 = por %p79, %p80
    %p82 = scmp.ne.s32.totalorder %s70, %s71
    %p83 = scmp.eq.s32.totalorder %s19, 1
    %p84 = por %p82, %p83
    %p86 = scmp.ne.s32.totalorder %s71, %s85
    %p87 = scmp.eq.s32.totalorder %s19, 0
    %p88 = por %p86, %p87
    %s90 = sadd.s32 %s89, 1
    %p93 = scmp.eq.s32.totalorder %s13, 1
    %p94 = scmp.ne.s32.totalorder %s89, %s91
    %p95 = scmp.eq.s32.totalorder %s13, 0
    %p96 = por %p94, %p95
    %p97 = scmp.ne.s32.totalorder %s89, %s91
    %p98 = scmp.eq.s32.totalorder %s18, 1
    %p99 = por %p97, %p98
    %p100 = scmp.ne.s32.totalorder %s91, %s92
    %p101 = scmp.eq.s32.totalorder %s18, 0
    %p102 = por %p100, %p101
    %p103 = scmp.ne.s32.totalorder %s91, %s92
    %p104 = scmp.eq.s32.totalorder %s19, 1
    %p105 = por %p103, %p104
    %p107 = scmp.ne.s32.totalorder %s92, %s106
    %p108 = scmp.eq.s32.totalorder %s19, 0
    %p109 = por %p107, %p108
    %s111 = sadd.s32 %s110, 1
    %p114 = scmp.eq.s32.totalorder %s13, 1
    %p115 = scmp.ne.s32.totalorder %s110, %s112
    %p116 = scmp.eq.s32.totalorder %s13, 0
    %p117 = por %p115, %p116
    %p118 = scmp.ne.s32.totalorder %s110, %s112
    %p119 = scmp.eq.s32.totalorder %s18, 1
    %p120 = por %p118, %p119
    %p121 = scmp.ne.s32.totalorder %s112, %s113
    %p122 = scmp.eq.s32.totalorder %s18, 0
    %p123 = por %p121, %p122
    %p124 = scmp.ne.s32.totalorder %s112, %s113
    %p125 = scmp.eq.s32.totalorder %s19, 1
    %p126 = por %p124, %p125
    %p128 = scmp.ne.s32.totalorder %s113, %s127
    %p129 = scmp.eq.s32.totalorder %s19, 0
    %p130 = por %p128, %p129
    %s131 = ssub.s32 %s13, %s20
    %p132 = scmp.eq.s32.totalorder %s131, 0
    %s134 = sadd.s32 %s133, 1
    %s135 = scalar_select %p132, %s133, %s134
    %p138 = pneg %p132
    %p139 = scmp.eq.s32.totalorder %s13, 1
    %p140 = por %p138, %p139
    %p141 = scmp.ne.s32.totalorder %s133, %s136
    %p142 = scmp.eq.s32.totalorder %s13, 0
    %p143 = por %p141, %p142
    %p144 = scmp.ne.s32.totalorder %s133, %s136
    %p145 = scmp.eq.s32.totalorder %s18, 1
    %p146 = por %p144, %p145
    %p147 = scmp.ne.s32.totalorder %s136, %s137
    %p148 = scmp.eq.s32.totalorder %s18, 0
    %p149 = por %p147, %p148
    %p150 = scmp.ne.s32.totalorder %s136, %s137
    %p151 = scmp.eq.s32.totalorder %s19, 1
    %p152 = por %p150, %p151
    %p154 = scmp.ne.s32.totalorder %s137, %s153
    %p155 = scmp.eq.s32.totalorder %s19, 0
    %p156 = por %p154, %p155
    %s157 = ssub.s32 %s13, %s20
    %p158 = scmp.eq.s32.totalorder %s157, 0
    %s160 = sadd.s32 %s159, 1
    %s161 = scalar_select %p158, %s159, %s160
    %p164 = pneg %p158
    %p165 = scmp.eq.s32.totalorder %s13, 1
    %p166 = por %p164, %p165
    %p167 = scmp.ne.s32.totalorder %s159, %s162
    %p168 = scmp.eq.s32.totalorder %s13, 0
    %p169 = por %p167, %p168
    %p170 = scmp.ne.s32.totalorder %s159, %s162
    %p171 = scmp.eq.s32.totalorder %s18, 1
    %p172 = por %p170, %p171
    %p173 = scmp.ne.s32.totalorder %s162, %s163
    %p174 = scmp.eq.s32.totalorder %s18, 0
    %p175 = por %p173, %p174
    %p176 = scmp.ne.s32.totalorder %s162, %s163
    %p177 = scmp.eq.s32.totalorder %s19, 1
    %p178 = por %p176, %p177
    %p180 = scmp.ne.s32.totalorder %s163, %s179
    %p181 = scmp.eq.s32.totalorder %s19, 0
    %p182 = por %p180, %p181
    %p183 = scmp.le.s32.totalorder 1, %s13
    %p184 = scmp.lt.s32.totalorder %s13, 3
    %p185 = pnand %p183, %p184
    %p186 = pneg %p185
    // Predicated region
    $region9: #{resnet_basicblock_forward.4} parent=5 // pred_check
      _
    $region10: #{resnet_basicblock_forward.4} parent=5 // pred_check_branch
      %188 = sbr.rel (%p185) target = $region12
    $region11: #{resnet_basicblock_forward.4} parent=5 // pred_region
      %s189 = ssub.s32 %s13, 1
      // Predicated region
      $region13: #{resnet_basicblock_forward.4} parent=11 // pred_check
        %p190 = pneg %p60
      $region14: #{resnet_basicblock_forward.4} parent=11 // pred_check_branch
        %192 = sbr.rel (%p190) target = $region16
      $region15: #{resnet_basicblock_forward.4} parent=11 // pred_region
        _
      $region16: #{resnet_basicblock_forward.4} parent=11 // pred_fallthru
        _
      // Predicated region
      $region17: #{resnet_basicblock_forward.4} parent=11 // pred_check
        %p193 = pneg %p81
      $region18: #{resnet_basicblock_forward.4} parent=11 // pred_check_branch
        %195 = sbr.rel (%p193) target = $region20
      $region19: #{resnet_basicblock_forward.4} parent=11 // pred_region
        _
      $region20: #{resnet_basicblock_forward.4} parent=11 // pred_fallthru
        _
      // Predicated region
      $region21: #{resnet_basicblock_forward.4} parent=11 // pred_check
        %p196 = pneg %p102
      $region22: #{resnet_basicblock_forward.4} parent=11 // pred_check_branch
        %198 = sbr.rel (%p196) target = $region24
      $region23: #{resnet_basicblock_forward.4} parent=11 // pred_region
        _
      $region24: #{resnet_basicblock_forward.4} parent=11 // pred_fallthru
        _
      // Predicated region
      $region25: #{resnet_basicblock_forward.4} parent=11 // pred_check
        %p199 = pneg %p123
      $region26: #{resnet_basicblock_forward.4} parent=11 // pred_check_branch
        %201 = sbr.rel (%p199) target = $region28
      $region27: #{resnet_basicblock_forward.4} parent=11 // pred_region
        _
      $region28: #{resnet_basicblock_forward.4} parent=11 // pred_fallthru
        _
    $region12: #{resnet_basicblock_forward.4} parent=5 // pred_fallthru
      _
    %p202 = scmp.lt.s32.totalorder %s13, 2
    // Predicated region
    $region29: #{resnet_basicblock_forward.4} parent=5 // pred_check
      %p203 = pneg %p202
    $region30: #{resnet_basicblock_forward.4} parent=5 // pred_check_branch
      %205 = sbr.rel (%p203) target = $region32
    $region31: #{resnet_basicblock_forward.4} parent=5 // pred_region
      // Predicated region
      $region33: #{resnet_basicblock_forward.4} parent=31 // pred_check
        %p206 = pneg %p33
      $region34: #{resnet_basicblock_forward.4} parent=31 // pred_check_branch
        %208 = sbr.rel (%p206) target = $region36
      $region35: #{resnet_basicblock_forward.4} parent=31 // pred_region
        %p209 = scmp.lt.s32.totalorder %s13, 1
        %s210 = scalar_select %p209, %s13, 1
        %s211 = smul.addr %s210, 32
        %s212 = smul.addr %s211, 8
        %s213 = scalar_lea.vmem %s0, %s212
      $region36: #{resnet_basicblock_forward.4} parent=31 // pred_fallthru
        _
    $region32: #{resnet_basicblock_forward.4} parent=5 // pred_fallthru
      _
    %p214 = scmp.le.s32.totalorder 1, %s13
    %p215 = scmp.lt.s32.totalorder %s13, 3
    %p216 = pnand %p214, %p215
    %p217 = pneg %p216
    // Predicated region
    $region37: #{resnet_basicblock_forward.4} parent=5 // pred_check
      _
    $region38: #{resnet_basicblock_forward.4} parent=5 // pred_check_branch
      %219 = sbr.rel (%p216) target = $region40
    $region39: #{resnet_basicblock_forward.4} parent=5 // pred_region
      %s220 = ssub.s32 %s13, 1
      %p221 = scmp.lt.s32.totalorder %s18, 1
      %s222 = scalar_select %p221, %s18, 1
      %s223 = smul.addr %s222, 32
      %s224 = smul.addr %s223, 8
      %s225 = scalar_lea.vmem %s0, %s224
      %p226 = pneg %p39
      %p227 = pneg %p36
      %p228 = pneg %p60
      %p229 = pneg %p57
      %p230 = pneg %p81
      %p231 = pneg %p78
      %p232 = pneg %p102
      %p233 = pneg %p99
      %p234 = pneg %p123
      %p235 = pneg %p120
      %p236 = pneg %p149
      %p237 = pneg %p146
      %p238 = scmp.lt.s32.totalorder %s18, 1
      %s239 = scalar_select %p238, %s18, 1
      %s240 = smul.addr %s239, 8
      %s241 = smul.addr %s240, 8
      %s242 = scalar_lea.vmem %s5, %s241
      %p243 = pneg %p175
      %p244 = pneg %p172
      %p245 = scmp.lt.s32.totalorder %s18, 1
      %s246 = scalar_select %p245, %s18, 1
      %s247 = smul.addr %s246, 2
      %s248 = scalar_lea.vmem %s6, %s247
      %p249 = scmp.lt.s32.totalorder %s18, 1
      %s250 = scalar_select %p249, %s18, 1
      %s251 = smul.addr %s250, 32
      %s252 = smul.addr %s251, 8
      %s253 = scalar_lea.vmem %s0, %s252
      %p254 = scmp.lt.s32.totalorder %s18, 1
      %s255 = scalar_select %p254, %s18, 1
      %s256 = smul.addr %s255, 8
      %s257 = smul.addr %s256, 8
      %s258 = scalar_lea.vmem %s5, %s257
      %p259 = scmp.lt.s32.totalorder %s18, 1
      %s260 = scalar_select %p259, %s18, 1
      %s261 = smul.addr %s260, 2
      %s262 = scalar_lea.vmem %s6, %s261
      %v263 = vld [vmem:[%s253] sm:$0xff]
      %v264 = vld [vmem:[%s253 + $0x8] sm:$0xff]
      %v265 = vld [vmem:[%s253 + $0x10] sm:$0xff]
      %v266 = vld [vmem:[%s253 + $0x18] sm:$0xff]
      %v267 = vld [vmem:[%s253 + $0x20] sm:$0xff]
      %v268 = vld [vmem:[%s253 + $0x28] sm:$0xff]
      %v269 = vld [vmem:[%s253 + $0x30] sm:$0xff]
      %v270 = vld [vmem:[%s253 + $0x38] sm:$0xff]
      %v271 = vld [vmem:[%s253 + $0x40] sm:$0xff]
      %v272 = vld [vmem:[%s253 + $0x48] sm:$0xff]
      %v273 = vld [vmem:[%s253 + $0x50] sm:$0xff]
      %v274 = vld [vmem:[%s253 + $0x58] sm:$0xff]
      %v275 = vld [vmem:[%s253 + $0x60] sm:$0xff]
      %v276 = vld [vmem:[%s253 + $0x68] sm:$0xff]
      %v277 = vld [vmem:[%s253 + $0x70] sm:$0xff]
      %v278 = vld [vmem:[%s253 + $0x78] sm:$0xff]
      %v279 = vld [vmem:[%s253 + $0x80] sm:$0xff]
      %v280 = vld [vmem:[%s253 + $0x88] sm:$0xff]
      %v281 = vld [vmem:[%s253 + $0x90] sm:$0xff]
      %v282 = vld [vmem:[%s253 + $0x98] sm:$0xff]
      %v283 = vld [vmem:[%s253 + $0xa0] sm:$0xff]
      %v284 = vld [vmem:[%s253 + $0xa8] sm:$0xff]
      %v285 = vld [vmem:[%s253 + $0xb0] sm:$0xff]
      %v286 = vld [vmem:[%s253 + $0xb8] sm:$0xff]
      %v287 = vld [vmem:[%s253 + $0xc0] sm:$0xff]
      %v288 = vld [vmem:[%s253 + $0xc8] sm:$0xff]
      %v289 = vld [vmem:[%s253 + $0xd0] sm:$0xff]
      %v290 = vld [vmem:[%s253 + $0xd8] sm:$0xff]
      %v291 = vld [vmem:[%s253 + $0xe0] sm:$0xff]
      %v292 = vld [vmem:[%s253 + $0xe8] sm:$0xff]
      %v293 = vld [vmem:[%s253 + $0xf0] sm:$0xff]
      %v294 = vld [vmem:[%s253 + $0xf8] sm:$0xff]
      %v295 = vld [vmem:[%s3] sm:$0x1]
      %v297 = vlaneseq
      %v298 = vshrl.u32 %v297, 7
      %v299 = vsub.s32 0, %v298
      %v300 = vrot.slane %v295, %v299
      %v302 = vmul.f32 %v263, %v300
      %v303 = vmul.f32 %v264, %v300
      %v304 = vmul.f32 %v265, %v300
      %v305 = vmul.f32 %v266, %v300
      %v306 = vmul.f32 %v267, %v300
      %v307 = vmul.f32 %v268, %v300
      %v308 = vmul.f32 %v269, %v300
      %v309 = vmul.f32 %v270, %v300
      %v310 = vmul.f32 %v271, %v300
      %v311 = vmul.f32 %v272, %v300
      %v312 = vmul.f32 %v273, %v300
      %v313 = vmul.f32 %v274, %v300
      %v314 = vmul.f32 %v275, %v300
      %v315 = vmul.f32 %v276, %v300
      %v316 = vmul.f32 %v277, %v300
      %v317 = vmul.f32 %v278, %v300
      %v318 = vmul.f32 %v279, %v300
      %v319 = vmul.f32 %v280, %v300
      %v320 = vmul.f32 %v281, %v300
      %v321 = vmul.f32 %v282, %v300
      %v322 = vmul.f32 %v283, %v300
      %v323 = vmul.f32 %v284, %v300
      %v324 = vmul.f32 %v285, %v300
      %v325 = vmul.f32 %v286, %v300
      %v326 = vmul.f32 %v287, %v300
      %v327 = vmul.f32 %v288, %v300
      %v328 = vmul.f32 %v289, %v300
      %v329 = vmul.f32 %v290, %v300
      %v330 = vmul.f32 %v291, %v300
      %v331 = vmul.f32 %v292, %v300
      %v332 = vmul.f32 %v293, %v300
      %v333 = vmul.f32 %v294, %v300
      %v334 = vld [vmem:[%s4] sm:$0x1]
      %v336 = vlaneseq
      %v337 = vshrl.u32 %v336, 7
      %v338 = vsub.s32 0, %v337
      %v339 = vrot.slane %v334, %v338
      %v341 = vadd.f32 %v302, %v339
      %v342 = vadd.f32 %v303, %v339
      %v343 = vadd.f32 %v304, %v339
      %v344 = vadd.f32 %v305, %v339
      %v345 = vadd.f32 %v306, %v339
      %v346 = vadd.f32 %v307, %v339
      %v347 = vadd.f32 %v308, %v339
      %v348 = vadd.f32 %v309, %v339
      %v349 = vadd.f32 %v310, %v339
      %v350 = vadd.f32 %v311, %v339
      %v351 = vadd.f32 %v312, %v339
      %v352 = vadd.f32 %v313, %v339
      %v353 = vadd.f32 %v314, %v339
      %v354 = vadd.f32 %v315, %v339
      %v355 = vadd.f32 %v316, %v339
      %v356 = vadd.f32 %v317, %v339
      %v357 = vadd.f32 %v318, %v339
      %v358 = vadd.f32 %v319, %v339
      %v359 = vadd.f32 %v320, %v339
      %v360 = vadd.f32 %v321, %v339
      %v361 = vadd.f32 %v322, %v339
      %v362 = vadd.f32 %v323, %v339
      %v363 = vadd.f32 %v324, %v339
      %v364 = vadd.f32 %v325, %v339
      %v365 = vadd.f32 %v326, %v339
      %v366 = vadd.f32 %v327, %v339
      %v367 = vadd.f32 %v328, %v339
      %v368 = vadd.f32 %v329, %v339
      %v369 = vadd.f32 %v330, %v339
      %v370 = vadd.f32 %v331, %v339
      %v371 = vadd.f32 %v332, %v339
      %v372 = vadd.f32 %v333, %v339
      %v373 = vmax.f32 %v341, 0.0
      %v374 = vmax.f32 %v342, 0.0
      %v375 = vmax.f32 %v343, 0.0
      %v376 = vmax.f32 %v344, 0.0
      %v377 = vmax.f32 %v345, 0.0
      %v378 = vmax.f32 %v346, 0.0
      %v379 = vmax.f32 %v347, 0.0
      %v380 = vmax.f32 %v348, 0.0
      %v381 = vmax.f32 %v349, 0.0
      %v382 = vmax.f32 %v350, 0.0
      %v383 = vmax.f32 %v351, 0.0
      %v384 = vmax.f32 %v352, 0.0
      %v385 = vmax.f32 %v353, 0.0
      %v386 = vmax.f32 %v354, 0.0
      %v387 = vmax.f32 %v355, 0.0
      %v388 = vmax.f32 %v356, 0.0
      %v389 = vmax.f32 %v357, 0.0
      %v390 = vmax.f32 %v358, 0.0
      %v391 = vmax.f32 %v359, 0.0
      %v392 = vmax.f32 %v360, 0.0
      %v393 = vmax.f32 %v361, 0.0
      %v394 = vmax.f32 %v362, 0.0
      %v395 = vmax.f32 %v363, 0.0
      %v396 = vmax.f32 %v364, 0.0
      %v397 = vmax.f32 %v365, 0.0
      %v398 = vmax.f32 %v366, 0.0
      %v399 = vmax.f32 %v367, 0.0
      %v400 = vmax.f32 %v368, 0.0
      %v401 = vmax.f32 %v369, 0.0
      %v402 = vmax.f32 %v370, 0.0
      %v403 = vmax.f32 %v371, 0.0
      %v404 = vmax.f32 %v372, 0.0
      %405 = vst [vmem:[#allocation2] sm:$0xff] 0.0
      %406 = vst [vmem:[#allocation2 + $0x8] sm:$0xff] 0.0
      %407 = vst [vmem:[#allocation2 + $0x10] sm:$0x3] 0.0
      %408 = vst [vmem:[#allocation2 + $0x18] sm:$0xff] 0.0
      %409 = vst [vmem:[#allocation2 + $0x20] sm:$0xff] 0.0
      %410 = vst [vmem:[#allocation2 + $0x28] sm:$0x3] 0.0
      %411 = vst [vmem:[#allocation2 + $0x30] sm:$0xff] 0.0
      %412 = vst [vmem:[#allocation2 + $0x38] sm:$0xff] 0.0
      %413 = vst [vmem:[#allocation2 + $0x40] sm:$0x3] 0.0
      %414 = vst [vmem:[#allocation2 + $0x48] sm:$0xff] 0.0
      %415 = vst [vmem:[#allocation2 + $0x50] sm:$0xff] 0.0
      %416 = vst [vmem:[#allocation2 + $0x58] sm:$0x3] 0.0
      %417 = vst [vmem:[#allocation2 + $0x60] sm:$0xff] 0.0
      %418 = vst [vmem:[#allocation2 + $0x68] sm:$0xff] 0.0
      %419 = vst [vmem:[#allocation2 + $0x70] sm:$0x3] 0.0
      %420 = vst [vmem:[#allocation2 + $0x78] sm:$0xff] 0.0
      %421 = vst [vmem:[#allocation2 + $0x80] sm:$0xff] 0.0
      %422 = vst [vmem:[#allocation2 + $0x88] sm:$0x3] 0.0
      %423 = vst [vmem:[#allocation2 + $0x90] sm:$0xff] 0.0
      %424 = vst [vmem:[#allocation2 + $0x98] sm:$0xff] 0.0
      %425 = vst [vmem:[#allocation2 + $0xa0] sm:$0x3] 0.0
      %426 = vst [vmem:[#allocation2 + $0xa8] sm:$0xff] 0.0
      %427 = vst [vmem:[#allocation2 + $0xb0] sm:$0xff] 0.0
      %428 = vst [vmem:[#allocation2 + $0xb8] sm:$0x3] 0.0
      %429 = vst [vmem:[#allocation2 + $0xc0] sm:$0xff] 0.0
      %430 = vst [vmem:[#allocation2 + $0xc8] sm:$0xff] 0.0
      %431 = vst [vmem:[#allocation2 + $0xd0] sm:$0x3] 0.0
      %432 = vst [vmem:[#allocation2 + $0xd8] sm:$0xff] 0.0
      %433 = vst [vmem:[#allocation2 + $0xe0] sm:$0xff] 0.0
      %434 = vst [vmem:[#allocation2 + $0xe8] sm:$0x3] 0.0
      %435 = vst [vmem:[#allocation2 + $0xf0] sm:$0xff] 0.0
      %436 = vst [vmem:[#allocation2 + $0xf8] sm:$0xff] 0.0
      %437 = vst [vmem:[#allocation2 + $0x100] sm:$0x3] 0.0
      %438 = vst [vmem:[#allocation2 + $0x108] sm:$0xff] 0.0
      %439 = vst [vmem:[#allocation2 + $0x110] sm:$0xff] 0.0
      %440 = vst [vmem:[#allocation2 + $0x118] sm:$0x3] 0.0
      %441 = vst [vmem:[#allocation2 + $0x120] sm:$0xff] 0.0
      %442 = vst [vmem:[#allocation2 + $0x128] sm:$0xff] 0.0
      %443 = vst [vmem:[#allocation2 + $0x130] sm:$0x3] 0.0
      %444 = vst [vmem:[#allocation2 + $0x138] sm:$0xff] 0.0
      %445 = vst [vmem:[#allocation2 + $0x140] sm:$0xff] 0.0
      %446 = vst [vmem:[#allocation2 + $0x148] sm:$0x3] 0.0
      %447 = vst [vmem:[#allocation2 + $0x150] sm:$0xff] 0.0
      %448 = vst [vmem:[#allocation2 + $0x158] sm:$0xff] 0.0
      %449 = vst [vmem:[#allocation2 + $0x160] sm:$0x3] 0.0
      %450 = vst [vmem:[#allocation2 + $0x168] sm:$0xff] 0.0
      %451 = vst [vmem:[#allocation2 + $0x170] sm:$0xff] 0.0
      %452 = vst [vmem:[#allocation2 + $0x178] sm:$0x3] 0.0
      %453 = vst [vmem:[#allocation2 + $0x180] sm:$0xff] 0.0
      %454 = vst [vmem:[#allocation2 + $0x188] sm:$0xff] 0.0
      %455 = vst [vmem:[#allocation2 + $0x190] sm:$0x3] 0.0
      %456 = vst [vmem:[#allocation2 + $0x198] sm:$0xff] 0.0
      %457 = vst [vmem:[#allocation2 + $0x1a0] sm:$0xff] 0.0
      %458 = vst [vmem:[#allocation2 + $0x1a8] sm:$0x3] 0.0
      %s459 = scalar_lea.vmem [#allocation2], 24
      %460 = vst [vmem:[%s459 + $0x1] sm:$0xff] %v373
      %461 = vst [vmem:[%s459 + $0x9] sm:$0xff] %v374
      %462 = vst [vmem:[%s459 + $0x19] sm:$0xff] %v375
      %463 = vst [vmem:[%s459 + $0x21] sm:$0xff] %v376
      %464 = vst [vmem:[%s459 + $0x31] sm:$0xff] %v377
      %465 = vst [vmem:[%s459 + $0x39] sm:$0xff] %v378
      %466 = vst [vmem:[%s459 + $0x49] sm:$0xff] %v379
      %467 = vst [vmem:[%s459 + $0x51] sm:$0xff] %v380
      %468 = vst [vmem:[%s459 + $0x61] sm:$0xff] %v381
      %469 = vst [vmem:[%s459 + $0x69] sm:$0xff] %v382
      %470 = vst [vmem:[%s459 + $0x79] sm:$0xff] %v383
      %471 = vst [vmem:[%s459 + $0x81] sm:$0xff] %v384
      %472 = vst [vmem:[%s459 + $0x91] sm:$0xff] %v385
      %473 = vst [vmem:[%s459 + $0x99] sm:$0xff] %v386
      %474 = vst [vmem:[%s459 + $0xa9] sm:$0xff] %v387
      %475 = vst [vmem:[%s459 + $0xb1] sm:$0xff] %v388
      %476 = vst [vmem:[%s459 + $0xc1] sm:$0xff] %v389
      %477 = vst [vmem:[%s459 + $0xc9] sm:$0xff] %v390
      %478 = vst [vmem:[%s459 + $0xd9] sm:$0xff] %v391
      %479 = vst [vmem:[%s459 + $0xe1] sm:$0xff] %v392
      %480 = vst [vmem:[%s459 + $0xf1] sm:$0xff] %v393
      %481 = vst [vmem:[%s459 + $0xf9] sm:$0xff] %v394
      %482 = vst [vmem:[%s459 + $0x109] sm:$0xff] %v395
      %483 = vst [vmem:[%s459 + $0x111] sm:$0xff] %v396
      %484 = vst [vmem:[%s459 + $0x121] sm:$0xff] %v397
      %485 = vst [vmem:[%s459 + $0x129] sm:$0xff] %v398
      %486 = vst [vmem:[%s459 + $0x139] sm:$0xff] %v399
      %487 = vst [vmem:[%s459 + $0x141] sm:$0xff] %v400
      %488 = vst [vmem:[%s459 + $0x151] sm:$0xff] %v401
      %489 = vst [vmem:[%s459 + $0x159] sm:$0xff] %v402
      %490 = vst [vmem:[%s459 + $0x169] sm:$0xff] %v403
      %491 = vst [vmem:[%s459 + $0x171] sm:$0xff] %v404
      %v492 = vld [vmem:[#allocation2] ss:$2 sm:$0xff]
      %s493 = scalar_lea.vmem [#allocation2], 48
      %v494 = vld [vmem:[%s493] ss:$2 sm:$0xff]
      %s495 = scalar_lea.vmem [#allocation2], 96
      %v496 = vld [vmem:[%s495] ss:$2 sm:$0xff]
      %s497 = scalar_lea.vmem [#allocation2], 144
      %v498 = vld [vmem:[%s497] ss:$2 sm:$0xff]
      %s499 = scalar_lea.vmem [#allocation2], 192
      %v500 = vld [vmem:[%s499] ss:$2 sm:$0xff]
      %s501 = scalar_lea.vmem [#allocation2], 240
      %v502 = vld [vmem:[%s501] ss:$2 sm:$0xff]
      %s503 = scalar_lea.vmem [#allocation2], 288
      %v504 = vld [vmem:[%s503] ss:$2 sm:$0xff]
      %s505 = scalar_lea.vmem [#allocation2], 336
      %v506 = vld [vmem:[%s505] ss:$2 sm:$0xff]
      %v507 = vld [vmem:[%s1] sm:$0xff]
      %v508 = vld [vmem:[%s1 + $0x8] sm:$0xff]
      %v509 = vld [vmem:[%s1 + $0x10] sm:$0xff]
      %v510 = vld [vmem:[%s1 + $0x18] sm:$0xff]
      %v511 = vld [vmem:[%s1 + $0x20] sm:$0xff]
      %v512 = vld [vmem:[%s1 + $0x28] sm:$0xff]
      %v513 = vld [vmem:[%s1 + $0x30] sm:$0xff]
      %v514 = vld [vmem:[%s1 + $0x38] sm:$0xff]
      %v515 = vld [vmem:[%s1 + $0x40] sm:$0xff]
      %v516 = vld [vmem:[%s1 + $0x48] sm:$0xff]
      %v517 = vld [vmem:[%s1 + $0x50] sm:$0xff]
      %v518 = vld [vmem:[%s1 + $0x58] sm:$0xff]
      %v519 = vld [vmem:[%s1 + $0x60] sm:$0xff]
      %v520 = vld [vmem:[%s1 + $0x68] sm:$0xff]
      %v521 = vld [vmem:[%s1 + $0x70] sm:$0xff]
      %v522 = vld [vmem:[%s1 + $0x78] sm:$0xff]
      %523 = vmatprep.subr.mxu0 0.0
      %524 = vmatpush1.msra.mxu0 %v522
      %525 = vmatprep.subr.mxu0 0.0
      %526 = vmatpush1.msra.mxu0 %v521
      %527 = vmatprep.subr.mxu0 0.0
      %528 = vmatpush1.msra.mxu0 %v520
      %529 = vmatprep.subr.mxu0 0.0
      %530 = vmatpush1.msra.mxu0 %v519
      %531 = vmatprep.subr.mxu0 0.0
      %532 = vmatpush1.msra.mxu0 %v518
      %533 = vmatprep.subr.mxu0 0.0
      %534 = vmatpush1.msra.mxu0 %v517
      %535 = vmatprep.subr.mxu0 0.0
      %536 = vmatpush1.msra.mxu0 %v516
      %537 = vmatprep.subr.mxu0 0.0
      %538 = vmatpush1.msra.mxu0 %v515
      %539 = vmatprep.subr.mxu0 0.0
      %540 = vmatpush1.msra.mxu0 %v514
      %541 = vmatprep.subr.mxu0 0.0
      %542 = vmatpush1.msra.mxu0 %v513
      %543 = vmatprep.subr.mxu0 0.0
      %544 = vmatpush1.msra.mxu0 %v512
      %545 = vmatprep.subr.mxu0 0.0
      %546 = vmatpush1.msra.mxu0 %v511
      %547 = vmatprep.subr.mxu0 0.0
      %548 = vmatpush1.msra.mxu0 %v510
      %549 = vmatprep.subr.mxu0 0.0
      %550 = vmatpush1.msra.mxu0 %v509
      %551 = vmatprep.subr.mxu0 0.0
      %552 = vmatpush1.msra.mxu0 %v508
      %553 = vmatprep.subr.mxu0 0.0
      %554 = vmatpush1.msra.mxu0 %v507
      %555 = vmatprep.subr.mxu0 0.0
      %556 = vmatpush2.msra.mxu0 0.0
      %557 = vmatprep.subr.mxu0 0.0
      %558 = vmatpush2.msra.mxu0 0.0
      %559 = vmatprep.subr.mxu0 0.0
      %560 = vmatpush2.msra.mxu0 0.0
      %561 = vmatprep.subr.mxu0 0.0
      %562 = vmatpush2.msra.mxu0 0.0
      %563 = vmatprep.subr.mxu0 0.0
      %564 = vmatpush2.msra.mxu0 0.0
      %565 = vmatprep.subr.mxu0 0.0
      %566 = vmatpush2.msra.mxu0 0.0
      %567 = vmatprep.subr.mxu0 0.0
      %568 = vmatpush2.msra.mxu0 0.0
      %569 = vmatprep.subr.mxu0 0.0
      %570 = vmatpush2.msra.mxu0 0.0
      %571 = vmatprep.subr.mxu0 0.0
      %572 = vmatpush2.msra.mxu0 0.0
      %573 = vmatprep.subr.mxu0 0.0
      %574 = vmatpush2.msra.mxu0 0.0
      %575 = vmatprep.subr.mxu0 0.0
      %576 = vmatpush2.msra.mxu0 0.0
      %577 = vmatprep.subr.mxu0 0.0
      %578 = vmatpush2.msra.mxu0 0.0
      %579 = vmatprep.subr.mxu0 0.0
      %580 = vmatpush2.msra.mxu0 0.0
      %581 = vmatprep.subr.mxu0 0.0
      %582 = vmatpush2.msra.mxu0 0.0
      %583 = vmatprep.subr.mxu0 0.0
      %584 = vmatpush2.msra.mxu0 0.0
      %585 = vmatprep.subr.mxu0 0.0
      %586 = vmatpush2.msra.mxu0 0.0
      %587 = vmatprep.mubr.f32.mxu0 0.0
      %588 = vmatmul.mubr.f32.gmra.mxu0 %v492
      %v589 = vpop.f32.mrf.mxu0
      %v590 = vadd.f32 0.0, %v589
      %v591 = vpop.f32.mrf.mxu0
      %592 = vmatprep.mubr.f32.mxu0 0.0
      %593 = vmatmul.mubr.f32.gmra.mxu0 %v494
      %v594 = vpop.f32.mrf.mxu0
      %v595 = vadd.f32 0.0, %v594
      %v596 = vpop.f32.mrf.mxu0
      %597 = vmatprep.mubr.f32.mxu0 0.0
      %598 = vmatmul.mubr.f32.gmra.mxu0 %v496
      %v599 = vpop.f32.mrf.mxu0
      %v600 = vadd.f32 0.0, %v599
      %v601 = vpop.f32.mrf.mxu0
      %602 = vmatprep.mubr.f32.mxu0 0.0
      %603 = vmatmul.mubr.f32.gmra.mxu0 %v498
      %v604 = vpop.f32.mrf.mxu0
      %v605 = vadd.f32 0.0, %v604
      %v606 = vpop.f32.mrf.mxu0
      %607 = vmatprep.mubr.f32.mxu0 0.0
      %608 = vmatmul.mubr.f32.gmra.mxu0 %v500
      %v609 = vpop.f32.mrf.mxu0
      %v610 = vadd.f32 0.0, %v609
      %v611 = vpop.f32.mrf.mxu0
      %612 = vmatprep.mubr.f32.mxu0 0.0
      %613 = vmatmul.mubr.f32.gmra.mxu0 %v502
      %v614 = vpop.f32.mrf.mxu0
      %v615 = vadd.f32 0.0, %v614
      %v616 = vpop.f32.mrf.mxu0
      %617 = vmatprep.mubr.f32.mxu0 0.0
      %618 = vmatmul.mubr.f32.gmra.mxu0 %v504
      %v619 = vpop.f32.mrf.mxu0
      %v620 = vadd.f32 0.0, %v619
      %v621 = vpop.f32.mrf.mxu0
      %622 = vmatprep.mubr.f32.mxu0 0.0
      %623 = vmatmul.mubr.f32.gmra.mxu0 %v506
      %v624 = vpop.f32.mrf.mxu0
      %v625 = vadd.f32 0.0, %v624
      %v626 = vpop.f32.mrf.mxu0
      %627 = vdwg.mxu0
      %628 = vst [vmem:[#allocation3] sm:$0xff] %v590
      %629 = vst [vmem:[#allocation3 + $0x8] sm:$0xff] %v595
      %630 = vst [vmem:[#allocation3 + $0x10] sm:$0xff] %v600
      %631 = vst [vmem:[#allocation3 + $0x18] sm:$0xff] %v605
      %632 = vst [vmem:[#allocation3 + $0x20] sm:$0xff] %v610
      %633 = vst [vmem:[#allocation3 + $0x28] sm:$0xff] %v615
      %634 = vst [vmem:[#allocation3 + $0x30] sm:$0xff] %v620
      %635 = vst [vmem:[#allocation3 + $0x38] sm:$0xff] %v625
      %s636 = scalar_lea.vmem [#allocation2], 1
      %v637 = vld [vmem:[%s636] ss:$2 sm:$0xff]
      %s638 = scalar_lea.vmem [#allocation2], 49
      %v639 = vld [vmem:[%s638] ss:$2 sm:$0xff]
      %s640 = scalar_lea.vmem [#allocation2], 97
      %v641 = vld [vmem:[%s640] ss:$2 sm:$0xff]
      %s642 = scalar_lea.vmem [#allocation2], 145
      %v643 = vld [vmem:[%s642] ss:$2 sm:$0xff]
      %s644 = scalar_lea.vmem [#allocation2], 193
      %v645 = vld [vmem:[%s644] ss:$2 sm:$0xff]
      %s646 = scalar_lea.vmem [#allocation2], 241
      %v647 = vld [vmem:[%s646] ss:$2 sm:$0xff]
      %s648 = scalar_lea.vmem [#allocation2], 289
      %v649 = vld [vmem:[%s648] ss:$2 sm:$0xff]
      %s650 = scalar_lea.vmem [#allocation2], 337
      %v651 = vld [vmem:[%s650] ss:$2 sm:$0xff]
      %s652 = scalar_lea.vmem %s1, 128
      %v653 = vld [vmem:[%s652] sm:$0xff]
      %v654 = vld [vmem:[%s652 + $0x8] sm:$0xff]
      %v655 = vld [vmem:[%s652 + $0x10] sm:$0xff]
      %v656 = vld [vmem:[%s652 + $0x18] sm:$0xff]
      %v657 = vld [vmem:[%s652 + $0x20] sm:$0xff]
      %v658 = vld [vmem:[%s652 + $0x28] sm:$0xff]
      %v659 = vld [vmem:[%s652 + $0x30] sm:$0xff]
      %v660 = vld [vmem:[%s652 + $0x38] sm:$0xff]
      %v661 = vld [vmem:[%s652 + $0x40] sm:$0xff]
      %v662 = vld [vmem:[%s652 + $0x48] sm:$0xff]
      %v663 = vld [vmem:[%s652 + $0x50] sm:$0xff]
      %v664 = vld [vmem:[%s652 + $0x58] sm:$0xff]
      %v665 = vld [vmem:[%s652 + $0x60] sm:$0xff]
      %v666 = vld [vmem:[%s652 + $0x68] sm:$0xff]
      %v667 = vld [vmem:[%s652 + $0x70] sm:$0xff]
      %v668 = vld [vmem:[%s652 + $0x78] sm:$0xff]
      %669 = vmatprep.subr.mxu0 0.0
      %670 = vmatpush1.msra.mxu0 %v668
      %671 = vmatprep.subr.mxu0 0.0
      %672 = vmatpush1.msra.mxu0 %v667
      %673 = vmatprep.subr.mxu0 0.0
      %674 = vmatpush1.msra.mxu0 %v666
      %675 = vmatprep.subr.mxu0 0.0
      %676 = vmatpush1.msra.mxu0 %v665
      %677 = vmatprep.subr.mxu0 0.0
      %678 = vmatpush1.msra.mxu0 %v664
      %679 = vmatprep.subr.mxu0 0.0
      %680 = vmatpush1.msra.mxu0 %v663
      %681 = vmatprep.subr.mxu0 0.0
      %682 = vmatpush1.msra.mxu0 %v662
      %683 = vmatprep.subr.mxu0 0.0
      %684 = vmatpush1.msra.mxu0 %v661
      %685 = vmatprep.subr.mxu0 0.0
      %686 = vmatpush1.msra.mxu0 %v660
      %687 = vmatprep.subr.mxu0 0.0
      %688 = vmatpush1.msra.mxu0 %v659
      %689 = vmatprep.subr.mxu0 0.0
      %690 = vmatpush1.msra.mxu0 %v658
      %691 = vmatprep.subr.mxu0 0.0
      %692 = vmatpush1.msra.mxu0 %v657
      %693 = vmatprep.subr.mxu0 0.0
      %694 = vmatpush1.msra.mxu0 %v656
      %695 = vmatprep.subr.mxu0 0.0
      %696 = vmatpush1.msra.mxu0 %v655
      %697 = vmatprep.subr.mxu0 0.0
      %698 = vmatpush1.msra.mxu0 %v654
      %699 = vmatprep.subr.mxu0 0.0
      %700 = vmatpush1.msra.mxu0 %v653
      %701 = vmatprep.subr.mxu0 0.0
      %702 = vmatpush2.msra.mxu0 0.0
      %703 = vmatprep.subr.mxu0 0.0
      %704 = vmatpush2.msra.mxu0 0.0
      %705 = vmatprep.subr.mxu0 0.0
      %706 = vmatpush2.msra.mxu0 0.0
      %707 = vmatprep.subr.mxu0 0.0
      %708 = vmatpush2.msra.mxu0 0.0
      %709 = vmatprep.subr.mxu0 0.0
      %710 = vmatpush2.msra.mxu0 0.0
      %711 = vmatprep.subr.mxu0 0.0
      %712 = vmatpush2.msra.mxu0 0.0
      %713 = vmatprep.subr.mxu0 0.0
      %714 = vmatpush2.msra.mxu0 0.0
      %715 = vmatprep.subr.mxu0 0.0
      %716 = vmatpush2.msra.mxu0 0.0
      %717 = vmatprep.subr.mxu0 0.0
      %718 = vmatpush2.msra.mxu0 0.0
      %719 = vmatprep.subr.mxu0 0.0
      %720 = vmatpush2.msra.mxu0 0.0
      %721 = vmatprep.subr.mxu0 0.0
      %722 = vmatpush2.msra.mxu0 0.0
      %723 = vmatprep.subr.mxu0 0.0
      %724 = vmatpush2.msra.mxu0 0.0
      %725 = vmatprep.subr.mxu0 0.0
      %726 = vmatpush2.msra.mxu0 0.0
      %727 = vmatprep.subr.mxu0 0.0
      %728 = vmatpush2.msra.mxu0 0.0
      %729 = vmatprep.subr.mxu0 0.0
      %730 = vmatpush2.msra.mxu0 0.0
      %731 = vmatprep.subr.mxu0 0.0
      %732 = vmatpush2.msra.mxu0 0.0
      %733 = vmatprep.mubr.f32.mxu0 0.0
      %734 = vmatmul.mubr.f32.gmra.mxu0 %v637
      %v735 = vpop.f32.mrf.mxu0
      %v736 = vadd.f32 0.0, %v735
      %v737 = vpop.f32.mrf.mxu0
      %738 = vmatprep.mubr.f32.mxu0 0.0
      %739 = vmatmul.mubr.f32.gmra.mxu0 %v639
      %v740 = vpop.f32.mrf.mxu0
      %v741 = vadd.f32 0.0, %v740
      %v742 = vpop.f32.mrf.mxu0
      %743 = vmatprep.mubr.f32.mxu0 0.0
      %744 = vmatmul.mubr.f32.gmra.mxu0 %v641
      %v745 = vpop.f32.mrf.mxu0
      %v746 = vadd.f32 0.0, %v745
      %v747 = vpop.f32.mrf.mxu0
      %748 = vmatprep.mubr.f32.mxu0 0.0
      %749 = vmatmul.mubr.f32.gmra.mxu0 %v643
      %v750 = vpop.f32.mrf.mxu0
      %v751 = vadd.f32 0.0, %v750
      %v752 = vpop.f32.mrf.mxu0
      %753 = vmatprep.mubr.f32.mxu0 0.0
      %754 = vmatmul.mubr.f32.gmra.mxu0 %v645
      %v755 = vpop.f32.mrf.mxu0
      %v756 = vadd.f32 0.0, %v755
      %v757 = vpop.f32.mrf.mxu0
      %758 = vmatprep.mubr.f32.mxu0 0.0
      %759 = vmatmul.mubr.f32.gmra.mxu0 %v647
      %v760 = vpop.f32.mrf.mxu0
      %v761 = vadd.f32 0.0, %v760
      %v762 = vpop.f32.mrf.mxu0
      %763 = vmatprep.mubr.f32.mxu0 0.0
      %764 = vmatmul.mubr.f32.gmra.mxu0 %v649
      %v765 = vpop.f32.mrf.mxu0
      %v766 = vadd.f32 0.0, %v765
      %v767 = vpop.f32.mrf.mxu0
      %768 = vmatprep.mubr.f32.mxu0 0.0
      %769 = vmatmul.mubr.f32.gmra.mxu0 %v651
      %v770 = vpop.f32.mrf.mxu0
      %v771 = vadd.f32 0.0, %v770
      %v772 = vpop.f32.mrf.mxu0
      %773 = vdwg.mxu0
      %v774 = vld [vmem:[#allocation3] sm:$0xff]
      %v775 = vld [vmem:[#allocation3 + $0x8] sm:$0xff]
      %v776 = vld [vmem:[#allocation3 + $0x10] sm:$0xff]
      %v777 = vld [vmem:[#allocation3 + $0x18] sm:$0xff]
      %v778 = vld [vmem:[#allocation3 + $0x20] sm:$0xff]
      %v779 = vld [vmem:[#allocation3 + $0x28] sm:$0xff]
      %v780 = vld [vmem:[#allocation3 + $0x30] sm:$0xff]
      %v781 = vld [vmem:[#allocation3 + $0x38] sm:$0xff]
      %v782 = vadd.f32 %v774, %v736
      %v783 = vadd.f32 %v775, %v741
      %v784 = vadd.f32 %v776, %v746
      %v785 = vadd.f32 %v777, %v751
      %v786 = vadd.f32 %v778, %v756
      %v787 = vadd.f32 %v779, %v761
      %v788 = vadd.f32 %v780, %v766
      %v789 = vadd.f32 %v781, %v771
      %790 = vst [vmem:[#allocation3] sm:$0xff] %v782
      %791 = vst [vmem:[#allocation3 + $0x8] sm:$0xff] %v783
      %792 = vst [vmem:[#allocation3 + $0x10] sm:$0xff] %v784
      %793 = vst [vmem:[#allocation3 + $0x18] sm:$0xff] %v785
      %794 = vst [vmem:[#allocation3 + $0x20] sm:$0xff] %v786
      %795 = vst [vmem:[#allocation3 + $0x28] sm:$0xff] %v787
      %796 = vst [vmem:[#allocation3 + $0x30] sm:$0xff] %v788
      %797 = vst [vmem:[#allocation3 + $0x38] sm:$0xff] %v789
      %s798 = scalar_lea.vmem [#allocation2], 2
      %v799 = vld [vmem:[%s798] ss:$2 sm:$0xff]
      %s800 = scalar_lea.vmem [#allocation2], 50
      %v801 = vld [vmem:[%s800] ss:$2 sm:$0xff]
      %s802 = scalar_lea.vmem [#allocation2], 98
      %v803 = vld [vmem:[%s802] ss:$2 sm:$0xff]
      %s804 = scalar_lea.vmem [#allocation2], 146
      %v805 = vld [vmem:[%s804] ss:$2 sm:$0xff]
      %s806 = scalar_lea.vmem [#allocation2], 194
      %v807 = vld [vmem:[%s806] ss:$2 sm:$0xff]
      %s808 = scalar_lea.vmem [#allocation2], 242
      %v809 = vld [vmem:[%s808] ss:$2 sm:$0xff]
      %s810 = scalar_lea.vmem [#allocation2], 290
      %v811 = vld [vmem:[%s810] ss:$2 sm:$0xff]
      %s812 = scalar_lea.vmem [#allocation2], 338
      %v813 = vld [vmem:[%s812] ss:$2 sm:$0xff]
      %s814 = scalar_lea.vmem %s1, 256
      %v815 = vld [vmem:[%s814] sm:$0xff]
      %v816 = vld [vmem:[%s814 + $0x8] sm:$0xff]
      %v817 = vld [vmem:[%s814 + $0x10] sm:$0xff]
      %v818 = vld [vmem:[%s814 + $0x18] sm:$0xff]
      %v819 = vld [vmem:[%s814 + $0x20] sm:$0xff]
      %v820 = vld [vmem:[%s814 + $0x28] sm:$0xff]
      %v821 = vld [vmem:[%s814 + $0x30] sm:$0xff]
      %v822 = vld [vmem:[%s814 + $0x38] sm:$0xff]
      %v823 = vld [vmem:[%s814 + $0x40] sm:$0xff]
      %v824 = vld [vmem:[%s814 + $0x48] sm:$0xff]
      %v825 = vld [vmem:[%s814 + $0x50] sm:$0xff]
      %v826 = vld [vmem:[%s814 + $0x58] sm:$0xff]
      %v827 = vld [vmem:[%s814 + $0x60] sm:$0xff]
      %v828 = vld [vmem:[%s814 + $0x68] sm:$0xff]
      %v829 = vld [vmem:[%s814 + $0x70] sm:$0xff]
      %v830 = vld [vmem:[%s814 + $0x78] sm:$0xff]
      %831 = vmatprep.subr.mxu0 0.0
      %832 = vmatpush1.msra.mxu0 %v830
      %833 = vmatprep.subr.mxu0 0.0
      %834 = vmatpush1.msra.mxu0 %v829
      %835 = vmatprep.subr.mxu0 0.0
      %836 = vmatpush1.msra.mxu0 %v828
      %837 = vmatprep.subr.mxu0 0.0
      %838 = vmatpush1.msra.mxu0 %v827
      %839 = vmatprep.subr.mxu0 0.0
      %840 = vmatpush1.msra.mxu0 %v826
      %841 = vmatprep.subr.mxu0 0.0
      %842 = vmatpush1.msra.mxu0 %v825
      %843 = vmatprep.subr.mxu0 0.0
      %844 = vmatpush1.msra.mxu0 %v824
      %845 = vmatprep.subr.mxu0 0.0
      %846 = vmatpush1.msra.mxu0 %v823
      %847 = vmatprep.subr.mxu0 0.0
      %848 = vmatpush1.msra.mxu0 %v822
      %849 = vmatprep.subr.mxu0 0.0
      %850 = vmatpush1.msra.mxu0 %v821
      %851 = vmatprep.subr.mxu0 0.0
      %852 = vmatpush1.msra.mxu0 %v820
      %853 = vmatprep.subr.mxu0 0.0
      %854 = vmatpush1.msra.mxu0 %v819
      %855 = vmatprep.subr.mxu0 0.0
      %856 = vmatpush1.msra.mxu0 %v818
      %857 = vmatprep.subr.mxu0 0.0
      %858 = vmatpush1.msra.mxu0 %v817
      %859 = vmatprep.subr.mxu0 0.0
      %860 = vmatpush1.msra.mxu0 %v816
      %861 = vmatprep.subr.mxu0 0.0
      %862 = vmatpush1.msra.mxu0 %v815
      %863 = vmatprep.subr.mxu0 0.0
      %864 = vmatpush2.msra.mxu0 0.0
      %865 = vmatprep.subr.mxu0 0.0
      %866 = vmatpush2.msra.mxu0 0.0
      %867 = vmatprep.subr.mxu0 0.0
      %868 = vmatpush2.msra.mxu0 0.0
      %869 = vmatprep.subr.mxu0 0.0
      %870 = vmatpush2.msra.mxu0 0.0
      %871 = vmatprep.subr.mxu0 0.0
      %872 = vmatpush2.msra.mxu0 0.0
      %873 = vmatprep.subr.mxu0 0.0
      %874 = vmatpush2.msra.mxu0 0.0
      %875 = vmatprep.subr.mxu0 0.0
      %876 = vmatpush2.msra.mxu0 0.0
      %877 = vmatprep.subr.mxu0 0.0
      %878 = vmatpush2.msra.mxu0 0.0
      %879 = vmatprep.subr.mxu0 0.0
      %880 = vmatpush2.msra.mxu0 0.0
      %881 = vmatprep.subr.mxu0 0.0
      %882 = vmatpush2.msra.mxu0 0.0
      %883 = vmatprep.subr.mxu0 0.0
      %884 = vmatpush2.msra.mxu0 0.0
      %885 = vmatprep.subr.mxu0 0.0
      %886 = vmatpush2.msra.mxu0 0.0
      %887 = vmatprep.subr.mxu0 0.0
      %888 = vmatpush2.msra.mxu0 0.0
      %889 = vmatprep.subr.mxu0 0.0
      %890 = vmatpush2.msra.mxu0 0.0
      %891 = vmatprep.subr.mxu0 0.0
      %892 = vmatpush2.msra.mxu0 0.0
      %893 = vmatprep.subr.mxu0 0.0
      %894 = vmatpush2.msra.mxu0 0.0
      %895 = vmatprep.mubr.f32.mxu0 0.0
      %896 = vmatmul.mubr.f32.gmra.mxu0 %v799
      %v897 = vpop.f32.mrf.mxu0
      %v898 = vadd.f32 0.0, %v897
      %v899 = vpop.f32.mrf.mxu0
      %900 = vmatprep.mubr.f32.mxu0 0.0
      %901 = vmatmul.mubr.f32.gmra.mxu0 %v801
      %v902 = vpop.f32.mrf.mxu0
      %v903 = vadd.f32 0.0, %v902
      %v904 = vpop.f32.mrf.mxu0
      %905 = vmatprep.mubr.f32.mxu0 0.0
      %906 = vmatmul.mubr.f32.gmra.mxu0 %v803
      %v907 = vpop.f32.mrf.mxu0
      %v908 = vadd.f32 0.0, %v907
      %v909 = vpop.f32.mrf.mxu0
      %910 = vmatprep.mubr.f32.mxu0 0.0
      %911 = vmatmul.mubr.f32.gmra.mxu0 %v805
      %v912 = vpop.f32.mrf.mxu0
      %v913 = vadd.f32 0.0, %v912
      %v914 = vpop.f32.mrf.mxu0
      %915 = vmatprep.mubr.f32.mxu0 0.0
      %916 = vmatmul.mubr.f32.gmra.mxu0 %v807
      %v917 = vpop.f32.mrf.mxu0
      %v918 = vadd.f32 0.0, %v917
      %v919 = vpop.f32.mrf.mxu0
      %920 = vmatprep.mubr.f32.mxu0 0.0
      %921 = vmatmul.mubr.f32.gmra.mxu0 %v809
      %v922 = vpop.f32.mrf.mxu0
      %v923 = vadd.f32 0.0, %v922
      %v924 = vpop.f32.mrf.mxu0
      %925 = vmatprep.mubr.f32.mxu0 0.0
      %926 = vmatmul.mubr.f32.gmra.mxu0 %v811
      %v927 = vpop.f32.mrf.mxu0
      %v928 = vadd.f32 0.0, %v927
      %v929 = vpop.f32.mrf.mxu0
      %930 = vmatprep.mubr.f32.mxu0 0.0
      %931 = vmatmul.mubr.f32.gmra.mxu0 %v813
      %v932 = vpop.f32.mrf.mxu0
      %v933 = vadd.f32 0.0, %v932
      %v934 = vpop.f32.mrf.mxu0
      %935 = vdwg.mxu0
      %v936 = vld [vmem:[#allocation3] sm:$0xff]
      %v937 = vld [vmem:[#allocation3 + $0x8] sm:$0xff]
      %v938 = vld [vmem:[#allocation3 + $0x10] sm:$0xff]
      %v939 = vld [vmem:[#allocation3 + $0x18] sm:$0xff]
      %v940 = vld [vmem:[#allocation3 + $0x20] sm:$0xff]
      %v941 = vld [vmem:[#allocation3 + $0x28] sm:$0xff]
      %v942 = vld [vmem:[#allocation3 + $0x30] sm:$0xff]
      %v943 = vld [vmem:[#allocation3 + $0x38] sm:$0xff]
      %v944 = vadd.f32 %v936, %v898
      %v945 = vadd.f32 %v937, %v903
      %v946 = vadd.f32 %v938, %v908
      %v947 = vadd.f32 %v939, %v913
      %v948 = vadd.f32 %v940, %v918
      %v949 = vadd.f32 %v941, %v923
      %v950 = vadd.f32 %v942, %v928
      %v951 = vadd.f32 %v943, %v933
      %952 = vst [vmem:[#allocation3] sm:$0xff] %v944
      %953 = vst [vmem:[#allocation3 + $0x8] sm:$0xff] %v945
      %954 = vst [vmem:[#allocation3 + $0x10] sm:$0xff] %v946
      %955 = vst [vmem:[#allocation3 + $0x18] sm:$0xff] %v947
      %956 = vst [vmem:[#allocation3 + $0x20] sm:$0xff] %v948
      %957 = vst [vmem:[#allocation3 + $0x28] sm:$0xff] %v949
      %958 = vst [vmem:[#allocation3 + $0x30] sm:$0xff] %v950
      %959 = vst [vmem:[#allocation3 + $0x38] sm:$0xff] %v951
      %v960 = vld [vmem:[%s459] ss:$2 sm:$0xff]
      %s961 = scalar_lea.vmem %s459, 48 [#allocation2]
      %v962 = vld [vmem:[%s961] ss:$2 sm:$0xff]
      %s963 = scalar_lea.vmem %s459, 96 [#allocation2]
      %v964 = vld [vmem:[%s963] ss:$2 sm:$0xff]
      %s965 = scalar_lea.vmem %s459, 144 [#allocation2]
      %v966 = vld [vmem:[%s965] ss:$2 sm:$0xff]
      %s967 = scalar_lea.vmem %s459, 192 [#allocation2]
      %v968 = vld [vmem:[%s967] ss:$2 sm:$0xff]
      %s969 = scalar_lea.vmem %s459, 240 [#allocation2]
      %v970 = vld [vmem:[%s969] ss:$2 sm:$0xff]
      %s971 = scalar_lea.vmem %s459, 288 [#allocation2]
      %v972 = vld [vmem:[%s971] ss:$2 sm:$0xff]
      %s973 = scalar_lea.vmem %s459, 336 [#allocation2]
      %v974 = vld [vmem:[%s973] ss:$2 sm:$0xff]
      %s975 = scalar_lea.vmem %s1, 384
      %v976 = vld [vmem:[%s975] sm:$0xff]
      %v977 = vld [vmem:[%s975 + $0x8] sm:$0xff]
      %v978 = vld [vmem:[%s975 + $0x10] sm:$0xff]
      %v979 = vld [vmem:[%s975 + $0x18] sm:$0xff]
      %v980 = vld [vmem:[%s975 + $0x20] sm:$0xff]
      %v981 = vld [vmem:[%s975 + $0x28] sm:$0xff]
      %v982 = vld [vmem:[%s975 + $0x30] sm:$0xff]
      %v983 = vld [vmem:[%s975 + $0x38] sm:$0xff]
      %v984 = vld [vmem:[%s975 + $0x40] sm:$0xff]
      %v985 = vld [vmem:[%s975 + $0x48] sm:$0xff]
      %v986 = vld [vmem:[%s975 + $0x50] sm:$0xff]
      %v987 = vld [vmem:[%s975 + $0x58] sm:$0xff]
      %v988 = vld [vmem:[%s975 + $0x60] sm:$0xff]
      %v989 = vld [vmem:[%s975 + $0x68] sm:$0xff]
      %v990 = vld [vmem:[%s975 + $0x70] sm:$0xff]
      %v991 = vld [vmem:[%s975 + $0x78] sm:$0xff]
      %992 = vmatprep.subr.mxu0 0.0
      %993 = vmatpush1.msra.mxu0 %v991
      %994 = vmatprep.subr.mxu0 0.0
      %995 = vmatpush1.msra.mxu0 %v990
      %996 = vmatprep.subr.mxu0 0.0
      %997 = vmatpush1.msra.mxu0 %v989
      %998 = vmatprep.subr.mxu0 0.0
      %999 = vmatpush1.msra.mxu0 %v988
      %1000 = vmatprep.subr.mxu0 0.0
      %1001 = vmatpush1.msra.mxu0 %v987
      %1002 = vmatprep.subr.mxu0 0.0
      %1003 = vmatpush1.msra.mxu0 %v986
      %1004 = vmatprep.subr.mxu0 0.0
      %1005 = vmatpush1.msra.mxu0 %v985
      %1006 = vmatprep.subr.mxu0 0.0
      %1007 = vmatpush1.msra.mxu0 %v984
      %1008 = vmatprep.subr.mxu0 0.0
      %1009 = vmatpush1.msra.mxu0 %v983
      %1010 = vmatprep.subr.mxu0 0.0
      %1011 = vmatpush1.msra.mxu0 %v982
      %1012 = vmatprep.subr.mxu0 0.0
      %1013 = vmatpush1.msra.mxu0 %v981
      %1014 = vmatprep.subr.mxu0 0.0
      %1015 = vmatpush1.msra.mxu0 %v980
      %1016 = vmatprep.subr.mxu0 0.0
      %1017 = vmatpush1.msra.mxu0 %v979
      %1018 = vmatprep.subr.mxu0 0.0
      %1019 = vmatpush1.msra.mxu0 %v978
      %1020 = vmatprep.subr.mxu0 0.0
      %1021 = vmatpush1.msra.mxu0 %v977
      %1022 = vmatprep.subr.mxu0 0.0
      %1023 = vmatpush1.msra.mxu0 %v976
      %1024 = vmatprep.subr.mxu0 0.0
      %1025 = vmatpush2.msra.mxu0 0.0
      %1026 = vmatprep.subr.mxu0 0.0
      %1027 = vmatpush2.msra.mxu0 0.0
      %1028 = vmatprep.subr.mxu0 0.0
      %1029 = vmatpush2.msra.mxu0 0.0
      %1030 = vmatprep.subr.mxu0 0.0
      %1031 = vmatpush2.msra.mxu0 0.0
      %1032 = vmatprep.subr.mxu0 0.0
      %1033 = vmatpush2.msra.mxu0 0.0
      %1034 = vmatprep.subr.mxu0 0.0
      %1035 = vmatpush2.msra.mxu0 0.0
      %1036 = vmatprep.subr.mxu0 0.0
      %1037 = vmatpush2.msra.mxu0 0.0
      %1038 = vmatprep.subr.mxu0 0.0
      %1039 = vmatpush2.msra.mxu0 0.0
      %1040 = vmatprep.subr.mxu0 0.0
      %1041 = vmatpush2.msra.mxu0 0.0
      %1042 = vmatprep.subr.mxu0 0.0
      %1043 = vmatpush2.msra.mxu0 0.0
      %1044 = vmatprep.subr.mxu0 0.0
      %1045 = vmatpush2.msra.mxu0 0.0
      %1046 = vmatprep.subr.mxu0 0.0
      %1047 = vmatpush2.msra.mxu0 0.0
      %1048 = vmatprep.subr.mxu0 0.0
      %1049 = vmatpush2.msra.mxu0 0.0
      %1050 = vmatprep.subr.mxu0 0.0
      %1051 = vmatpush2.msra.mxu0 0.0
      %1052 = vmatprep.subr.mxu0 0.0
      %1053 = vmatpush2.msra.mxu0 0.0
      %1054 = vmatprep.subr.mxu0 0.0
      %1055 = vmatpush2.msra.mxu0 0.0
      %1056 = vmatprep.mubr.f32.mxu0 0.0
      %1057 = vmatmul.mubr.f32.gmra.mxu0 %v960
      %v1058 = vpop.f32.mrf.mxu0
      %v1059 = vadd.f32 0.0, %v1058
      %v1060 = vpop.f32.mrf.mxu0
      %1061 = vmatprep.mubr.f32.mxu0 0.0
      %1062 = vmatmul.mubr.f32.gmra.mxu0 %v962
      %v1063 = vpop.f32.mrf.mxu0
      %v1064 = vadd.f32 0.0, %v1063
      %v1065 = vpop.f32.mrf.mxu0
      %1066 = vmatprep.mubr.f32.mxu0 0.0
      %1067 = vmatmul.mubr.f32.gmra.mxu0 %v964
      %v1068 = vpop.f32.mrf.mxu0
      %v1069 = vadd.f32 0.0, %v1068
      %v1070 = vpop.f32.mrf.mxu0
      %1071 = vmatprep.mubr.f32.mxu0 0.0
      %1072 = vmatmul.mubr.f32.gmra.mxu0 %v966
      %v1073 = vpop.f32.mrf.mxu0
      %v1074 = vadd.f32 0.0, %v1073
      %v1075 = vpop.f32.mrf.mxu0
      %1076 = vmatprep.mubr.f32.mxu0 0.0
      %1077 = vmatmul.mubr.f32.gmra.mxu0 %v968
      %v1078 = vpop.f32.mrf.mxu0
      %v1079 = vadd.f32 0.0, %v1078
      %v1080 = vpop.f32.mrf.mxu0
      %1081 = vmatprep.mubr.f32.mxu0 0.0
      %1082 = vmatmul.mubr.f32.gmra.mxu0 %v970
      %v1083 = vpop.f32.mrf.mxu0
      %v1084 = vadd.f32 0.0, %v1083
      %v1085 = vpop.f32.mrf.mxu0
      %1086 = vmatprep.mubr.f32.mxu0 0.0
      %1087 = vmatmul.mubr.f32.gmra.mxu0 %v972
      %v1088 = vpop.f32.mrf.mxu0
      %v1089 = vadd.f32 0.0, %v1088
      %v1090 = vpop.f32.mrf.mxu0
      %1091 = vmatprep.mubr.f32.mxu0 0.0
      %1092 = vmatmul.mubr.f32.gmra.mxu0 %v974
      %v1093 = vpop.f32.mrf.mxu0
      %v1094 = vadd.f32 0.0, %v1093
      %v1095 = vpop.f32.mrf.mxu0
      %1096 = vdwg.mxu0
      %v1097 = vld [vmem:[#allocation3] sm:$0xff]
      %v1098 = vld [vmem:[#allocation3 + $0x8] sm:$0xff]
      %v1099 = vld [vmem:[#allocation3 + $0x10] sm:$0xff]
      %v1100 = vld [vmem:[#allocation3 + $0x18] sm:$0xff]
      %v1101 = vld [vmem:[#allocation3 + $0x20] sm:$0xff]
      %v1102 = vld [vmem:[#allocation3 + $0x28] sm:$0xff]
      %v1103 = vld [vmem:[#allocation3 + $0x30] sm:$0xff]
      %v1104 = vld [vmem:[#allocation3 + $0x38] sm:$0xff]
      %v1105 = vadd.f32 %v1097, %v1059
      %v1106 = vadd.f32 %v1098, %v1064
      %v1107 = vadd.f32 %v1099, %v1069
      %v1108 = vadd.f32 %v1100, %v1074
      %v1109 = vadd.f32 %v1101, %v1079
      %v1110 = vadd.f32 %v1102, %v1084
      %v1111 = vadd.f32 %v1103, %v1089
      %v1112 = vadd.f32 %v1104, %v1094
      %1113 = vst [vmem:[#allocation3] sm:$0xff] %v1105
      %1114 = vst [vmem:[#allocation3 + $0x8] sm:$0xff] %v1106
      %1115 = vst [vmem:[#allocation3 + $0x10] sm:$0xff] %v1107
      %1116 = vst [vmem:[#allocation3 + $0x18] sm:$0xff] %v1108
      %1117 = vst [vmem:[#allocation3 + $0x20] sm:$0xff] %v1109
      %1118 = vst [vmem:[#allocation3 + $0x28] sm:$0xff] %v1110
      %1119 = vst [vmem:[#allocation3 + $0x30] sm:$0xff] %v1111
      %1120 = vst [vmem:[#allocation3 + $0x38] sm:$0xff] %v1112
      %s1121 = scalar_lea.vmem %s459, 1 [#allocation2]
      %v1122 = vld [vmem:[%s1121] ss:$2 sm:$0xff]
      %s1123 = scalar_lea.vmem %s459, 49 [#allocation2]
      %v1124 = vld [vmem:[%s1123] ss:$2 sm:$0xff]
      %s1125 = scalar_lea.vmem %s459, 97 [#allocation2]
      %v1126 = vld [vmem:[%s1125] ss:$2 sm:$0xff]
      %s1127 = scalar_lea.vmem %s459, 145 [#allocation2]
      %v1128 = vld [vmem:[%s1127] ss:$2 sm:$0xff]
      %s1129 = scalar_lea.vmem %s459, 193 [#allocation2]
      %v1130 = vld [vmem:[%s1129] ss:$2 sm:$0xff]
      %s1131 = scalar_lea.vmem %s459, 241 [#allocation2]
      %v1132 = vld [vmem:[%s1131] ss:$2 sm:$0xff]
      %s1133 = scalar_lea.vmem %s459, 289 [#allocation2]
      %v1134 = vld [vmem:[%s1133] ss:$2 sm:$0xff]
      %s1135 = scalar_lea.vmem %s459, 337 [#allocation2]
      %v1136 = vld [vmem:[%s1135] ss:$2 sm:$0xff]
      %s1137 = scalar_lea.vmem %s1, 512
      %v1138 = vld [vmem:[%s1137] sm:$0xff]
      %v1139 = vld [vmem:[%s1137 + $0x8] sm:$0xff]
      %v1140 = vld [vmem:[%s1137 + $0x10] sm:$0xff]
      %v1141 = vld [vmem:[%s1137 + $0x18] sm:$0xff]
      %v1142 = vld [vmem:[%s1137 + $0x20] sm:$0xff]
      %v1143 = vld [vmem:[%s1137 + $0x28] sm:$0xff]
      %v1144 = vld [vmem:[%s1137 + $0x30] sm:$0xff]
      %v1145 = vld [vmem:[%s1137 + $0x38] sm:$0xff]
      %v1146 = vld [vmem:[%s1137 + $0x40] sm:$0xff]
      %v1147 = vld [vmem:[%s1137 + $0x48] sm:$0xff]
      %v1148 = vld [vmem:[%s1137 + $0x50] sm:$0xff]
      %v1149 = vld [vmem:[%s1137 + $0x58] sm:$0xff]
      %v1150 = vld [vmem:[%s1137 + $0x60] sm:$0xff]
      %v1151 = vld [vmem:[%s1137 + $0x68] sm:$0xff]
      %v1152 = vld [vmem:[%s1137 + $0x70] sm:$0xff]
      %v1153 = vld [vmem:[%s1137 + $0x78] sm:$0xff]
      %1154 = vmatprep.subr.mxu0 0.0
      %1155 = vmatpush1.msra.mxu0 %v1153
      %1156 = vmatprep.subr.mxu0 0.0
      %1157 = vmatpush1.msra.mxu0 %v1152
      %1158 = vmatprep.subr.mxu0 0.0
      %1159 = vmatpush1.msra.mxu0 %v1151
      %1160 = vmatprep.subr.mxu0 0.0
      %1161 = vmatpush1.msra.mxu0 %v1150
      %1162 = vmatprep.subr.mxu0 0.0
      %1163 = vmatpush1.msra.mxu0 %v1149
      %1164 = vmatprep.subr.mxu0 0.0
      %1165 = vmatpush1.msra.mxu0 %v1148
      %1166 = vmatprep.subr.mxu0 0.0
      %1167 = vmatpush1.msra.mxu0 %v1147
      %1168 = vmatprep.subr.mxu0 0.0
      %1169 = vmatpush1.msra.mxu0 %v1146
      %1170 = vmatprep.subr.mxu0 0.0
      %1171 = vmatpush1.msra.mxu0 %v1145
      %1172 = vmatprep.subr.mxu0 0.0
      %1173 = vmatpush1.msra.mxu0 %v1144
      %1174 = vmatprep.subr.mxu0 0.0
      %1175 = vmatpush1.msra.mxu0 %v1143
      %1176 = vmatprep.subr.mxu0 0.0
      %1177 = vmatpush1.msra.mxu0 %v1142
      %1178 = vmatprep.subr.mxu0 0.0
      %1179 = vmatpush1.msra.mxu0 %v1141
      %1180 = vmatprep.subr.mxu0 0.0
      %1181 = vmatpush1.msra.mxu0 %v1140
      %1182 = vmatprep.subr.mxu0 0.0
      %1183 = vmatpush1.msra.mxu0 %v1139
      %1184 = vmatprep.subr.mxu0 0.0
      %1185 = vmatpush1.msra.mxu0 %v1138
      %1186 = vmatprep.subr.mxu0 0.0
      %1187 = vmatpush2.msra.mxu0 0.0
      %1188 = vmatprep.subr.mxu0 0.0
      %1189 = vmatpush2.msra.mxu0 0.0
      %1190 = vmatprep.subr.mxu0 0.0
      %1191 = vmatpush2.msra.mxu0 0.0
      %1192 = vmatprep.subr.mxu0 0.0
      %1193 = vmatpush2.msra.mxu0 0.0
      %1194 = vmatprep.subr.mxu0 0.0
      %1195 = vmatpush2.msra.mxu0 0.0
      %1196 = vmatprep.subr.mxu0 0.0
      %1197 = vmatpush2.msra.mxu0 0.0
      %1198 = vmatprep.subr.mxu0 0.0
      %1199 = vmatpush2.msra.mxu0 0.0
      %1200 = vmatprep.subr.mxu0 0.0
      %1201 = vmatpush2.msra.mxu0 0.0
      %1202 = vmatprep.subr.mxu0 0.0
      %1203 = vmatpush2.msra.mxu0 0.0
      %1204 = vmatprep.subr.mxu0 0.0
      %1205 = vmatpush2.msra.mxu0 0.0
      %1206 = vmatprep.subr.mxu0 0.0
      %1207 = vmatpush2.msra.mxu0 0.0
      %1208 = vmatprep.subr.mxu0 0.0
      %1209 = vmatpush2.msra.mxu0 0.0
      %1210 = vmatprep.subr.mxu0 0.0
      %1211 = vmatpush2.msra.mxu0 0.0
      %1212 = vmatprep.subr.mxu0 0.0
      %1213 = vmatpush2.msra.mxu0 0.0
      %1214 = vmatprep.subr.mxu0 0.0
      %1215 = vmatpush2.msra.mxu0 0.0
      %1216 = vmatprep.subr.mxu0 0.0
      %1217 = vmatpush2.msra.mxu0 0.0
      %1218 = vmatprep.mubr.f32.mxu0 0.0
      %1219 = vmatmul.mubr.f32.gmra.mxu0 %v1122
      %v1220 = vpop.f32.mrf.mxu0
      %v1221 = vadd.f32 0.0, %v1220
      %v1222 = vpop.f32.mrf.mxu0
      %1223 = vmatprep.mubr.f32.mxu0 0.0
      %1224 = vmatmul.mubr.f32.gmra.mxu0 %v1124
      %v1225 = vpop.f32.mrf.mxu0
      %v1226 = vadd.f32 0.0, %v1225
      %v1227 = vpop.f32.mrf.mxu0
      %1228 = vmatprep.mubr.f32.mxu0 0.0
      %1229 = vmatmul.mubr.f32.gmra.mxu0 %v1126
      %v1230 = vpop.f32.mrf.mxu0
      %v1231 = vadd.f32 0.0, %v1230
      %v1232 = vpop.f32.mrf.mxu0
      %1233 = vmatprep.mubr.f32.mxu0 0.0
      %1234 = vmatmul.mubr.f32.gmra.mxu0 %v1128
      %v1235 = vpop.f32.mrf.mxu0
      %v1236 = vadd.f32 0.0, %v1235
      %v1237 = vpop.f32.mrf.mxu0
      %1238 = vmatprep.mubr.f32.mxu0 0.0
      %1239 = vmatmul.mubr.f32.gmra.mxu0 %v1130
      %v1240 = vpop.f32.mrf.mxu0
      %v1241 = vadd.f32 0.0, %v1240
      %v1242 = vpop.f32.mrf.mxu0
      %1243 = vmatprep.mubr.f32.mxu0 0.0
      %1244 = vmatmul.mubr.f32.gmra.mxu0 %v1132
      %v1245 = vpop.f32.mrf.mxu0
      %v1246 = vadd.f32 0.0, %v1245
      %v1247 = vpop.f32.mrf.mxu0
      %1248 = vmatprep.mubr.f32.mxu0 0.0
      %1249 = vmatmul.mubr.f32.gmra.mxu0 %v1134
      %v1250 = vpop.f32.mrf.mxu0
      %v1251 = vadd.f32 0.0, %v1250
      %v1252 = vpop.f32.mrf.mxu0
      %1253 = vmatprep.mubr.f32.mxu0 0.0
      %1254 = vmatmul.mubr.f32.gmra.mxu0 %v1136
      %v1255 = vpop.f32.mrf.mxu0
      %v1256 = vadd.f32 0.0, %v1255
      %v1257 = vpop.f32.mrf.mxu0
      %1258 = vdwg.mxu0
      %v1259 = vld [vmem:[#allocation3] sm:$0xff]
      %v1260 = vld [vmem:[#allocation3 + $0x8] sm:$0xff]
      %v1261 = vld [vmem:[#allocation3 + $0x10] sm:$0xff]
      %v1262 = vld [vmem:[#allocation3 + $0x18] sm:$0xff]
      %v1263 = vld [vmem:[#allocation3 + $0x20] sm:$0xff]
      %v1264 = vld [vmem:[#allocation3 + $0x28] sm:$0xff]
      %v1265 = vld [vmem:[#allocation3 + $0x30] sm:$0xff]
      %v1266 = vld [vmem:[#allocation3 + $0x38] sm:$0xff]
      %v1267 = vadd.f32 %v1259, %v1221
      %v1268 = vadd.f32 %v1260, %v1226
      %v1269 = vadd.f32 %v1261, %v1231
      %v1270 = vadd.f32 %v1262, %v1236
      %v1271 = vadd.f32 %v1263, %v1241
      %v1272 = vadd.f32 %v1264, %v1246
      %v1273 = vadd.f32 %v1265, %v1251
      %v1274 = vadd.f32 %v1266, %v1256
      %1275 = vst [vmem:[#allocation3] sm:$0xff] %v1267
      %1276 = vst [vmem:[#allocation3 + $0x8] sm:$0xff] %v1268
      %1277 = vst [vmem:[#allocation3 + $0x10] sm:$0xff] %v1269
      %1278 = vst [vmem:[#allocation3 + $0x18] sm:$0xff] %v1270
      %1279 = vst [vmem:[#allocation3 + $0x20] sm:$0xff] %v1271
      %1280 = vst [vmem:[#allocation3 + $0x28] sm:$0xff] %v1272
      %1281 = vst [vmem:[#allocation3 + $0x30] sm:$0xff] %v1273
      %1282 = vst [vmem:[#allocation3 + $0x38] sm:$0xff] %v1274
      %s1283 = scalar_lea.vmem %s459, 2 [#allocation2]
      %v1284 = vld [vmem:[%s1283] ss:$2 sm:$0xff]
      %s1285 = scalar_lea.vmem %s459, 50 [#allocation2]
      %v1286 = vld [vmem:[%s1285] ss:$2 sm:$0xff]
      %s1287 = scalar_lea.vmem %s459, 98 [#allocation2]
      %v1288 = vld [vmem:[%s1287] ss:$2 sm:$0xff]
      %s1289 = scalar_lea.vmem %s459, 146 [#allocation2]
      %v1290 = vld [vmem:[%s1289] ss:$2 sm:$0xff]
      %s1291 = scalar_lea.vmem %s459, 194 [#allocation2]
      %v1292 = vld [vmem:[%s1291] ss:$2 sm:$0xff]
      %s1293 = scalar_lea.vmem %s459, 242 [#allocation2]
      %v1294 = vld [vmem:[%s1293] ss:$2 sm:$0xff]
      %s1295 = scalar_lea.vmem %s459, 290 [#allocation2]
      %v1296 = vld [vmem:[%s1295] ss:$2 sm:$0xff]
      %s1297 = scalar_lea.vmem %s459, 338 [#allocation2]
      %v1298 = vld [vmem:[%s1297] ss:$2 sm:$0xff]
      %s1299 = scalar_lea.vmem %s1, 640
      %v1300 = vld [vmem:[%s1299] sm:$0xff]
      %v1301 = vld [vmem:[%s1299 + $0x8] sm:$0xff]
      %v1302 = vld [vmem:[%s1299 + $0x10] sm:$0xff]
      %v1303 = vld [vmem:[%s1299 + $0x18] sm:$0xff]
      %v1304 = vld [vmem:[%s1299 + $0x20] sm:$0xff]
      %v1305 = vld [vmem:[%s1299 + $0x28] sm:$0xff]
      %v1306 = vld [vmem:[%s1299 + $0x30] sm:$0xff]
      %v1307 = vld [vmem:[%s1299 + $0x38] sm:$0xff]
      %v1308 = vld [vmem:[%s1299 + $0x40] sm:$0xff]
      %v1309 = vld [vmem:[%s1299 + $0x48] sm:$0xff]
      %v1310 = vld [vmem:[%s1299 + $0x50] sm:$0xff]
      %v1311 = vld [vmem:[%s1299 + $0x58] sm:$0xff]
      %v1312 = vld [vmem:[%s1299 + $0x60] sm:$0xff]
      %v1313 = vld [vmem:[%s1299 + $0x68] sm:$0xff]
      %v1314 = vld [vmem:[%s1299 + $0x70] sm:$0xff]
      %v1315 = vld [vmem:[%s1299 + $0x78] sm:$0xff]
      %1316 = vmatprep.subr.mxu0 0.0
      %1317 = vmatpush1.msra.mxu0 %v1315
      %1318 = vmatprep.subr.mxu0 0.0
      %1319 = vmatpush1.msra.mxu0 %v1314
      %1320 = vmatprep.subr.mxu0 0.0
      %1321 = vmatpush1.msra.mxu0 %v1313
      %1322 = vmatprep.subr.mxu0 0.0
      %1323 = vmatpush1.msra.mxu0 %v1312
      %1324 = vmatprep.subr.mxu0 0.0
      %1325 = vmatpush1.msra.mxu0 %v1311
      %1326 = vmatprep.subr.mxu0 0.0
      %1327 = vmatpush1.msra.mxu0 %v1310
      %1328 = vmatprep.subr.mxu0 0.0
      %1329 = vmatpush1.msra.mxu0 %v1309
      %1330 = vmatprep.subr.mxu0 0.0
      %1331 = vmatpush1.msra.mxu0 %v1308
      %1332 = vmatprep.subr.mxu0 0.0
      %1333 = vmatpush1.msra.mxu0 %v1307
      %1334 = vmatprep.subr.mxu0 0.0
      %1335 = vmatpush1.msra.mxu0 %v1306
      %1336 = vmatprep.subr.mxu0 0.0
      %1337 = vmatpush1.msra.mxu0 %v1305
      %1338 = vmatprep.subr.mxu0 0.0
      %1339 = vmatpush1.msra.mxu0 %v1304
      %1340 = vmatprep.subr.mxu0 0.0
      %1341 = vmatpush1.msra.mxu0 %v1303
      %1342 = vmatprep.subr.mxu0 0.0
      %1343 = vmatpush1.msra.mxu0 %v1302
      %1344 = vmatprep.subr.mxu0 0.0
      %1345 = vmatpush1.msra.mxu0 %v1301
      %1346 = vmatprep.subr.mxu0 0.0
      %1347 = vmatpush1.msra.mxu0 %v1300
      %1348 = vmatprep.subr.mxu0 0.0
      %1349 = vmatpush2.msra.mxu0 0.0
      %1350 = vmatprep.subr.mxu0 0.0
      %1351 = vmatpush2.msra.mxu0 0.0
      %1352 = vmatprep.subr.mxu0 0.0
      %1353 = vmatpush2.msra.mxu0 0.0
      %1354 = vmatprep.subr.mxu0 0.0
      %1355 = vmatpush2.msra.mxu0 0.0
      %1356 = vmatprep.subr.mxu0 0.0
      %1357 = vmatpush2.msra.mxu0 0.0
      %1358 = vmatprep.subr.mxu0 0.0
      %1359 = vmatpush2.msra.mxu0 0.0
      %1360 = vmatprep.subr.mxu0 0.0
      %1361 = vmatpush2.msra.mxu0 0.0
      %1362 = vmatprep.subr.mxu0 0.0
      %1363 = vmatpush2.msra.mxu0 0.0
      %1364 = vmatprep.subr.mxu0 0.0
      %1365 = vmatpush2.msra.mxu0 0.0
      %1366 = vmatprep.subr.mxu0 0.0
      %1367 = vmatpush2.msra.mxu0 0.0
      %1368 = vmatprep.subr.mxu0 0.0
      %1369 = vmatpush2.msra.mxu0 0.0
      %1370 = vmatprep.subr.mxu0 0.0
      %1371 = vmatpush2.msra.mxu0 0.0
      %1372 = vmatprep.subr.mxu0 0.0
      %1373 = vmatpush2.msra.mxu0 0.0
      %1374 = vmatprep.subr.mxu0 0.0
      %1375 = vmatpush2.msra.mxu0 0.0
      %1376 = vmatprep.subr.mxu0 0.0
      %1377 = vmatpush2.msra.mxu0 0.0
      %1378 = vmatprep.subr.mxu0 0.0
      %1379 = vmatpush2.msra.mxu0 0.0
      %1380 = vmatprep.mubr.f32.mxu0 0.0
      %1381 = vmatmul.mubr.f32.gmra.mxu0 %v1284
      %v1382 = vpop.f32.mrf.mxu0
      %v1383 = vadd.f32 0.0, %v1382
      %v1384 = vpop.f32.mrf.mxu0
      %1385 = vmatprep.mubr.f32.mxu0 0.0
      %1386 = vmatmul.mubr.f32.gmra.mxu0 %v1286
      %v1387 = vpop.f32.mrf.mxu0
      %v1388 = vadd.f32 0.0, %v1387
      %v1389 = vpop.f32.mrf.mxu0
      %1390 = vmatprep.mubr.f32.mxu0 0.0
      %1391 = vmatmul.mubr.f32.gmra.mxu0 %v1288
      %v1392 = vpop.f32.mrf.mxu0
      %v1393 = vadd.f32 0.0, %v1392
      %v1394 = vpop.f32.mrf.mxu0
      %1395 = vmatprep.mubr.f32.mxu0 0.0
      %1396 = vmatmul.mubr.f32.gmra.mxu0 %v1290
      %v1397 = vpop.f32.mrf.mxu0
      %v1398 = vadd.f32 0.0, %v1397
      %v1399 = vpop.f32.mrf.mxu0
      %1400 = vmatprep.mubr.f32.mxu0 0.0
      %1401 = vmatmul.mubr.f32.gmra.mxu0 %v1292
      %v1402 = vpop.f32.mrf.mxu0
      %v1403 = vadd.f32 0.0, %v1402
      %v1404 = vpop.f32.mrf.mxu0
      %1405 = vmatprep.mubr.f32.mxu0 0.0
      %1406 = vmatmul.mubr.f32.gmra.mxu0 %v1294
      %v1407 = vpop.f32.mrf.mxu0
      %v1408 = vadd.f32 0.0, %v1407
      %v1409 = vpop.f32.mrf.mxu0
      %1410 = vmatprep.mubr.f32.mxu0 0.0
      %1411 = vmatmul.mubr.f32.gmra.mxu0 %v1296
      %v1412 = vpop.f32.mrf.mxu0
      %v1413 = vadd.f32 0.0, %v1412
      %v1414 = vpop.f32.mrf.mxu0
      %1415 = vmatprep.mubr.f32.mxu0 0.0
      %1416 = vmatmul.mubr.f32.gmra.mxu0 %v1298
      %v1417 = vpop.f32.mrf.mxu0
      %v1418 = vadd.f32 0.0, %v1417
      %v1419 = vpop.f32.mrf.mxu0
      %1420 = vdwg.mxu0
      %v1421 = vld [vmem:[#allocation3] sm:$0xff]
      %v1422 = vld [vmem:[#allocation3 + $0x8] sm:$0xff]
      %v1423 = vld [vmem:[#allocation3 + $0x10] sm:$0xff]
      %v1424 = vld [vmem:[#allocation3 + $0x18] sm:$0xff]
      %v1425 = vld [vmem:[#allocation3 + $0x20] sm:$0xff]
      %v1426 = vld [vmem:[#allocation3 + $0x28] sm:$0xff]
      %v1427 = vld [vmem:[#allocation3 + $0x30] sm:$0xff]
      %v1428 = vld [vmem:[#allocation3 + $0x38] sm:$0xff]
      %v1429 = vadd.f32 %v1421, %v1383
      %v1430 = vadd.f32 %v1422, %v1388
      %v1431 = vadd.f32 %v1423, %v1393
      %v1432 = vadd.f32 %v1424, %v1398
      %v1433 = vadd.f32 %v1425, %v1403
      %v1434 = vadd.f32 %v1426, %v1408
      %v1435 = vadd.f32 %v1427, %v1413
      %v1436 = vadd.f32 %v1428, %v1418
      %1437 = vst [vmem:[#allocation3] sm:$0xff] %v1429
      %1438 = vst [vmem:[#allocation3 + $0x8] sm:$0xff] %v1430
      %1439 = vst [vmem:[#allocation3 + $0x10] sm:$0xff] %v1431
      %1440 = vst [vmem:[#allocation3 + $0x18] sm:$0xff] %v1432
      %1441 = vst [vmem:[#allocation3 + $0x20] sm:$0xff] %v1433
      %1442 = vst [vmem:[#allocation3 + $0x28] sm:$0xff] %v1434
      %1443 = vst [vmem:[#allocation3 + $0x30] sm:$0xff] %v1435
      %1444 = vst [vmem:[#allocation3 + $0x38] sm:$0xff] %v1436
      %s1445 = scalar_lea.vmem [#allocation2], 48
      %v1446 = vld [vmem:[%s1445] ss:$2 sm:$0xff]
      %s1447 = scalar_lea.vmem %s1445, 48 [#allocation2]
      %v1448 = vld [vmem:[%s1447] ss:$2 sm:$0xff]
      %s1449 = scalar_lea.vmem %s1445, 96 [#allocation2]
      %v1450 = vld [vmem:[%s1449] ss:$2 sm:$0xff]
      %s1451 = scalar_lea.vmem %s1445, 144 [#allocation2]
      %v1452 = vld [vmem:[%s1451] ss:$2 sm:$0xff]
      %s1453 = scalar_lea.vmem %s1445, 192 [#allocation2]
      %v1454 = vld [vmem:[%s1453] ss:$2 sm:$0xff]
      %s1455 = scalar_lea.vmem %s1445, 240 [#allocation2]
      %v1456 = vld [vmem:[%s1455] ss:$2 sm:$0xff]
      %s1457 = scalar_lea.vmem %s1445, 288 [#allocation2]
      %v1458 = vld [vmem:[%s1457] ss:$2 sm:$0xff]
      %s1459 = scalar_lea.vmem %s1445, 336 [#allocation2]
      %v1460 = vld [vmem:[%s1459] ss:$2 sm:$0xff]
      %s1461 = scalar_lea.vmem %s1, 768
      %v1462 = vld [vmem:[%s1461] sm:$0xff]
      %v1463 = vld [vmem:[%s1461 + $0x8] sm:$0xff]
      %v1464 = vld [vmem:[%s1461 + $0x10] sm:$0xff]
      %v1465 = vld [vmem:[%s1461 + $0x18] sm:$0xff]
      %v1466 = vld [vmem:[%s1461 + $0x20] sm:$0xff]
      %v1467 = vld [vmem:[%s1461 + $0x28] sm:$0xff]
      %v1468 = vld [vmem:[%s1461 + $0x30] sm:$0xff]
      %v1469 = vld [vmem:[%s1461 + $0x38] sm:$0xff]
      %v1470 = vld [vmem:[%s1461 + $0x40] sm:$0xff]
      %v1471 = vld [vmem:[%s1461 + $0x48] sm:$0xff]
      %v1472 = vld [vmem:[%s1461 + $0x50] sm:$0xff]
      %v1473 = vld [vmem:[%s1461 + $0x58] sm:$0xff]
      %v1474 = vld [vmem:[%s1461 + $0x60] sm:$0xff]
      %v1475 = vld [vmem:[%s1461 + $0x68] sm:$0xff]
      %v1476 = vld [vmem:[%s1461 + $0x70] sm:$0xff]
      %v1477 = vld [vmem:[%s1461 + $0x78] sm:$0xff]
      %1478 = vmatprep.subr.mxu0 0.0
      %1479 = vmatpush1.msra.mxu0 %v1477
      %1480 = vmatprep.subr.mxu0 0.0
      %1481 = vmatpush1.msra.mxu0 %v1476
      %1482 = vmatprep.subr.mxu0 0.0
      %1483 = vmatpush1.msra.mxu0 %v1475
      %1484 = vmatprep.subr.mxu0 0.0
      %1485 = vmatpush1.msra.mxu0 %v1474
      %1486 = vmatprep.subr.mxu0 0.0
      %1487 = vmatpush1.msra.mxu0 %v1473
      %1488 = vmatprep.subr.mxu0 0.0
      %1489 = vmatpush1.msra.mxu0 %v1472
      %1490 = vmatprep.subr.mxu0 0.0
      %1491 = vmatpush1.msra.mxu0 %v1471
      %1492 = vmatprep.subr.mxu0 0.0
      %1493 = vmatpush1.msra.mxu0 %v1470
      %1494 = vmatprep.subr.mxu0 0.0
      %1495 = vmatpush1.msra.mxu0 %v1469
      %1496 = vmatprep.subr.mxu0 0.0
      %1497 = vmatpush1.msra.mxu0 %v1468
      %1498 = vmatprep.subr.mxu0 0.0
      %1499 = vmatpush1.msra.mxu0 %v1467
      %1500 = vmatprep.subr.mxu0 0.0
      %1501 = vmatpush1.msra.mxu0 %v1466
      %1502 = vmatprep.subr.mxu0 0.0
      %1503 = vmatpush1.msra.mxu0 %v1465
      %1504 = vmatprep.subr.mxu0 0.0
      %1505 = vmatpush1.msra.mxu0 %v1464
      %1506 = vmatprep.subr.mxu0 0.0
      %1507 = vmatpush1.msra.mxu0 %v1463
      %1508 = vmatprep.subr.mxu0 0.0
      %1509 = vmatpush1.msra.mxu0 %v1462
      %1510 = vmatprep.subr.mxu0 0.0
      %1511 = vmatpush2.msra.mxu0 0.0
      %1512 = vmatprep.subr.mxu0 0.0
      %1513 = vmatpush2.msra.mxu0 0.0
      %1514 = vmatprep.subr.mxu0 0.0
      %1515 = vmatpush2.msra.mxu0 0.0
      %1516 = vmatprep.subr.mxu0 0.0
      %1517 = vmatpush2.msra.mxu0 0.0
      %1518 = vmatprep.subr.mxu0 0.0
      %1519 = vmatpush2.msra.mxu0 0.0
      %1520 = vmatprep.subr.mxu0 0.0
      %1521 = vmatpush2.msra.mxu0 0.0
      %1522 = vmatprep.subr.mxu0 0.0
      %1523 = vmatpush2.msra.mxu0 0.0
      %1524 = vmatprep.subr.mxu0 0.0
      %1525 = vmatpush2.msra.mxu0 0.0
      %1526 = vmatprep.subr.mxu0 0.0
      %1527 = vmatpush2.msra.mxu0 0.0
      %1528 = vmatprep.subr.mxu0 0.0
      %1529 = vmatpush2.msra.mxu0 0.0
      %1530 = vmatprep.subr.mxu0 0.0
      %1531 = vmatpush2.msra.mxu0 0.0
      %1532 = vmatprep.subr.mxu0 0.0
      %1533 = vmatpush2.msra.mxu0 0.0
      %1534 = vmatprep.subr.mxu0 0.0
      %1535 = vmatpush2.msra.mxu0 0.0
      %1536 = vmatprep.subr.mxu0 0.0
      %1537 = vmatpush2.msra.mxu0 0.0
      %1538 = vmatprep.subr.mxu0 0.0
      %1539 = vmatpush2.msra.mxu0 0.0
      %1540 = vmatprep.subr.mxu0 0.0
      %1541 = vmatpush2.msra.mxu0 0.0
      %1542 = vmatprep.mubr.f32.mxu0 0.0
      %1543 = vmatmul.mubr.f32.gmra.mxu0 %v1446
      %v1544 = vpop.f32.mrf.mxu0
      %v1545 = vadd.f32 0.0, %v1544
      %v1546 = vpop.f32.mrf.mxu0
      %1547 = vmatprep.mubr.f32.mxu0 0.0
      %1548 = vmatmul.mubr.f32.gmra.mxu0 %v1448
      %v1549 = vpop.f32.mrf.mxu0
      %v1550 = vadd.f32 0.0, %v1549
      %v1551 = vpop.f32.mrf.mxu0
      %1552 = vmatprep.mubr.f32.mxu0 0.0
      %1553 = vmatmul.mubr.f32.gmra.mxu0 %v1450
      %v1554 = vpop.f32.mrf.mxu0
      %v1555 = vadd.f32 0.0, %v1554
      %v1556 = vpop.f32.mrf.mxu0
      %1557 = vmatprep.mubr.f32.mxu0 0.0
      %1558 = vmatmul.mubr.f32.gmra.mxu0 %v1452
      %v1559 = vpop.f32.mrf.mxu0
      %v1560 = vadd.f32 0.0, %v1559
      %v1561 = vpop.f32.mrf.mxu0
      %1562 = vmatprep.mubr.f32.mxu0 0.0
      %1563 = vmatmul.mubr.f32.gmra.mxu0 %v1454
      %v1564 = vpop.f32.mrf.mxu0
      %v1565 = vadd.f32 0.0, %v1564
      %v1566 = vpop.f32.mrf.mxu0
      %1567 = vmatprep.mubr.f32.mxu0 0.0
      %1568 = vmatmul.mubr.f32.gmra.mxu0 %v1456
      %v1569 = vpop.f32.mrf.mxu0
      %v1570 = vadd.f32 0.0, %v1569
      %v1571 = vpop.f32.mrf.mxu0
      %1572 = vmatprep.mubr.f32.mxu0 0.0
      %1573 = vmatmul.mubr.f32.gmra.mxu0 %v1458
      %v1574 = vpop.f32.mrf.mxu0
      %v1575 = vadd.f32 0.0, %v1574
      %v1576 = vpop.f32.mrf.mxu0
      %1577 = vmatprep.mubr.f32.mxu0 0.0
      %1578 = vmatmul.mubr.f32.gmra.mxu0 %v1460
      %v1579 = vpop.f32.mrf.mxu0
      %v1580 = vadd.f32 0.0, %v1579
      %v1581 = vpop.f32.mrf.mxu0
      %1582 = vdwg.mxu0
      %v1583 = vld [vmem:[#allocation3] sm:$0xff]
      %v1584 = vld [vmem:[#allocation3 + $0x8] sm:$0xff]
      %v1585 = vld [vmem:[#allocation3 + $0x10] sm:$0xff]
      %v1586 = vld [vmem:[#allocation3 + $0x18] sm:$0xff]
      %v1587 = vld [vmem:[#allocation3 + $0x20] sm:$0xff]
      %v1588 = vld [vmem:[#allocation3 + $0x28] sm:$0xff]
      %v1589 = vld [vmem:[#allocation3 + $0x30] sm:$0xff]
      %v1590 = vld [vmem:[#allocation3 + $0x38] sm:$0xff]
      %v1591 = vadd.f32 %v1583, %v1545
      %v1592 = vadd.f32 %v1584, %v1550
      %v1593 = vadd.f32 %v1585, %v1555
      %v1594 = vadd.f32 %v1586, %v1560
      %v1595 = vadd.f32 %v1587, %v1565
      %v1596 = vadd.f32 %v1588, %v1570
      %v1597 = vadd.f32 %v1589, %v1575
      %v1598 = vadd.f32 %v1590, %v1580
      %1599 = vst [vmem:[#allocation3] sm:$0xff] %v1591
      %1600 = vst [vmem:[#allocation3 + $0x8] sm:$0xff] %v1592
      %1601 = vst [vmem:[#allocation3 + $0x10] sm:$0xff] %v1593
      %1602 = vst [vmem:[#allocation3 + $0x18] sm:$0xff] %v1594
      %1603 = vst [vmem:[#allocation3 + $0x20] sm:$0xff] %v1595
      %1604 = vst [vmem:[#allocation3 + $0x28] sm:$0xff] %v1596
      %1605 = vst [vmem:[#allocation3 + $0x30] sm:$0xff] %v1597
      %1606 = vst [vmem:[#allocation3 + $0x38] sm:$0xff] %v1598
      %s1607 = scalar_lea.vmem %s1445, 1 [#allocation2]
      %v1608 = vld [vmem:[%s1607] ss:$2 sm:$0xff]
      %s1609 = scalar_lea.vmem %s1445, 49 [#allocation2]
      %v1610 = vld [vmem:[%s1609] ss:$2 sm:$0xff]
      %s1611 = scalar_lea.vmem %s1445, 97 [#allocation2]
      %v1612 = vld [vmem:[%s1611] ss:$2 sm:$0xff]
      %s1613 = scalar_lea.vmem %s1445, 145 [#allocation2]
      %v1614 = vld [vmem:[%s1613] ss:$2 sm:$0xff]
      %s1615 = scalar_lea.vmem %s1445, 193 [#allocation2]
      %v1616 = vld [vmem:[%s1615] ss:$2 sm:$0xff]
      %s1617 = scalar_lea.vmem %s1445, 241 [#allocation2]
      %v1618 = vld [vmem:[%s1617] ss:$2 sm:$0xff]
      %s1619 = scalar_lea.vmem %s1445, 289 [#allocation2]
      %v1620 = vld [vmem:[%s1619] ss:$2 sm:$0xff]
      %s1621 = scalar_lea.vmem %s1445, 337 [#allocation2]
      %v1622 = vld [vmem:[%s1621] ss:$2 sm:$0xff]
      %s1623 = scalar_lea.vmem %s1, 896
      %v1624 = vld [vmem:[%s1623] sm:$0xff]
      %v1625 = vld [vmem:[%s1623 + $0x8] sm:$0xff]
      %v1626 = vld [vmem:[%s1623 + $0x10] sm:$0xff]
      %v1627 = vld [vmem:[%s1623 + $0x18] sm:$0xff]
      %v1628 = vld [vmem:[%s1623 + $0x20] sm:$0xff]
      %v1629 = vld [vmem:[%s1623 + $0x28] sm:$0xff]
      %v1630 = vld [vmem:[%s1623 + $0x30] sm:$0xff]
      %v1631 = vld [vmem:[%s1623 + $0x38] sm:$0xff]
      %v1632 = vld [vmem:[%s1623 + $0x40] sm:$0xff]
      %v1633 = vld [vmem:[%s1623 + $0x48] sm:$0xff]
      %v1634 = vld [vmem:[%s1623 + $0x50] sm:$0xff]
      %v1635 = vld [vmem:[%s1623 + $0x58] sm:$0xff]
      %v1636 = vld [vmem:[%s1623 + $0x60] sm:$0xff]
      %v1637 = vld [vmem:[%s1623 + $0x68] sm:$0xff]
      %v1638 = vld [vmem:[%s1623 + $0x70] sm:$0xff]
      %v1639 = vld [vmem:[%s1623 + $0x78] sm:$0xff]
      %1640 = vmatprep.subr.mxu0 0.0
      %1641 = vmatpush1.msra.mxu0 %v1639
      %1642 = vmatprep.subr.mxu0 0.0
      %1643 = vmatpush1.msra.mxu0 %v1638
      %1644 = vmatprep.subr.mxu0 0.0
      %1645 = vmatpush1.msra.mxu0 %v1637
      %1646 = vmatprep.subr.mxu0 0.0
      %1647 = vmatpush1.msra.mxu0 %v1636
      %1648 = vmatprep.subr.mxu0 0.0
      %1649 = vmatpush1.msra.mxu0 %v1635
      %1650 = vmatprep.subr.mxu0 0.0
      %1651 = vmatpush1.msra.mxu0 %v1634
      %1652 = vmatprep.subr.mxu0 0.0
      %1653 = vmatpush1.msra.mxu0 %v1633
      %1654 = vmatprep.subr.mxu0 0.0
      %1655 = vmatpush1.msra.mxu0 %v1632
      %1656 = vmatprep.subr.mxu0 0.0
      %1657 = vmatpush1.msra.mxu0 %v1631
      %1658 = vmatprep.subr.mxu0 0.0
      %1659 = vmatpush1.msra.mxu0 %v1630
      %1660 = vmatprep.subr.mxu0 0.0
      %1661 = vmatpush1.msra.mxu0 %v1629
      %1662 = vmatprep.subr.mxu0 0.0
      %1663 = vmatpush1.msra.mxu0 %v1628
      %1664 = vmatprep.subr.mxu0 0.0
      %1665 = vmatpush1.msra.mxu0 %v1627
      %1666 = vmatprep.subr.mxu0 0.0
      %1667 = vmatpush1.msra.mxu0 %v1626
      %1668 = vmatprep.subr.mxu0 0.0
      %1669 = vmatpush1.msra.mxu0 %v1625
      %1670 = vmatprep.subr.mxu0 0.0
      %1671 = vmatpush1.msra.mxu0 %v1624
      %1672 = vmatprep.subr.mxu0 0.0
      %1673 = vmatpush2.msra.mxu0 0.0
      %1674 = vmatprep.subr.mxu0 0.0
      %1675 = vmatpush2.msra.mxu0 0.0
      %1676 = vmatprep.subr.mxu0 0.0
      %1677 = vmatpush2.msra.mxu0 0.0
      %1678 = vmatprep.subr.mxu0 0.0
      %1679 = vmatpush2.msra.mxu0 0.0
      %1680 = vmatprep.subr.mxu0 0.0
      %1681 = vmatpush2.msra.mxu0 0.0
      %1682 = vmatprep.subr.mxu0 0.0
      %1683 = vmatpush2.msra.mxu0 0.0
      %1684 = vmatprep.subr.mxu0 0.0
      %1685 = vmatpush2.msra.mxu0 0.0
      %1686 = vmatprep.subr.mxu0 0.0
      %1687 = vmatpush2.msra.mxu0 0.0
      %1688 = vmatprep.subr.mxu0 0.0
      %1689 = vmatpush2.msra.mxu0 0.0
      %1690 = vmatprep.subr.mxu0 0.0
      %1691 = vmatpush2.msra.mxu0 0.0
      %1692 = vmatprep.subr.mxu0 0.0
      %1693 = vmatpush2.msra.mxu0 0.0
      %1694 = vmatprep.subr.mxu0 0.0
      %1695 = vmatpush2.msra.mxu0 0.0
      %1696 = vmatprep.subr.mxu0 0.0
      %1697 = vmatpush2.msra.mxu0 0.0
      %1698 = vmatprep.subr.mxu0 0.0
      %1699 = vmatpush2.msra.mxu0 0.0
      %1700 = vmatprep.subr.mxu0 0.0
      %1701 = vmatpush2.msra.mxu0 0.0
      %1702 = vmatprep.subr.mxu0 0.0
      %1703 = vmatpush2.msra.mxu0 0.0
      %1704 = vmatprep.mubr.f32.mxu0 0.0
      %1705 = vmatmul.mubr.f32.gmra.mxu0 %v1608
      %v1706 = vpop.f32.mrf.mxu0
      %v1707 = vadd.f32 0.0, %v1706
      %v1708 = vpop.f32.mrf.mxu0
      %1709 = vmatprep.mubr.f32.mxu0 0.0
      %1710 = vmatmul.mubr.f32.gmra.mxu0 %v1610
      %v1711 = vpop.f32.mrf.mxu0
      %v1712 = vadd.f32 0.0, %v1711
      %v1713 = vpop.f32.mrf.mxu0
      %1714 = vmatprep.mubr.f32.mxu0 0.0
      %1715 = vmatmul.mubr.f32.gmra.mxu0 %v1612
      %v1716 = vpop.f32.mrf.mxu0
      %v1717 = vadd.f32 0.0, %v1716
      %v1718 = vpop.f32.mrf.mxu0
      %1719 = vmatprep.mubr.f32.mxu0 0.0
      %1720 = vmatmul.mubr.f32.gmra.mxu0 %v1614
      %v1721 = vpop.f32.mrf.mxu0
      %v1722 = vadd.f32 0.0, %v1721
      %v1723 = vpop.f32.mrf.mxu0
      %1724 = vmatprep.mubr.f32.mxu0 0.0
      %1725 = vmatmul.mubr.f32.gmra.mxu0 %v1616
      %v1726 = vpop.f32.mrf.mxu0
      %v1727 = vadd.f32 0.0, %v1726
      %v1728 = vpop.f32.mrf.mxu0
      %1729 = vmatprep.mubr.f32.mxu0 0.0
      %1730 = vmatmul.mubr.f32.gmra.mxu0 %v1618
      %v1731 = vpop.f32.mrf.mxu0
      %v1732 = vadd.f32 0.0, %v1731
      %v1733 = vpop.f32.mrf.mxu0
      %1734 = vmatprep.mubr.f32.mxu0 0.0
      %1735 = vmatmul.mubr.f32.gmra.mxu0 %v1620
      %v1736 = vpop.f32.mrf.mxu0
      %v1737 = vadd.f32 0.0, %v1736
      %v1738 = vpop.f32.mrf.mxu0
      %1739 = vmatprep.mubr.f32.mxu0 0.0
      %1740 = vmatmul.mubr.f32.gmra.mxu0 %v1622
      %v1741 = vpop.f32.mrf.mxu0
      %v1742 = vadd.f32 0.0, %v1741
      %v1743 = vpop.f32.mrf.mxu0
      %1744 = vdwg.mxu0
      %v1745 = vld [vmem:[#allocation3] sm:$0xff]
      %v1746 = vld [vmem:[#allocation3 + $0x8] sm:$0xff]
      %v1747 = vld [vmem:[#allocation3 + $0x10] sm:$0xff]
      %v1748 = vld [vmem:[#allocation3 + $0x18] sm:$0xff]
      %v1749 = vld [vmem:[#allocation3 + $0x20] sm:$0xff]
      %v1750 = vld [vmem:[#allocation3 + $0x28] sm:$0xff]
      %v1751 = vld [vmem:[#allocation3 + $0x30] sm:$0xff]
      %v1752 = vld [vmem:[#allocation3 + $0x38] sm:$0xff]
      %v1753 = vadd.f32 %v1745, %v1707
      %v1754 = vadd.f32 %v1746, %v1712
      %v1755 = vadd.f32 %v1747, %v1717
      %v1756 = vadd.f32 %v1748, %v1722
      %v1757 = vadd.f32 %v1749, %v1727
      %v1758 = vadd.f32 %v1750, %v1732
      %v1759 = vadd.f32 %v1751, %v1737
      %v1760 = vadd.f32 %v1752, %v1742
      %1761 = vst [vmem:[#allocation3] sm:$0xff] %v1753
      %1762 = vst [vmem:[#allocation3 + $0x8] sm:$0xff] %v1754
      %1763 = vst [vmem:[#allocation3 + $0x10] sm:$0xff] %v1755
      %1764 = vst [vmem:[#allocation3 + $0x18] sm:$0xff] %v1756
      %1765 = vst [vmem:[#allocation3 + $0x20] sm:$0xff] %v1757
      %1766 = vst [vmem:[#allocation3 + $0x28] sm:$0xff] %v1758
      %1767 = vst [vmem:[#allocation3 + $0x30] sm:$0xff] %v1759
      %1768 = vst [vmem:[#allocation3 + $0x38] sm:$0xff] %v1760
      %s1769 = scalar_lea.vmem %s1445, 2 [#allocation2]
      %v1770 = vld [vmem:[%s1769] ss:$2 sm:$0xff]
      %s1771 = scalar_lea.vmem %s1445, 50 [#allocation2]
      %v1772 = vld [vmem:[%s1771] ss:$2 sm:$0xff]
      %s1773 = scalar_lea.vmem %s1445, 98 [#allocation2]
      %v1774 = vld [vmem:[%s1773] ss:$2 sm:$0xff]
      %s1775 = scalar_lea.vmem %s1445, 146 [#allocation2]
      %v1776 = vld [vmem:[%s1775] ss:$2 sm:$0xff]
      %s1777 = scalar_lea.vmem %s1445, 194 [#allocation2]
      %v1778 = vld [vmem:[%s1777] ss:$2 sm:$0xff]
      %s1779 = scalar_lea.vmem %s1445, 242 [#allocation2]
      %v1780 = vld [vmem:[%s1779] ss:$2 sm:$0xff]
      %s1781 = scalar_lea.vmem %s1445, 290 [#allocation2]
      %v1782 = vld [vmem:[%s1781] ss:$2 sm:$0xff]
      %s1783 = scalar_lea.vmem %s1445, 338 [#allocation2]
      %v1784 = vld [vmem:[%s1783] ss:$2 sm:$0xff]
      %s1785 = scalar_lea.vmem %s1, 1024
      %v1786 = vld [vmem:[%s1785] sm:$0xff]
      %v1787 = vld [vmem:[%s1785 + $0x8] sm:$0xff]
      %v1788 = vld [vmem:[%s1785 + $0x10] sm:$0xff]
      %v1789 = vld [vmem:[%s1785 + $0x18] sm:$0xff]
      %v1790 = vld [vmem:[%s1785 + $0x20] sm:$0xff]
      %v1791 = vld [vmem:[%s1785 + $0x28] sm:$0xff]
      %v1792 = vld [vmem:[%s1785 + $0x30] sm:$0xff]
      %v1793 = vld [vmem:[%s1785 + $0x38] sm:$0xff]
      %v1794 = vld [vmem:[%s1785 + $0x40] sm:$0xff]
      %v1795 = vld [vmem:[%s1785 + $0x48] sm:$0xff]
      %v1796 = vld [vmem:[%s1785 + $0x50] sm:$0xff]
      %v1797 = vld [vmem:[%s1785 + $0x58] sm:$0xff]
      %v1798 = vld [vmem:[%s1785 + $0x60] sm:$0xff]
      %v1799 = vld [vmem:[%s1785 + $0x68] sm:$0xff]
      %v1800 = vld [vmem:[%s1785 + $0x70] sm:$0xff]
      %v1801 = vld [vmem:[%s1785 + $0x78] sm:$0xff]
      %1802 = vmatprep.subr.mxu0 0.0
      %1803 = vmatpush1.msra.mxu0 %v1801
      %1804 = vmatprep.subr.mxu0 0.0
      %1805 = vmatpush1.msra.mxu0 %v1800
      %1806 = vmatprep.subr.mxu0 0.0
      %1807 = vmatpush1.msra.mxu0 %v1799
      %1808 = vmatprep.subr.mxu0 0.0
      %1809 = vmatpush1.msra.mxu0 %v1798
      %1810 = vmatprep.subr.mxu0 0.0
      %1811 = vmatpush1.msra.mxu0 %v1797
      %1812 = vmatprep.subr.mxu0 0.0
      %1813 = vmatpush1.msra.mxu0 %v1796
      %1814 = vmatprep.subr.mxu0 0.0
      %1815 = vmatpush1.msra.mxu0 %v1795
      %1816 = vmatprep.subr.mxu0 0.0
      %1817 = vmatpush1.msra.mxu0 %v1794
      %1818 = vmatprep.subr.mxu0 0.0
      %1819 = vmatpush1.msra.mxu0 %v1793
      %1820 = vmatprep.subr.mxu0 0.0
      %1821 = vmatpush1.msra.mxu0 %v1792
      %1822 = vmatprep.subr.mxu0 0.0
      %1823 = vmatpush1.msra.mxu0 %v1791
      %1824 = vmatprep.subr.mxu0 0.0
      %1825 = vmatpush1.msra.mxu0 %v1790
      %1826 = vmatprep.subr.mxu0 0.0
      %1827 = vmatpush1.msra.mxu0 %v1789
      %1828 = vmatprep.subr.mxu0 0.0
      %1829 = vmatpush1.msra.mxu0 %v1788
      %1830 = vmatprep.subr.mxu0 0.0
      %1831 = vmatpush1.msra.mxu0 %v1787
      %1832 = vmatprep.subr.mxu0 0.0
      %1833 = vmatpush1.msra.mxu0 %v1786
      %1834 = vmatprep.subr.mxu0 0.0
      %1835 = vmatpush2.msra.mxu0 0.0
      %1836 = vmatprep.subr.mxu0 0.0
      %1837 = vmatpush2.msra.mxu0 0.0
      %1838 = vmatprep.subr.mxu0 0.0
      %1839 = vmatpush2.msra.mxu0 0.0
      %1840 = vmatprep.subr.mxu0 0.0
      %1841 = vmatpush2.msra.mxu0 0.0
      %1842 = vmatprep.subr.mxu0 0.0
      %1843 = vmatpush2.msra.mxu0 0.0
      %1844 = vmatprep.subr.mxu0 0.0
      %1845 = vmatpush2.msra.mxu0 0.0
      %1846 = vmatprep.subr.mxu0 0.0
      %1847 = vmatpush2.msra.mxu0 0.0
      %1848 = vmatprep.subr.mxu0 0.0
      %1849 = vmatpush2.msra.mxu0 0.0
      %1850 = vmatprep.subr.mxu0 0.0
      %1851 = vmatpush2.msra.mxu0 0.0
      %1852 = vmatprep.subr.mxu0 0.0
      %1853 = vmatpush2.msra.mxu0 0.0
      %1854 = vmatprep.subr.mxu0 0.0
      %1855 = vmatpush2.msra.mxu0 0.0
      %1856 = vmatprep.subr.mxu0 0.0
      %1857 = vmatpush2.msra.mxu0 0.0
      %1858 = vmatprep.subr.mxu0 0.0
      %1859 = vmatpush2.msra.mxu0 0.0
      %1860 = vmatprep.subr.mxu0 0.0
      %1861 = vmatpush2.msra.mxu0 0.0
      %1862 = vmatprep.subr.mxu0 0.0
      %1863 = vmatpush2.msra.mxu0 0.0
      %1864 = vmatprep.subr.mxu0 0.0
      %1865 = vmatpush2.msra.mxu0 0.0
      %1866 = vmatprep.mubr.f32.mxu0 0.0
      %1867 = vmatmul.mubr.f32.gmra.mxu0 %v1770
      %v1868 = vpop.f32.mrf.mxu0
      %v1869 = vadd.f32 0.0, %v1868
      %v1870 = vpop.f32.mrf.mxu0
      %1871 = vmatprep.mubr.f32.mxu0 0.0
      %1872 = vmatmul.mubr.f32.gmra.mxu0 %v1772
      %v1873 = vpop.f32.mrf.mxu0
      %v1874 = vadd.f32 0.0, %v1873
      %v1875 = vpop.f32.mrf.mxu0
      %1876 = vmatprep.mubr.f32.mxu0 0.0
      %1877 = vmatmul.mubr.f32.gmra.mxu0 %v1774
      %v1878 = vpop.f32.mrf.mxu0
      %v1879 = vadd.f32 0.0, %v1878
      %v1880 = vpop.f32.mrf.mxu0
      %1881 = vmatprep.mubr.f32.mxu0 0.0
      %1882 = vmatmul.mubr.f32.gmra.mxu0 %v1776
      %v1883 = vpop.f32.mrf.mxu0
      %v1884 = vadd.f32 0.0, %v1883
      %v1885 = vpop.f32.mrf.mxu0
      %1886 = vmatprep.mubr.f32.mxu0 0.0
      %1887 = vmatmul.mubr.f32.gmra.mxu0 %v1778
      %v1888 = vpop.f32.mrf.mxu0
      %v1889 = vadd.f32 0.0, %v1888
      %v1890 = vpop.f32.mrf.mxu0
      %1891 = vmatprep.mubr.f32.mxu0 0.0
      %1892 = vmatmul.mubr.f32.gmra.mxu0 %v1780
      %v1893 = vpop.f32.mrf.mxu0
      %v1894 = vadd.f32 0.0, %v1893
      %v1895 = vpop.f32.mrf.mxu0
      %1896 = vmatprep.mubr.f32.mxu0 0.0
      %1897 = vmatmul.mubr.f32.gmra.mxu0 %v1782
      %v1898 = vpop.f32.mrf.mxu0
      %v1899 = vadd.f32 0.0, %v1898
      %v1900 = vpop.f32.mrf.mxu0
      %1901 = vmatprep.mubr.f32.mxu0 0.0
      %1902 = vmatmul.mubr.f32.gmra.mxu0 %v1784
      %v1903 = vpop.f32.mrf.mxu0
      %v1904 = vadd.f32 0.0, %v1903
      %v1905 = vpop.f32.mrf.mxu0
      %1906 = vdwg.mxu0
      %v1907 = vld [vmem:[#allocation3] sm:$0xff]
      %v1908 = vld [vmem:[#allocation3 + $0x8] sm:$0xff]
      %v1909 = vld [vmem:[#allocation3 + $0x10] sm:$0xff]
      %v1910 = vld [vmem:[#allocation3 + $0x18] sm:$0xff]
      %v1911 = vld [vmem:[#allocation3 + $0x20] sm:$0xff]
      %v1912 = vld [vmem:[#allocation3 + $0x28] sm:$0xff]
      %v1913 = vld [vmem:[#allocation3 + $0x30] sm:$0xff]
      %v1914 = vld [vmem:[#allocation3 + $0x38] sm:$0xff]
      %v1915 = vadd.f32 %v1907, %v1869
      %v1916 = vadd.f32 %v1908, %v1874
      %v1917 = vadd.f32 %v1909, %v1879
      %v1918 = vadd.f32 %v1910, %v1884
      %v1919 = vadd.f32 %v1911, %v1889
      %v1920 = vadd.f32 %v1912, %v1894
      %v1921 = vadd.f32 %v1913, %v1899
      %v1922 = vadd.f32 %v1914, %v1904
      %1923 = vst [vmem:[#allocation3] sm:$0xff] %v1915
      %1924 = vst [vmem:[#allocation3 + $0x8] sm:$0xff] %v1916
      %1925 = vst [vmem:[#allocation3 + $0x10] sm:$0xff] %v1917
      %1926 = vst [vmem:[#allocation3 + $0x18] sm:$0xff] %v1918
      %1927 = vst [vmem:[#allocation3 + $0x20] sm:$0xff] %v1919
      %1928 = vst [vmem:[#allocation3 + $0x28] sm:$0xff] %v1920
      %1929 = vst [vmem:[#allocation3 + $0x30] sm:$0xff] %v1921
      %1930 = vst [vmem:[#allocation3 + $0x38] sm:$0xff] %v1922
      %v1931 = vld [vmem:[#allocation3] sm:$0xff]
      %v1932 = vld [vmem:[#allocation3 + $0x8] sm:$0xff]
      %v1933 = vld [vmem:[#allocation3 + $0x10] sm:$0xff]
      %v1934 = vld [vmem:[#allocation3 + $0x18] sm:$0xff]
      %v1935 = vld [vmem:[#allocation3 + $0x20] sm:$0xff]
      %v1936 = vld [vmem:[#allocation3 + $0x28] sm:$0xff]
      %v1937 = vld [vmem:[#allocation3 + $0x30] sm:$0xff]
      %v1938 = vld [vmem:[#allocation3 + $0x38] sm:$0xff]
      %v1939 = vld [vmem:[%s2] sm:$0x1]
      %v1941 = vlaneseq
      %v1942 = vshrl.u32 %v1941, 7
      %v1943 = vsub.s32 0, %v1942
      %v1944 = vrot.slane %v1939, %v1943
      %v1946 = vadd.f32 %v1931, %v1944
      %v1947 = vadd.f32 %v1932, %v1944
      %v1948 = vadd.f32 %v1933, %v1944
      %v1949 = vadd.f32 %v1934, %v1944
      %v1950 = vadd.f32 %v1935, %v1944
      %v1951 = vadd.f32 %v1936, %v1944
      %v1952 = vadd.f32 %v1937, %v1944
      %v1953 = vadd.f32 %v1938, %v1944
      %1954 = vst [vmem:[%s258] sm:$0xff] %v1946
      %1955 = vst [vmem:[%s258 + $0x8] sm:$0xff] %v1947
      %1956 = vst [vmem:[%s258 + $0x10] sm:$0xff] %v1948
      %1957 = vst [vmem:[%s258 + $0x18] sm:$0xff] %v1949
      %1958 = vst [vmem:[%s258 + $0x20] sm:$0xff] %v1950
      %1959 = vst [vmem:[%s258 + $0x28] sm:$0xff] %v1951
      %1960 = vst [vmem:[%s258 + $0x30] sm:$0xff] %v1952
      %1961 = vst [vmem:[%s258 + $0x38] sm:$0xff] %v1953
      %v1962 = vadd.f32 %v1946, %v1947
      %v1963 = vadd.f32 %v1962, %v1948
      %v1964 = vadd.f32 %v1963, %v1949
      %v1965 = vadd.f32 %v1964, %v1950
      %v1966 = vadd.f32 %v1965, %v1951
      %v1967 = vadd.f32 %v1966, %v1952
      %v1968 = vadd.f32 %v1967, %v1953
      %v1969 = vrot.slane %v1968, 4
      %v1970 = vadd.f32 %v1968, %v1969
      %v1971 = vrot.slane %v1970, 2
      %v1972 = vadd.f32 %v1970, %v1971
      %v1973 = vrot.slane %v1972, 1
      %v1974 = vadd.f32 %v1972, %v1973
      %1975 = vst [vmem:[%s262] sm:$0x1] %v1974
      %v1976 = vmul.f32 %v1946, %v1946
      %v1977 = vmul.f32 %v1947, %v1947
      %v1978 = vmul.f32 %v1948, %v1948
      %v1979 = vmul.f32 %v1949, %v1949
      %v1980 = vmul.f32 %v1950, %v1950
      %v1981 = vmul.f32 %v1951, %v1951
      %v1982 = vmul.f32 %v1952, %v1952
      %v1983 = vmul.f32 %v1953, %v1953
      %v1984 = vadd.f32 %v1976, %v1977
      %v1985 = vadd.f32 %v1984, %v1978
      %v1986 = vadd.f32 %v1985, %v1979
      %v1987 = vadd.f32 %v1986, %v1980
      %v1988 = vadd.f32 %v1987, %v1981
      %v1989 = vadd.f32 %v1988, %v1982
      %v1990 = vadd.f32 %v1989, %v1983
      %v1991 = vrot.slane %v1990, 4
      %v1992 = vadd.f32 %v1990, %v1991
      %v1993 = vrot.slane %v1992, 2
      %v1994 = vadd.f32 %v1992, %v1993
      %v1995 = vrot.slane %v1994, 1
      %v1996 = vadd.f32 %v1994, %v1995
      %1997 = vst [vmem:[%s262 + $0x1] sm:$0x1] %v1996
      %p1998 = scmp.lt.s32.totalorder %s18, 1
      %s1999 = scalar_select %p1998, %s18, 1
      %s2000 = smul.addr %s1999, 8
      %s2001 = smul.addr %s2000, 8
      %s2002 = scalar_lea.vmem %s5, %s2001
      %p2003 = scmp.lt.s32.totalorder %s18, 1
      %s2004 = scalar_select %p2003, %s18, 1
      %s2005 = smul.addr %s2004, 2
      %s2006 = scalar_lea.vmem %s6, %s2005
      // Predicated region
      $region41: #{resnet_basicblock_forward.4} parent=39 // pred_check
        %p2007 = pneg %p146
      $region42: #{resnet_basicblock_forward.4} parent=39 // pred_check_branch
        %2009 = sbr.rel (%p2007) target = $region44
      $region43: #{resnet_basicblock_forward.4} parent=39 // pred_region
        _
      $region44: #{resnet_basicblock_forward.4} parent=39 // pred_fallthru
        _
      // Predicated region
      $region45: #{resnet_basicblock_forward.4} parent=39 // pred_check
        %p2010 = pneg %p172
      $region46: #{resnet_basicblock_forward.4} parent=39 // pred_check_branch
        %2012 = sbr.rel (%p2010) target = $region48
      $region47: #{resnet_basicblock_forward.4} parent=39 // pred_region
        _
      $region48: #{resnet_basicblock_forward.4} parent=39 // pred_fallthru
        _
    $region40: #{resnet_basicblock_forward.4} parent=5 // pred_fallthru
      _
    %p2013 = scmp.le.s32.totalorder 2, %s13
    // Predicated region
    $region49: #{resnet_basicblock_forward.4} parent=5 // pred_check
      %p2014 = pneg %p2013
    $region50: #{resnet_basicblock_forward.4} parent=5 // pred_check_branch
      %2016 = sbr.rel (%p2014) target = $region52
    $region51: #{resnet_basicblock_forward.4} parent=5 // pred_region
      %s2017 = ssub.s32 %s13, 2
      // Predicated region
      $region53: #{resnet_basicblock_forward.4} parent=51 // pred_check
        %p2018 = pneg %p152
      $region54: #{resnet_basicblock_forward.4} parent=51 // pred_check_branch
        %2020 = sbr.rel (%p2018) target = $region56
      $region55: #{resnet_basicblock_forward.4} parent=51 // pred_region
        %p2021 = scmp.lt.s32.totalorder %s19, 1
        %s2022 = scalar_select %p2021, %s19, 1
        %s2023 = smul.addr %s2022, 8
        %s2024 = smul.addr %s2023, 8
        %s2025 = scalar_lea.vmem %s5, %s2024
      $region56: #{resnet_basicblock_forward.4} parent=51 // pred_fallthru
        _
      // Predicated region
      $region57: #{resnet_basicblock_forward.4} parent=51 // pred_check
        %p2026 = pneg %p178
      $region58: #{resnet_basicblock_forward.4} parent=51 // pred_check_branch
        %2028 = sbr.rel (%p2026) target = $region60
      $region59: #{resnet_basicblock_forward.4} parent=51 // pred_region
        %p2029 = scmp.lt.s32.totalorder %s19, 1
        %s2030 = scalar_select %p2029, %s19, 1
        %s2031 = smul.addr %s2030, 2
        %s2032 = scalar_lea.vmem %s6, %s2031
      $region60: #{resnet_basicblock_forward.4} parent=51 // pred_fallthru
        _
    $region52: #{resnet_basicblock_forward.4} parent=5 // pred_fallthru
      _
  $region6: #{resnet_basicblock_forward.4} parent=0 // loop_footer
    %s17 = sadd.s32 1, %s13
  $region7: #{resnet_basicblock_forward.4} parent=0 // loop_footer_branch
    %12 = sbr.rel target = $region3
  $region8: #{resnet_basicblock_forward.4} parent=0 // loop_exit
    _

</llo_original>
